<compile_context>
chip_gen: v7x
topology: tpu7x:2x2x1
jax: 0.10.0
libtpu: 0.0.40
codegen_flags: <defaults>
</compile_context>

<pallas_src>
import jax
import jax.numpy as jnp
from jax.experimental import pallas as pl
from jax.experimental.pallas import tpu as pltpu


def _segnet_kernel(x_ref,                       # (N, H, W, Cin)  f32
                   w1_ref, g1_ref, be1_ref,     # (9*Cin, C1) bf16, (1,C1) f32 x2
                   w2_ref, g2_ref, be2_ref,     # (C1, C2)   bf16, (1,C2) f32 x2
                   w3_ref, g3_ref, be3_ref,     # (9*C2, C1) bf16, (1,C1) f32 x2
                   w4_ref, g4_ref, be4_ref,     # (C1, Cout) bf16, (1,Cout) f32 x2
                   o_ref,                       # (N*H*W, Cout) f32
                   pad1_ref, pad3_ref):         # f32 padded-input scratch
    N, H, W, Cin = x_ref.shape
    C1 = w1_ref.shape[1]
    C2 = w2_ref.shape[1]
    Cout = w4_ref.shape[1]
    M = N * H * W
    inv_m = 1.0 / M
    bf16 = jnp.bfloat16

    def zero_halo(pad_ref, c):
        # Only the 1-pixel halo needs zeros; the interior is fully overwritten.
        z_row = jnp.zeros((N, 1, W + 2, c), jnp.float32)
        z_col = jnp.zeros((N, H + 2, 1, c), jnp.float32)
        pad_ref[:, 0:1, :, :] = z_row
        pad_ref[:, H + 1:H + 2, :, :] = z_row
        pad_ref[:, :, 0:1, :] = z_col
        pad_ref[:, :, W + 1:W + 2, :] = z_col

    def conv3x3(x_nhwc, pad_ref, w_ref, cin):
        # im2col: single (M, 9*cin) @ (9*cin, cout) MXU matmul, bf16 operands,
        # f32 accumulation.  Tap order (ky, kx, cin) matches w.reshape(9*cin, cout).
        pad_ref[:, 1:H + 1, 1:W + 1, :] = x_nhwc
        taps = [pad_ref[:, ky:ky + H, kx:kx + W, :]
                for ky in range(3) for kx in range(3)]
        col = jnp.concatenate(taps, axis=-1).reshape(M, 9 * cin).astype(bf16)
        return jnp.dot(col, w_ref[...], preferred_element_type=jnp.float32)

    def bn(a, gamma, beta, relu, out_dtype):
        # Training-mode BatchNorm2d (biased variance, eps=1e-5).
        # Single pass over `a` for sum / sum-of-squares, then one fused
        # per-channel scale+shift.  Conv bias omitted upstream (cancels here).
        s = jnp.sum(a, axis=0, keepdims=True)
        ss = jnp.sum(a * a, axis=0, keepdims=True)
        mean = s * inv_m
        var = ss * inv_m - mean * mean
        scale = gamma * jax.lax.rsqrt(var + 1e-5)
        shift = beta - mean * scale
        y = a * scale + shift
        if relu:
            y = jnp.maximum(y, 0.0)
        return y.astype(out_dtype)

    # layer 1: 3x3 conv (pad 1) + BN + ReLU
    zero_halo(pad1_ref, Cin)
    h1 = bn(conv3x3(x_ref[...], pad1_ref, w1_ref, Cin),
            g1_ref[...], be1_ref[...], relu=True, out_dtype=bf16)       # (M, C1)

    # layer 2: 1x1 conv + BN + ReLU (pure channel matmul)
    h2 = bn(jnp.dot(h1, w2_ref[...], preferred_element_type=jnp.float32),
            g2_ref[...], be2_ref[...], relu=True, out_dtype=jnp.float32)  # (M, C2)

    # layer 3: 3x3 conv (pad 1) + BN + ReLU
    zero_halo(pad3_ref, C2)
    h3 = bn(conv3x3(h2.reshape(N, H, W, C2), pad3_ref, w3_ref, C2),
            g3_ref[...], be3_ref[...], relu=True, out_dtype=bf16)       # (M, C1)

    # layer 4: 1x1 conv + BN (no ReLU)
    h4 = bn(jnp.dot(h3, w4_ref[...], preferred_element_type=jnp.float32),
            g4_ref[...], be4_ref[...], relu=False, out_dtype=jnp.float32)

    o_ref[...] = h4


@jax.jit
def segnet_forward(x_nchw, params):
    """x_nchw: (N, Cin, H, W) float32. Returns (N, out_dim, H, W) float32."""
    (w1, b1, g1, be1,
     w2, b2, g2, be2,
     w3, b3, g3, be3,
     w4, b4, g4, be4) = params
    del b1, b2, b3, b4  # conv bias before training-mode BN cancels exactly
    N, Cin, H, W = x_nchw.shape
    C1 = w1.shape[3]
    C2 = w2.shape[1]
    Cout = w4.shape[1]
    M = N * H * W
    bf16 = jnp.bfloat16

    x_nhwc = jnp.transpose(x_nchw, (0, 2, 3, 1))
    # Pre-reshape / pre-cast conv weights for the in-kernel im2col matmuls.
    w1r = w1.reshape(9 * Cin, C1).astype(bf16)
    w3r = w3.reshape(9 * C2, C1).astype(bf16)
    w2c = w2.astype(bf16)
    w4c = w4.astype(bf16)

    vmem = pl.BlockSpec(memory_space=pltpu.MemorySpace.VMEM)

    out_flat = pl.pallas_call(
        _segnet_kernel,
        out_shape=jax.ShapeDtypeStruct((M, Cout), jnp.float32),
        in_specs=[vmem] * 13,
        out_specs=vmem,
        scratch_shapes=[
            pltpu.VMEM((N, H + 2, W + 2, Cin), jnp.float32),  # padded input, layer 1
            pltpu.VMEM((N, H + 2, W + 2, C2), jnp.float32),   # padded input, layer 3
        ],
        compiler_params=pltpu.CompilerParams(
            # Working set at these shapes is well under a few MiB even with
            # 128-lane padding; 32 MiB is safe on v5e/v6e and on v7x (64 MiB).
            vmem_limit_bytes=32 * 1024 * 1024),
    )(x_nhwc,
      w1r, g1, be1,
      w2c, g2, be2,
      w3r, g3, be3,
      w4c, g4, be4)

    out_nhwc = out_flat.reshape(N, H, W, Cout)
    return jnp.transpose(out_nhwc, (0, 3, 1, 2))


def init_params(key, inp_dim, mod_dim1, mod_dim2, out_dim):
    ks = jax.random.split(key, 8)

    def conv3x3_w(k, cin, cout):
        return 0.1 * jax.random.normal(k, (3, 3, cin, cout), jnp.float32)

    def conv1x1_w(k, cin, cout):
        return 0.1 * jax.random.normal(k, (cin, cout), jnp.float32)

    def bias(k, c):
        return 0.05 * jax.random.normal(k, (1, c), jnp.float32)

    w1 = conv3x3_w(ks[0], inp_dim, mod_dim1)
    b1 = bias(ks[1], mod_dim1)
    g1 = jnp.full((1, mod_dim1), 1.1, jnp.float32)
    be1 = jnp.full((1, mod_dim1), 0.05, jnp.float32)

    w2 = conv1x1_w(ks[2], mod_dim1, mod_dim2)
    b2 = bias(ks[3], mod_dim2)
    g2 = jnp.full((1, mod_dim2), 0.9, jnp.float32)
    be2 = jnp.full((1, mod_dim2), -0.05, jnp.float32)

    w3 = conv3x3_w(ks[4], mod_dim2, mod_dim1)
    b3 = bias(ks[5], mod_dim1)
    g3 = jnp.full((1, mod_dim1), 1.05, jnp.float32)
    be3 = jnp.full((1, mod_dim1), 0.02, jnp.float32)

    w4 = conv1x1_w(ks[6], mod_dim1, out_dim)
    b4 = bias(ks[7], out_dim)
    g4 = jnp.full((1, out_dim), 1.0, jnp.float32)
    be4 = jnp.full((1, out_dim), 0.0, jnp.float32)

    return (w1, b1, g1, be1, w2, b2, g2, be2,
            w3, b3, g3, be3, w4, b4, g4, be4)


def segnet_reference(x_nchw, params, matmul_dtype=None):
    """Plain-JAX reference (NHWC, includes conv biases).

    matmul_dtype=None          -> full-f32 PyTorch-faithful reference.
    matmul_dtype=jnp.bfloat16  -> conv operands cast to bf16 (f32 accumulate),
                                  matching the kernel's MXU precision.
    """
    (w1, b1, g1, be1,
     w2, b2, g2, be2,
     w3, b3, g3, be3,
     w4, b4, g4, be4) = params
    x = jnp.transpose(x_nchw, (0, 2, 3, 1))
    prec = jax.lax.Precision.HIGHEST if matmul_dtype is None else None

    def cast(t):
        return t if matmul_dtype is None else t.astype(matmul_dtype)

    def conv3(h, w, b):
        y = jax.lax.conv_general_dilated(
            cast(h), cast(w), window_strides=(1, 1), padding='SAME',
            dimension_numbers=('NHWC', 'HWIO', 'NHWC'),
            preferred_element_type=jnp.float32, precision=prec)
        return y + b

    def conv1(h, w, b):
        y = jnp.einsum('nhwc,cd->nhwd', cast(h), cast(w),
                       preferred_element_type=jnp.float32, precision=prec)
        return y + b

    def bn(a, g, be, relu):
        m = jnp.mean(a, axis=(0, 1, 2), keepdims=True)
        v = jnp.mean((a - m) ** 2, axis=(0, 1, 2), keepdims=True)
        y = (a - m) * jax.lax.rsqrt(v + 1e-5) * g + be
        return jnp.maximum(y, 0.0) if relu else y

    h = bn(conv3(x, w1, b1), g1, be1, True)
    h = bn(conv1(h, w2, b2), g2, be2, True)
    h = bn(conv3(h, w3, b3), g3, be3, True)
    h = bn(conv1(h, w4, b4), g4, be4, False)
    return jnp.transpose(h, (0, 3, 1, 2))


if __name__ == "__main__":
    # module dims: SegNet(inp_dim=4, mod_dim1=32, mod_dim2=16, out_dim=8)
    inp_dim, mod_dim1, mod_dim2, out_dim = 4, 32, 16, 8
    N, H, W = 2, 16, 16

    key = jax.random.PRNGKey(0)
    kx, kp = jax.random.split(key)
    x = jax.random.normal(kx, (N, inp_dim, H, W), jnp.float32)
    params = init_params(kp, inp_dim, mod_dim1, mod_dim2, out_dim)

    out = jax.block_until_ready(segnet_forward(x, params))
    ref_match = jax.block_until_ready(
        segnet_reference(x, params, matmul_dtype=jnp.bfloat16))
    ref_f32 = jax.block_until_ready(segnet_reference(x, params, matmul_dtype=None))

    assert out.shape == (N, out_dim, H, W), out.shape
    assert bool(jnp.all(jnp.isfinite(out)))

    # Tight check vs a reference with the same bf16-operand / f32-accumulate convs.
    max_err = float(jnp.max(jnp.abs(out - ref_match)))
    assert jnp.allclose(out, ref_match, atol=2e-3, rtol=2e-3), max_err

    # Looser semantic check vs the full-f32 PyTorch-faithful reference; the only
    # difference is bf16 rounding of the MXU operands.
    rel = float(jnp.linalg.norm(out - ref_f32) / jnp.linalg.norm(ref_f32))
    assert rel < 5e-2, rel

    print("KERNEL_OK")
</pallas_src>

<mosaic_0001>
module attributes {stable_mosaic.version = 11 : i64} {
  func.func @_segnet_kernel(%arg0: memref<2x16x16x4xf32, #tpu.memory_space<vmem>>, %arg1: memref<36x32xbf16, #tpu.memory_space<vmem>>, %arg2: memref<1x32xf32, #tpu.memory_space<vmem>>, %arg3: memref<1x32xf32, #tpu.memory_space<vmem>>, %arg4: memref<32x16xbf16, #tpu.memory_space<vmem>>, %arg5: memref<1x16xf32, #tpu.memory_space<vmem>>, %arg6: memref<1x16xf32, #tpu.memory_space<vmem>>, %arg7: memref<144x32xbf16, #tpu.memory_space<vmem>>, %arg8: memref<1x32xf32, #tpu.memory_space<vmem>>, %arg9: memref<1x32xf32, #tpu.memory_space<vmem>>, %arg10: memref<32x8xbf16, #tpu.memory_space<vmem>>, %arg11: memref<1x8xf32, #tpu.memory_space<vmem>>, %arg12: memref<1x8xf32, #tpu.memory_space<vmem>>, %arg13: memref<512x8xf32, #tpu.memory_space<vmem>>, %arg14: memref<2x18x18x4xf32, #tpu.memory_space<vmem>>, %arg15: memref<2x18x18x16xf32, #tpu.memory_space<vmem>>) attributes {dimension_semantics = [], scalar_prefetch = 0 : i64, scratch_operands = 2 : i64, tpu.core_type = #tpu.core_type<tc>} {
    %cst = arith.constant 0.000000e+00 : f32
    %0 = vector.broadcast %cst : f32 to vector<2x1x18x4xf32>
    %cst_0 = arith.constant 0.000000e+00 : f32
    %1 = vector.broadcast %cst_0 : f32 to vector<2x18x1x4xf32>
    %c0 = arith.constant 0 : index
    %c0_1 = arith.constant 0 : index
    %c0_2 = arith.constant 0 : index
    %c0_3 = arith.constant 0 : index
    %2 = vector.load %arg14[%c0, %c0_1, %c0_2, %c0_3] : memref<2x18x18x4xf32, #tpu.memory_space<vmem>>, vector<2x1x18x4xf32>
    tpu.vector_store %arg14[%c0, %c0_1, %c0_2, %c0_3], %0 {strides = array<i32>} : memref<2x18x18x4xf32, #tpu.memory_space<vmem>>, vector<2x1x18x4xf32>,
    %c0_4 = arith.constant 0 : index
    %c17 = arith.constant 17 : index
    %c0_5 = arith.constant 0 : index
    %c0_6 = arith.constant 0 : index
    %3 = vector.load %arg14[%c0_4, %c17, %c0_5, %c0_6] : memref<2x18x18x4xf32, #tpu.memory_space<vmem>>, vector<2x1x18x4xf32>
    tpu.vector_store %arg14[%c0_4, %c17, %c0_5, %c0_6], %0 {strides = array<i32>} : memref<2x18x18x4xf32, #tpu.memory_space<vmem>>, vector<2x1x18x4xf32>,
    %c0_7 = arith.constant 0 : index
    %c0_8 = arith.constant 0 : index
    %c0_9 = arith.constant 0 : index
    %c0_10 = arith.constant 0 : index
    %4 = vector.load %arg14[%c0_7, %c0_8, %c0_9, %c0_10] : memref<2x18x18x4xf32, #tpu.memory_space<vmem>>, vector<2x18x1x4xf32>
    tpu.vector_store %arg14[%c0_7, %c0_8, %c0_9, %c0_10], %1 {strides = array<i32>} : memref<2x18x18x4xf32, #tpu.memory_space<vmem>>, vector<2x18x1x4xf32>,
    %c0_11 = arith.constant 0 : index
    %c0_12 = arith.constant 0 : index
    %c17_13 = arith.constant 17 : index
    %c0_14 = arith.constant 0 : index
    %5 = vector.load %arg14[%c0_11, %c0_12, %c17_13, %c0_14] : memref<2x18x18x4xf32, #tpu.memory_space<vmem>>, vector<2x18x1x4xf32>
    tpu.vector_store %arg14[%c0_11, %c0_12, %c17_13, %c0_14], %1 {strides = array<i32>} : memref<2x18x18x4xf32, #tpu.memory_space<vmem>>, vector<2x18x1x4xf32>,
    %c0_15 = arith.constant 0 : index
    %c0_16 = arith.constant 0 : index
    %c0_17 = arith.constant 0 : index
    %c0_18 = arith.constant 0 : index
    %6 = vector.load %arg0[%c0_15, %c0_16, %c0_17, %c0_18] : memref<2x16x16x4xf32, #tpu.memory_space<vmem>>, vector<2x16x16x4xf32>
    %c0_19 = arith.constant 0 : index
    %c1 = arith.constant 1 : index
    %c1_20 = arith.constant 1 : index
    %c0_21 = arith.constant 0 : index
    %7 = vector.load %arg14[%c0_19, %c1, %c1_20, %c0_21] : memref<2x18x18x4xf32, #tpu.memory_space<vmem>>, vector<2x16x16x4xf32>
    tpu.vector_store %arg14[%c0_19, %c1, %c1_20, %c0_21], %6 {strides = array<i32>} : memref<2x18x18x4xf32, #tpu.memory_space<vmem>>, vector<2x16x16x4xf32>,
    %c0_22 = arith.constant 0 : index
    %c0_23 = arith.constant 0 : index
    %c0_24 = arith.constant 0 : index
    %c0_25 = arith.constant 0 : index
    %8 = vector.load %arg14[%c0_22, %c0_23, %c0_24, %c0_25] : memref<2x18x18x4xf32, #tpu.memory_space<vmem>>, vector<2x16x16x4xf32>
    %c0_26 = arith.constant 0 : index
    %c0_27 = arith.constant 0 : index
    %c1_28 = arith.constant 1 : index
    %c0_29 = arith.constant 0 : index
    %9 = vector.load %arg14[%c0_26, %c0_27, %c1_28, %c0_29] : memref<2x18x18x4xf32, #tpu.memory_space<vmem>>, vector<2x16x16x4xf32>
    %c0_30 = arith.constant 0 : index
    %c0_31 = arith.constant 0 : index
    %c2 = arith.constant 2 : index
    %c0_32 = arith.constant 0 : index
    %10 = vector.load %arg14[%c0_30, %c0_31, %c2, %c0_32] : memref<2x18x18x4xf32, #tpu.memory_space<vmem>>, vector<2x16x16x4xf32>
    %c0_33 = arith.constant 0 : index
    %c1_34 = arith.constant 1 : index
    %c0_35 = arith.constant 0 : index
    %c0_36 = arith.constant 0 : index
    %11 = vector.load %arg14[%c0_33, %c1_34, %c0_35, %c0_36] : memref<2x18x18x4xf32, #tpu.memory_space<vmem>>, vector<2x16x16x4xf32>
    %c0_37 = arith.constant 0 : index
    %c1_38 = arith.constant 1 : index
    %c1_39 = arith.constant 1 : index
    %c0_40 = arith.constant 0 : index
    %12 = vector.load %arg14[%c0_37, %c1_38, %c1_39, %c0_40] : memref<2x18x18x4xf32, #tpu.memory_space<vmem>>, vector<2x16x16x4xf32>
    %c0_41 = arith.constant 0 : index
    %c1_42 = arith.constant 1 : index
    %c2_43 = arith.constant 2 : index
    %c0_44 = arith.constant 0 : index
    %13 = vector.load %arg14[%c0_41, %c1_42, %c2_43, %c0_44] : memref<2x18x18x4xf32, #tpu.memory_space<vmem>>, vector<2x16x16x4xf32>
    %c0_45 = arith.constant 0 : index
    %c2_46 = arith.constant 2 : index
    %c0_47 = arith.constant 0 : index
    %c0_48 = arith.constant 0 : index
    %14 = vector.load %arg14[%c0_45, %c2_46, %c0_47, %c0_48] : memref<2x18x18x4xf32, #tpu.memory_space<vmem>>, vector<2x16x16x4xf32>
    %c0_49 = arith.constant 0 : index
    %c2_50 = arith.constant 2 : index
    %c1_51 = arith.constant 1 : index
    %c0_52 = arith.constant 0 : index
    %15 = vector.load %arg14[%c0_49, %c2_50, %c1_51, %c0_52] : memref<2x18x18x4xf32, #tpu.memory_space<vmem>>, vector<2x16x16x4xf32>
    %c0_53 = arith.constant 0 : index
    %c2_54 = arith.constant 2 : index
    %c2_55 = arith.constant 2 : index
    %c0_56 = arith.constant 0 : index
    %16 = vector.load %arg14[%c0_53, %c2_54, %c2_55, %c0_56] : memref<2x18x18x4xf32, #tpu.memory_space<vmem>>, vector<2x16x16x4xf32>
    %17 = tpu.concatenate %8, %9, %10, %11, %12, %13, %14, %15, %16 in 3 : vector<2x16x16x4xf32>, vector<2x16x16x4xf32>, vector<2x16x16x4xf32>, vector<2x16x16x4xf32>, vector<2x16x16x4xf32>, vector<2x16x16x4xf32>, vector<2x16x16x4xf32>, vector<2x16x16x4xf32>, vector<2x16x16x4xf32> -> vector<2x16x16x36xf32>
    %18 = vector.shape_cast %17 : vector<2x16x16x36xf32> to vector<512x36xf32>
    %19 = arith.truncf %18 : vector<512x36xf32> to vector<512x36xbf16>
    %c0_57 = arith.constant 0 : index
    %c0_58 = arith.constant 0 : index
    %20 = vector.load %arg1[%c0_57, %c0_58] : memref<36x32xbf16, #tpu.memory_space<vmem>>, vector<36x32xbf16>
    %cst_59 = arith.constant dense<0.000000e+00> : vector<512x32xf32>
    %21 = tpu.matmul %19, %20, %cst_59 {dimension_numbers = #tpu.dot_dimension_numbers<[1], [0], [0], [1], [0, 0, 1, 1], [], []>} : vector<512x36xbf16>, vector<36x32xbf16>, vector<512x32xf32> -> vector<512x32xf32>
    %c0_60 = arith.constant 0 : index
    %c0_61 = arith.constant 0 : index
    %22 = vector.load %arg2[%c0_60, %c0_61] : memref<1x32xf32, #tpu.memory_space<vmem>>, vector<1x32xf32>
    %c0_62 = arith.constant 0 : index
    %c0_63 = arith.constant 0 : index
    %23 = vector.load %arg3[%c0_62, %c0_63] : memref<1x32xf32, #tpu.memory_space<vmem>>, vector<1x32xf32>
    %cst_64 = arith.constant dense<0.000000e+00> : vector<32xf32>
    %24 = vector.multi_reduction <add>, %21, %cst_64 [0] : vector<512x32xf32> to vector<32xf32>
    %25 = vector.shape_cast %24 : vector<32xf32> to vector<1x32xf32>
    %26 = arith.mulf %21, %21 : vector<512x32xf32>
    %cst_65 = arith.constant dense<0.000000e+00> : vector<32xf32>
    %27 = vector.multi_reduction <add>, %26, %cst_65 [0] : vector<512x32xf32> to vector<32xf32>
    %28 = vector.shape_cast %27 : vector<32xf32> to vector<1x32xf32>
    %cst_66 = arith.constant 0.001953125 : f32
    %29 = vector.broadcast %cst_66 : f32 to vector<1x32xf32>
    %30 = arith.mulf %25, %29 : vector<1x32xf32>
    %cst_67 = arith.constant 0.001953125 : f32
    %31 = vector.broadcast %cst_67 : f32 to vector<1x32xf32>
    %32 = arith.mulf %28, %31 : vector<1x32xf32>
    %33 = arith.mulf %30, %30 : vector<1x32xf32>
    %34 = arith.subf %32, %33 : vector<1x32xf32>
    %cst_68 = arith.constant 9.99999974E-6 : f32
    %35 = vector.broadcast %cst_68 : f32 to vector<1x32xf32>
    %36 = arith.addf %34, %35 : vector<1x32xf32>
    %37 = math.rsqrt %36 : vector<1x32xf32>
    %38 = arith.mulf %22, %37 : vector<1x32xf32>
    %39 = arith.mulf %30, %38 : vector<1x32xf32>
    %40 = arith.subf %23, %39 : vector<1x32xf32>
    %41 = vector.broadcast %38 : vector<1x32xf32> to vector<512x32xf32>
    %42 = arith.mulf %21, %41 : vector<512x32xf32>
    %43 = vector.broadcast %40 : vector<1x32xf32> to vector<512x32xf32>
    %44 = arith.addf %42, %43 : vector<512x32xf32>
    %cst_69 = arith.constant 0.000000e+00 : f32
    %45 = vector.broadcast %cst_69 : f32 to vector<512x32xf32>
    %46 = arith.maximumf %44, %45 : vector<512x32xf32>
    %47 = arith.truncf %46 : vector<512x32xf32> to vector<512x32xbf16>
    %c0_70 = arith.constant 0 : index
    %c0_71 = arith.constant 0 : index
    %48 = vector.load %arg4[%c0_70, %c0_71] : memref<32x16xbf16, #tpu.memory_space<vmem>>, vector<32x16xbf16>
    %cst_72 = arith.constant dense<0.000000e+00> : vector<512x16xf32>
    %49 = tpu.matmul %47, %48, %cst_72 {dimension_numbers = #tpu.dot_dimension_numbers<[1], [0], [0], [1], [0, 0, 1, 1], [], []>} : vector<512x32xbf16>, vector<32x16xbf16>, vector<512x16xf32> -> vector<512x16xf32>
    %c0_73 = arith.constant 0 : index
    %c0_74 = arith.constant 0 : index
    %50 = vector.load %arg5[%c0_73, %c0_74] : memref<1x16xf32, #tpu.memory_space<vmem>>, vector<1x16xf32>
    %c0_75 = arith.constant 0 : index
    %c0_76 = arith.constant 0 : index
    %51 = vector.load %arg6[%c0_75, %c0_76] : memref<1x16xf32, #tpu.memory_space<vmem>>, vector<1x16xf32>
    %cst_77 = arith.constant dense<0.000000e+00> : vector<16xf32>
    %52 = vector.multi_reduction <add>, %49, %cst_77 [0] : vector<512x16xf32> to vector<16xf32>
    %53 = vector.shape_cast %52 : vector<16xf32> to vector<1x16xf32>
    %54 = arith.mulf %49, %49 : vector<512x16xf32>
    %cst_78 = arith.constant dense<0.000000e+00> : vector<16xf32>
    %55 = vector.multi_reduction <add>, %54, %cst_78 [0] : vector<512x16xf32> to vector<16xf32>
    %56 = vector.shape_cast %55 : vector<16xf32> to vector<1x16xf32>
    %cst_79 = arith.constant 0.001953125 : f32
    %57 = vector.broadcast %cst_79 : f32 to vector<1x16xf32>
    %58 = arith.mulf %53, %57 : vector<1x16xf32>
    %cst_80 = arith.constant 0.001953125 : f32
    %59 = vector.broadcast %cst_80 : f32 to vector<1x16xf32>
    %60 = arith.mulf %56, %59 : vector<1x16xf32>
    %61 = arith.mulf %58, %58 : vector<1x16xf32>
    %62 = arith.subf %60, %61 : vector<1x16xf32>
    %cst_81 = arith.constant 9.99999974E-6 : f32
    %63 = vector.broadcast %cst_81 : f32 to vector<1x16xf32>
    %64 = arith.addf %62, %63 : vector<1x16xf32>
    %65 = math.rsqrt %64 : vector<1x16xf32>
    %66 = arith.mulf %50, %65 : vector<1x16xf32>
    %67 = arith.mulf %58, %66 : vector<1x16xf32>
    %68 = arith.subf %51, %67 : vector<1x16xf32>
    %69 = vector.broadcast %66 : vector<1x16xf32> to vector<512x16xf32>
    %70 = arith.mulf %49, %69 : vector<512x16xf32>
    %71 = vector.broadcast %68 : vector<1x16xf32> to vector<512x16xf32>
    %72 = arith.addf %70, %71 : vector<512x16xf32>
    %cst_82 = arith.constant 0.000000e+00 : f32
    %73 = vector.broadcast %cst_82 : f32 to vector<512x16xf32>
    %74 = arith.maximumf %72, %73 : vector<512x16xf32>
    %cst_83 = arith.constant 0.000000e+00 : f32
    %75 = vector.broadcast %cst_83 : f32 to vector<2x1x18x16xf32>
    %cst_84 = arith.constant 0.000000e+00 : f32
    %76 = vector.broadcast %cst_84 : f32 to vector<2x18x1x16xf32>
    %c0_85 = arith.constant 0 : index
    %c0_86 = arith.constant 0 : index
    %c0_87 = arith.constant 0 : index
    %c0_88 = arith.constant 0 : index
    %77 = vector.load %arg15[%c0_85, %c0_86, %c0_87, %c0_88] : memref<2x18x18x16xf32, #tpu.memory_space<vmem>>, vector<2x1x18x16xf32>
    tpu.vector_store %arg15[%c0_85, %c0_86, %c0_87, %c0_88], %75 {strides = array<i32>} : memref<2x18x18x16xf32, #tpu.memory_space<vmem>>, vector<2x1x18x16xf32>,
    %c0_89 = arith.constant 0 : index
    %c17_90 = arith.constant 17 : index
    %c0_91 = arith.constant 0 : index
    %c0_92 = arith.constant 0 : index
    %78 = vector.load %arg15[%c0_89, %c17_90, %c0_91, %c0_92] : memref<2x18x18x16xf32, #tpu.memory_space<vmem>>, vector<2x1x18x16xf32>
    tpu.vector_store %arg15[%c0_89, %c17_90, %c0_91, %c0_92], %75 {strides = array<i32>} : memref<2x18x18x16xf32, #tpu.memory_space<vmem>>, vector<2x1x18x16xf32>,
    %c0_93 = arith.constant 0 : index
    %c0_94 = arith.constant 0 : index
    %c0_95 = arith.constant 0 : index
    %c0_96 = arith.constant 0 : index
    %79 = vector.load %arg15[%c0_93, %c0_94, %c0_95, %c0_96] : memref<2x18x18x16xf32, #tpu.memory_space<vmem>>, vector<2x18x1x16xf32>
    tpu.vector_store %arg15[%c0_93, %c0_94, %c0_95, %c0_96], %76 {strides = array<i32>} : memref<2x18x18x16xf32, #tpu.memory_space<vmem>>, vector<2x18x1x16xf32>,
    %c0_97 = arith.constant 0 : index
    %c0_98 = arith.constant 0 : index
    %c17_99 = arith.constant 17 : index
    %c0_100 = arith.constant 0 : index
    %80 = vector.load %arg15[%c0_97, %c0_98, %c17_99, %c0_100] : memref<2x18x18x16xf32, #tpu.memory_space<vmem>>, vector<2x18x1x16xf32>
    tpu.vector_store %arg15[%c0_97, %c0_98, %c17_99, %c0_100], %76 {strides = array<i32>} : memref<2x18x18x16xf32, #tpu.memory_space<vmem>>, vector<2x18x1x16xf32>,
    %81 = vector.shape_cast %74 : vector<512x16xf32> to vector<2x16x16x16xf32>
    %c0_101 = arith.constant 0 : index
    %c1_102 = arith.constant 1 : index
    %c1_103 = arith.constant 1 : index
    %c0_104 = arith.constant 0 : index
    %82 = vector.load %arg15[%c0_101, %c1_102, %c1_103, %c0_104] : memref<2x18x18x16xf32, #tpu.memory_space<vmem>>, vector<2x16x16x16xf32>
    tpu.vector_store %arg15[%c0_101, %c1_102, %c1_103, %c0_104], %81 {strides = array<i32>} : memref<2x18x18x16xf32, #tpu.memory_space<vmem>>, vector<2x16x16x16xf32>,
    %c0_105 = arith.constant 0 : index
    %c0_106 = arith.constant 0 : index
    %c0_107 = arith.constant 0 : index
    %c0_108 = arith.constant 0 : index
    %83 = vector.load %arg15[%c0_105, %c0_106, %c0_107, %c0_108] : memref<2x18x18x16xf32, #tpu.memory_space<vmem>>, vector<2x16x16x16xf32>
    %c0_109 = arith.constant 0 : index
    %c0_110 = arith.constant 0 : index
    %c1_111 = arith.constant 1 : index
    %c0_112 = arith.constant 0 : index
    %84 = vector.load %arg15[%c0_109, %c0_110, %c1_111, %c0_112] : memref<2x18x18x16xf32, #tpu.memory_space<vmem>>, vector<2x16x16x16xf32>
    %c0_113 = arith.constant 0 : index
    %c0_114 = arith.constant 0 : index
    %c2_115 = arith.constant 2 : index
    %c0_116 = arith.constant 0 : index
    %85 = vector.load %arg15[%c0_113, %c0_114, %c2_115, %c0_116] : memref<2x18x18x16xf32, #tpu.memory_space<vmem>>, vector<2x16x16x16xf32>
    %c0_117 = arith.constant 0 : index
    %c1_118 = arith.constant 1 : index
    %c0_119 = arith.constant 0 : index
    %c0_120 = arith.constant 0 : index
    %86 = vector.load %arg15[%c0_117, %c1_118, %c0_119, %c0_120] : memref<2x18x18x16xf32, #tpu.memory_space<vmem>>, vector<2x16x16x16xf32>
    %c0_121 = arith.constant 0 : index
    %c1_122 = arith.constant 1 : index
    %c1_123 = arith.constant 1 : index
    %c0_124 = arith.constant 0 : index
    %87 = vector.load %arg15[%c0_121, %c1_122, %c1_123, %c0_124] : memref<2x18x18x16xf32, #tpu.memory_space<vmem>>, vector<2x16x16x16xf32>
    %c0_125 = arith.constant 0 : index
    %c1_126 = arith.constant 1 : index
    %c2_127 = arith.constant 2 : index
    %c0_128 = arith.constant 0 : index
    %88 = vector.load %arg15[%c0_125, %c1_126, %c2_127, %c0_128] : memref<2x18x18x16xf32, #tpu.memory_space<vmem>>, vector<2x16x16x16xf32>
    %c0_129 = arith.constant 0 : index
    %c2_130 = arith.constant 2 : index
    %c0_131 = arith.constant 0 : index
    %c0_132 = arith.constant 0 : index
    %89 = vector.load %arg15[%c0_129, %c2_130, %c0_131, %c0_132] : memref<2x18x18x16xf32, #tpu.memory_space<vmem>>, vector<2x16x16x16xf32>
    %c0_133 = arith.constant 0 : index
    %c2_134 = arith.constant 2 : index
    %c1_135 = arith.constant 1 : index
    %c0_136 = arith.constant 0 : index
    %90 = vector.load %arg15[%c0_133, %c2_134, %c1_135, %c0_136] : memref<2x18x18x16xf32, #tpu.memory_space<vmem>>, vector<2x16x16x16xf32>
    %c0_137 = arith.constant 0 : index
    %c2_138 = arith.constant 2 : index
    %c2_139 = arith.constant 2 : index
    %c0_140 = arith.constant 0 : index
    %91 = vector.load %arg15[%c0_137, %c2_138, %c2_139, %c0_140] : memref<2x18x18x16xf32, #tpu.memory_space<vmem>>, vector<2x16x16x16xf32>
    %92 = tpu.concatenate %83, %84, %85, %86, %87, %88, %89, %90, %91 in 3 : vector<2x16x16x16xf32>, vector<2x16x16x16xf32>, vector<2x16x16x16xf32>, vector<2x16x16x16xf32>, vector<2x16x16x16xf32>, vector<2x16x16x16xf32>, vector<2x16x16x16xf32>, vector<2x16x16x16xf32>, vector<2x16x16x16xf32> -> vector<2x16x16x144xf32>
    %93 = vector.shape_cast %92 : vector<2x16x16x144xf32> to vector<512x144xf32>
    %94 = arith.truncf %93 : vector<512x144xf32> to vector<512x144xbf16>
    %c0_141 = arith.constant 0 : index
    %c0_142 = arith.constant 0 : index
    %95 = vector.load %arg7[%c0_141, %c0_142] : memref<144x32xbf16, #tpu.memory_space<vmem>>, vector<144x32xbf16>
    %cst_143 = arith.constant dense<0.000000e+00> : vector<512x32xf32>
    %96 = tpu.matmul %94, %95, %cst_143 {dimension_numbers = #tpu.dot_dimension_numbers<[1], [0], [0], [1], [0, 0, 1, 1], [], []>} : vector<512x144xbf16>, vector<144x32xbf16>, vector<512x32xf32> -> vector<512x32xf32>
    %c0_144 = arith.constant 0 : index
    %c0_145 = arith.constant 0 : index
    %97 = vector.load %arg8[%c0_144, %c0_145] : memref<1x32xf32, #tpu.memory_space<vmem>>, vector<1x32xf32>
    %c0_146 = arith.constant 0 : index
    %c0_147 = arith.constant 0 : index
    %98 = vector.load %arg9[%c0_146, %c0_147] : memref<1x32xf32, #tpu.memory_space<vmem>>, vector<1x32xf32>
    %cst_148 = arith.constant dense<0.000000e+00> : vector<32xf32>
    %99 = vector.multi_reduction <add>, %96, %cst_148 [0] : vector<512x32xf32> to vector<32xf32>
    %100 = vector.shape_cast %99 : vector<32xf32> to vector<1x32xf32>
    %101 = arith.mulf %96, %96 : vector<512x32xf32>
    %cst_149 = arith.constant dense<0.000000e+00> : vector<32xf32>
    %102 = vector.multi_reduction <add>, %101, %cst_149 [0] : vector<512x32xf32> to vector<32xf32>
    %103 = vector.shape_cast %102 : vector<32xf32> to vector<1x32xf32>
    %cst_150 = arith.constant 0.001953125 : f32
    %104 = vector.broadcast %cst_150 : f32 to vector<1x32xf32>
    %105 = arith.mulf %100, %104 : vector<1x32xf32>
    %cst_151 = arith.constant 0.001953125 : f32
    %106 = vector.broadcast %cst_151 : f32 to vector<1x32xf32>
    %107 = arith.mulf %103, %106 : vector<1x32xf32>
    %108 = arith.mulf %105, %105 : vector<1x32xf32>
    %109 = arith.subf %107, %108 : vector<1x32xf32>
    %cst_152 = arith.constant 9.99999974E-6 : f32
    %110 = vector.broadcast %cst_152 : f32 to vector<1x32xf32>
    %111 = arith.addf %109, %110 : vector<1x32xf32>
    %112 = math.rsqrt %111 : vector<1x32xf32>
    %113 = arith.mulf %97, %112 : vector<1x32xf32>
    %114 = arith.mulf %105, %113 : vector<1x32xf32>
    %115 = arith.subf %98, %114 : vector<1x32xf32>
    %116 = vector.broadcast %113 : vector<1x32xf32> to vector<512x32xf32>
    %117 = arith.mulf %96, %116 : vector<512x32xf32>
    %118 = vector.broadcast %115 : vector<1x32xf32> to vector<512x32xf32>
    %119 = arith.addf %117, %118 : vector<512x32xf32>
    %cst_153 = arith.constant 0.000000e+00 : f32
    %120 = vector.broadcast %cst_153 : f32 to vector<512x32xf32>
    %121 = arith.maximumf %119, %120 : vector<512x32xf32>
    %122 = arith.truncf %121 : vector<512x32xf32> to vector<512x32xbf16>
    %c0_154 = arith.constant 0 : index
    %c0_155 = arith.constant 0 : index
    %123 = vector.load %arg10[%c0_154, %c0_155] : memref<32x8xbf16, #tpu.memory_space<vmem>>, vector<32x8xbf16>
    %cst_156 = arith.constant dense<0.000000e+00> : vector<512x8xf32>
    %124 = tpu.matmul %122, %123, %cst_156 {dimension_numbers = #tpu.dot_dimension_numbers<[1], [0], [0], [1], [0, 0, 1, 1], [], []>} : vector<512x32xbf16>, vector<32x8xbf16>, vector<512x8xf32> -> vector<512x8xf32>
    %c0_157 = arith.constant 0 : index
    %c0_158 = arith.constant 0 : index
    %125 = vector.load %arg11[%c0_157, %c0_158] : memref<1x8xf32, #tpu.memory_space<vmem>>, vector<1x8xf32>
    %c0_159 = arith.constant 0 : index
    %c0_160 = arith.constant 0 : index
    %126 = vector.load %arg12[%c0_159, %c0_160] : memref<1x8xf32, #tpu.memory_space<vmem>>, vector<1x8xf32>
    %cst_161 = arith.constant dense<0.000000e+00> : vector<8xf32>
    %127 = vector.multi_reduction <add>, %124, %cst_161 [0] : vector<512x8xf32> to vector<8xf32>
    %128 = vector.shape_cast %127 : vector<8xf32> to vector<1x8xf32>
    %129 = arith.mulf %124, %124 : vector<512x8xf32>
    %cst_162 = arith.constant dense<0.000000e+00> : vector<8xf32>
    %130 = vector.multi_reduction <add>, %129, %cst_162 [0] : vector<512x8xf32> to vector<8xf32>
    %131 = vector.shape_cast %130 : vector<8xf32> to vector<1x8xf32>
    %cst_163 = arith.constant 0.001953125 : f32
    %132 = vector.broadcast %cst_163 : f32 to vector<1x8xf32>
    %133 = arith.mulf %128, %132 : vector<1x8xf32>
    %cst_164 = arith.constant 0.001953125 : f32
    %134 = vector.broadcast %cst_164 : f32 to vector<1x8xf32>
    %135 = arith.mulf %131, %134 : vector<1x8xf32>
    %136 = arith.mulf %133, %133 : vector<1x8xf32>
    %137 = arith.subf %135, %136 : vector<1x8xf32>
    %cst_165 = arith.constant 9.99999974E-6 : f32
    %138 = vector.broadcast %cst_165 : f32 to vector<1x8xf32>
    %139 = arith.addf %137, %138 : vector<1x8xf32>
    %140 = math.rsqrt %139 : vector<1x8xf32>
    %141 = arith.mulf %125, %140 : vector<1x8xf32>
    %142 = arith.mulf %133, %141 : vector<1x8xf32>
    %143 = arith.subf %126, %142 : vector<1x8xf32>
    %144 = vector.broadcast %141 : vector<1x8xf32> to vector<512x8xf32>
    %145 = arith.mulf %124, %144 : vector<512x8xf32>
    %146 = vector.broadcast %143 : vector<1x8xf32> to vector<512x8xf32>
    %147 = arith.addf %145, %146 : vector<512x8xf32>
    %c0_166 = arith.constant 0 : index
    %c0_167 = arith.constant 0 : index
    %148 = vector.load %arg13[%c0_166, %c0_167] : memref<512x8xf32, #tpu.memory_space<vmem>>, vector<512x8xf32>
    tpu.vector_store %arg13[%c0_166, %c0_167], %147 {strides = array<i32>} : memref<512x8xf32, #tpu.memory_space<vmem>>, vector<512x8xf32>,
    return
  }
}

</mosaic_0001>

<llo_original>
// kernel: segnet_forward.1
$region0: #{segnet_forward.1}
  #allocation0 [shape = 'u32[]', space=smem, size = 0x4, offset = 0x4, fixed_abs, tag = 'smem constant byte address 0x4 - core index']
  #allocation1 [shape = 'u32[144,128]{1,0:T(1,128)}', space=vmem, size = 0x12000, scoped, tag = 'internal scratch']
  #allocation2 [shape = 'f32[2,18,18,4]{3,2,1,0:T(8,128)}', space=vmem, size = 0x6c000, scoped, tag = 'scratch operand']
  #allocation3 [shape = 'f32[2,18,18,16]{3,2,1,0:T(8,128)}', space=vmem, size = 0x6c000, scoped, tag = 'scratch operand']
  %s0 = inlined_call_operand.vmem [shape: f32[2,16,16,4], index: 0, kind: input, shape index: {}]
  %s1 = inlined_call_operand.vmem [shape: bf16[36,32], index: 1, kind: input, shape index: {}]
  %s2 = inlined_call_operand.vmem [shape: f32[1,32], index: 2, kind: input, shape index: {}]
  %s3 = inlined_call_operand.vmem [shape: f32[1,32], index: 3, kind: input, shape index: {}]
  %s4 = inlined_call_operand.vmem [shape: bf16[32,16], index: 4, kind: input, shape index: {}]
  %s5 = inlined_call_operand.vmem [shape: f32[1,16], index: 5, kind: input, shape index: {}]
  %s6 = inlined_call_operand.vmem [shape: f32[1,16], index: 6, kind: input, shape index: {}]
  %s7 = inlined_call_operand.vmem [shape: bf16[144,32], index: 7, kind: input, shape index: {}]
  %s8 = inlined_call_operand.vmem [shape: f32[1,32], index: 8, kind: input, shape index: {}]
  %s9 = inlined_call_operand.vmem [shape: f32[1,32], index: 9, kind: input, shape index: {}]
  %s10 = inlined_call_operand.vmem [shape: bf16[32,8], index: 10, kind: input, shape index: {}]
  %s11 = inlined_call_operand.vmem [shape: f32[1,8], index: 11, kind: input, shape index: {}]
  %s12 = inlined_call_operand.vmem [shape: f32[1,8], index: 12, kind: input, shape index: {}]
  %s13 = inlined_call_operand.vmem [shape: f32[512,8], index: 13, kind: output, shape index: {}]
  %s14 = sld [smem:[#allocation0]]
  $region62: #{segnet_forward.1} parent=0
    _
  %s16 = ssub.s32 1, %s14
  %s17 = scalar_select 0, %s16, %s14
  // Predicated region
  $region2: #{segnet_forward.1} parent=0 // pred_check
    _
  $region3: #{segnet_forward.1} parent=0 // pred_check_branch
    %19 = sbr.rel (0) target = $region5
  $region4: #{segnet_forward.1} parent=0 // pred_region
    _
  $region5: #{segnet_forward.1} parent=0 // pred_fallthru
    _
  // Predicated region
  $region6: #{segnet_forward.1} parent=0 // pred_check
    _
  $region7: #{segnet_forward.1} parent=0 // pred_check_branch
    %21 = sbr.rel (0) target = $region9
  $region8: #{segnet_forward.1} parent=0 // pred_region
    _
  $region9: #{segnet_forward.1} parent=0 // pred_fallthru
    _
  // Predicated region
  $region10: #{segnet_forward.1} parent=0 // pred_check
    _
  $region11: #{segnet_forward.1} parent=0 // pred_check_branch
    %23 = sbr.rel (0) target = $region13
  $region12: #{segnet_forward.1} parent=0 // pred_region
    _
  $region13: #{segnet_forward.1} parent=0 // pred_fallthru
    _
  // Predicated region
  $region14: #{segnet_forward.1} parent=0 // pred_check
    _
  $region15: #{segnet_forward.1} parent=0 // pred_check_branch
    %25 = sbr.rel (0) target = $region17
  $region16: #{segnet_forward.1} parent=0 // pred_region
    _
  $region17: #{segnet_forward.1} parent=0 // pred_fallthru
    _
  // Predicated region
  $region18: #{segnet_forward.1} parent=0 // pred_check
    _
  $region19: #{segnet_forward.1} parent=0 // pred_check_branch
    %27 = sbr.rel (0) target = $region21
  $region20: #{segnet_forward.1} parent=0 // pred_region
    _
  $region21: #{segnet_forward.1} parent=0 // pred_fallthru
    _
  // Predicated region
  $region22: #{segnet_forward.1} parent=0 // pred_check
    _
  $region23: #{segnet_forward.1} parent=0 // pred_check_branch
    %29 = sbr.rel (0) target = $region25
  $region24: #{segnet_forward.1} parent=0 // pred_region
    _
  $region25: #{segnet_forward.1} parent=0 // pred_fallthru
    _
  // Predicated region
  $region26: #{segnet_forward.1} parent=0 // pred_check
    _
  $region27: #{segnet_forward.1} parent=0 // pred_check_branch
    %31 = sbr.rel (0) target = $region29
  $region28: #{segnet_forward.1} parent=0 // pred_region
    _
  $region29: #{segnet_forward.1} parent=0 // pred_fallthru
    _
  // Predicated region
  $region30: #{segnet_forward.1} parent=0 // pred_check
    _
  $region31: #{segnet_forward.1} parent=0 // pred_check_branch
    %33 = sbr.rel (0) target = $region33
  $region32: #{segnet_forward.1} parent=0 // pred_region
    _
  $region33: #{segnet_forward.1} parent=0 // pred_fallthru
    _
  // Predicated region
  $region34: #{segnet_forward.1} parent=0 // pred_check
    _
  $region35: #{segnet_forward.1} parent=0 // pred_check_branch
    %35 = sbr.rel (0) target = $region37
  $region36: #{segnet_forward.1} parent=0 // pred_region
    _
  $region37: #{segnet_forward.1} parent=0 // pred_fallthru
    _
  // Predicated region
  $region38: #{segnet_forward.1} parent=0 // pred_check
    _
  $region39: #{segnet_forward.1} parent=0 // pred_check_branch
    %37 = sbr.rel (0) target = $region41
  $region40: #{segnet_forward.1} parent=0 // pred_region
    _
  $region41: #{segnet_forward.1} parent=0 // pred_fallthru
    _
  // Predicated region
  $region42: #{segnet_forward.1} parent=0 // pred_check
    _
  $region43: #{segnet_forward.1} parent=0 // pred_check_branch
    %39 = sbr.rel (0) target = $region45
  $region44: #{segnet_forward.1} parent=0 // pred_region
    _
  $region45: #{segnet_forward.1} parent=0 // pred_fallthru
    _
  // Predicated region
  $region46: #{segnet_forward.1} parent=0 // pred_check
    _
  $region47: #{segnet_forward.1} parent=0 // pred_check_branch
    %41 = sbr.rel (0) target = $region49
  $region48: #{segnet_forward.1} parent=0 // pred_region
    _
  $region49: #{segnet_forward.1} parent=0 // pred_fallthru
    _
  // Predicated region
  $region50: #{segnet_forward.1} parent=0 // pred_check
    _
  $region51: #{segnet_forward.1} parent=0 // pred_check_branch
    %43 = sbr.rel (0) target = $region53
  $region52: #{segnet_forward.1} parent=0 // pred_region
    _
  $region53: #{segnet_forward.1} parent=0 // pred_fallthru
    _
  %vm45 = vcmask 31744
  %46 = vst.msk [vmem:[#allocation2] sm:$0xff] %vm45, 0.0
  %47 = vst.msk [vmem:[#allocation2 + $0x8] sm:$0xff] %vm45, 0.0
  %vm48 = vcmask 25600
  %49 = vst.msk [vmem:[#allocation2 + $0x10] sm:$0x3] %vm48, 0.0
  %50 = vst.msk [vmem:[#allocation2 + $0x1b0] sm:$0xff] %vm45, 0.0
  %51 = vst.msk [vmem:[#allocation2 + $0x1b8] sm:$0xff] %vm45, 0.0
  %52 = vst.msk [vmem:[#allocation2 + $0x1c0] sm:$0x3] %vm48, 0.0
  %s53 = scalar_lea.vmem [#allocation2], 408
  %54 = vst.msk [vmem:[%s53] sm:$0xff] %vm45, 0.0
  %55 = vst.msk [vmem:[%s53 + $0x8] sm:$0xff] %vm45, 0.0
  %56 = vst.msk [vmem:[%s53 + $0x10] sm:$0x3] %vm48, 0.0
  %57 = vst.msk [vmem:[%s53 + $0x1b0] sm:$0xff] %vm45, 0.0
  %58 = vst.msk [vmem:[%s53 + $0x1b8] sm:$0xff] %vm45, 0.0
  %59 = vst.msk [vmem:[%s53 + $0x1c0] sm:$0x3] %vm48, 0.0
  %vm60 = vcmask 24576
  %61 = vst.msk [vmem:[#allocation2] sm:$0x1] %vm60, 0.0
  %62 = vst.msk [vmem:[#allocation2 + $0x18] sm:$0x1] %vm60, 0.0
  %63 = vst.msk [vmem:[#allocation2 + $0x30] sm:$0x1] %vm60, 0.0
  %64 = vst.msk [vmem:[#allocation2 + $0x48] sm:$0x1] %vm60, 0.0
  %65 = vst.msk [vmem:[#allocation2 + $0x60] sm:$0x1] %vm60, 0.0
  %66 = vst.msk [vmem:[#allocation2 + $0x78] sm:$0x1] %vm60, 0.0
  %67 = vst.msk [vmem:[#allocation2 + $0x90] sm:$0x1] %vm60, 0.0
  %68 = vst.msk [vmem:[#allocation2 + $0xa8] sm:$0x1] %vm60, 0.0
  %69 = vst.msk [vmem:[#allocation2 + $0xc0] sm:$0x1] %vm60, 0.0
  %70 = vst.msk [vmem:[#allocation2 + $0xd8] sm:$0x1] %vm60, 0.0
  %71 = vst.msk [vmem:[#allocation2 + $0xf0] sm:$0x1] %vm60, 0.0
  %72 = vst.msk [vmem:[#allocation2 + $0x108] sm:$0x1] %vm60, 0.0
  %73 = vst.msk [vmem:[#allocation2 + $0x120] sm:$0x1] %vm60, 0.0
  %74 = vst.msk [vmem:[#allocation2 + $0x138] sm:$0x1] %vm60, 0.0
  %75 = vst.msk [vmem:[#allocation2 + $0x150] sm:$0x1] %vm60, 0.0
  %76 = vst.msk [vmem:[#allocation2 + $0x168] sm:$0x1] %vm60, 0.0
  %77 = vst.msk [vmem:[#allocation2 + $0x180] sm:$0x1] %vm60, 0.0
  %78 = vst.msk [vmem:[#allocation2 + $0x198] sm:$0x1] %vm60, 0.0
  %79 = vst.msk [vmem:[#allocation2 + $0x1b0] sm:$0x1] %vm60, 0.0
  %80 = vst.msk [vmem:[#allocation2 + $0x1c8] sm:$0x1] %vm60, 0.0
  %81 = vst.msk [vmem:[#allocation2 + $0x1e0] sm:$0x1] %vm60, 0.0
  %82 = vst.msk [vmem:[#allocation2 + $0x1f8] sm:$0x1] %vm60, 0.0
  %83 = vst.msk [vmem:[#allocation2 + $0x210] sm:$0x1] %vm60, 0.0
  %84 = vst.msk [vmem:[#allocation2 + $0x228] sm:$0x1] %vm60, 0.0
  %85 = vst.msk [vmem:[#allocation2 + $0x240] sm:$0x1] %vm60, 0.0
  %86 = vst.msk [vmem:[#allocation2 + $0x258] sm:$0x1] %vm60, 0.0
  %87 = vst.msk [vmem:[#allocation2 + $0x270] sm:$0x1] %vm60, 0.0
  %88 = vst.msk [vmem:[#allocation2 + $0x288] sm:$0x1] %vm60, 0.0
  %89 = vst.msk [vmem:[#allocation2 + $0x2a0] sm:$0x1] %vm60, 0.0
  %90 = vst.msk [vmem:[#allocation2 + $0x2b8] sm:$0x1] %vm60, 0.0
  %91 = vst.msk [vmem:[#allocation2 + $0x2d0] sm:$0x1] %vm60, 0.0
  %92 = vst.msk [vmem:[#allocation2 + $0x2e8] sm:$0x1] %vm60, 0.0
  %93 = vst.msk [vmem:[#allocation2 + $0x300] sm:$0x1] %vm60, 0.0
  %94 = vst.msk [vmem:[#allocation2 + $0x318] sm:$0x1] %vm60, 0.0
  %95 = vst.msk [vmem:[#allocation2 + $0x330] sm:$0x1] %vm60, 0.0
  %96 = vst.msk [vmem:[#allocation2 + $0x348] sm:$0x1] %vm60, 0.0
  %97 = vst.msk [vmem:[#allocation2 + $0x11] sm:$0x1] %vm60, 0.0
  %98 = vst.msk [vmem:[#allocation2 + $0x29] sm:$0x1] %vm60, 0.0
  %99 = vst.msk [vmem:[#allocation2 + $0x41] sm:$0x1] %vm60, 0.0
  %100 = vst.msk [vmem:[#allocation2 + $0x59] sm:$0x1] %vm60, 0.0
  %101 = vst.msk [vmem:[#allocation2 + $0x71] sm:$0x1] %vm60, 0.0
  %102 = vst.msk [vmem:[#allocation2 + $0x89] sm:$0x1] %vm60, 0.0
  %103 = vst.msk [vmem:[#allocation2 + $0xa1] sm:$0x1] %vm60, 0.0
  %104 = vst.msk [vmem:[#allocation2 + $0xb9] sm:$0x1] %vm60, 0.0
  %105 = vst.msk [vmem:[#allocation2 + $0xd1] sm:$0x1] %vm60, 0.0
  %106 = vst.msk [vmem:[#allocation2 + $0xe9] sm:$0x1] %vm60, 0.0
  %107 = vst.msk [vmem:[#allocation2 + $0x101] sm:$0x1] %vm60, 0.0
  %108 = vst.msk [vmem:[#allocation2 + $0x119] sm:$0x1] %vm60, 0.0
  %109 = vst.msk [vmem:[#allocation2 + $0x131] sm:$0x1] %vm60, 0.0
  %110 = vst.msk [vmem:[#allocation2 + $0x149] sm:$0x1] %vm60, 0.0
  %111 = vst.msk [vmem:[#allocation2 + $0x161] sm:$0x1] %vm60, 0.0
  %112 = vst.msk [vmem:[#allocation2 + $0x179] sm:$0x1] %vm60, 0.0
  %113 = vst.msk [vmem:[#allocation2 + $0x191] sm:$0x1] %vm60, 0.0
  %114 = vst.msk [vmem:[#allocation2 + $0x1a9] sm:$0x1] %vm60, 0.0
  %115 = vst.msk [vmem:[#allocation2 + $0x1c1] sm:$0x1] %vm60, 0.0
  %116 = vst.msk [vmem:[#allocation2 + $0x1d9] sm:$0x1] %vm60, 0.0
  %117 = vst.msk [vmem:[#allocation2 + $0x1f1] sm:$0x1] %vm60, 0.0
  %118 = vst.msk [vmem:[#allocation2 + $0x209] sm:$0x1] %vm60, 0.0
  %119 = vst.msk [vmem:[#allocation2 + $0x221] sm:$0x1] %vm60, 0.0
  %120 = vst.msk [vmem:[#allocation2 + $0x239] sm:$0x1] %vm60, 0.0
  %121 = vst.msk [vmem:[#allocation2 + $0x251] sm:$0x1] %vm60, 0.0
  %122 = vst.msk [vmem:[#allocation2 + $0x269] sm:$0x1] %vm60, 0.0
  %123 = vst.msk [vmem:[#allocation2 + $0x281] sm:$0x1] %vm60, 0.0
  %124 = vst.msk [vmem:[#allocation2 + $0x299] sm:$0x1] %vm60, 0.0
  %125 = vst.msk [vmem:[#allocation2 + $0x2b1] sm:$0x1] %vm60, 0.0
  %126 = vst.msk [vmem:[#allocation2 + $0x2c9] sm:$0x1] %vm60, 0.0
  %127 = vst.msk [vmem:[#allocation2 + $0x2e1] sm:$0x1] %vm60, 0.0
  %128 = vst.msk [vmem:[#allocation2 + $0x2f9] sm:$0x1] %vm60, 0.0
  %129 = vst.msk [vmem:[#allocation2 + $0x311] sm:$0x1] %vm60, 0.0
  %130 = vst.msk [vmem:[#allocation2 + $0x329] sm:$0x1] %vm60, 0.0
  %131 = vst.msk [vmem:[#allocation2 + $0x341] sm:$0x1] %vm60, 0.0
  %132 = vst.msk [vmem:[#allocation2 + $0x359] sm:$0x1] %vm60, 0.0
  %v133 = vld [vmem:[%s0] sm:$0xff]
  %v134 = vld [vmem:[%s0 + $0x8] sm:$0xff]
  %v135 = vld [vmem:[%s0 + $0x10] sm:$0xff]
  %v136 = vld [vmem:[%s0 + $0x18] sm:$0xff]
  %v137 = vld [vmem:[%s0 + $0x20] sm:$0xff]
  %v138 = vld [vmem:[%s0 + $0x28] sm:$0xff]
  %v139 = vld [vmem:[%s0 + $0x30] sm:$0xff]
  %v140 = vld [vmem:[%s0 + $0x38] sm:$0xff]
  %v141 = vld [vmem:[%s0 + $0x40] sm:$0xff]
  %v142 = vld [vmem:[%s0 + $0x48] sm:$0xff]
  %v143 = vld [vmem:[%s0 + $0x50] sm:$0xff]
  %v144 = vld [vmem:[%s0 + $0x58] sm:$0xff]
  %v145 = vld [vmem:[%s0 + $0x60] sm:$0xff]
  %v146 = vld [vmem:[%s0 + $0x68] sm:$0xff]
  %v147 = vld [vmem:[%s0 + $0x70] sm:$0xff]
  %v148 = vld [vmem:[%s0 + $0x78] sm:$0xff]
  %v149 = vld [vmem:[%s0 + $0x80] sm:$0xff]
  %v150 = vld [vmem:[%s0 + $0x88] sm:$0xff]
  %v151 = vld [vmem:[%s0 + $0x90] sm:$0xff]
  %v152 = vld [vmem:[%s0 + $0x98] sm:$0xff]
  %v153 = vld [vmem:[%s0 + $0xa0] sm:$0xff]
  %v154 = vld [vmem:[%s0 + $0xa8] sm:$0xff]
  %v155 = vld [vmem:[%s0 + $0xb0] sm:$0xff]
  %v156 = vld [vmem:[%s0 + $0xb8] sm:$0xff]
  %v157 = vld [vmem:[%s0 + $0xc0] sm:$0xff]
  %v158 = vld [vmem:[%s0 + $0xc8] sm:$0xff]
  %v159 = vld [vmem:[%s0 + $0xd0] sm:$0xff]
  %v160 = vld [vmem:[%s0 + $0xd8] sm:$0xff]
  %v161 = vld [vmem:[%s0 + $0xe0] sm:$0xff]
  %v162 = vld [vmem:[%s0 + $0xe8] sm:$0xff]
  %v163 = vld [vmem:[%s0 + $0xf0] sm:$0xff]
  %v164 = vld [vmem:[%s0 + $0xf8] sm:$0xff]
  %v165 = vld [vmem:[%s0 + $0x100] sm:$0xff]
  %v166 = vld [vmem:[%s0 + $0x108] sm:$0xff]
  %v167 = vld [vmem:[%s0 + $0x110] sm:$0xff]
  %v168 = vld [vmem:[%s0 + $0x118] sm:$0xff]
  %v169 = vld [vmem:[%s0 + $0x120] sm:$0xff]
  %v170 = vld [vmem:[%s0 + $0x128] sm:$0xff]
  %v171 = vld [vmem:[%s0 + $0x130] sm:$0xff]
  %v172 = vld [vmem:[%s0 + $0x138] sm:$0xff]
  %v173 = vld [vmem:[%s0 + $0x140] sm:$0xff]
  %v174 = vld [vmem:[%s0 + $0x148] sm:$0xff]
  %v175 = vld [vmem:[%s0 + $0x150] sm:$0xff]
  %v176 = vld [vmem:[%s0 + $0x158] sm:$0xff]
  %v177 = vld [vmem:[%s0 + $0x160] sm:$0xff]
  %v178 = vld [vmem:[%s0 + $0x168] sm:$0xff]
  %v179 = vld [vmem:[%s0 + $0x170] sm:$0xff]
  %v180 = vld [vmem:[%s0 + $0x178] sm:$0xff]
  %v181 = vld [vmem:[%s0 + $0x180] sm:$0xff]
  %v182 = vld [vmem:[%s0 + $0x188] sm:$0xff]
  %v183 = vld [vmem:[%s0 + $0x190] sm:$0xff]
  %v184 = vld [vmem:[%s0 + $0x198] sm:$0xff]
  %v185 = vld [vmem:[%s0 + $0x1a0] sm:$0xff]
  %v186 = vld [vmem:[%s0 + $0x1a8] sm:$0xff]
  %v187 = vld [vmem:[%s0 + $0x1b0] sm:$0xff]
  %v188 = vld [vmem:[%s0 + $0x1b8] sm:$0xff]
  %v189 = vld [vmem:[%s0 + $0x1c0] sm:$0xff]
  %v190 = vld [vmem:[%s0 + $0x1c8] sm:$0xff]
  %v191 = vld [vmem:[%s0 + $0x1d0] sm:$0xff]
  %v192 = vld [vmem:[%s0 + $0x1d8] sm:$0xff]
  %v193 = vld [vmem:[%s0 + $0x1e0] sm:$0xff]
  %v194 = vld [vmem:[%s0 + $0x1e8] sm:$0xff]
  %v195 = vld [vmem:[%s0 + $0x1f0] sm:$0xff]
  %v196 = vld [vmem:[%s0 + $0x1f8] sm:$0xff]
  %s197 = scalar_lea.vmem [#allocation2], 24
  %198 = vst.msk [vmem:[%s197 + $0x1] sm:$0xff] %vm45, %v133
  %199 = vst.msk [vmem:[%s197 + $0x9] sm:$0xff] %vm45, %v134
  %200 = vst.msk [vmem:[%s197 + $0x19] sm:$0xff] %vm45, %v135
  %201 = vst.msk [vmem:[%s197 + $0x21] sm:$0xff] %vm45, %v136
  %202 = vst.msk [vmem:[%s197 + $0x31] sm:$0xff] %vm45, %v137
  %203 = vst.msk [vmem:[%s197 + $0x39] sm:$0xff] %vm45, %v138
  %204 = vst.msk [vmem:[%s197 + $0x49] sm:$0xff] %vm45, %v139
  %205 = vst.msk [vmem:[%s197 + $0x51] sm:$0xff] %vm45, %v140
  %206 = vst.msk [vmem:[%s197 + $0x61] sm:$0xff] %vm45, %v141
  %207 = vst.msk [vmem:[%s197 + $0x69] sm:$0xff] %vm45, %v142
  %208 = vst.msk [vmem:[%s197 + $0x79] sm:$0xff] %vm45, %v143
  %209 = vst.msk [vmem:[%s197 + $0x81] sm:$0xff] %vm45, %v144
  %210 = vst.msk [vmem:[%s197 + $0x91] sm:$0xff] %vm45, %v145
  %211 = vst.msk [vmem:[%s197 + $0x99] sm:$0xff] %vm45, %v146
  %212 = vst.msk [vmem:[%s197 + $0xa9] sm:$0xff] %vm45, %v147
  %213 = vst.msk [vmem:[%s197 + $0xb1] sm:$0xff] %vm45, %v148
  %214 = vst.msk [vmem:[%s197 + $0xc1] sm:$0xff] %vm45, %v149
  %215 = vst.msk [vmem:[%s197 + $0xc9] sm:$0xff] %vm45, %v150
  %216 = vst.msk [vmem:[%s197 + $0xd9] sm:$0xff] %vm45, %v151
  %217 = vst.msk [vmem:[%s197 + $0xe1] sm:$0xff] %vm45, %v152
  %218 = vst.msk [vmem:[%s197 + $0xf1] sm:$0xff] %vm45, %v153
  %219 = vst.msk [vmem:[%s197 + $0xf9] sm:$0xff] %vm45, %v154
  %220 = vst.msk [vmem:[%s197 + $0x109] sm:$0xff] %vm45, %v155
  %221 = vst.msk [vmem:[%s197 + $0x111] sm:$0xff] %vm45, %v156
  %222 = vst.msk [vmem:[%s197 + $0x121] sm:$0xff] %vm45, %v157
  %223 = vst.msk [vmem:[%s197 + $0x129] sm:$0xff] %vm45, %v158
  %224 = vst.msk [vmem:[%s197 + $0x139] sm:$0xff] %vm45, %v159
  %225 = vst.msk [vmem:[%s197 + $0x141] sm:$0xff] %vm45, %v160
  %226 = vst.msk [vmem:[%s197 + $0x151] sm:$0xff] %vm45, %v161
  %227 = vst.msk [vmem:[%s197 + $0x159] sm:$0xff] %vm45, %v162
  %228 = vst.msk [vmem:[%s197 + $0x169] sm:$0xff] %vm45, %v163
  %229 = vst.msk [vmem:[%s197 + $0x171] sm:$0xff] %vm45, %v164
  %230 = vst.msk [vmem:[%s197 + $0x1b1] sm:$0xff] %vm45, %v165
  %231 = vst.msk [vmem:[%s197 + $0x1b9] sm:$0xff] %vm45, %v166
  %232 = vst.msk [vmem:[%s197 + $0x1c9] sm:$0xff] %vm45, %v167
  %233 = vst.msk [vmem:[%s197 + $0x1d1] sm:$0xff] %vm45, %v168
  %234 = vst.msk [vmem:[%s197 + $0x1e1] sm:$0xff] %vm45, %v169
  %235 = vst.msk [vmem:[%s197 + $0x1e9] sm:$0xff] %vm45, %v170
  %236 = vst.msk [vmem:[%s197 + $0x1f9] sm:$0xff] %vm45, %v171
  %237 = vst.msk [vmem:[%s197 + $0x201] sm:$0xff] %vm45, %v172
  %238 = vst.msk [vmem:[%s197 + $0x211] sm:$0xff] %vm45, %v173
  %239 = vst.msk [vmem:[%s197 + $0x219] sm:$0xff] %vm45, %v174
  %240 = vst.msk [vmem:[%s197 + $0x229] sm:$0xff] %vm45, %v175
  %241 = vst.msk [vmem:[%s197 + $0x231] sm:$0xff] %vm45, %v176
  %242 = vst.msk [vmem:[%s197 + $0x241] sm:$0xff] %vm45, %v177
  %243 = vst.msk [vmem:[%s197 + $0x249] sm:$0xff] %vm45, %v178
  %244 = vst.msk [vmem:[%s197 + $0x259] sm:$0xff] %vm45, %v179
  %245 = vst.msk [vmem:[%s197 + $0x261] sm:$0xff] %vm45, %v180
  %246 = vst.msk [vmem:[%s197 + $0x271] sm:$0xff] %vm45, %v181
  %247 = vst.msk [vmem:[%s197 + $0x279] sm:$0xff] %vm45, %v182
  %248 = vst.msk [vmem:[%s197 + $0x289] sm:$0xff] %vm45, %v183
  %249 = vst.msk [vmem:[%s197 + $0x291] sm:$0xff] %vm45, %v184
  %250 = vst.msk [vmem:[%s197 + $0x2a1] sm:$0xff] %vm45, %v185
  %251 = vst.msk [vmem:[%s197 + $0x2a9] sm:$0xff] %vm45, %v186
  %252 = vst.msk [vmem:[%s197 + $0x2b9] sm:$0xff] %vm45, %v187
  %253 = vst.msk [vmem:[%s197 + $0x2c1] sm:$0xff] %vm45, %v188
  %254 = vst.msk [vmem:[%s197 + $0x2d1] sm:$0xff] %vm45, %v189
  %255 = vst.msk [vmem:[%s197 + $0x2d9] sm:$0xff] %vm45, %v190
  %256 = vst.msk [vmem:[%s197 + $0x2e9] sm:$0xff] %vm45, %v191
  %257 = vst.msk [vmem:[%s197 + $0x2f1] sm:$0xff] %vm45, %v192
  %258 = vst.msk [vmem:[%s197 + $0x301] sm:$0xff] %vm45, %v193
  %259 = vst.msk [vmem:[%s197 + $0x309] sm:$0xff] %vm45, %v194
  %260 = vst.msk [vmem:[%s197 + $0x319] sm:$0xff] %vm45, %v195
  %261 = vst.msk [vmem:[%s197 + $0x321] sm:$0xff] %vm45, %v196
  %v262 = vld [vmem:[#allocation2] sm:$0xff]
  %v263 = vld [vmem:[#allocation2 + $0x8] sm:$0xff]
  %v264 = vld [vmem:[#allocation2 + $0x18] sm:$0xff]
  %v265 = vld [vmem:[#allocation2 + $0x20] sm:$0xff]
  %v266 = vld [vmem:[#allocation2 + $0x30] sm:$0xff]
  %v267 = vld [vmem:[#allocation2 + $0x38] sm:$0xff]
  %v268 = vld [vmem:[#allocation2 + $0x48] sm:$0xff]
  %v269 = vld [vmem:[#allocation2 + $0x50] sm:$0xff]
  %v270 = vld [vmem:[#allocation2 + $0x60] sm:$0xff]
  %v271 = vld [vmem:[#allocation2 + $0x68] sm:$0xff]
  %v272 = vld [vmem:[#allocation2 + $0x78] sm:$0xff]
  %v273 = vld [vmem:[#allocation2 + $0x80] sm:$0xff]
  %v274 = vld [vmem:[#allocation2 + $0x90] sm:$0xff]
  %v275 = vld [vmem:[#allocation2 + $0x98] sm:$0xff]
  %v276 = vld [vmem:[#allocation2 + $0xa8] sm:$0xff]
  %v277 = vld [vmem:[#allocation2 + $0xb0] sm:$0xff]
  %v278 = vld [vmem:[#allocation2 + $0xc0] sm:$0xff]
  %v279 = vld [vmem:[#allocation2 + $0xc8] sm:$0xff]
  %v280 = vld [vmem:[#allocation2 + $0xd8] sm:$0xff]
  %v281 = vld [vmem:[#allocation2 + $0xe0] sm:$0xff]
  %v282 = vld [vmem:[#allocation2 + $0xf0] sm:$0xff]
  %v283 = vld [vmem:[#allocation2 + $0xf8] sm:$0xff]
  %v284 = vld [vmem:[#allocation2 + $0x108] sm:$0xff]
  %v285 = vld [vmem:[#allocation2 + $0x110] sm:$0xff]
  %v286 = vld [vmem:[#allocation2 + $0x120] sm:$0xff]
  %v287 = vld [vmem:[#allocation2 + $0x128] sm:$0xff]
  %v288 = vld [vmem:[#allocation2 + $0x138] sm:$0xff]
  %v289 = vld [vmem:[#allocation2 + $0x140] sm:$0xff]
  %v290 = vld [vmem:[#allocation2 + $0x150] sm:$0xff]
  %v291 = vld [vmem:[#allocation2 + $0x158] sm:$0xff]
  %v292 = vld [vmem:[#allocation2 + $0x168] sm:$0xff]
  %v293 = vld [vmem:[#allocation2 + $0x170] sm:$0xff]
  %v294 = vld [vmem:[#allocation2 + $0x1b0] sm:$0xff]
  %v295 = vld [vmem:[#allocation2 + $0x1b8] sm:$0xff]
  %v296 = vld [vmem:[#allocation2 + $0x1c8] sm:$0xff]
  %v297 = vld [vmem:[#allocation2 + $0x1d0] sm:$0xff]
  %v298 = vld [vmem:[#allocation2 + $0x1e0] sm:$0xff]
  %v299 = vld [vmem:[#allocation2 + $0x1e8] sm:$0xff]
  %v300 = vld [vmem:[#allocation2 + $0x1f8] sm:$0xff]
  %v301 = vld [vmem:[#allocation2 + $0x200] sm:$0xff]
  %v302 = vld [vmem:[#allocation2 + $0x210] sm:$0xff]
  %v303 = vld [vmem:[#allocation2 + $0x218] sm:$0xff]
  %v304 = vld [vmem:[#allocation2 + $0x228] sm:$0xff]
  %v305 = vld [vmem:[#allocation2 + $0x230] sm:$0xff]
  %v306 = vld [vmem:[#allocation2 + $0x240] sm:$0xff]
  %v307 = vld [vmem:[#allocation2 + $0x248] sm:$0xff]
  %v308 = vld [vmem:[#allocation2 + $0x258] sm:$0xff]
  %v309 = vld [vmem:[#allocation2 + $0x260] sm:$0xff]
  %v310 = vld [vmem:[#allocation2 + $0x270] sm:$0xff]
  %v311 = vld [vmem:[#allocation2 + $0x278] sm:$0xff]
  %v312 = vld [vmem:[#allocation2 + $0x288] sm:$0xff]
  %v313 = vld [vmem:[#allocation2 + $0x290] sm:$0xff]
  %v314 = vld [vmem:[#allocation2 + $0x2a0] sm:$0xff]
  %v315 = vld [vmem:[#allocation2 + $0x2a8] sm:$0xff]
  %v316 = vld [vmem:[#allocation2 + $0x2b8] sm:$0xff]
  %v317 = vld [vmem:[#allocation2 + $0x2c0] sm:$0xff]
  %v318 = vld [vmem:[#allocation2 + $0x2d0] sm:$0xff]
  %v319 = vld [vmem:[#allocation2 + $0x2d8] sm:$0xff]
  %v320 = vld [vmem:[#allocation2 + $0x2e8] sm:$0xff]
  %v321 = vld [vmem:[#allocation2 + $0x2f0] sm:$0xff]
  %v322 = vld [vmem:[#allocation2 + $0x300] sm:$0xff]
  %v323 = vld [vmem:[#allocation2 + $0x308] sm:$0xff]
  %v324 = vld [vmem:[#allocation2 + $0x318] sm:$0xff]
  %v325 = vld [vmem:[#allocation2 + $0x320] sm:$0xff]
  %v326 = vld [vmem:[#allocation2 + $0x1] sm:$0xff]
  %v327 = vld [vmem:[#allocation2 + $0x9] sm:$0xff]
  %v328 = vld [vmem:[#allocation2 + $0x19] sm:$0xff]
  %v329 = vld [vmem:[#allocation2 + $0x21] sm:$0xff]
  %v330 = vld [vmem:[#allocation2 + $0x31] sm:$0xff]
  %v331 = vld [vmem:[#allocation2 + $0x39] sm:$0xff]
  %v332 = vld [vmem:[#allocation2 + $0x49] sm:$0xff]
  %v333 = vld [vmem:[#allocation2 + $0x51] sm:$0xff]
  %v334 = vld [vmem:[#allocation2 + $0x61] sm:$0xff]
  %v335 = vld [vmem:[#allocation2 + $0x69] sm:$0xff]
  %v336 = vld [vmem:[#allocation2 + $0x79] sm:$0xff]
  %v337 = vld [vmem:[#allocation2 + $0x81] sm:$0xff]
  %v338 = vld [vmem:[#allocation2 + $0x91] sm:$0xff]
  %v339 = vld [vmem:[#allocation2 + $0x99] sm:$0xff]
  %v340 = vld [vmem:[#allocation2 + $0xa9] sm:$0xff]
  %v341 = vld [vmem:[#allocation2 + $0xb1] sm:$0xff]
  %v342 = vld [vmem:[#allocation2 + $0xc1] sm:$0xff]
  %v343 = vld [vmem:[#allocation2 + $0xc9] sm:$0xff]
  %v344 = vld [vmem:[#allocation2 + $0xd9] sm:$0xff]
  %v345 = vld [vmem:[#allocation2 + $0xe1] sm:$0xff]
  %v346 = vld [vmem:[#allocation2 + $0xf1] sm:$0xff]
  %v347 = vld [vmem:[#allocation2 + $0xf9] sm:$0xff]
  %v348 = vld [vmem:[#allocation2 + $0x109] sm:$0xff]
  %v349 = vld [vmem:[#allocation2 + $0x111] sm:$0xff]
  %v350 = vld [vmem:[#allocation2 + $0x121] sm:$0xff]
  %v351 = vld [vmem:[#allocation2 + $0x129] sm:$0xff]
  %v352 = vld [vmem:[#allocation2 + $0x139] sm:$0xff]
  %v353 = vld [vmem:[#allocation2 + $0x141] sm:$0xff]
  %v354 = vld [vmem:[#allocation2 + $0x151] sm:$0xff]
  %v355 = vld [vmem:[#allocation2 + $0x159] sm:$0xff]
  %v356 = vld [vmem:[#allocation2 + $0x169] sm:$0xff]
  %v357 = vld [vmem:[#allocation2 + $0x171] sm:$0xff]
  %v358 = vld [vmem:[#allocation2 + $0x1b1] sm:$0xff]
  %v359 = vld [vmem:[#allocation2 + $0x1b9] sm:$0xff]
  %v360 = vld [vmem:[#allocation2 + $0x1c9] sm:$0xff]
  %v361 = vld [vmem:[#allocation2 + $0x1d1] sm:$0xff]
  %v362 = vld [vmem:[#allocation2 + $0x1e1] sm:$0xff]
  %v363 = vld [vmem:[#allocation2 + $0x1e9] sm:$0xff]
  %v364 = vld [vmem:[#allocation2 + $0x1f9] sm:$0xff]
  %v365 = vld [vmem:[#allocation2 + $0x201] sm:$0xff]
  %v366 = vld [vmem:[#allocation2 + $0x211] sm:$0xff]
  %v367 = vld [vmem:[#allocation2 + $0x219] sm:$0xff]
  %v368 = vld [vmem:[#allocation2 + $0x229] sm:$0xff]
  %v369 = vld [vmem:[#allocation2 + $0x231] sm:$0xff]
  %v370 = vld [vmem:[#allocation2 + $0x241] sm:$0xff]
  %v371 = vld [vmem:[#allocation2 + $0x249] sm:$0xff]
  %v372 = vld [vmem:[#allocation2 + $0x259] sm:$0xff]
  %v373 = vld [vmem:[#allocation2 + $0x261] sm:$0xff]
  %v374 = vld [vmem:[#allocation2 + $0x271] sm:$0xff]
  %v375 = vld [vmem:[#allocation2 + $0x279] sm:$0xff]
  %v376 = vld [vmem:[#allocation2 + $0x289] sm:$0xff]
  %v377 = vld [vmem:[#allocation2 + $0x291] sm:$0xff]
  %v378 = vld [vmem:[#allocation2 + $0x2a1] sm:$0xff]
  %v379 = vld [vmem:[#allocation2 + $0x2a9] sm:$0xff]
  %v380 = vld [vmem:[#allocation2 + $0x2b9] sm:$0xff]
  %v381 = vld [vmem:[#allocation2 + $0x2c1] sm:$0xff]
  %v382 = vld [vmem:[#allocation2 + $0x2d1] sm:$0xff]
  %v383 = vld [vmem:[#allocation2 + $0x2d9] sm:$0xff]
  %v384 = vld [vmem:[#allocation2 + $0x2e9] sm:$0xff]
  %v385 = vld [vmem:[#allocation2 + $0x2f1] sm:$0xff]
  %v386 = vld [vmem:[#allocation2 + $0x301] sm:$0xff]
  %v387 = vld [vmem:[#allocation2 + $0x309] sm:$0xff]
  %v388 = vld [vmem:[#allocation2 + $0x319] sm:$0xff]
  %v389 = vld [vmem:[#allocation2 + $0x321] sm:$0xff]
  %v390 = vld [vmem:[#allocation2 + $0x2] sm:$0xff]
  %v391 = vld [vmem:[#allocation2 + $0xa] sm:$0xff]
  %v392 = vld [vmem:[#allocation2 + $0x1a] sm:$0xff]
  %v393 = vld [vmem:[#allocation2 + $0x22] sm:$0xff]
  %v394 = vld [vmem:[#allocation2 + $0x32] sm:$0xff]
  %v395 = vld [vmem:[#allocation2 + $0x3a] sm:$0xff]
  %v396 = vld [vmem:[#allocation2 + $0x4a] sm:$0xff]
  %v397 = vld [vmem:[#allocation2 + $0x52] sm:$0xff]
  %v398 = vld [vmem:[#allocation2 + $0x62] sm:$0xff]
  %v399 = vld [vmem:[#allocation2 + $0x6a] sm:$0xff]
  %v400 = vld [vmem:[#allocation2 + $0x7a] sm:$0xff]
  %v401 = vld [vmem:[#allocation2 + $0x82] sm:$0xff]
  %v402 = vld [vmem:[#allocation2 + $0x92] sm:$0xff]
  %v403 = vld [vmem:[#allocation2 + $0x9a] sm:$0xff]
  %v404 = vld [vmem:[#allocation2 + $0xaa] sm:$0xff]
  %v405 = vld [vmem:[#allocation2 + $0xb2] sm:$0xff]
  %v406 = vld [vmem:[#allocation2 + $0xc2] sm:$0xff]
  %v407 = vld [vmem:[#allocation2 + $0xca] sm:$0xff]
  %v408 = vld [vmem:[#allocation2 + $0xda] sm:$0xff]
  %v409 = vld [vmem:[#allocation2 + $0xe2] sm:$0xff]
  %v410 = vld [vmem:[#allocation2 + $0xf2] sm:$0xff]
  %v411 = vld [vmem:[#allocation2 + $0xfa] sm:$0xff]
  %v412 = vld [vmem:[#allocation2 + $0x10a] sm:$0xff]
  %v413 = vld [vmem:[#allocation2 + $0x112] sm:$0xff]
  %v414 = vld [vmem:[#allocation2 + $0x122] sm:$0xff]
  %v415 = vld [vmem:[#allocation2 + $0x12a] sm:$0xff]
  %v416 = vld [vmem:[#allocation2 + $0x13a] sm:$0xff]
  %v417 = vld [vmem:[#allocation2 + $0x142] sm:$0xff]
  %v418 = vld [vmem:[#allocation2 + $0x152] sm:$0xff]
  %v419 = vld [vmem:[#allocation2 + $0x15a] sm:$0xff]
  %v420 = vld [vmem:[#allocation2 + $0x16a] sm:$0xff]
  %v421 = vld [vmem:[#allocation2 + $0x172] sm:$0xff]
  %v422 = vld [vmem:[#allocation2 + $0x1b2] sm:$0xff]
  %v423 = vld [vmem:[#allocation2 + $0x1ba] sm:$0xff]
  %v424 = vld [vmem:[#allocation2 + $0x1ca] sm:$0xff]
  %v425 = vld [vmem:[#allocation2 + $0x1d2] sm:$0xff]
  %v426 = vld [vmem:[#allocation2 + $0x1e2] sm:$0xff]
  %v427 = vld [vmem:[#allocation2 + $0x1ea] sm:$0xff]
  %v428 = vld [vmem:[#allocation2 + $0x1fa] sm:$0xff]
  %v429 = vld [vmem:[#allocation2 + $0x202] sm:$0xff]
  %v430 = vld [vmem:[#allocation2 + $0x212] sm:$0xff]
  %v431 = vld [vmem:[#allocation2 + $0x21a] sm:$0xff]
  %v432 = vld [vmem:[#allocation2 + $0x22a] sm:$0xff]
  %v433 = vld [vmem:[#allocation2 + $0x232] sm:$0xff]
  %v434 = vld [vmem:[#allocation2 + $0x242] sm:$0xff]
  %v435 = vld [vmem:[#allocation2 + $0x24a] sm:$0xff]
  %v436 = vld [vmem:[#allocation2 + $0x25a] sm:$0xff]
  %v437 = vld [vmem:[#allocation2 + $0x262] sm:$0xff]
  %v438 = vld [vmem:[#allocation2 + $0x272] sm:$0xff]
  %v439 = vld [vmem:[#allocation2 + $0x27a] sm:$0xff]
  %v440 = vld [vmem:[#allocation2 + $0x28a] sm:$0xff]
  %v441 = vld [vmem:[#allocation2 + $0x292] sm:$0xff]
  %v442 = vld [vmem:[#allocation2 + $0x2a2] sm:$0xff]
  %v443 = vld [vmem:[#allocation2 + $0x2aa] sm:$0xff]
  %v444 = vld [vmem:[#allocation2 + $0x2ba] sm:$0xff]
  %v445 = vld [vmem:[#allocation2 + $0x2c2] sm:$0xff]
  %v446 = vld [vmem:[#allocation2 + $0x2d2] sm:$0xff]
  %v447 = vld [vmem:[#allocation2 + $0x2da] sm:$0xff]
  %v448 = vld [vmem:[#allocation2 + $0x2ea] sm:$0xff]
  %v449 = vld [vmem:[#allocation2 + $0x2f2] sm:$0xff]
  %v450 = vld [vmem:[#allocation2 + $0x302] sm:$0xff]
  %v451 = vld [vmem:[#allocation2 + $0x30a] sm:$0xff]
  %v452 = vld [vmem:[#allocation2 + $0x31a] sm:$0xff]
  %v453 = vld [vmem:[#allocation2 + $0x322] sm:$0xff]
  %v454 = vld [vmem:[%s197] sm:$0xff]
  %v455 = vld [vmem:[%s197 + $0x8] sm:$0xff]
  %v456 = vld [vmem:[%s197 + $0x18] sm:$0xff]
  %v457 = vld [vmem:[%s197 + $0x20] sm:$0xff]
  %v458 = vld [vmem:[%s197 + $0x30] sm:$0xff]
  %v459 = vld [vmem:[%s197 + $0x38] sm:$0xff]
  %v460 = vld [vmem:[%s197 + $0x48] sm:$0xff]
  %v461 = vld [vmem:[%s197 + $0x50] sm:$0xff]
  %v462 = vld [vmem:[%s197 + $0x60] sm:$0xff]
  %v463 = vld [vmem:[%s197 + $0x68] sm:$0xff]
  %v464 = vld [vmem:[%s197 + $0x78] sm:$0xff]
  %v465 = vld [vmem:[%s197 + $0x80] sm:$0xff]
  %v466 = vld [vmem:[%s197 + $0x90] sm:$0xff]
  %v467 = vld [vmem:[%s197 + $0x98] sm:$0xff]
  %v468 = vld [vmem:[%s197 + $0xa8] sm:$0xff]
  %v469 = vld [vmem:[%s197 + $0xb0] sm:$0xff]
  %v470 = vld [vmem:[%s197 + $0xc0] sm:$0xff]
  %v471 = vld [vmem:[%s197 + $0xc8] sm:$0xff]
  %v472 = vld [vmem:[%s197 + $0xd8] sm:$0xff]
  %v473 = vld [vmem:[%s197 + $0xe0] sm:$0xff]
  %v474 = vld [vmem:[%s197 + $0xf0] sm:$0xff]
  %v475 = vld [vmem:[%s197 + $0xf8] sm:$0xff]
  %v476 = vld [vmem:[%s197 + $0x108] sm:$0xff]
  %v477 = vld [vmem:[%s197 + $0x110] sm:$0xff]
  %v478 = vld [vmem:[%s197 + $0x120] sm:$0xff]
  %v479 = vld [vmem:[%s197 + $0x128] sm:$0xff]
  %v480 = vld [vmem:[%s197 + $0x138] sm:$0xff]
  %v481 = vld [vmem:[%s197 + $0x140] sm:$0xff]
  %v482 = vld [vmem:[%s197 + $0x150] sm:$0xff]
  %v483 = vld [vmem:[%s197 + $0x158] sm:$0xff]
  %v484 = vld [vmem:[%s197 + $0x168] sm:$0xff]
  %v485 = vld [vmem:[%s197 + $0x170] sm:$0xff]
  %v486 = vld [vmem:[%s197 + $0x1b0] sm:$0xff]
  %v487 = vld [vmem:[%s197 + $0x1b8] sm:$0xff]
  %v488 = vld [vmem:[%s197 + $0x1c8] sm:$0xff]
  %v489 = vld [vmem:[%s197 + $0x1d0] sm:$0xff]
  %v490 = vld [vmem:[%s197 + $0x1e0] sm:$0xff]
  %v491 = vld [vmem:[%s197 + $0x1e8] sm:$0xff]
  %v492 = vld [vmem:[%s197 + $0x1f8] sm:$0xff]
  %v493 = vld [vmem:[%s197 + $0x200] sm:$0xff]
  %v494 = vld [vmem:[%s197 + $0x210] sm:$0xff]
  %v495 = vld [vmem:[%s197 + $0x218] sm:$0xff]
  %v496 = vld [vmem:[%s197 + $0x228] sm:$0xff]
  %v497 = vld [vmem:[%s197 + $0x230] sm:$0xff]
  %v498 = vld [vmem:[%s197 + $0x240] sm:$0xff]
  %v499 = vld [vmem:[%s197 + $0x248] sm:$0xff]
  %v500 = vld [vmem:[%s197 + $0x258] sm:$0xff]
  %v501 = vld [vmem:[%s197 + $0x260] sm:$0xff]
  %v502 = vld [vmem:[%s197 + $0x270] sm:$0xff]
  %v503 = vld [vmem:[%s197 + $0x278] sm:$0xff]
  %v504 = vld [vmem:[%s197 + $0x288] sm:$0xff]
  %v505 = vld [vmem:[%s197 + $0x290] sm:$0xff]
  %v506 = vld [vmem:[%s197 + $0x2a0] sm:$0xff]
  %v507 = vld [vmem:[%s197 + $0x2a8] sm:$0xff]
  %v508 = vld [vmem:[%s197 + $0x2b8] sm:$0xff]
  %v509 = vld [vmem:[%s197 + $0x2c0] sm:$0xff]
  %v510 = vld [vmem:[%s197 + $0x2d0] sm:$0xff]
  %v511 = vld [vmem:[%s197 + $0x2d8] sm:$0xff]
  %v512 = vld [vmem:[%s197 + $0x2e8] sm:$0xff]
  %v513 = vld [vmem:[%s197 + $0x2f0] sm:$0xff]
  %v514 = vld [vmem:[%s197 + $0x300] sm:$0xff]
  %v515 = vld [vmem:[%s197 + $0x308] sm:$0xff]
  %v516 = vld [vmem:[%s197 + $0x318] sm:$0xff]
  %v517 = vld [vmem:[%s197 + $0x320] sm:$0xff]
  %v518 = vld [vmem:[%s197 + $0x1] sm:$0xff]
  %v519 = vld [vmem:[%s197 + $0x9] sm:$0xff]
  %v520 = vld [vmem:[%s197 + $0x19] sm:$0xff]
  %v521 = vld [vmem:[%s197 + $0x21] sm:$0xff]
  %v522 = vld [vmem:[%s197 + $0x31] sm:$0xff]
  %v523 = vld [vmem:[%s197 + $0x39] sm:$0xff]
  %v524 = vld [vmem:[%s197 + $0x49] sm:$0xff]
  %v525 = vld [vmem:[%s197 + $0x51] sm:$0xff]
  %v526 = vld [vmem:[%s197 + $0x61] sm:$0xff]
  %v527 = vld [vmem:[%s197 + $0x69] sm:$0xff]
  %v528 = vld [vmem:[%s197 + $0x79] sm:$0xff]
  %v529 = vld [vmem:[%s197 + $0x81] sm:$0xff]
  %v530 = vld [vmem:[%s197 + $0x91] sm:$0xff]
  %v531 = vld [vmem:[%s197 + $0x99] sm:$0xff]
  %v532 = vld [vmem:[%s197 + $0xa9] sm:$0xff]
  %v533 = vld [vmem:[%s197 + $0xb1] sm:$0xff]
  %v534 = vld [vmem:[%s197 + $0xc1] sm:$0xff]
  %v535 = vld [vmem:[%s197 + $0xc9] sm:$0xff]
  %v536 = vld [vmem:[%s197 + $0xd9] sm:$0xff]
  %v537 = vld [vmem:[%s197 + $0xe1] sm:$0xff]
  %v538 = vld [vmem:[%s197 + $0xf1] sm:$0xff]
  %v539 = vld [vmem:[%s197 + $0xf9] sm:$0xff]
  %v540 = vld [vmem:[%s197 + $0x109] sm:$0xff]
  %v541 = vld [vmem:[%s197 + $0x111] sm:$0xff]
  %v542 = vld [vmem:[%s197 + $0x121] sm:$0xff]
  %v543 = vld [vmem:[%s197 + $0x129] sm:$0xff]
  %v544 = vld [vmem:[%s197 + $0x139] sm:$0xff]
  %v545 = vld [vmem:[%s197 + $0x141] sm:$0xff]
  %v546 = vld [vmem:[%s197 + $0x151] sm:$0xff]
  %v547 = vld [vmem:[%s197 + $0x159] sm:$0xff]
  %v548 = vld [vmem:[%s197 + $0x169] sm:$0xff]
  %v549 = vld [vmem:[%s197 + $0x171] sm:$0xff]
  %v550 = vld [vmem:[%s197 + $0x1b1] sm:$0xff]
  %v551 = vld [vmem:[%s197 + $0x1b9] sm:$0xff]
  %v552 = vld [vmem:[%s197 + $0x1c9] sm:$0xff]
  %v553 = vld [vmem:[%s197 + $0x1d1] sm:$0xff]
  %v554 = vld [vmem:[%s197 + $0x1e1] sm:$0xff]
  %v555 = vld [vmem:[%s197 + $0x1e9] sm:$0xff]
  %v556 = vld [vmem:[%s197 + $0x1f9] sm:$0xff]
  %v557 = vld [vmem:[%s197 + $0x201] sm:$0xff]
  %v558 = vld [vmem:[%s197 + $0x211] sm:$0xff]
  %v559 = vld [vmem:[%s197 + $0x219] sm:$0xff]
  %v560 = vld [vmem:[%s197 + $0x229] sm:$0xff]
  %v561 = vld [vmem:[%s197 + $0x231] sm:$0xff]
  %v562 = vld [vmem:[%s197 + $0x241] sm:$0xff]
  %v563 = vld [vmem:[%s197 + $0x249] sm:$0xff]
  %v564 = vld [vmem:[%s197 + $0x259] sm:$0xff]
  %v565 = vld [vmem:[%s197 + $0x261] sm:$0xff]
  %v566 = vld [vmem:[%s197 + $0x271] sm:$0xff]
  %v567 = vld [vmem:[%s197 + $0x279] sm:$0xff]
  %v568 = vld [vmem:[%s197 + $0x289] sm:$0xff]
  %v569 = vld [vmem:[%s197 + $0x291] sm:$0xff]
  %v570 = vld [vmem:[%s197 + $0x2a1] sm:$0xff]
  %v571 = vld [vmem:[%s197 + $0x2a9] sm:$0xff]
  %v572 = vld [vmem:[%s197 + $0x2b9] sm:$0xff]
  %v573 = vld [vmem:[%s197 + $0x2c1] sm:$0xff]
  %v574 = vld [vmem:[%s197 + $0x2d1] sm:$0xff]
  %v575 = vld [vmem:[%s197 + $0x2d9] sm:$0xff]
  %v576 = vld [vmem:[%s197 + $0x2e9] sm:$0xff]
  %v577 = vld [vmem:[%s197 + $0x2f1] sm:$0xff]
  %v578 = vld [vmem:[%s197 + $0x301] sm:$0xff]
  %v579 = vld [vmem:[%s197 + $0x309] sm:$0xff]
  %v580 = vld [vmem:[%s197 + $0x319] sm:$0xff]
  %v581 = vld [vmem:[%s197 + $0x321] sm:$0xff]
  %v582 = vld [vmem:[%s197 + $0x2] sm:$0xff]
  %v583 = vld [vmem:[%s197 + $0xa] sm:$0xff]
  %v584 = vld [vmem:[%s197 + $0x1a] sm:$0xff]
  %v585 = vld [vmem:[%s197 + $0x22] sm:$0xff]
  %v586 = vld [vmem:[%s197 + $0x32] sm:$0xff]
  %v587 = vld [vmem:[%s197 + $0x3a] sm:$0xff]
  %v588 = vld [vmem:[%s197 + $0x4a] sm:$0xff]
  %v589 = vld [vmem:[%s197 + $0x52] sm:$0xff]
  %v590 = vld [vmem:[%s197 + $0x62] sm:$0xff]
  %v591 = vld [vmem:[%s197 + $0x6a] sm:$0xff]
  %v592 = vld [vmem:[%s197 + $0x7a] sm:$0xff]
  %v593 = vld [vmem:[%s197 + $0x82] sm:$0xff]
  %v594 = vld [vmem:[%s197 + $0x92] sm:$0xff]
  %v595 = vld [vmem:[%s197 + $0x9a] sm:$0xff]
  %v596 = vld [vmem:[%s197 + $0xaa] sm:$0xff]
  %v597 = vld [vmem:[%s197 + $0xb2] sm:$0xff]
  %v598 = vld [vmem:[%s197 + $0xc2] sm:$0xff]
  %v599 = vld [vmem:[%s197 + $0xca] sm:$0xff]
  %v600 = vld [vmem:[%s197 + $0xda] sm:$0xff]
  %v601 = vld [vmem:[%s197 + $0xe2] sm:$0xff]
  %v602 = vld [vmem:[%s197 + $0xf2] sm:$0xff]
  %v603 = vld [vmem:[%s197 + $0xfa] sm:$0xff]
  %v604 = vld [vmem:[%s197 + $0x10a] sm:$0xff]
  %v605 = vld [vmem:[%s197 + $0x112] sm:$0xff]
  %v606 = vld [vmem:[%s197 + $0x122] sm:$0xff]
  %v607 = vld [vmem:[%s197 + $0x12a] sm:$0xff]
  %v608 = vld [vmem:[%s197 + $0x13a] sm:$0xff]
  %v609 = vld [vmem:[%s197 + $0x142] sm:$0xff]
  %v610 = vld [vmem:[%s197 + $0x152] sm:$0xff]
  %v611 = vld [vmem:[%s197 + $0x15a] sm:$0xff]
  %v612 = vld [vmem:[%s197 + $0x16a] sm:$0xff]
  %v613 = vld [vmem:[%s197 + $0x172] sm:$0xff]
  %v614 = vld [vmem:[%s197 + $0x1b2] sm:$0xff]
  %v615 = vld [vmem:[%s197 + $0x1ba] sm:$0xff]
  %v616 = vld [vmem:[%s197 + $0x1ca] sm:$0xff]
  %v617 = vld [vmem:[%s197 + $0x1d2] sm:$0xff]
  %v618 = vld [vmem:[%s197 + $0x1e2] sm:$0xff]
  %v619 = vld [vmem:[%s197 + $0x1ea] sm:$0xff]
  %v620 = vld [vmem:[%s197 + $0x1fa] sm:$0xff]
  %v621 = vld [vmem:[%s197 + $0x202] sm:$0xff]
  %v622 = vld [vmem:[%s197 + $0x212] sm:$0xff]
  %v623 = vld [vmem:[%s197 + $0x21a] sm:$0xff]
  %v624 = vld [vmem:[%s197 + $0x22a] sm:$0xff]
  %v625 = vld [vmem:[%s197 + $0x232] sm:$0xff]
  %v626 = vld [vmem:[%s197 + $0x242] sm:$0xff]
  %v627 = vld [vmem:[%s197 + $0x24a] sm:$0xff]
  %v628 = vld [vmem:[%s197 + $0x25a] sm:$0xff]
  %v629 = vld [vmem:[%s197 + $0x262] sm:$0xff]
  %v630 = vld [vmem:[%s197 + $0x272] sm:$0xff]
  %v631 = vld [vmem:[%s197 + $0x27a] sm:$0xff]
  %v632 = vld [vmem:[%s197 + $0x28a] sm:$0xff]
  %v633 = vld [vmem:[%s197 + $0x292] sm:$0xff]
  %v634 = vld [vmem:[%s197 + $0x2a2] sm:$0xff]
  %v635 = vld [vmem:[%s197 + $0x2aa] sm:$0xff]
  %v636 = vld [vmem:[%s197 + $0x2ba] sm:$0xff]
  %v637 = vld [vmem:[%s197 + $0x2c2] sm:$0xff]
  %v638 = vld [vmem:[%s197 + $0x2d2] sm:$0xff]
  %v639 = vld [vmem:[%s197 + $0x2da] sm:$0xff]
  %v640 = vld [vmem:[%s197 + $0x2ea] sm:$0xff]
  %v641 = vld [vmem:[%s197 + $0x2f2] sm:$0xff]
  %v642 = vld [vmem:[%s197 + $0x302] sm:$0xff]
  %v643 = vld [vmem:[%s197 + $0x30a] sm:$0xff]
  %v644 = vld [vmem:[%s197 + $0x31a] sm:$0xff]
  %v645 = vld [vmem:[%s197 + $0x322] sm:$0xff]
  %s646 = scalar_lea.vmem [#allocation2], 48
  %v647 = vld [vmem:[%s646] sm:$0xff]
  %v648 = vld [vmem:[%s646 + $0x8] sm:$0xff]
  %v649 = vld [vmem:[%s646 + $0x18] sm:$0xff]
  %v650 = vld [vmem:[%s646 + $0x20] sm:$0xff]
  %v651 = vld [vmem:[%s646 + $0x30] sm:$0xff]
  %v652 = vld [vmem:[%s646 + $0x38] sm:$0xff]
  %v653 = vld [vmem:[%s646 + $0x48] sm:$0xff]
  %v654 = vld [vmem:[%s646 + $0x50] sm:$0xff]
  %v655 = vld [vmem:[%s646 + $0x60] sm:$0xff]
  %v656 = vld [vmem:[%s646 + $0x68] sm:$0xff]
  %v657 = vld [vmem:[%s646 + $0x78] sm:$0xff]
  %v658 = vld [vmem:[%s646 + $0x80] sm:$0xff]
  %v659 = vld [vmem:[%s646 + $0x90] sm:$0xff]
  %v660 = vld [vmem:[%s646 + $0x98] sm:$0xff]
  %v661 = vld [vmem:[%s646 + $0xa8] sm:$0xff]
  %v662 = vld [vmem:[%s646 + $0xb0] sm:$0xff]
  %v663 = vld [vmem:[%s646 + $0xc0] sm:$0xff]
  %v664 = vld [vmem:[%s646 + $0xc8] sm:$0xff]
  %v665 = vld [vmem:[%s646 + $0xd8] sm:$0xff]
  %v666 = vld [vmem:[%s646 + $0xe0] sm:$0xff]
  %v667 = vld [vmem:[%s646 + $0xf0] sm:$0xff]
  %v668 = vld [vmem:[%s646 + $0xf8] sm:$0xff]
  %v669 = vld [vmem:[%s646 + $0x108] sm:$0xff]
  %v670 = vld [vmem:[%s646 + $0x110] sm:$0xff]
  %v671 = vld [vmem:[%s646 + $0x120] sm:$0xff]
  %v672 = vld [vmem:[%s646 + $0x128] sm:$0xff]
  %v673 = vld [vmem:[%s646 + $0x138] sm:$0xff]
  %v674 = vld [vmem:[%s646 + $0x140] sm:$0xff]
  %v675 = vld [vmem:[%s646 + $0x150] sm:$0xff]
  %v676 = vld [vmem:[%s646 + $0x158] sm:$0xff]
  %v677 = vld [vmem:[%s646 + $0x168] sm:$0xff]
  %v678 = vld [vmem:[%s646 + $0x170] sm:$0xff]
  %v679 = vld [vmem:[%s646 + $0x1b0] sm:$0xff]
  %v680 = vld [vmem:[%s646 + $0x1b8] sm:$0xff]
  %v681 = vld [vmem:[%s646 + $0x1c8] sm:$0xff]
  %v682 = vld [vmem:[%s646 + $0x1d0] sm:$0xff]
  %v683 = vld [vmem:[%s646 + $0x1e0] sm:$0xff]
  %v684 = vld [vmem:[%s646 + $0x1e8] sm:$0xff]
  %v685 = vld [vmem:[%s646 + $0x1f8] sm:$0xff]
  %v686 = vld [vmem:[%s646 + $0x200] sm:$0xff]
  %v687 = vld [vmem:[%s646 + $0x210] sm:$0xff]
  %v688 = vld [vmem:[%s646 + $0x218] sm:$0xff]
  %v689 = vld [vmem:[%s646 + $0x228] sm:$0xff]
  %v690 = vld [vmem:[%s646 + $0x230] sm:$0xff]
  %v691 = vld [vmem:[%s646 + $0x240] sm:$0xff]
  %v692 = vld [vmem:[%s646 + $0x248] sm:$0xff]
  %v693 = vld [vmem:[%s646 + $0x258] sm:$0xff]
  %v694 = vld [vmem:[%s646 + $0x260] sm:$0xff]
  %v695 = vld [vmem:[%s646 + $0x270] sm:$0xff]
  %v696 = vld [vmem:[%s646 + $0x278] sm:$0xff]
  %v697 = vld [vmem:[%s646 + $0x288] sm:$0xff]
  %v698 = vld [vmem:[%s646 + $0x290] sm:$0xff]
  %v699 = vld [vmem:[%s646 + $0x2a0] sm:$0xff]
  %v700 = vld [vmem:[%s646 + $0x2a8] sm:$0xff]
  %v701 = vld [vmem:[%s646 + $0x2b8] sm:$0xff]
  %v702 = vld [vmem:[%s646 + $0x2c0] sm:$0xff]
  %v703 = vld [vmem:[%s646 + $0x2d0] sm:$0xff]
  %v704 = vld [vmem:[%s646 + $0x2d8] sm:$0xff]
  %v705 = vld [vmem:[%s646 + $0x2e8] sm:$0xff]
  %v706 = vld [vmem:[%s646 + $0x2f0] sm:$0xff]
  %v707 = vld [vmem:[%s646 + $0x300] sm:$0xff]
  %v708 = vld [vmem:[%s646 + $0x308] sm:$0xff]
  %v709 = vld [vmem:[%s646 + $0x318] sm:$0xff]
  %v710 = vld [vmem:[%s646 + $0x320] sm:$0xff]
  %v711 = vld [vmem:[%s646 + $0x1] sm:$0xff]
  %v712 = vld [vmem:[%s646 + $0x9] sm:$0xff]
  %v713 = vld [vmem:[%s646 + $0x19] sm:$0xff]
  %v714 = vld [vmem:[%s646 + $0x21] sm:$0xff]
  %v715 = vld [vmem:[%s646 + $0x31] sm:$0xff]
  %v716 = vld [vmem:[%s646 + $0x39] sm:$0xff]
  %v717 = vld [vmem:[%s646 + $0x49] sm:$0xff]
  %v718 = vld [vmem:[%s646 + $0x51] sm:$0xff]
  %v719 = vld [vmem:[%s646 + $0x61] sm:$0xff]
  %v720 = vld [vmem:[%s646 + $0x69] sm:$0xff]
  %v721 = vld [vmem:[%s646 + $0x79] sm:$0xff]
  %v722 = vld [vmem:[%s646 + $0x81] sm:$0xff]
  %v723 = vld [vmem:[%s646 + $0x91] sm:$0xff]
  %v724 = vld [vmem:[%s646 + $0x99] sm:$0xff]
  %v725 = vld [vmem:[%s646 + $0xa9] sm:$0xff]
  %v726 = vld [vmem:[%s646 + $0xb1] sm:$0xff]
  %v727 = vld [vmem:[%s646 + $0xc1] sm:$0xff]
  %v728 = vld [vmem:[%s646 + $0xc9] sm:$0xff]
  %v729 = vld [vmem:[%s646 + $0xd9] sm:$0xff]
  %v730 = vld [vmem:[%s646 + $0xe1] sm:$0xff]
  %v731 = vld [vmem:[%s646 + $0xf1] sm:$0xff]
  %v732 = vld [vmem:[%s646 + $0xf9] sm:$0xff]
  %v733 = vld [vmem:[%s646 + $0x109] sm:$0xff]
  %v734 = vld [vmem:[%s646 + $0x111] sm:$0xff]
  %v735 = vld [vmem:[%s646 + $0x121] sm:$0xff]
  %v736 = vld [vmem:[%s646 + $0x129] sm:$0xff]
  %v737 = vld [vmem:[%s646 + $0x139] sm:$0xff]
  %v738 = vld [vmem:[%s646 + $0x141] sm:$0xff]
  %v739 = vld [vmem:[%s646 + $0x151] sm:$0xff]
  %v740 = vld [vmem:[%s646 + $0x159] sm:$0xff]
  %v741 = vld [vmem:[%s646 + $0x169] sm:$0xff]
  %v742 = vld [vmem:[%s646 + $0x171] sm:$0xff]
  %v743 = vld [vmem:[%s646 + $0x1b1] sm:$0xff]
  %v744 = vld [vmem:[%s646 + $0x1b9] sm:$0xff]
  %v745 = vld [vmem:[%s646 + $0x1c9] sm:$0xff]
  %v746 = vld [vmem:[%s646 + $0x1d1] sm:$0xff]
  %v747 = vld [vmem:[%s646 + $0x1e1] sm:$0xff]
  %v748 = vld [vmem:[%s646 + $0x1e9] sm:$0xff]
  %v749 = vld [vmem:[%s646 + $0x1f9] sm:$0xff]
  %v750 = vld [vmem:[%s646 + $0x201] sm:$0xff]
  %v751 = vld [vmem:[%s646 + $0x211] sm:$0xff]
  %v752 = vld [vmem:[%s646 + $0x219] sm:$0xff]
  %v753 = vld [vmem:[%s646 + $0x229] sm:$0xff]
  %v754 = vld [vmem:[%s646 + $0x231] sm:$0xff]
  %v755 = vld [vmem:[%s646 + $0x241] sm:$0xff]
  %v756 = vld [vmem:[%s646 + $0x249] sm:$0xff]
  %v757 = vld [vmem:[%s646 + $0x259] sm:$0xff]
  %v758 = vld [vmem:[%s646 + $0x261] sm:$0xff]
  %v759 = vld [vmem:[%s646 + $0x271] sm:$0xff]
  %v760 = vld [vmem:[%s646 + $0x279] sm:$0xff]
  %v761 = vld [vmem:[%s646 + $0x289] sm:$0xff]
  %v762 = vld [vmem:[%s646 + $0x291] sm:$0xff]
  %v763 = vld [vmem:[%s646 + $0x2a1] sm:$0xff]
  %v764 = vld [vmem:[%s646 + $0x2a9] sm:$0xff]
  %v765 = vld [vmem:[%s646 + $0x2b9] sm:$0xff]
  %v766 = vld [vmem:[%s646 + $0x2c1] sm:$0xff]
  %v767 = vld [vmem:[%s646 + $0x2d1] sm:$0xff]
  %v768 = vld [vmem:[%s646 + $0x2d9] sm:$0xff]
  %v769 = vld [vmem:[%s646 + $0x2e9] sm:$0xff]
  %v770 = vld [vmem:[%s646 + $0x2f1] sm:$0xff]
  %v771 = vld [vmem:[%s646 + $0x301] sm:$0xff]
  %v772 = vld [vmem:[%s646 + $0x309] sm:$0xff]
  %v773 = vld [vmem:[%s646 + $0x319] sm:$0xff]
  %v774 = vld [vmem:[%s646 + $0x321] sm:$0xff]
  %v775 = vld [vmem:[%s646 + $0x2] sm:$0xff]
  %v776 = vld [vmem:[%s646 + $0xa] sm:$0xff]
  %v777 = vld [vmem:[%s646 + $0x1a] sm:$0xff]
  %v778 = vld [vmem:[%s646 + $0x22] sm:$0xff]
  %v779 = vld [vmem:[%s646 + $0x32] sm:$0xff]
  %v780 = vld [vmem:[%s646 + $0x3a] sm:$0xff]
  %v781 = vld [vmem:[%s646 + $0x4a] sm:$0xff]
  %v782 = vld [vmem:[%s646 + $0x52] sm:$0xff]
  %v783 = vld [vmem:[%s646 + $0x62] sm:$0xff]
  %v784 = vld [vmem:[%s646 + $0x6a] sm:$0xff]
  %v785 = vld [vmem:[%s646 + $0x7a] sm:$0xff]
  %v786 = vld [vmem:[%s646 + $0x82] sm:$0xff]
  %v787 = vld [vmem:[%s646 + $0x92] sm:$0xff]
  %v788 = vld [vmem:[%s646 + $0x9a] sm:$0xff]
  %v789 = vld [vmem:[%s646 + $0xaa] sm:$0xff]
  %v790 = vld [vmem:[%s646 + $0xb2] sm:$0xff]
  %v791 = vld [vmem:[%s646 + $0xc2] sm:$0xff]
  %v792 = vld [vmem:[%s646 + $0xca] sm:$0xff]
  %v793 = vld [vmem:[%s646 + $0xda] sm:$0xff]
  %v794 = vld [vmem:[%s646 + $0xe2] sm:$0xff]
  %v795 = vld [vmem:[%s646 + $0xf2] sm:$0xff]
  %v796 = vld [vmem:[%s646 + $0xfa] sm:$0xff]
  %v797 = vld [vmem:[%s646 + $0x10a] sm:$0xff]
  %v798 = vld [vmem:[%s646 + $0x112] sm:$0xff]
  %v799 = vld [vmem:[%s646 + $0x122] sm:$0xff]
  %v800 = vld [vmem:[%s646 + $0x12a] sm:$0xff]
  %v801 = vld [vmem:[%s646 + $0x13a] sm:$0xff]
  %v802 = vld [vmem:[%s646 + $0x142] sm:$0xff]
  %v803 = vld [vmem:[%s646 + $0x152] sm:$0xff]
  %v804 = vld [vmem:[%s646 + $0x15a] sm:$0xff]
  %v805 = vld [vmem:[%s646 + $0x16a] sm:$0xff]
  %v806 = vld [vmem:[%s646 + $0x172] sm:$0xff]
  %v807 = vld [vmem:[%s646 + $0x1b2] sm:$0xff]
  %v808 = vld [vmem:[%s646 + $0x1ba] sm:$0xff]
  %v809 = vld [vmem:[%s646 + $0x1ca] sm:$0xff]
  %v810 = vld [vmem:[%s646 + $0x1d2] sm:$0xff]
  %v811 = vld [vmem:[%s646 + $0x1e2] sm:$0xff]
  %v812 = vld [vmem:[%s646 + $0x1ea] sm:$0xff]
  %v813 = vld [vmem:[%s646 + $0x1fa] sm:$0xff]
  %v814 = vld [vmem:[%s646 + $0x202] sm:$0xff]
  %v815 = vld [vmem:[%s646 + $0x212] sm:$0xff]
  %v816 = vld [vmem:[%s646 + $0x21a] sm:$0xff]
  %v817 = vld [vmem:[%s646 + $0x22a] sm:$0xff]
  %v818 = vld [vmem:[%s646 + $0x232] sm:$0xff]
  %v819 = vld [vmem:[%s646 + $0x242] sm:$0xff]
  %v820 = vld [vmem:[%s646 + $0x24a] sm:$0xff]
  %v821 = vld [vmem:[%s646 + $0x25a] sm:$0xff]
  %v822 = vld [vmem:[%s646 + $0x262] sm:$0xff]
  %v823 = vld [vmem:[%s646 + $0x272] sm:$0xff]
  %v824 = vld [vmem:[%s646 + $0x27a] sm:$0xff]
  %v825 = vld [vmem:[%s646 + $0x28a] sm:$0xff]
  %v826 = vld [vmem:[%s646 + $0x292] sm:$0xff]
  %v827 = vld [vmem:[%s646 + $0x2a2] sm:$0xff]
  %v828 = vld [vmem:[%s646 + $0x2aa] sm:$0xff]
  %v829 = vld [vmem:[%s646 + $0x2ba] sm:$0xff]
  %v830 = vld [vmem:[%s646 + $0x2c2] sm:$0xff]
  %v831 = vld [vmem:[%s646 + $0x2d2] sm:$0xff]
  %v832 = vld [vmem:[%s646 + $0x2da] sm:$0xff]
  %v833 = vld [vmem:[%s646 + $0x2ea] sm:$0xff]
  %v834 = vld [vmem:[%s646 + $0x2f2] sm:$0xff]
  %v835 = vld [vmem:[%s646 + $0x302] sm:$0xff]
  %v836 = vld [vmem:[%s646 + $0x30a] sm:$0xff]
  %v837 = vld [vmem:[%s646 + $0x31a] sm:$0xff]
  %v838 = vld [vmem:[%s646 + $0x322] sm:$0xff]
  %903 = vrot.lane.b32.xlu0 %v326, 4
  %v904 = vpop.permute.xlu0 %903
  %905 = vrot.lane.b32.xlu0 %v327, 4
  %v906 = vpop.permute.xlu0 %905
  %907 = vrot.lane.b32.xlu0 %v328, 4
  %v908 = vpop.permute.xlu0 %907
  %909 = vrot.lane.b32.xlu0 %v329, 4
  %v910 = vpop.permute.xlu0 %909
  %911 = vrot.lane.b32.xlu0 %v330, 4
  %v912 = vpop.permute.xlu0 %911
  %913 = vrot.lane.b32.xlu0 %v331, 4
  %v914 = vpop.permute.xlu0 %913
  %915 = vrot.lane.b32.xlu0 %v332, 4
  %v916 = vpop.permute.xlu0 %915
  %917 = vrot.lane.b32.xlu0 %v333, 4
  %v918 = vpop.permute.xlu0 %917
  %919 = vrot.lane.b32.xlu0 %v334, 4
  %v920 = vpop.permute.xlu0 %919
  %921 = vrot.lane.b32.xlu0 %v335, 4
  %v922 = vpop.permute.xlu0 %921
  %923 = vrot.lane.b32.xlu0 %v336, 4
  %v924 = vpop.permute.xlu0 %923
  %925 = vrot.lane.b32.xlu0 %v337, 4
  %v926 = vpop.permute.xlu0 %925
  %927 = vrot.lane.b32.xlu0 %v338, 4
  %v928 = vpop.permute.xlu0 %927
  %929 = vrot.lane.b32.xlu0 %v339, 4
  %v930 = vpop.permute.xlu0 %929
  %931 = vrot.lane.b32.xlu0 %v340, 4
  %v932 = vpop.permute.xlu0 %931
  %933 = vrot.lane.b32.xlu0 %v341, 4
  %v934 = vpop.permute.xlu0 %933
  %935 = vrot.lane.b32.xlu0 %v342, 4
  %v936 = vpop.permute.xlu0 %935
  %937 = vrot.lane.b32.xlu0 %v343, 4
  %v938 = vpop.permute.xlu0 %937
  %939 = vrot.lane.b32.xlu0 %v344, 4
  %v940 = vpop.permute.xlu0 %939
  %941 = vrot.lane.b32.xlu0 %v345, 4
  %v942 = vpop.permute.xlu0 %941
  %943 = vrot.lane.b32.xlu0 %v346, 4
  %v944 = vpop.permute.xlu0 %943
  %945 = vrot.lane.b32.xlu0 %v347, 4
  %v946 = vpop.permute.xlu0 %945
  %947 = vrot.lane.b32.xlu0 %v348, 4
  %v948 = vpop.permute.xlu0 %947
  %949 = vrot.lane.b32.xlu0 %v349, 4
  %v950 = vpop.permute.xlu0 %949
  %951 = vrot.lane.b32.xlu0 %v350, 4
  %v952 = vpop.permute.xlu0 %951
  %953 = vrot.lane.b32.xlu0 %v351, 4
  %v954 = vpop.permute.xlu0 %953
  %955 = vrot.lane.b32.xlu0 %v352, 4
  %v956 = vpop.permute.xlu0 %955
  %957 = vrot.lane.b32.xlu0 %v353, 4
  %v958 = vpop.permute.xlu0 %957
  %959 = vrot.lane.b32.xlu0 %v354, 4
  %v960 = vpop.permute.xlu0 %959
  %961 = vrot.lane.b32.xlu0 %v355, 4
  %v962 = vpop.permute.xlu0 %961
  %963 = vrot.lane.b32.xlu0 %v356, 4
  %v964 = vpop.permute.xlu0 %963
  %965 = vrot.lane.b32.xlu0 %v357, 4
  %v966 = vpop.permute.xlu0 %965
  %967 = vrot.lane.b32.xlu0 %v358, 4
  %v968 = vpop.permute.xlu0 %967
  %969 = vrot.lane.b32.xlu0 %v359, 4
  %v970 = vpop.permute.xlu0 %969
  %971 = vrot.lane.b32.xlu0 %v360, 4
  %v972 = vpop.permute.xlu0 %971
  %973 = vrot.lane.b32.xlu0 %v361, 4
  %v974 = vpop.permute.xlu0 %973
  %975 = vrot.lane.b32.xlu0 %v362, 4
  %v976 = vpop.permute.xlu0 %975
  %977 = vrot.lane.b32.xlu0 %v363, 4
  %v978 = vpop.permute.xlu0 %977
  %979 = vrot.lane.b32.xlu0 %v364, 4
  %v980 = vpop.permute.xlu0 %979
  %981 = vrot.lane.b32.xlu0 %v365, 4
  %v982 = vpop.permute.xlu0 %981
  %983 = vrot.lane.b32.xlu0 %v366, 4
  %v984 = vpop.permute.xlu0 %983
  %985 = vrot.lane.b32.xlu0 %v367, 4
  %v986 = vpop.permute.xlu0 %985
  %987 = vrot.lane.b32.xlu0 %v368, 4
  %v988 = vpop.permute.xlu0 %987
  %989 = vrot.lane.b32.xlu0 %v369, 4
  %v990 = vpop.permute.xlu0 %989
  %991 = vrot.lane.b32.xlu0 %v370, 4
  %v992 = vpop.permute.xlu0 %991
  %993 = vrot.lane.b32.xlu0 %v371, 4
  %v994 = vpop.permute.xlu0 %993
  %995 = vrot.lane.b32.xlu0 %v372, 4
  %v996 = vpop.permute.xlu0 %995
  %997 = vrot.lane.b32.xlu0 %v373, 4
  %v998 = vpop.permute.xlu0 %997
  %999 = vrot.lane.b32.xlu0 %v374, 4
  %v1000 = vpop.permute.xlu0 %999
  %1001 = vrot.lane.b32.xlu0 %v375, 4
  %v1002 = vpop.permute.xlu0 %1001
  %1003 = vrot.lane.b32.xlu0 %v376, 4
  %v1004 = vpop.permute.xlu0 %1003
  %1005 = vrot.lane.b32.xlu0 %v377, 4
  %v1006 = vpop.permute.xlu0 %1005
  %1007 = vrot.lane.b32.xlu0 %v378, 4
  %v1008 = vpop.permute.xlu0 %1007
  %1009 = vrot.lane.b32.xlu0 %v379, 4
  %v1010 = vpop.permute.xlu0 %1009
  %1011 = vrot.lane.b32.xlu0 %v380, 4
  %v1012 = vpop.permute.xlu0 %1011
  %1013 = vrot.lane.b32.xlu0 %v381, 4
  %v1014 = vpop.permute.xlu0 %1013
  %1015 = vrot.lane.b32.xlu0 %v382, 4
  %v1016 = vpop.permute.xlu0 %1015
  %1017 = vrot.lane.b32.xlu0 %v383, 4
  %v1018 = vpop.permute.xlu0 %1017
  %1019 = vrot.lane.b32.xlu0 %v384, 4
  %v1020 = vpop.permute.xlu0 %1019
  %1021 = vrot.lane.b32.xlu0 %v385, 4
  %v1022 = vpop.permute.xlu0 %1021
  %1023 = vrot.lane.b32.xlu0 %v386, 4
  %v1024 = vpop.permute.xlu0 %1023
  %1025 = vrot.lane.b32.xlu0 %v387, 4
  %v1026 = vpop.permute.xlu0 %1025
  %1027 = vrot.lane.b32.xlu0 %v388, 4
  %v1028 = vpop.permute.xlu0 %1027
  %1029 = vrot.lane.b32.xlu0 %v389, 4
  %v1030 = vpop.permute.xlu0 %1029
  %1159 = vrot.lane.b32.xlu0 %v390, 8
  %v1160 = vpop.permute.xlu0 %1159
  %1161 = vrot.lane.b32.xlu0 %v391, 8
  %v1162 = vpop.permute.xlu0 %1161
  %1163 = vrot.lane.b32.xlu0 %v392, 8
  %v1164 = vpop.permute.xlu0 %1163
  %1165 = vrot.lane.b32.xlu0 %v393, 8
  %v1166 = vpop.permute.xlu0 %1165
  %1167 = vrot.lane.b32.xlu0 %v394, 8
  %v1168 = vpop.permute.xlu0 %1167
  %1169 = vrot.lane.b32.xlu0 %v395, 8
  %v1170 = vpop.permute.xlu0 %1169
  %1171 = vrot.lane.b32.xlu0 %v396, 8
  %v1172 = vpop.permute.xlu0 %1171
  %1173 = vrot.lane.b32.xlu0 %v397, 8
  %v1174 = vpop.permute.xlu0 %1173
  %1175 = vrot.lane.b32.xlu0 %v398, 8
  %v1176 = vpop.permute.xlu0 %1175
  %1177 = vrot.lane.b32.xlu0 %v399, 8
  %v1178 = vpop.permute.xlu0 %1177
  %1179 = vrot.lane.b32.xlu0 %v400, 8
  %v1180 = vpop.permute.xlu0 %1179
  %1181 = vrot.lane.b32.xlu0 %v401, 8
  %v1182 = vpop.permute.xlu0 %1181
  %1183 = vrot.lane.b32.xlu0 %v402, 8
  %v1184 = vpop.permute.xlu0 %1183
  %1185 = vrot.lane.b32.xlu0 %v403, 8
  %v1186 = vpop.permute.xlu0 %1185
  %1187 = vrot.lane.b32.xlu0 %v404, 8
  %v1188 = vpop.permute.xlu0 %1187
  %1189 = vrot.lane.b32.xlu0 %v405, 8
  %v1190 = vpop.permute.xlu0 %1189
  %1191 = vrot.lane.b32.xlu0 %v406, 8
  %v1192 = vpop.permute.xlu0 %1191
  %1193 = vrot.lane.b32.xlu0 %v407, 8
  %v1194 = vpop.permute.xlu0 %1193
  %1195 = vrot.lane.b32.xlu0 %v408, 8
  %v1196 = vpop.permute.xlu0 %1195
  %1197 = vrot.lane.b32.xlu0 %v409, 8
  %v1198 = vpop.permute.xlu0 %1197
  %1199 = vrot.lane.b32.xlu0 %v410, 8
  %v1200 = vpop.permute.xlu0 %1199
  %1201 = vrot.lane.b32.xlu0 %v411, 8
  %v1202 = vpop.permute.xlu0 %1201
  %1203 = vrot.lane.b32.xlu0 %v412, 8
  %v1204 = vpop.permute.xlu0 %1203
  %1205 = vrot.lane.b32.xlu0 %v413, 8
  %v1206 = vpop.permute.xlu0 %1205
  %1207 = vrot.lane.b32.xlu0 %v414, 8
  %v1208 = vpop.permute.xlu0 %1207
  %1209 = vrot.lane.b32.xlu0 %v415, 8
  %v1210 = vpop.permute.xlu0 %1209
  %1211 = vrot.lane.b32.xlu0 %v416, 8
  %v1212 = vpop.permute.xlu0 %1211
  %1213 = vrot.lane.b32.xlu0 %v417, 8
  %v1214 = vpop.permute.xlu0 %1213
  %1215 = vrot.lane.b32.xlu0 %v418, 8
  %v1216 = vpop.permute.xlu0 %1215
  %1217 = vrot.lane.b32.xlu0 %v419, 8
  %v1218 = vpop.permute.xlu0 %1217
  %1219 = vrot.lane.b32.xlu0 %v420, 8
  %v1220 = vpop.permute.xlu0 %1219
  %1221 = vrot.lane.b32.xlu0 %v421, 8
  %v1222 = vpop.permute.xlu0 %1221
  %1223 = vrot.lane.b32.xlu0 %v422, 8
  %v1224 = vpop.permute.xlu0 %1223
  %1225 = vrot.lane.b32.xlu0 %v423, 8
  %v1226 = vpop.permute.xlu0 %1225
  %1227 = vrot.lane.b32.xlu0 %v424, 8
  %v1228 = vpop.permute.xlu0 %1227
  %1229 = vrot.lane.b32.xlu0 %v425, 8
  %v1230 = vpop.permute.xlu0 %1229
  %1231 = vrot.lane.b32.xlu0 %v426, 8
  %v1232 = vpop.permute.xlu0 %1231
  %1233 = vrot.lane.b32.xlu0 %v427, 8
  %v1234 = vpop.permute.xlu0 %1233
  %1235 = vrot.lane.b32.xlu0 %v428, 8
  %v1236 = vpop.permute.xlu0 %1235
  %1237 = vrot.lane.b32.xlu0 %v429, 8
  %v1238 = vpop.permute.xlu0 %1237
  %1239 = vrot.lane.b32.xlu0 %v430, 8
  %v1240 = vpop.permute.xlu0 %1239
  %1241 = vrot.lane.b32.xlu0 %v431, 8
  %v1242 = vpop.permute.xlu0 %1241
  %1243 = vrot.lane.b32.xlu0 %v432, 8
  %v1244 = vpop.permute.xlu0 %1243
  %1245 = vrot.lane.b32.xlu0 %v433, 8
  %v1246 = vpop.permute.xlu0 %1245
  %1247 = vrot.lane.b32.xlu0 %v434, 8
  %v1248 = vpop.permute.xlu0 %1247
  %1249 = vrot.lane.b32.xlu0 %v435, 8
  %v1250 = vpop.permute.xlu0 %1249
  %1251 = vrot.lane.b32.xlu0 %v436, 8
  %v1252 = vpop.permute.xlu0 %1251
  %1253 = vrot.lane.b32.xlu0 %v437, 8
  %v1254 = vpop.permute.xlu0 %1253
  %1255 = vrot.lane.b32.xlu0 %v438, 8
  %v1256 = vpop.permute.xlu0 %1255
  %1257 = vrot.lane.b32.xlu0 %v439, 8
  %v1258 = vpop.permute.xlu0 %1257
  %1259 = vrot.lane.b32.xlu0 %v440, 8
  %v1260 = vpop.permute.xlu0 %1259
  %1261 = vrot.lane.b32.xlu0 %v441, 8
  %v1262 = vpop.permute.xlu0 %1261
  %1263 = vrot.lane.b32.xlu0 %v442, 8
  %v1264 = vpop.permute.xlu0 %1263
  %1265 = vrot.lane.b32.xlu0 %v443, 8
  %v1266 = vpop.permute.xlu0 %1265
  %1267 = vrot.lane.b32.xlu0 %v444, 8
  %v1268 = vpop.permute.xlu0 %1267
  %1269 = vrot.lane.b32.xlu0 %v445, 8
  %v1270 = vpop.permute.xlu0 %1269
  %1271 = vrot.lane.b32.xlu0 %v446, 8
  %v1272 = vpop.permute.xlu0 %1271
  %1273 = vrot.lane.b32.xlu0 %v447, 8
  %v1274 = vpop.permute.xlu0 %1273
  %1275 = vrot.lane.b32.xlu0 %v448, 8
  %v1276 = vpop.permute.xlu0 %1275
  %1277 = vrot.lane.b32.xlu0 %v449, 8
  %v1278 = vpop.permute.xlu0 %1277
  %1279 = vrot.lane.b32.xlu0 %v450, 8
  %v1280 = vpop.permute.xlu0 %1279
  %1281 = vrot.lane.b32.xlu0 %v451, 8
  %v1282 = vpop.permute.xlu0 %1281
  %1283 = vrot.lane.b32.xlu0 %v452, 8
  %v1284 = vpop.permute.xlu0 %1283
  %1285 = vrot.lane.b32.xlu0 %v453, 8
  %v1286 = vpop.permute.xlu0 %1285
  %1415 = vrot.lane.b32.xlu0 %v454, 12
  %v1416 = vpop.permute.xlu0 %1415
  %1417 = vrot.lane.b32.xlu0 %v455, 12
  %v1418 = vpop.permute.xlu0 %1417
  %1419 = vrot.lane.b32.xlu0 %v456, 12
  %v1420 = vpop.permute.xlu0 %1419
  %1421 = vrot.lane.b32.xlu0 %v457, 12
  %v1422 = vpop.permute.xlu0 %1421
  %1423 = vrot.lane.b32.xlu0 %v458, 12
  %v1424 = vpop.permute.xlu0 %1423
  %1425 = vrot.lane.b32.xlu0 %v459, 12
  %v1426 = vpop.permute.xlu0 %1425
  %1427 = vrot.lane.b32.xlu0 %v460, 12
  %v1428 = vpop.permute.xlu0 %1427
  %1429 = vrot.lane.b32.xlu0 %v461, 12
  %v1430 = vpop.permute.xlu0 %1429
  %1431 = vrot.lane.b32.xlu0 %v462, 12
  %v1432 = vpop.permute.xlu0 %1431
  %1433 = vrot.lane.b32.xlu0 %v463, 12
  %v1434 = vpop.permute.xlu0 %1433
  %1435 = vrot.lane.b32.xlu0 %v464, 12
  %v1436 = vpop.permute.xlu0 %1435
  %1437 = vrot.lane.b32.xlu0 %v465, 12
  %v1438 = vpop.permute.xlu0 %1437
  %1439 = vrot.lane.b32.xlu0 %v466, 12
  %v1440 = vpop.permute.xlu0 %1439
  %1441 = vrot.lane.b32.xlu0 %v467, 12
  %v1442 = vpop.permute.xlu0 %1441
  %1443 = vrot.lane.b32.xlu0 %v468, 12
  %v1444 = vpop.permute.xlu0 %1443
  %1445 = vrot.lane.b32.xlu0 %v469, 12
  %v1446 = vpop.permute.xlu0 %1445
  %1447 = vrot.lane.b32.xlu0 %v470, 12
  %v1448 = vpop.permute.xlu0 %1447
  %1449 = vrot.lane.b32.xlu0 %v471, 12
  %v1450 = vpop.permute.xlu0 %1449
  %1451 = vrot.lane.b32.xlu0 %v472, 12
  %v1452 = vpop.permute.xlu0 %1451
  %1453 = vrot.lane.b32.xlu0 %v473, 12
  %v1454 = vpop.permute.xlu0 %1453
  %1455 = vrot.lane.b32.xlu0 %v474, 12
  %v1456 = vpop.permute.xlu0 %1455
  %1457 = vrot.lane.b32.xlu0 %v475, 12
  %v1458 = vpop.permute.xlu0 %1457
  %1459 = vrot.lane.b32.xlu0 %v476, 12
  %v1460 = vpop.permute.xlu0 %1459
  %1461 = vrot.lane.b32.xlu0 %v477, 12
  %v1462 = vpop.permute.xlu0 %1461
  %1463 = vrot.lane.b32.xlu0 %v478, 12
  %v1464 = vpop.permute.xlu0 %1463
  %1465 = vrot.lane.b32.xlu0 %v479, 12
  %v1466 = vpop.permute.xlu0 %1465
  %1467 = vrot.lane.b32.xlu0 %v480, 12
  %v1468 = vpop.permute.xlu0 %1467
  %1469 = vrot.lane.b32.xlu0 %v481, 12
  %v1470 = vpop.permute.xlu0 %1469
  %1471 = vrot.lane.b32.xlu0 %v482, 12
  %v1472 = vpop.permute.xlu0 %1471
  %1473 = vrot.lane.b32.xlu0 %v483, 12
  %v1474 = vpop.permute.xlu0 %1473
  %1475 = vrot.lane.b32.xlu0 %v484, 12
  %v1476 = vpop.permute.xlu0 %1475
  %1477 = vrot.lane.b32.xlu0 %v485, 12
  %v1478 = vpop.permute.xlu0 %1477
  %1479 = vrot.lane.b32.xlu0 %v486, 12
  %v1480 = vpop.permute.xlu0 %1479
  %1481 = vrot.lane.b32.xlu0 %v487, 12
  %v1482 = vpop.permute.xlu0 %1481
  %1483 = vrot.lane.b32.xlu0 %v488, 12
  %v1484 = vpop.permute.xlu0 %1483
  %1485 = vrot.lane.b32.xlu0 %v489, 12
  %v1486 = vpop.permute.xlu0 %1485
  %1487 = vrot.lane.b32.xlu0 %v490, 12
  %v1488 = vpop.permute.xlu0 %1487
  %1489 = vrot.lane.b32.xlu0 %v491, 12
  %v1490 = vpop.permute.xlu0 %1489
  %1491 = vrot.lane.b32.xlu0 %v492, 12
  %v1492 = vpop.permute.xlu0 %1491
  %1493 = vrot.lane.b32.xlu0 %v493, 12
  %v1494 = vpop.permute.xlu0 %1493
  %1495 = vrot.lane.b32.xlu0 %v494, 12
  %v1496 = vpop.permute.xlu0 %1495
  %1497 = vrot.lane.b32.xlu0 %v495, 12
  %v1498 = vpop.permute.xlu0 %1497
  %1499 = vrot.lane.b32.xlu0 %v496, 12
  %v1500 = vpop.permute.xlu0 %1499
  %1501 = vrot.lane.b32.xlu0 %v497, 12
  %v1502 = vpop.permute.xlu0 %1501
  %1503 = vrot.lane.b32.xlu0 %v498, 12
  %v1504 = vpop.permute.xlu0 %1503
  %1505 = vrot.lane.b32.xlu0 %v499, 12
  %v1506 = vpop.permute.xlu0 %1505
  %1507 = vrot.lane.b32.xlu0 %v500, 12
  %v1508 = vpop.permute.xlu0 %1507
  %1509 = vrot.lane.b32.xlu0 %v501, 12
  %v1510 = vpop.permute.xlu0 %1509
  %1511 = vrot.lane.b32.xlu0 %v502, 12
  %v1512 = vpop.permute.xlu0 %1511
  %1513 = vrot.lane.b32.xlu0 %v503, 12
  %v1514 = vpop.permute.xlu0 %1513
  %1515 = vrot.lane.b32.xlu0 %v504, 12
  %v1516 = vpop.permute.xlu0 %1515
  %1517 = vrot.lane.b32.xlu0 %v505, 12
  %v1518 = vpop.permute.xlu0 %1517
  %1519 = vrot.lane.b32.xlu0 %v506, 12
  %v1520 = vpop.permute.xlu0 %1519
  %1521 = vrot.lane.b32.xlu0 %v507, 12
  %v1522 = vpop.permute.xlu0 %1521
  %1523 = vrot.lane.b32.xlu0 %v508, 12
  %v1524 = vpop.permute.xlu0 %1523
  %1525 = vrot.lane.b32.xlu0 %v509, 12
  %v1526 = vpop.permute.xlu0 %1525
  %1527 = vrot.lane.b32.xlu0 %v510, 12
  %v1528 = vpop.permute.xlu0 %1527
  %1529 = vrot.lane.b32.xlu0 %v511, 12
  %v1530 = vpop.permute.xlu0 %1529
  %1531 = vrot.lane.b32.xlu0 %v512, 12
  %v1532 = vpop.permute.xlu0 %1531
  %1533 = vrot.lane.b32.xlu0 %v513, 12
  %v1534 = vpop.permute.xlu0 %1533
  %1535 = vrot.lane.b32.xlu0 %v514, 12
  %v1536 = vpop.permute.xlu0 %1535
  %1537 = vrot.lane.b32.xlu0 %v515, 12
  %v1538 = vpop.permute.xlu0 %1537
  %1539 = vrot.lane.b32.xlu0 %v516, 12
  %v1540 = vpop.permute.xlu0 %1539
  %1541 = vrot.lane.b32.xlu0 %v517, 12
  %v1542 = vpop.permute.xlu0 %1541
  %1671 = vrot.lane.b32.xlu0 %v518, 16
  %v1672 = vpop.permute.xlu0 %1671
  %1673 = vrot.lane.b32.xlu0 %v519, 16
  %v1674 = vpop.permute.xlu0 %1673
  %1675 = vrot.lane.b32.xlu0 %v520, 16
  %v1676 = vpop.permute.xlu0 %1675
  %1677 = vrot.lane.b32.xlu0 %v521, 16
  %v1678 = vpop.permute.xlu0 %1677
  %1679 = vrot.lane.b32.xlu0 %v522, 16
  %v1680 = vpop.permute.xlu0 %1679
  %1681 = vrot.lane.b32.xlu0 %v523, 16
  %v1682 = vpop.permute.xlu0 %1681
  %1683 = vrot.lane.b32.xlu0 %v524, 16
  %v1684 = vpop.permute.xlu0 %1683
  %1685 = vrot.lane.b32.xlu0 %v525, 16
  %v1686 = vpop.permute.xlu0 %1685
  %1687 = vrot.lane.b32.xlu0 %v526, 16
  %v1688 = vpop.permute.xlu0 %1687
  %1689 = vrot.lane.b32.xlu0 %v527, 16
  %v1690 = vpop.permute.xlu0 %1689
  %1691 = vrot.lane.b32.xlu0 %v528, 16
  %v1692 = vpop.permute.xlu0 %1691
  %1693 = vrot.lane.b32.xlu0 %v529, 16
  %v1694 = vpop.permute.xlu0 %1693
  %1695 = vrot.lane.b32.xlu0 %v530, 16
  %v1696 = vpop.permute.xlu0 %1695
  %1697 = vrot.lane.b32.xlu0 %v531, 16
  %v1698 = vpop.permute.xlu0 %1697
  %1699 = vrot.lane.b32.xlu0 %v532, 16
  %v1700 = vpop.permute.xlu0 %1699
  %1701 = vrot.lane.b32.xlu0 %v533, 16
  %v1702 = vpop.permute.xlu0 %1701
  %1703 = vrot.lane.b32.xlu0 %v534, 16
  %v1704 = vpop.permute.xlu0 %1703
  %1705 = vrot.lane.b32.xlu0 %v535, 16
  %v1706 = vpop.permute.xlu0 %1705
  %1707 = vrot.lane.b32.xlu0 %v536, 16
  %v1708 = vpop.permute.xlu0 %1707
  %1709 = vrot.lane.b32.xlu0 %v537, 16
  %v1710 = vpop.permute.xlu0 %1709
  %1711 = vrot.lane.b32.xlu0 %v538, 16
  %v1712 = vpop.permute.xlu0 %1711
  %1713 = vrot.lane.b32.xlu0 %v539, 16
  %v1714 = vpop.permute.xlu0 %1713
  %1715 = vrot.lane.b32.xlu0 %v540, 16
  %v1716 = vpop.permute.xlu0 %1715
  %1717 = vrot.lane.b32.xlu0 %v541, 16
  %v1718 = vpop.permute.xlu0 %1717
  %1719 = vrot.lane.b32.xlu0 %v542, 16
  %v1720 = vpop.permute.xlu0 %1719
  %1721 = vrot.lane.b32.xlu0 %v543, 16
  %v1722 = vpop.permute.xlu0 %1721
  %1723 = vrot.lane.b32.xlu0 %v544, 16
  %v1724 = vpop.permute.xlu0 %1723
  %1725 = vrot.lane.b32.xlu0 %v545, 16
  %v1726 = vpop.permute.xlu0 %1725
  %1727 = vrot.lane.b32.xlu0 %v546, 16
  %v1728 = vpop.permute.xlu0 %1727
  %1729 = vrot.lane.b32.xlu0 %v547, 16
  %v1730 = vpop.permute.xlu0 %1729
  %1731 = vrot.lane.b32.xlu0 %v548, 16
  %v1732 = vpop.permute.xlu0 %1731
  %1733 = vrot.lane.b32.xlu0 %v549, 16
  %v1734 = vpop.permute.xlu0 %1733
  %1735 = vrot.lane.b32.xlu0 %v550, 16
  %v1736 = vpop.permute.xlu0 %1735
  %1737 = vrot.lane.b32.xlu0 %v551, 16
  %v1738 = vpop.permute.xlu0 %1737
  %1739 = vrot.lane.b32.xlu0 %v552, 16
  %v1740 = vpop.permute.xlu0 %1739
  %1741 = vrot.lane.b32.xlu0 %v553, 16
  %v1742 = vpop.permute.xlu0 %1741
  %1743 = vrot.lane.b32.xlu0 %v554, 16
  %v1744 = vpop.permute.xlu0 %1743
  %1745 = vrot.lane.b32.xlu0 %v555, 16
  %v1746 = vpop.permute.xlu0 %1745
  %1747 = vrot.lane.b32.xlu0 %v556, 16
  %v1748 = vpop.permute.xlu0 %1747
  %1749 = vrot.lane.b32.xlu0 %v557, 16
  %v1750 = vpop.permute.xlu0 %1749
  %1751 = vrot.lane.b32.xlu0 %v558, 16
  %v1752 = vpop.permute.xlu0 %1751
  %1753 = vrot.lane.b32.xlu0 %v559, 16
  %v1754 = vpop.permute.xlu0 %1753
  %1755 = vrot.lane.b32.xlu0 %v560, 16
  %v1756 = vpop.permute.xlu0 %1755
  %1757 = vrot.lane.b32.xlu0 %v561, 16
  %v1758 = vpop.permute.xlu0 %1757
  %1759 = vrot.lane.b32.xlu0 %v562, 16
  %v1760 = vpop.permute.xlu0 %1759
  %1761 = vrot.lane.b32.xlu0 %v563, 16
  %v1762 = vpop.permute.xlu0 %1761
  %1763 = vrot.lane.b32.xlu0 %v564, 16
  %v1764 = vpop.permute.xlu0 %1763
  %1765 = vrot.lane.b32.xlu0 %v565, 16
  %v1766 = vpop.permute.xlu0 %1765
  %1767 = vrot.lane.b32.xlu0 %v566, 16
  %v1768 = vpop.permute.xlu0 %1767
  %1769 = vrot.lane.b32.xlu0 %v567, 16
  %v1770 = vpop.permute.xlu0 %1769
  %1771 = vrot.lane.b32.xlu0 %v568, 16
  %v1772 = vpop.permute.xlu0 %1771
  %1773 = vrot.lane.b32.xlu0 %v569, 16
  %v1774 = vpop.permute.xlu0 %1773
  %1775 = vrot.lane.b32.xlu0 %v570, 16
  %v1776 = vpop.permute.xlu0 %1775
  %1777 = vrot.lane.b32.xlu0 %v571, 16
  %v1778 = vpop.permute.xlu0 %1777
  %1779 = vrot.lane.b32.xlu0 %v572, 16
  %v1780 = vpop.permute.xlu0 %1779
  %1781 = vrot.lane.b32.xlu0 %v573, 16
  %v1782 = vpop.permute.xlu0 %1781
  %1783 = vrot.lane.b32.xlu0 %v574, 16
  %v1784 = vpop.permute.xlu0 %1783
  %1785 = vrot.lane.b32.xlu0 %v575, 16
  %v1786 = vpop.permute.xlu0 %1785
  %1787 = vrot.lane.b32.xlu0 %v576, 16
  %v1788 = vpop.permute.xlu0 %1787
  %1789 = vrot.lane.b32.xlu0 %v577, 16
  %v1790 = vpop.permute.xlu0 %1789
  %1791 = vrot.lane.b32.xlu0 %v578, 16
  %v1792 = vpop.permute.xlu0 %1791
  %1793 = vrot.lane.b32.xlu0 %v579, 16
  %v1794 = vpop.permute.xlu0 %1793
  %1795 = vrot.lane.b32.xlu0 %v580, 16
  %v1796 = vpop.permute.xlu0 %1795
  %1797 = vrot.lane.b32.xlu0 %v581, 16
  %v1798 = vpop.permute.xlu0 %1797
  %1927 = vrot.lane.b32.xlu0 %v582, 20
  %v1928 = vpop.permute.xlu0 %1927
  %1929 = vrot.lane.b32.xlu0 %v583, 20
  %v1930 = vpop.permute.xlu0 %1929
  %1931 = vrot.lane.b32.xlu0 %v584, 20
  %v1932 = vpop.permute.xlu0 %1931
  %1933 = vrot.lane.b32.xlu0 %v585, 20
  %v1934 = vpop.permute.xlu0 %1933
  %1935 = vrot.lane.b32.xlu0 %v586, 20
  %v1936 = vpop.permute.xlu0 %1935
  %1937 = vrot.lane.b32.xlu0 %v587, 20
  %v1938 = vpop.permute.xlu0 %1937
  %1939 = vrot.lane.b32.xlu0 %v588, 20
  %v1940 = vpop.permute.xlu0 %1939
  %1941 = vrot.lane.b32.xlu0 %v589, 20
  %v1942 = vpop.permute.xlu0 %1941
  %1943 = vrot.lane.b32.xlu0 %v590, 20
  %v1944 = vpop.permute.xlu0 %1943
  %1945 = vrot.lane.b32.xlu0 %v591, 20
  %v1946 = vpop.permute.xlu0 %1945
  %1947 = vrot.lane.b32.xlu0 %v592, 20
  %v1948 = vpop.permute.xlu0 %1947
  %1949 = vrot.lane.b32.xlu0 %v593, 20
  %v1950 = vpop.permute.xlu0 %1949
  %1951 = vrot.lane.b32.xlu0 %v594, 20
  %v1952 = vpop.permute.xlu0 %1951
  %1953 = vrot.lane.b32.xlu0 %v595, 20
  %v1954 = vpop.permute.xlu0 %1953
  %1955 = vrot.lane.b32.xlu0 %v596, 20
  %v1956 = vpop.permute.xlu0 %1955
  %1957 = vrot.lane.b32.xlu0 %v597, 20
  %v1958 = vpop.permute.xlu0 %1957
  %1959 = vrot.lane.b32.xlu0 %v598, 20
  %v1960 = vpop.permute.xlu0 %1959
  %1961 = vrot.lane.b32.xlu0 %v599, 20
  %v1962 = vpop.permute.xlu0 %1961
  %1963 = vrot.lane.b32.xlu0 %v600, 20
  %v1964 = vpop.permute.xlu0 %1963
  %1965 = vrot.lane.b32.xlu0 %v601, 20
  %v1966 = vpop.permute.xlu0 %1965
  %1967 = vrot.lane.b32.xlu0 %v602, 20
  %v1968 = vpop.permute.xlu0 %1967
  %1969 = vrot.lane.b32.xlu0 %v603, 20
  %v1970 = vpop.permute.xlu0 %1969
  %1971 = vrot.lane.b32.xlu0 %v604, 20
  %v1972 = vpop.permute.xlu0 %1971
  %1973 = vrot.lane.b32.xlu0 %v605, 20
  %v1974 = vpop.permute.xlu0 %1973
  %1975 = vrot.lane.b32.xlu0 %v606, 20
  %v1976 = vpop.permute.xlu0 %1975
  %1977 = vrot.lane.b32.xlu0 %v607, 20
  %v1978 = vpop.permute.xlu0 %1977
  %1979 = vrot.lane.b32.xlu0 %v608, 20
  %v1980 = vpop.permute.xlu0 %1979
  %1981 = vrot.lane.b32.xlu0 %v609, 20
  %v1982 = vpop.permute.xlu0 %1981
  %1983 = vrot.lane.b32.xlu0 %v610, 20
  %v1984 = vpop.permute.xlu0 %1983
  %1985 = vrot.lane.b32.xlu0 %v611, 20
  %v1986 = vpop.permute.xlu0 %1985
  %1987 = vrot.lane.b32.xlu0 %v612, 20
  %v1988 = vpop.permute.xlu0 %1987
  %1989 = vrot.lane.b32.xlu0 %v613, 20
  %v1990 = vpop.permute.xlu0 %1989
  %1991 = vrot.lane.b32.xlu0 %v614, 20
  %v1992 = vpop.permute.xlu0 %1991
  %1993 = vrot.lane.b32.xlu0 %v615, 20
  %v1994 = vpop.permute.xlu0 %1993
  %1995 = vrot.lane.b32.xlu0 %v616, 20
  %v1996 = vpop.permute.xlu0 %1995
  %1997 = vrot.lane.b32.xlu0 %v617, 20
  %v1998 = vpop.permute.xlu0 %1997
  %1999 = vrot.lane.b32.xlu0 %v618, 20
  %v2000 = vpop.permute.xlu0 %1999
  %2001 = vrot.lane.b32.xlu0 %v619, 20
  %v2002 = vpop.permute.xlu0 %2001
  %2003 = vrot.lane.b32.xlu0 %v620, 20
  %v2004 = vpop.permute.xlu0 %2003
  %2005 = vrot.lane.b32.xlu0 %v621, 20
  %v2006 = vpop.permute.xlu0 %2005
  %2007 = vrot.lane.b32.xlu0 %v622, 20
  %v2008 = vpop.permute.xlu0 %2007
  %2009 = vrot.lane.b32.xlu0 %v623, 20
  %v2010 = vpop.permute.xlu0 %2009
  %2011 = vrot.lane.b32.xlu0 %v624, 20
  %v2012 = vpop.permute.xlu0 %2011
  %2013 = vrot.lane.b32.xlu0 %v625, 20
  %v2014 = vpop.permute.xlu0 %2013
  %2015 = vrot.lane.b32.xlu0 %v626, 20
  %v2016 = vpop.permute.xlu0 %2015
  %2017 = vrot.lane.b32.xlu0 %v627, 20
  %v2018 = vpop.permute.xlu0 %2017
  %2019 = vrot.lane.b32.xlu0 %v628, 20
  %v2020 = vpop.permute.xlu0 %2019
  %2021 = vrot.lane.b32.xlu0 %v629, 20
  %v2022 = vpop.permute.xlu0 %2021
  %2023 = vrot.lane.b32.xlu0 %v630, 20
  %v2024 = vpop.permute.xlu0 %2023
  %2025 = vrot.lane.b32.xlu0 %v631, 20
  %v2026 = vpop.permute.xlu0 %2025
  %2027 = vrot.lane.b32.xlu0 %v632, 20
  %v2028 = vpop.permute.xlu0 %2027
  %2029 = vrot.lane.b32.xlu0 %v633, 20
  %v2030 = vpop.permute.xlu0 %2029
  %2031 = vrot.lane.b32.xlu0 %v634, 20
  %v2032 = vpop.permute.xlu0 %2031
  %2033 = vrot.lane.b32.xlu0 %v635, 20
  %v2034 = vpop.permute.xlu0 %2033
  %2035 = vrot.lane.b32.xlu0 %v636, 20
  %v2036 = vpop.permute.xlu0 %2035
  %2037 = vrot.lane.b32.xlu0 %v637, 20
  %v2038 = vpop.permute.xlu0 %2037
  %2039 = vrot.lane.b32.xlu0 %v638, 20
  %v2040 = vpop.permute.xlu0 %2039
  %2041 = vrot.lane.b32.xlu0 %v639, 20
  %v2042 = vpop.permute.xlu0 %2041
  %2043 = vrot.lane.b32.xlu0 %v640, 20
  %v2044 = vpop.permute.xlu0 %2043
  %2045 = vrot.lane.b32.xlu0 %v641, 20
  %v2046 = vpop.permute.xlu0 %2045
  %2047 = vrot.lane.b32.xlu0 %v642, 20
  %v2048 = vpop.permute.xlu0 %2047
  %2049 = vrot.lane.b32.xlu0 %v643, 20
  %v2050 = vpop.permute.xlu0 %2049
  %2051 = vrot.lane.b32.xlu0 %v644, 20
  %v2052 = vpop.permute.xlu0 %2051
  %2053 = vrot.lane.b32.xlu0 %v645, 20
  %v2054 = vpop.permute.xlu0 %2053
  %2183 = vrot.lane.b32.xlu0 %v647, 24
  %v2184 = vpop.permute.xlu0 %2183
  %2185 = vrot.lane.b32.xlu0 %v648, 24
  %v2186 = vpop.permute.xlu0 %2185
  %2187 = vrot.lane.b32.xlu0 %v649, 24
  %v2188 = vpop.permute.xlu0 %2187
  %2189 = vrot.lane.b32.xlu0 %v650, 24
  %v2190 = vpop.permute.xlu0 %2189
  %2191 = vrot.lane.b32.xlu0 %v651, 24
  %v2192 = vpop.permute.xlu0 %2191
  %2193 = vrot.lane.b32.xlu0 %v652, 24
  %v2194 = vpop.permute.xlu0 %2193
  %2195 = vrot.lane.b32.xlu0 %v653, 24
  %v2196 = vpop.permute.xlu0 %2195
  %2197 = vrot.lane.b32.xlu0 %v654, 24
  %v2198 = vpop.permute.xlu0 %2197
  %2199 = vrot.lane.b32.xlu0 %v655, 24
  %v2200 = vpop.permute.xlu0 %2199
  %2201 = vrot.lane.b32.xlu0 %v656, 24
  %v2202 = vpop.permute.xlu0 %2201
  %2203 = vrot.lane.b32.xlu0 %v657, 24
  %v2204 = vpop.permute.xlu0 %2203
  %2205 = vrot.lane.b32.xlu0 %v658, 24
  %v2206 = vpop.permute.xlu0 %2205
  %2207 = vrot.lane.b32.xlu0 %v659, 24
  %v2208 = vpop.permute.xlu0 %2207
  %2209 = vrot.lane.b32.xlu0 %v660, 24
  %v2210 = vpop.permute.xlu0 %2209
  %2211 = vrot.lane.b32.xlu0 %v661, 24
  %v2212 = vpop.permute.xlu0 %2211
  %2213 = vrot.lane.b32.xlu0 %v662, 24
  %v2214 = vpop.permute.xlu0 %2213
  %2215 = vrot.lane.b32.xlu0 %v663, 24
  %v2216 = vpop.permute.xlu0 %2215
  %2217 = vrot.lane.b32.xlu0 %v664, 24
  %v2218 = vpop.permute.xlu0 %2217
  %2219 = vrot.lane.b32.xlu0 %v665, 24
  %v2220 = vpop.permute.xlu0 %2219
  %2221 = vrot.lane.b32.xlu0 %v666, 24
  %v2222 = vpop.permute.xlu0 %2221
  %2223 = vrot.lane.b32.xlu0 %v667, 24
  %v2224 = vpop.permute.xlu0 %2223
  %2225 = vrot.lane.b32.xlu0 %v668, 24
  %v2226 = vpop.permute.xlu0 %2225
  %2227 = vrot.lane.b32.xlu0 %v669, 24
  %v2228 = vpop.permute.xlu0 %2227
  %2229 = vrot.lane.b32.xlu0 %v670, 24
  %v2230 = vpop.permute.xlu0 %2229
  %2231 = vrot.lane.b32.xlu0 %v671, 24
  %v2232 = vpop.permute.xlu0 %2231
  %2233 = vrot.lane.b32.xlu0 %v672, 24
  %v2234 = vpop.permute.xlu0 %2233
  %2235 = vrot.lane.b32.xlu0 %v673, 24
  %v2236 = vpop.permute.xlu0 %2235
  %2237 = vrot.lane.b32.xlu0 %v674, 24
  %v2238 = vpop.permute.xlu0 %2237
  %2239 = vrot.lane.b32.xlu0 %v675, 24
  %v2240 = vpop.permute.xlu0 %2239
  %2241 = vrot.lane.b32.xlu0 %v676, 24
  %v2242 = vpop.permute.xlu0 %2241
  %2243 = vrot.lane.b32.xlu0 %v677, 24
  %v2244 = vpop.permute.xlu0 %2243
  %2245 = vrot.lane.b32.xlu0 %v678, 24
  %v2246 = vpop.permute.xlu0 %2245
  %2247 = vrot.lane.b32.xlu0 %v679, 24
  %v2248 = vpop.permute.xlu0 %2247
  %2249 = vrot.lane.b32.xlu0 %v680, 24
  %v2250 = vpop.permute.xlu0 %2249
  %2251 = vrot.lane.b32.xlu0 %v681, 24
  %v2252 = vpop.permute.xlu0 %2251
  %2253 = vrot.lane.b32.xlu0 %v682, 24
  %v2254 = vpop.permute.xlu0 %2253
  %2255 = vrot.lane.b32.xlu0 %v683, 24
  %v2256 = vpop.permute.xlu0 %2255
  %2257 = vrot.lane.b32.xlu0 %v684, 24
  %v2258 = vpop.permute.xlu0 %2257
  %2259 = vrot.lane.b32.xlu0 %v685, 24
  %v2260 = vpop.permute.xlu0 %2259
  %2261 = vrot.lane.b32.xlu0 %v686, 24
  %v2262 = vpop.permute.xlu0 %2261
  %2263 = vrot.lane.b32.xlu0 %v687, 24
  %v2264 = vpop.permute.xlu0 %2263
  %2265 = vrot.lane.b32.xlu0 %v688, 24
  %v2266 = vpop.permute.xlu0 %2265
  %2267 = vrot.lane.b32.xlu0 %v689, 24
  %v2268 = vpop.permute.xlu0 %2267
  %2269 = vrot.lane.b32.xlu0 %v690, 24
  %v2270 = vpop.permute.xlu0 %2269
  %2271 = vrot.lane.b32.xlu0 %v691, 24
  %v2272 = vpop.permute.xlu0 %2271
  %2273 = vrot.lane.b32.xlu0 %v692, 24
  %v2274 = vpop.permute.xlu0 %2273
  %2275 = vrot.lane.b32.xlu0 %v693, 24
  %v2276 = vpop.permute.xlu0 %2275
  %2277 = vrot.lane.b32.xlu0 %v694, 24
  %v2278 = vpop.permute.xlu0 %2277
  %2279 = vrot.lane.b32.xlu0 %v695, 24
  %v2280 = vpop.permute.xlu0 %2279
  %2281 = vrot.lane.b32.xlu0 %v696, 24
  %v2282 = vpop.permute.xlu0 %2281
  %2283 = vrot.lane.b32.xlu0 %v697, 24
  %v2284 = vpop.permute.xlu0 %2283
  %2285 = vrot.lane.b32.xlu0 %v698, 24
  %v2286 = vpop.permute.xlu0 %2285
  %2287 = vrot.lane.b32.xlu0 %v699, 24
  %v2288 = vpop.permute.xlu0 %2287
  %2289 = vrot.lane.b32.xlu0 %v700, 24
  %v2290 = vpop.permute.xlu0 %2289
  %2291 = vrot.lane.b32.xlu0 %v701, 24
  %v2292 = vpop.permute.xlu0 %2291
  %2293 = vrot.lane.b32.xlu0 %v702, 24
  %v2294 = vpop.permute.xlu0 %2293
  %2295 = vrot.lane.b32.xlu0 %v703, 24
  %v2296 = vpop.permute.xlu0 %2295
  %2297 = vrot.lane.b32.xlu0 %v704, 24
  %v2298 = vpop.permute.xlu0 %2297
  %2299 = vrot.lane.b32.xlu0 %v705, 24
  %v2300 = vpop.permute.xlu0 %2299
  %2301 = vrot.lane.b32.xlu0 %v706, 24
  %v2302 = vpop.permute.xlu0 %2301
  %2303 = vrot.lane.b32.xlu0 %v707, 24
  %v2304 = vpop.permute.xlu0 %2303
  %2305 = vrot.lane.b32.xlu0 %v708, 24
  %v2306 = vpop.permute.xlu0 %2305
  %2307 = vrot.lane.b32.xlu0 %v709, 24
  %v2308 = vpop.permute.xlu0 %2307
  %2309 = vrot.lane.b32.xlu0 %v710, 24
  %v2310 = vpop.permute.xlu0 %2309
  %2439 = vrot.lane.b32.xlu0 %v711, 28
  %v2440 = vpop.permute.xlu0 %2439
  %2441 = vrot.lane.b32.xlu0 %v712, 28
  %v2442 = vpop.permute.xlu0 %2441
  %2443 = vrot.lane.b32.xlu0 %v713, 28
  %v2444 = vpop.permute.xlu0 %2443
  %2445 = vrot.lane.b32.xlu0 %v714, 28
  %v2446 = vpop.permute.xlu0 %2445
  %2447 = vrot.lane.b32.xlu0 %v715, 28
  %v2448 = vpop.permute.xlu0 %2447
  %2449 = vrot.lane.b32.xlu0 %v716, 28
  %v2450 = vpop.permute.xlu0 %2449
  %2451 = vrot.lane.b32.xlu0 %v717, 28
  %v2452 = vpop.permute.xlu0 %2451
  %2453 = vrot.lane.b32.xlu0 %v718, 28
  %v2454 = vpop.permute.xlu0 %2453
  %2455 = vrot.lane.b32.xlu0 %v719, 28
  %v2456 = vpop.permute.xlu0 %2455
  %2457 = vrot.lane.b32.xlu0 %v720, 28
  %v2458 = vpop.permute.xlu0 %2457
  %2459 = vrot.lane.b32.xlu0 %v721, 28
  %v2460 = vpop.permute.xlu0 %2459
  %2461 = vrot.lane.b32.xlu0 %v722, 28
  %v2462 = vpop.permute.xlu0 %2461
  %2463 = vrot.lane.b32.xlu0 %v723, 28
  %v2464 = vpop.permute.xlu0 %2463
  %2465 = vrot.lane.b32.xlu0 %v724, 28
  %v2466 = vpop.permute.xlu0 %2465
  %2467 = vrot.lane.b32.xlu0 %v725, 28
  %v2468 = vpop.permute.xlu0 %2467
  %2469 = vrot.lane.b32.xlu0 %v726, 28
  %v2470 = vpop.permute.xlu0 %2469
  %2471 = vrot.lane.b32.xlu0 %v727, 28
  %v2472 = vpop.permute.xlu0 %2471
  %2473 = vrot.lane.b32.xlu0 %v728, 28
  %v2474 = vpop.permute.xlu0 %2473
  %2475 = vrot.lane.b32.xlu0 %v729, 28
  %v2476 = vpop.permute.xlu0 %2475
  %2477 = vrot.lane.b32.xlu0 %v730, 28
  %v2478 = vpop.permute.xlu0 %2477
  %2479 = vrot.lane.b32.xlu0 %v731, 28
  %v2480 = vpop.permute.xlu0 %2479
  %2481 = vrot.lane.b32.xlu0 %v732, 28
  %v2482 = vpop.permute.xlu0 %2481
  %2483 = vrot.lane.b32.xlu0 %v733, 28
  %v2484 = vpop.permute.xlu0 %2483
  %2485 = vrot.lane.b32.xlu0 %v734, 28
  %v2486 = vpop.permute.xlu0 %2485
  %2487 = vrot.lane.b32.xlu0 %v735, 28
  %v2488 = vpop.permute.xlu0 %2487
  %2489 = vrot.lane.b32.xlu0 %v736, 28
  %v2490 = vpop.permute.xlu0 %2489
  %2491 = vrot.lane.b32.xlu0 %v737, 28
  %v2492 = vpop.permute.xlu0 %2491
  %2493 = vrot.lane.b32.xlu0 %v738, 28
  %v2494 = vpop.permute.xlu0 %2493
  %2495 = vrot.lane.b32.xlu0 %v739, 28
  %v2496 = vpop.permute.xlu0 %2495
  %2497 = vrot.lane.b32.xlu0 %v740, 28
  %v2498 = vpop.permute.xlu0 %2497
  %2499 = vrot.lane.b32.xlu0 %v741, 28
  %v2500 = vpop.permute.xlu0 %2499
  %2501 = vrot.lane.b32.xlu0 %v742, 28
  %v2502 = vpop.permute.xlu0 %2501
  %2503 = vrot.lane.b32.xlu0 %v743, 28
  %v2504 = vpop.permute.xlu0 %2503
  %2505 = vrot.lane.b32.xlu0 %v744, 28
  %v2506 = vpop.permute.xlu0 %2505
  %2507 = vrot.lane.b32.xlu0 %v745, 28
  %v2508 = vpop.permute.xlu0 %2507
  %2509 = vrot.lane.b32.xlu0 %v746, 28
  %v2510 = vpop.permute.xlu0 %2509
  %2511 = vrot.lane.b32.xlu0 %v747, 28
  %v2512 = vpop.permute.xlu0 %2511
  %2513 = vrot.lane.b32.xlu0 %v748, 28
  %v2514 = vpop.permute.xlu0 %2513
  %2515 = vrot.lane.b32.xlu0 %v749, 28
  %v2516 = vpop.permute.xlu0 %2515
  %2517 = vrot.lane.b32.xlu0 %v750, 28
  %v2518 = vpop.permute.xlu0 %2517
  %2519 = vrot.lane.b32.xlu0 %v751, 28
  %v2520 = vpop.permute.xlu0 %2519
  %2521 = vrot.lane.b32.xlu0 %v752, 28
  %v2522 = vpop.permute.xlu0 %2521
  %2523 = vrot.lane.b32.xlu0 %v753, 28
  %v2524 = vpop.permute.xlu0 %2523
  %2525 = vrot.lane.b32.xlu0 %v754, 28
  %v2526 = vpop.permute.xlu0 %2525
  %2527 = vrot.lane.b32.xlu0 %v755, 28
  %v2528 = vpop.permute.xlu0 %2527
  %2529 = vrot.lane.b32.xlu0 %v756, 28
  %v2530 = vpop.permute.xlu0 %2529
  %2531 = vrot.lane.b32.xlu0 %v757, 28
  %v2532 = vpop.permute.xlu0 %2531
  %2533 = vrot.lane.b32.xlu0 %v758, 28
  %v2534 = vpop.permute.xlu0 %2533
  %2535 = vrot.lane.b32.xlu0 %v759, 28
  %v2536 = vpop.permute.xlu0 %2535
  %2537 = vrot.lane.b32.xlu0 %v760, 28
  %v2538 = vpop.permute.xlu0 %2537
  %2539 = vrot.lane.b32.xlu0 %v761, 28
  %v2540 = vpop.permute.xlu0 %2539
  %2541 = vrot.lane.b32.xlu0 %v762, 28
  %v2542 = vpop.permute.xlu0 %2541
  %2543 = vrot.lane.b32.xlu0 %v763, 28
  %v2544 = vpop.permute.xlu0 %2543
  %2545 = vrot.lane.b32.xlu0 %v764, 28
  %v2546 = vpop.permute.xlu0 %2545
  %2547 = vrot.lane.b32.xlu0 %v765, 28
  %v2548 = vpop.permute.xlu0 %2547
  %2549 = vrot.lane.b32.xlu0 %v766, 28
  %v2550 = vpop.permute.xlu0 %2549
  %2551 = vrot.lane.b32.xlu0 %v767, 28
  %v2552 = vpop.permute.xlu0 %2551
  %2553 = vrot.lane.b32.xlu0 %v768, 28
  %v2554 = vpop.permute.xlu0 %2553
  %2555 = vrot.lane.b32.xlu0 %v769, 28
  %v2556 = vpop.permute.xlu0 %2555
  %2557 = vrot.lane.b32.xlu0 %v770, 28
  %v2558 = vpop.permute.xlu0 %2557
  %2559 = vrot.lane.b32.xlu0 %v771, 28
  %v2560 = vpop.permute.xlu0 %2559
  %2561 = vrot.lane.b32.xlu0 %v772, 28
  %v2562 = vpop.permute.xlu0 %2561
  %2563 = vrot.lane.b32.xlu0 %v773, 28
  %v2564 = vpop.permute.xlu0 %2563
  %2565 = vrot.lane.b32.xlu0 %v774, 28
  %v2566 = vpop.permute.xlu0 %2565
  %2695 = vrot.lane.b32.xlu0 %v775, 32
  %v2696 = vpop.permute.xlu0 %2695
  %2697 = vrot.lane.b32.xlu0 %v776, 32
  %v2698 = vpop.permute.xlu0 %2697
  %2699 = vrot.lane.b32.xlu0 %v777, 32
  %v2700 = vpop.permute.xlu0 %2699
  %2701 = vrot.lane.b32.xlu0 %v778, 32
  %v2702 = vpop.permute.xlu0 %2701
  %2703 = vrot.lane.b32.xlu0 %v779, 32
  %v2704 = vpop.permute.xlu0 %2703
  %2705 = vrot.lane.b32.xlu0 %v780, 32
  %v2706 = vpop.permute.xlu0 %2705
  %2707 = vrot.lane.b32.xlu0 %v781, 32
  %v2708 = vpop.permute.xlu0 %2707
  %2709 = vrot.lane.b32.xlu0 %v782, 32
  %v2710 = vpop.permute.xlu0 %2709
  %2711 = vrot.lane.b32.xlu0 %v783, 32
  %v2712 = vpop.permute.xlu0 %2711
  %2713 = vrot.lane.b32.xlu0 %v784, 32
  %v2714 = vpop.permute.xlu0 %2713
  %2715 = vrot.lane.b32.xlu0 %v785, 32
  %v2716 = vpop.permute.xlu0 %2715
  %2717 = vrot.lane.b32.xlu0 %v786, 32
  %v2718 = vpop.permute.xlu0 %2717
  %2719 = vrot.lane.b32.xlu0 %v787, 32
  %v2720 = vpop.permute.xlu0 %2719
  %2721 = vrot.lane.b32.xlu0 %v788, 32
  %v2722 = vpop.permute.xlu0 %2721
  %2723 = vrot.lane.b32.xlu0 %v789, 32
  %v2724 = vpop.permute.xlu0 %2723
  %2725 = vrot.lane.b32.xlu0 %v790, 32
  %v2726 = vpop.permute.xlu0 %2725
  %2727 = vrot.lane.b32.xlu0 %v791, 32
  %v2728 = vpop.permute.xlu0 %2727
  %2729 = vrot.lane.b32.xlu0 %v792, 32
  %v2730 = vpop.permute.xlu0 %2729
  %2731 = vrot.lane.b32.xlu0 %v793, 32
  %v2732 = vpop.permute.xlu0 %2731
  %2733 = vrot.lane.b32.xlu0 %v794, 32
  %v2734 = vpop.permute.xlu0 %2733
  %2735 = vrot.lane.b32.xlu0 %v795, 32
  %v2736 = vpop.permute.xlu0 %2735
  %2737 = vrot.lane.b32.xlu0 %v796, 32
  %v2738 = vpop.permute.xlu0 %2737
  %2739 = vrot.lane.b32.xlu0 %v797, 32
  %v2740 = vpop.permute.xlu0 %2739
  %2741 = vrot.lane.b32.xlu0 %v798, 32
  %v2742 = vpop.permute.xlu0 %2741
  %2743 = vrot.lane.b32.xlu0 %v799, 32
  %v2744 = vpop.permute.xlu0 %2743
  %2745 = vrot.lane.b32.xlu0 %v800, 32
  %v2746 = vpop.permute.xlu0 %2745
  %2747 = vrot.lane.b32.xlu0 %v801, 32
  %v2748 = vpop.permute.xlu0 %2747
  %2749 = vrot.lane.b32.xlu0 %v802, 32
  %v2750 = vpop.permute.xlu0 %2749
  %2751 = vrot.lane.b32.xlu0 %v803, 32
  %v2752 = vpop.permute.xlu0 %2751
  %2753 = vrot.lane.b32.xlu0 %v804, 32
  %v2754 = vpop.permute.xlu0 %2753
  %2755 = vrot.lane.b32.xlu0 %v805, 32
  %v2756 = vpop.permute.xlu0 %2755
  %2757 = vrot.lane.b32.xlu0 %v806, 32
  %v2758 = vpop.permute.xlu0 %2757
  %2759 = vrot.lane.b32.xlu0 %v807, 32
  %v2760 = vpop.permute.xlu0 %2759
  %2761 = vrot.lane.b32.xlu0 %v808, 32
  %v2762 = vpop.permute.xlu0 %2761
  %2763 = vrot.lane.b32.xlu0 %v809, 32
  %v2764 = vpop.permute.xlu0 %2763
  %2765 = vrot.lane.b32.xlu0 %v810, 32
  %v2766 = vpop.permute.xlu0 %2765
  %2767 = vrot.lane.b32.xlu0 %v811, 32
  %v2768 = vpop.permute.xlu0 %2767
  %2769 = vrot.lane.b32.xlu0 %v812, 32
  %v2770 = vpop.permute.xlu0 %2769
  %2771 = vrot.lane.b32.xlu0 %v813, 32
  %v2772 = vpop.permute.xlu0 %2771
  %2773 = vrot.lane.b32.xlu0 %v814, 32
  %v2774 = vpop.permute.xlu0 %2773
  %2775 = vrot.lane.b32.xlu0 %v815, 32
  %v2776 = vpop.permute.xlu0 %2775
  %2777 = vrot.lane.b32.xlu0 %v816, 32
  %v2778 = vpop.permute.xlu0 %2777
  %2779 = vrot.lane.b32.xlu0 %v817, 32
  %v2780 = vpop.permute.xlu0 %2779
  %2781 = vrot.lane.b32.xlu0 %v818, 32
  %v2782 = vpop.permute.xlu0 %2781
  %2783 = vrot.lane.b32.xlu0 %v819, 32
  %v2784 = vpop.permute.xlu0 %2783
  %2785 = vrot.lane.b32.xlu0 %v820, 32
  %v2786 = vpop.permute.xlu0 %2785
  %2787 = vrot.lane.b32.xlu0 %v821, 32
  %v2788 = vpop.permute.xlu0 %2787
  %2789 = vrot.lane.b32.xlu0 %v822, 32
  %v2790 = vpop.permute.xlu0 %2789
  %2791 = vrot.lane.b32.xlu0 %v823, 32
  %v2792 = vpop.permute.xlu0 %2791
  %2793 = vrot.lane.b32.xlu0 %v824, 32
  %v2794 = vpop.permute.xlu0 %2793
  %2795 = vrot.lane.b32.xlu0 %v825, 32
  %v2796 = vpop.permute.xlu0 %2795
  %2797 = vrot.lane.b32.xlu0 %v826, 32
  %v2798 = vpop.permute.xlu0 %2797
  %2799 = vrot.lane.b32.xlu0 %v827, 32
  %v2800 = vpop.permute.xlu0 %2799
  %2801 = vrot.lane.b32.xlu0 %v828, 32
  %v2802 = vpop.permute.xlu0 %2801
  %2803 = vrot.lane.b32.xlu0 %v829, 32
  %v2804 = vpop.permute.xlu0 %2803
  %2805 = vrot.lane.b32.xlu0 %v830, 32
  %v2806 = vpop.permute.xlu0 %2805
  %2807 = vrot.lane.b32.xlu0 %v831, 32
  %v2808 = vpop.permute.xlu0 %2807
  %2809 = vrot.lane.b32.xlu0 %v832, 32
  %v2810 = vpop.permute.xlu0 %2809
  %2811 = vrot.lane.b32.xlu0 %v833, 32
  %v2812 = vpop.permute.xlu0 %2811
  %2813 = vrot.lane.b32.xlu0 %v834, 32
  %v2814 = vpop.permute.xlu0 %2813
  %2815 = vrot.lane.b32.xlu0 %v835, 32
  %v2816 = vpop.permute.xlu0 %2815
  %2817 = vrot.lane.b32.xlu0 %v836, 32
  %v2818 = vpop.permute.xlu0 %2817
  %2819 = vrot.lane.b32.xlu0 %v837, 32
  %v2820 = vpop.permute.xlu0 %2819
  %2821 = vrot.lane.b32.xlu0 %v838, 32
  %v2822 = vpop.permute.xlu0 %2821
  %v2887 = vsel %vm45, %v262, %v904
  %v2888 = vsel %vm45, %v263, %v906
  %v2889 = vsel %vm45, %v264, %v908
  %v2890 = vsel %vm45, %v265, %v910
  %v2891 = vsel %vm45, %v266, %v912
  %v2892 = vsel %vm45, %v267, %v914
  %v2893 = vsel %vm45, %v268, %v916
  %v2894 = vsel %vm45, %v269, %v918
  %v2895 = vsel %vm45, %v270, %v920
  %v2896 = vsel %vm45, %v271, %v922
  %v2897 = vsel %vm45, %v272, %v924
  %v2898 = vsel %vm45, %v273, %v926
  %v2899 = vsel %vm45, %v274, %v928
  %v2900 = vsel %vm45, %v275, %v930
  %v2901 = vsel %vm45, %v276, %v932
  %v2902 = vsel %vm45, %v277, %v934
  %v2903 = vsel %vm45, %v278, %v936
  %v2904 = vsel %vm45, %v279, %v938
  %v2905 = vsel %vm45, %v280, %v940
  %v2906 = vsel %vm45, %v281, %v942
  %v2907 = vsel %vm45, %v282, %v944
  %v2908 = vsel %vm45, %v283, %v946
  %v2909 = vsel %vm45, %v284, %v948
  %v2910 = vsel %vm45, %v285, %v950
  %v2911 = vsel %vm45, %v286, %v952
  %v2912 = vsel %vm45, %v287, %v954
  %v2913 = vsel %vm45, %v288, %v956
  %v2914 = vsel %vm45, %v289, %v958
  %v2915 = vsel %vm45, %v290, %v960
  %v2916 = vsel %vm45, %v291, %v962
  %v2917 = vsel %vm45, %v292, %v964
  %v2918 = vsel %vm45, %v293, %v966
  %v2919 = vsel %vm45, %v294, %v968
  %v2920 = vsel %vm45, %v295, %v970
  %v2921 = vsel %vm45, %v296, %v972
  %v2922 = vsel %vm45, %v297, %v974
  %v2923 = vsel %vm45, %v298, %v976
  %v2924 = vsel %vm45, %v299, %v978
  %v2925 = vsel %vm45, %v300, %v980
  %v2926 = vsel %vm45, %v301, %v982
  %v2927 = vsel %vm45, %v302, %v984
  %v2928 = vsel %vm45, %v303, %v986
  %v2929 = vsel %vm45, %v304, %v988
  %v2930 = vsel %vm45, %v305, %v990
  %v2931 = vsel %vm45, %v306, %v992
  %v2932 = vsel %vm45, %v307, %v994
  %v2933 = vsel %vm45, %v308, %v996
  %v2934 = vsel %vm45, %v309, %v998
  %v2935 = vsel %vm45, %v310, %v1000
  %v2936 = vsel %vm45, %v311, %v1002
  %v2937 = vsel %vm45, %v312, %v1004
  %v2938 = vsel %vm45, %v313, %v1006
  %v2939 = vsel %vm45, %v314, %v1008
  %v2940 = vsel %vm45, %v315, %v1010
  %v2941 = vsel %vm45, %v316, %v1012
  %v2942 = vsel %vm45, %v317, %v1014
  %v2943 = vsel %vm45, %v318, %v1016
  %v2944 = vsel %vm45, %v319, %v1018
  %v2945 = vsel %vm45, %v320, %v1020
  %v2946 = vsel %vm45, %v321, %v1022
  %v2947 = vsel %vm45, %v322, %v1024
  %v2948 = vsel %vm45, %v323, %v1026
  %v2949 = vsel %vm45, %v324, %v1028
  %v2950 = vsel %vm45, %v325, %v1030
  %vm2951 = vcmask 64512
  %v2952 = vsel %vm2951, %v2887, %v1160
  %v2953 = vsel %vm2951, %v2888, %v1162
  %v2954 = vsel %vm2951, %v2889, %v1164
  %v2955 = vsel %vm2951, %v2890, %v1166
  %v2956 = vsel %vm2951, %v2891, %v1168
  %v2957 = vsel %vm2951, %v2892, %v1170
  %v2958 = vsel %vm2951, %v2893, %v1172
  %v2959 = vsel %vm2951, %v2894, %v1174
  %v2960 = vsel %vm2951, %v2895, %v1176
  %v2961 = vsel %vm2951, %v2896, %v1178
  %v2962 = vsel %vm2951, %v2897, %v1180
  %v2963 = vsel %vm2951, %v2898, %v1182
  %v2964 = vsel %vm2951, %v2899, %v1184
  %v2965 = vsel %vm2951, %v2900, %v1186
  %v2966 = vsel %vm2951, %v2901, %v1188
  %v2967 = vsel %vm2951, %v2902, %v1190
  %v2968 = vsel %vm2951, %v2903, %v1192
  %v2969 = vsel %vm2951, %v2904, %v1194
  %v2970 = vsel %vm2951, %v2905, %v1196
  %v2971 = vsel %vm2951, %v2906, %v1198
  %v2972 = vsel %vm2951, %v2907, %v1200
  %v2973 = vsel %vm2951, %v2908, %v1202
  %v2974 = vsel %vm2951, %v2909, %v1204
  %v2975 = vsel %vm2951, %v2910, %v1206
  %v2976 = vsel %vm2951, %v2911, %v1208
  %v2977 = vsel %vm2951, %v2912, %v1210
  %v2978 = vsel %vm2951, %v2913, %v1212
  %v2979 = vsel %vm2951, %v2914, %v1214
  %v2980 = vsel %vm2951, %v2915, %v1216
  %v2981 = vsel %vm2951, %v2916, %v1218
  %v2982 = vsel %vm2951, %v2917, %v1220
  %v2983 = vsel %vm2951, %v2918, %v1222
  %v2984 = vsel %vm2951, %v2919, %v1224
  %v2985 = vsel %vm2951, %v2920, %v1226
  %v2986 = vsel %vm2951, %v2921, %v1228
  %v2987 = vsel %vm2951, %v2922, %v1230
  %v2988 = vsel %vm2951, %v2923, %v1232
  %v2989 = vsel %vm2951, %v2924, %v1234
  %v2990 = vsel %vm2951, %v2925, %v1236
  %v2991 = vsel %vm2951, %v2926, %v1238
  %v2992 = vsel %vm2951, %v2927, %v1240
  %v2993 = vsel %vm2951, %v2928, %v1242
  %v2994 = vsel %vm2951, %v2929, %v1244
  %v2995 = vsel %vm2951, %v2930, %v1246
  %v2996 = vsel %vm2951, %v2931, %v1248
  %v2997 = vsel %vm2951, %v2932, %v1250
  %v2998 = vsel %vm2951, %v2933, %v1252
  %v2999 = vsel %vm2951, %v2934, %v1254
  %v3000 = vsel %vm2951, %v2935, %v1256
  %v3001 = vsel %vm2951, %v2936, %v1258
  %v3002 = vsel %vm2951, %v2937, %v1260
  %v3003 = vsel %vm2951, %v2938, %v1262
  %v3004 = vsel %vm2951, %v2939, %v1264
  %v3005 = vsel %vm2951, %v2940, %v1266
  %v3006 = vsel %vm2951, %v2941, %v1268
  %v3007 = vsel %vm2951, %v2942, %v1270
  %v3008 = vsel %vm2951, %v2943, %v1272
  %v3009 = vsel %vm2951, %v2944, %v1274
  %v3010 = vsel %vm2951, %v2945, %v1276
  %v3011 = vsel %vm2951, %v2946, %v1278
  %v3012 = vsel %vm2951, %v2947, %v1280
  %v3013 = vsel %vm2951, %v2948, %v1282
  %v3014 = vsel %vm2951, %v2949, %v1284
  %v3015 = vsel %vm2951, %v2950, %v1286
  %vm3016 = vcmask 97280
  %v3017 = vsel %vm3016, %v2952, %v1416
  %v3018 = vsel %vm3016, %v2953, %v1418
  %v3019 = vsel %vm3016, %v2954, %v1420
  %v3020 = vsel %vm3016, %v2955, %v1422
  %v3021 = vsel %vm3016, %v2956, %v1424
  %v3022 = vsel %vm3016, %v2957, %v1426
  %v3023 = vsel %vm3016, %v2958, %v1428
  %v3024 = vsel %vm3016, %v2959, %v1430
  %v3025 = vsel %vm3016, %v2960, %v1432
  %v3026 = vsel %vm3016, %v2961, %v1434
  %v3027 = vsel %vm3016, %v2962, %v1436
  %v3028 = vsel %vm3016, %v2963, %v1438
  %v3029 = vsel %vm3016, %v2964, %v1440
  %v3030 = vsel %vm3016, %v2965, %v1442
  %v3031 = vsel %vm3016, %v2966, %v1444
  %v3032 = vsel %vm3016, %v2967, %v1446
  %v3033 = vsel %vm3016, %v2968, %v1448
  %v3034 = vsel %vm3016, %v2969, %v1450
  %v3035 = vsel %vm3016, %v2970, %v1452
  %v3036 = vsel %vm3016, %v2971, %v1454
  %v3037 = vsel %vm3016, %v2972, %v1456
  %v3038 = vsel %vm3016, %v2973, %v1458
  %v3039 = vsel %vm3016, %v2974, %v1460
  %v3040 = vsel %vm3016, %v2975, %v1462
  %v3041 = vsel %vm3016, %v2976, %v1464
  %v3042 = vsel %vm3016, %v2977, %v1466
  %v3043 = vsel %vm3016, %v2978, %v1468
  %v3044 = vsel %vm3016, %v2979, %v1470
  %v3045 = vsel %vm3016, %v2980, %v1472
  %v3046 = vsel %vm3016, %v2981, %v1474
  %v3047 = vsel %vm3016, %v2982, %v1476
  %v3048 = vsel %vm3016, %v2983, %v1478
  %v3049 = vsel %vm3016, %v2984, %v1480
  %v3050 = vsel %vm3016, %v2985, %v1482
  %v3051 = vsel %vm3016, %v2986, %v1484
  %v3052 = vsel %vm3016, %v2987, %v1486
  %v3053 = vsel %vm3016, %v2988, %v1488
  %v3054 = vsel %vm3016, %v2989, %v1490
  %v3055 = vsel %vm3016, %v2990, %v1492
  %v3056 = vsel %vm3016, %v2991, %v1494
  %v3057 = vsel %vm3016, %v2992, %v1496
  %v3058 = vsel %vm3016, %v2993, %v1498
  %v3059 = vsel %vm3016, %v2994, %v1500
  %v3060 = vsel %vm3016, %v2995, %v1502
  %v3061 = vsel %vm3016, %v2996, %v1504
  %v3062 = vsel %vm3016, %v2997, %v1506
  %v3063 = vsel %vm3016, %v2998, %v1508
  %v3064 = vsel %vm3016, %v2999, %v1510
  %v3065 = vsel %vm3016, %v3000, %v1512
  %v3066 = vsel %vm3016, %v3001, %v1514
  %v3067 = vsel %vm3016, %v3002, %v1516
  %v3068 = vsel %vm3016, %v3003, %v1518
  %v3069 = vsel %vm3016, %v3004, %v1520
  %v3070 = vsel %vm3016, %v3005, %v1522
  %v3071 = vsel %vm3016, %v3006, %v1524
  %v3072 = vsel %vm3016, %v3007, %v1526
  %v3073 = vsel %vm3016, %v3008, %v1528
  %v3074 = vsel %vm3016, %v3009, %v1530
  %v3075 = vsel %vm3016, %v3010, %v1532
  %v3076 = vsel %vm3016, %v3011, %v1534
  %v3077 = vsel %vm3016, %v3012, %v1536
  %v3078 = vsel %vm3016, %v3013, %v1538
  %v3079 = vsel %vm3016, %v3014, %v1540
  %v3080 = vsel %vm3016, %v3015, %v1542
  %vm3081 = vcmask 130048
  %v3082 = vsel %vm3081, %v3017, %v1672
  %v3083 = vsel %vm3081, %v3018, %v1674
  %v3084 = vsel %vm3081, %v3019, %v1676
  %v3085 = vsel %vm3081, %v3020, %v1678
  %v3086 = vsel %vm3081, %v3021, %v1680
  %v3087 = vsel %vm3081, %v3022, %v1682
  %v3088 = vsel %vm3081, %v3023, %v1684
  %v3089 = vsel %vm3081, %v3024, %v1686
  %v3090 = vsel %vm3081, %v3025, %v1688
  %v3091 = vsel %vm3081, %v3026, %v1690
  %v3092 = vsel %vm3081, %v3027, %v1692
  %v3093 = vsel %vm3081, %v3028, %v1694
  %v3094 = vsel %vm3081, %v3029, %v1696
  %v3095 = vsel %vm3081, %v3030, %v1698
  %v3096 = vsel %vm3081, %v3031, %v1700
  %v3097 = vsel %vm3081, %v3032, %v1702
  %v3098 = vsel %vm3081, %v3033, %v1704
  %v3099 = vsel %vm3081, %v3034, %v1706
  %v3100 = vsel %vm3081, %v3035, %v1708
  %v3101 = vsel %vm3081, %v3036, %v1710
  %v3102 = vsel %vm3081, %v3037, %v1712
  %v3103 = vsel %vm3081, %v3038, %v1714
  %v3104 = vsel %vm3081, %v3039, %v1716
  %v3105 = vsel %vm3081, %v3040, %v1718
  %v3106 = vsel %vm3081, %v3041, %v1720
  %v3107 = vsel %vm3081, %v3042, %v1722
  %v3108 = vsel %vm3081, %v3043, %v1724
  %v3109 = vsel %vm3081, %v3044, %v1726
  %v3110 = vsel %vm3081, %v3045, %v1728
  %v3111 = vsel %vm3081, %v3046, %v1730
  %v3112 = vsel %vm3081, %v3047, %v1732
  %v3113 = vsel %vm3081, %v3048, %v1734
  %v3114 = vsel %vm3081, %v3049, %v1736
  %v3115 = vsel %vm3081, %v3050, %v1738
  %v3116 = vsel %vm3081, %v3051, %v1740
  %v3117 = vsel %vm3081, %v3052, %v1742
  %v3118 = vsel %vm3081, %v3053, %v1744
  %v3119 = vsel %vm3081, %v3054, %v1746
  %v3120 = vsel %vm3081, %v3055, %v1748
  %v3121 = vsel %vm3081, %v3056, %v1750
  %v3122 = vsel %vm3081, %v3057, %v1752
  %v3123 = vsel %vm3081, %v3058, %v1754
  %v3124 = vsel %vm3081, %v3059, %v1756
  %v3125 = vsel %vm3081, %v3060, %v1758
  %v3126 = vsel %vm3081, %v3061, %v1760
  %v3127 = vsel %vm3081, %v3062, %v1762
  %v3128 = vsel %vm3081, %v3063, %v1764
  %v3129 = vsel %vm3081, %v3064, %v1766
  %v3130 = vsel %vm3081, %v3065, %v1768
  %v3131 = vsel %vm3081, %v3066, %v1770
  %v3132 = vsel %vm3081, %v3067, %v1772
  %v3133 = vsel %vm3081, %v3068, %v1774
  %v3134 = vsel %vm3081, %v3069, %v1776
  %v3135 = vsel %vm3081, %v3070, %v1778
  %v3136 = vsel %vm3081, %v3071, %v1780
  %v3137 = vsel %vm3081, %v3072, %v1782
  %v3138 = vsel %vm3081, %v3073, %v1784
  %v3139 = vsel %vm3081, %v3074, %v1786
  %v3140 = vsel %vm3081, %v3075, %v1788
  %v3141 = vsel %vm3081, %v3076, %v1790
  %v3142 = vsel %vm3081, %v3077, %v1792
  %v3143 = vsel %vm3081, %v3078, %v1794
  %v3144 = vsel %vm3081, %v3079, %v1796
  %v3145 = vsel %vm3081, %v3080, %v1798
  %vm3146 = vcmask 162816
  %v3147 = vsel %vm3146, %v3082, %v1928
  %v3148 = vsel %vm3146, %v3083, %v1930
  %v3149 = vsel %vm3146, %v3084, %v1932
  %v3150 = vsel %vm3146, %v3085, %v1934
  %v3151 = vsel %vm3146, %v3086, %v1936
  %v3152 = vsel %vm3146, %v3087, %v1938
  %v3153 = vsel %vm3146, %v3088, %v1940
  %v3154 = vsel %vm3146, %v3089, %v1942
  %v3155 = vsel %vm3146, %v3090, %v1944
  %v3156 = vsel %vm3146, %v3091, %v1946
  %v3157 = vsel %vm3146, %v3092, %v1948
  %v3158 = vsel %vm3146, %v3093, %v1950
  %v3159 = vsel %vm3146, %v3094, %v1952
  %v3160 = vsel %vm3146, %v3095, %v1954
  %v3161 = vsel %vm3146, %v3096, %v1956
  %v3162 = vsel %vm3146, %v3097, %v1958
  %v3163 = vsel %vm3146, %v3098, %v1960
  %v3164 = vsel %vm3146, %v3099, %v1962
  %v3165 = vsel %vm3146, %v3100, %v1964
  %v3166 = vsel %vm3146, %v3101, %v1966
  %v3167 = vsel %vm3146, %v3102, %v1968
  %v3168 = vsel %vm3146, %v3103, %v1970
  %v3169 = vsel %vm3146, %v3104, %v1972
  %v3170 = vsel %vm3146, %v3105, %v1974
  %v3171 = vsel %vm3146, %v3106, %v1976
  %v3172 = vsel %vm3146, %v3107, %v1978
  %v3173 = vsel %vm3146, %v3108, %v1980
  %v3174 = vsel %vm3146, %v3109, %v1982
  %v3175 = vsel %vm3146, %v3110, %v1984
  %v3176 = vsel %vm3146, %v3111, %v1986
  %v3177 = vsel %vm3146, %v3112, %v1988
  %v3178 = vsel %vm3146, %v3113, %v1990
  %v3179 = vsel %vm3146, %v3114, %v1992
  %v3180 = vsel %vm3146, %v3115, %v1994
  %v3181 = vsel %vm3146, %v3116, %v1996
  %v3182 = vsel %vm3146, %v3117, %v1998
  %v3183 = vsel %vm3146, %v3118, %v2000
  %v3184 = vsel %vm3146, %v3119, %v2002
  %v3185 = vsel %vm3146, %v3120, %v2004
  %v3186 = vsel %vm3146, %v3121, %v2006
  %v3187 = vsel %vm3146, %v3122, %v2008
  %v3188 = vsel %vm3146, %v3123, %v2010
  %v3189 = vsel %vm3146, %v3124, %v2012
  %v3190 = vsel %vm3146, %v3125, %v2014
  %v3191 = vsel %vm3146, %v3126, %v2016
  %v3192 = vsel %vm3146, %v3127, %v2018
  %v3193 = vsel %vm3146, %v3128, %v2020
  %v3194 = vsel %vm3146, %v3129, %v2022
  %v3195 = vsel %vm3146, %v3130, %v2024
  %v3196 = vsel %vm3146, %v3131, %v2026
  %v3197 = vsel %vm3146, %v3132, %v2028
  %v3198 = vsel %vm3146, %v3133, %v2030
  %v3199 = vsel %vm3146, %v3134, %v2032
  %v3200 = vsel %vm3146, %v3135, %v2034
  %v3201 = vsel %vm3146, %v3136, %v2036
  %v3202 = vsel %vm3146, %v3137, %v2038
  %v3203 = vsel %vm3146, %v3138, %v2040
  %v3204 = vsel %vm3146, %v3139, %v2042
  %v3205 = vsel %vm3146, %v3140, %v2044
  %v3206 = vsel %vm3146, %v3141, %v2046
  %v3207 = vsel %vm3146, %v3142, %v2048
  %v3208 = vsel %vm3146, %v3143, %v2050
  %v3209 = vsel %vm3146, %v3144, %v2052
  %v3210 = vsel %vm3146, %v3145, %v2054
  %vm3211 = vcmask 195584
  %v3212 = vsel %vm3211, %v3147, %v2184
  %v3213 = vsel %vm3211, %v3148, %v2186
  %v3214 = vsel %vm3211, %v3149, %v2188
  %v3215 = vsel %vm3211, %v3150, %v2190
  %v3216 = vsel %vm3211, %v3151, %v2192
  %v3217 = vsel %vm3211, %v3152, %v2194
  %v3218 = vsel %vm3211, %v3153, %v2196
  %v3219 = vsel %vm3211, %v3154, %v2198
  %v3220 = vsel %vm3211, %v3155, %v2200
  %v3221 = vsel %vm3211, %v3156, %v2202
  %v3222 = vsel %vm3211, %v3157, %v2204
  %v3223 = vsel %vm3211, %v3158, %v2206
  %v3224 = vsel %vm3211, %v3159, %v2208
  %v3225 = vsel %vm3211, %v3160, %v2210
  %v3226 = vsel %vm3211, %v3161, %v2212
  %v3227 = vsel %vm3211, %v3162, %v2214
  %v3228 = vsel %vm3211, %v3163, %v2216
  %v3229 = vsel %vm3211, %v3164, %v2218
  %v3230 = vsel %vm3211, %v3165, %v2220
  %v3231 = vsel %vm3211, %v3166, %v2222
  %v3232 = vsel %vm3211, %v3167, %v2224
  %v3233 = vsel %vm3211, %v3168, %v2226
  %v3234 = vsel %vm3211, %v3169, %v2228
  %v3235 = vsel %vm3211, %v3170, %v2230
  %v3236 = vsel %vm3211, %v3171, %v2232
  %v3237 = vsel %vm3211, %v3172, %v2234
  %v3238 = vsel %vm3211, %v3173, %v2236
  %v3239 = vsel %vm3211, %v3174, %v2238
  %v3240 = vsel %vm3211, %v3175, %v2240
  %v3241 = vsel %vm3211, %v3176, %v2242
  %v3242 = vsel %vm3211, %v3177, %v2244
  %v3243 = vsel %vm3211, %v3178, %v2246
  %v3244 = vsel %vm3211, %v3179, %v2248
  %v3245 = vsel %vm3211, %v3180, %v2250
  %v3246 = vsel %vm3211, %v3181, %v2252
  %v3247 = vsel %vm3211, %v3182, %v2254
  %v3248 = vsel %vm3211, %v3183, %v2256
  %v3249 = vsel %vm3211, %v3184, %v2258
  %v3250 = vsel %vm3211, %v3185, %v2260
  %v3251 = vsel %vm3211, %v3186, %v2262
  %v3252 = vsel %vm3211, %v3187, %v2264
  %v3253 = vsel %vm3211, %v3188, %v2266
  %v3254 = vsel %vm3211, %v3189, %v2268
  %v3255 = vsel %vm3211, %v3190, %v2270
  %v3256 = vsel %vm3211, %v3191, %v2272
  %v3257 = vsel %vm3211, %v3192, %v2274
  %v3258 = vsel %vm3211, %v3193, %v2276
  %v3259 = vsel %vm3211, %v3194, %v2278
  %v3260 = vsel %vm3211, %v3195, %v2280
  %v3261 = vsel %vm3211, %v3196, %v2282
  %v3262 = vsel %vm3211, %v3197, %v2284
  %v3263 = vsel %vm3211, %v3198, %v2286
  %v3264 = vsel %vm3211, %v3199, %v2288
  %v3265 = vsel %vm3211, %v3200, %v2290
  %v3266 = vsel %vm3211, %v3201, %v2292
  %v3267 = vsel %vm3211, %v3202, %v2294
  %v3268 = vsel %vm3211, %v3203, %v2296
  %v3269 = vsel %vm3211, %v3204, %v2298
  %v3270 = vsel %vm3211, %v3205, %v2300
  %v3271 = vsel %vm3211, %v3206, %v2302
  %v3272 = vsel %vm3211, %v3207, %v2304
  %v3273 = vsel %vm3211, %v3208, %v2306
  %v3274 = vsel %vm3211, %v3209, %v2308
  %v3275 = vsel %vm3211, %v3210, %v2310
  %vm3276 = vcmask 228352
  %v3277 = vsel %vm3276, %v3212, %v2440
  %v3278 = vsel %vm3276, %v3213, %v2442
  %v3279 = vsel %vm3276, %v3214, %v2444
  %v3280 = vsel %vm3276, %v3215, %v2446
  %v3281 = vsel %vm3276, %v3216, %v2448
  %v3282 = vsel %vm3276, %v3217, %v2450
  %v3283 = vsel %vm3276, %v3218, %v2452
  %v3284 = vsel %vm3276, %v3219, %v2454
  %v3285 = vsel %vm3276, %v3220, %v2456
  %v3286 = vsel %vm3276, %v3221, %v2458
  %v3287 = vsel %vm3276, %v3222, %v2460
  %v3288 = vsel %vm3276, %v3223, %v2462
  %v3289 = vsel %vm3276, %v3224, %v2464
  %v3290 = vsel %vm3276, %v3225, %v2466
  %v3291 = vsel %vm3276, %v3226, %v2468
  %v3292 = vsel %vm3276, %v3227, %v2470
  %v3293 = vsel %vm3276, %v3228, %v2472
  %v3294 = vsel %vm3276, %v3229, %v2474
  %v3295 = vsel %vm3276, %v3230, %v2476
  %v3296 = vsel %vm3276, %v3231, %v2478
  %v3297 = vsel %vm3276, %v3232, %v2480
  %v3298 = vsel %vm3276, %v3233, %v2482
  %v3299 = vsel %vm3276, %v3234, %v2484
  %v3300 = vsel %vm3276, %v3235, %v2486
  %v3301 = vsel %vm3276, %v3236, %v2488
  %v3302 = vsel %vm3276, %v3237, %v2490
  %v3303 = vsel %vm3276, %v3238, %v2492
  %v3304 = vsel %vm3276, %v3239, %v2494
  %v3305 = vsel %vm3276, %v3240, %v2496
  %v3306 = vsel %vm3276, %v3241, %v2498
  %v3307 = vsel %vm3276, %v3242, %v2500
  %v3308 = vsel %vm3276, %v3243, %v2502
  %v3309 = vsel %vm3276, %v3244, %v2504
  %v3310 = vsel %vm3276, %v3245, %v2506
  %v3311 = vsel %vm3276, %v3246, %v2508
  %v3312 = vsel %vm3276, %v3247, %v2510
  %v3313 = vsel %vm3276, %v3248, %v2512
  %v3314 = vsel %vm3276, %v3249, %v2514
  %v3315 = vsel %vm3276, %v3250, %v2516
  %v3316 = vsel %vm3276, %v3251, %v2518
  %v3317 = vsel %vm3276, %v3252, %v2520
  %v3318 = vsel %vm3276, %v3253, %v2522
  %v3319 = vsel %vm3276, %v3254, %v2524
  %v3320 = vsel %vm3276, %v3255, %v2526
  %v3321 = vsel %vm3276, %v3256, %v2528
  %v3322 = vsel %vm3276, %v3257, %v2530
  %v3323 = vsel %vm3276, %v3258, %v2532
  %v3324 = vsel %vm3276, %v3259, %v2534
  %v3325 = vsel %vm3276, %v3260, %v2536
  %v3326 = vsel %vm3276, %v3261, %v2538
  %v3327 = vsel %vm3276, %v3262, %v2540
  %v3328 = vsel %vm3276, %v3263, %v2542
  %v3329 = vsel %vm3276, %v3264, %v2544
  %v3330 = vsel %vm3276, %v3265, %v2546
  %v3331 = vsel %vm3276, %v3266, %v2548
  %v3332 = vsel %vm3276, %v3267, %v2550
  %v3333 = vsel %vm3276, %v3268, %v2552
  %v3334 = vsel %vm3276, %v3269, %v2554
  %v3335 = vsel %vm3276, %v3270, %v2556
  %v3336 = vsel %vm3276, %v3271, %v2558
  %v3337 = vsel %vm3276, %v3272, %v2560
  %v3338 = vsel %vm3276, %v3273, %v2562
  %v3339 = vsel %vm3276, %v3274, %v2564
  %v3340 = vsel %vm3276, %v3275, %v2566
  %vm3341 = vcmask 261120
  %v3342 = vsel %vm3341, %v3277, %v2696
  %v3343 = vsel %vm3341, %v3278, %v2698
  %v3344 = vsel %vm3341, %v3279, %v2700
  %v3345 = vsel %vm3341, %v3280, %v2702
  %v3346 = vsel %vm3341, %v3281, %v2704
  %v3347 = vsel %vm3341, %v3282, %v2706
  %v3348 = vsel %vm3341, %v3283, %v2708
  %v3349 = vsel %vm3341, %v3284, %v2710
  %v3350 = vsel %vm3341, %v3285, %v2712
  %v3351 = vsel %vm3341, %v3286, %v2714
  %v3352 = vsel %vm3341, %v3287, %v2716
  %v3353 = vsel %vm3341, %v3288, %v2718
  %v3354 = vsel %vm3341, %v3289, %v2720
  %v3355 = vsel %vm3341, %v3290, %v2722
  %v3356 = vsel %vm3341, %v3291, %v2724
  %v3357 = vsel %vm3341, %v3292, %v2726
  %v3358 = vsel %vm3341, %v3293, %v2728
  %v3359 = vsel %vm3341, %v3294, %v2730
  %v3360 = vsel %vm3341, %v3295, %v2732
  %v3361 = vsel %vm3341, %v3296, %v2734
  %v3362 = vsel %vm3341, %v3297, %v2736
  %v3363 = vsel %vm3341, %v3298, %v2738
  %v3364 = vsel %vm3341, %v3299, %v2740
  %v3365 = vsel %vm3341, %v3300, %v2742
  %v3366 = vsel %vm3341, %v3301, %v2744
  %v3367 = vsel %vm3341, %v3302, %v2746
  %v3368 = vsel %vm3341, %v3303, %v2748
  %v3369 = vsel %vm3341, %v3304, %v2750
  %v3370 = vsel %vm3341, %v3305, %v2752
  %v3371 = vsel %vm3341, %v3306, %v2754
  %v3372 = vsel %vm3341, %v3307, %v2756
  %v3373 = vsel %vm3341, %v3308, %v2758
  %v3374 = vsel %vm3341, %v3309, %v2760
  %v3375 = vsel %vm3341, %v3310, %v2762
  %v3376 = vsel %vm3341, %v3311, %v2764
  %v3377 = vsel %vm3341, %v3312, %v2766
  %v3378 = vsel %vm3341, %v3313, %v2768
  %v3379 = vsel %vm3341, %v3314, %v2770
  %v3380 = vsel %vm3341, %v3315, %v2772
  %v3381 = vsel %vm3341, %v3316, %v2774
  %v3382 = vsel %vm3341, %v3317, %v2776
  %v3383 = vsel %vm3341, %v3318, %v2778
  %v3384 = vsel %vm3341, %v3319, %v2780
  %v3385 = vsel %vm3341, %v3320, %v2782
  %v3386 = vsel %vm3341, %v3321, %v2784
  %v3387 = vsel %vm3341, %v3322, %v2786
  %v3388 = vsel %vm3341, %v3323, %v2788
  %v3389 = vsel %vm3341, %v3324, %v2790
  %v3390 = vsel %vm3341, %v3325, %v2792
  %v3391 = vsel %vm3341, %v3326, %v2794
  %v3392 = vsel %vm3341, %v3327, %v2796
  %v3393 = vsel %vm3341, %v3328, %v2798
  %v3394 = vsel %vm3341, %v3329, %v2800
  %v3395 = vsel %vm3341, %v3330, %v2802
  %v3396 = vsel %vm3341, %v3331, %v2804
  %v3397 = vsel %vm3341, %v3332, %v2806
  %v3398 = vsel %vm3341, %v3333, %v2808
  %v3399 = vsel %vm3341, %v3334, %v2810
  %v3400 = vsel %vm3341, %v3335, %v2812
  %v3401 = vsel %vm3341, %v3336, %v2814
  %v3402 = vsel %vm3341, %v3337, %v2816
  %v3403 = vsel %vm3341, %v3338, %v2818
  %v3404 = vsel %vm3341, %v3339, %v2820
  %v3405 = vsel %vm3341, %v3340, %v2822
  %v3406 = vpack.c.bf16 %v3343, %v3342
  %v3407 = vpack.c.bf16 %v3345, %v3344
  %v3408 = vpack.c.bf16 %v3347, %v3346
  %v3409 = vpack.c.bf16 %v3349, %v3348
  %v3410 = vpack.c.bf16 %v3351, %v3350
  %v3411 = vpack.c.bf16 %v3353, %v3352
  %v3412 = vpack.c.bf16 %v3355, %v3354
  %v3413 = vpack.c.bf16 %v3357, %v3356
  %v3414 = vpack.c.bf16 %v3359, %v3358
  %v3415 = vpack.c.bf16 %v3361, %v3360
  %v3416 = vpack.c.bf16 %v3363, %v3362
  %v3417 = vpack.c.bf16 %v3365, %v3364
  %v3418 = vpack.c.bf16 %v3367, %v3366
  %v3419 = vpack.c.bf16 %v3369, %v3368
  %v3420 = vpack.c.bf16 %v3371, %v3370
  %v3421 = vpack.c.bf16 %v3373, %v3372
  %v3422 = vpack.c.bf16 %v3375, %v3374
  %v3423 = vpack.c.bf16 %v3377, %v3376
  %v3424 = vpack.c.bf16 %v3379, %v3378
  %v3425 = vpack.c.bf16 %v3381, %v3380
  %v3426 = vpack.c.bf16 %v3383, %v3382
  %v3427 = vpack.c.bf16 %v3385, %v3384
  %v3428 = vpack.c.bf16 %v3387, %v3386
  %v3429 = vpack.c.bf16 %v3389, %v3388
  %v3430 = vpack.c.bf16 %v3391, %v3390
  %v3431 = vpack.c.bf16 %v3393, %v3392
  %v3432 = vpack.c.bf16 %v3395, %v3394
  %v3433 = vpack.c.bf16 %v3397, %v3396
  %v3434 = vpack.c.bf16 %v3399, %v3398
  %v3435 = vpack.c.bf16 %v3401, %v3400
  %v3436 = vpack.c.bf16 %v3403, %v3402
  %v3437 = vpack.c.bf16 %v3405, %v3404
  %v3438 = vld [vmem:[%s1] sm:$0xf]
  %v3439 = vld [vmem:[%s1 + $0x4] sm:$0xf]
  %v3440 = vld [vmem:[%s1 + $0x8] sm:$0xf]
  %v3441 = vld [vmem:[%s1 + $0xc] sm:$0xf]
  %v3442 = vld [vmem:[%s1 + $0x10] sm:$0x3]
  %v3448 = vunpack.c.l.b16 %v3438
  %v3449 = vunpack.c.l.b16 %v3439
  %v3450 = vunpack.c.l.b16 %v3440
  %v3451 = vunpack.c.l.b16 %v3441
  %v3452 = vunpack.c.l.b16 %v3442
  %v3453 = vpack.c.b16 %v3449, %v3448
  %v3454 = vpack.c.b16 %v3451, %v3450
  %v3455 = vpack.c.b16 %v3452, %v3452
  %vm3458 = vcmask 293888
  %v3460 = vsel %vm3458, %v3406, 0
  %v3463 = vsel %vm3458, %v3407, 0
  %v3466 = vsel %vm3458, %v3408, 0
  %v3469 = vsel %vm3458, %v3409, 0
  %v3472 = vsel %vm3458, %v3410, 0
  %v3475 = vsel %vm3458, %v3411, 0
  %v3478 = vsel %vm3458, %v3412, 0
  %v3481 = vsel %vm3458, %v3413, 0
  %v3484 = vsel %vm3458, %v3414, 0
  %v3487 = vsel %vm3458, %v3415, 0
  %v3490 = vsel %vm3458, %v3416, 0
  %v3493 = vsel %vm3458, %v3417, 0
  %v3496 = vsel %vm3458, %v3418, 0
  %v3499 = vsel %vm3458, %v3419, 0
  %v3502 = vsel %vm3458, %v3420, 0
  %v3505 = vsel %vm3458, %v3421, 0
  %v3508 = vsel %vm3458, %v3422, 0
  %v3511 = vsel %vm3458, %v3423, 0
  %v3514 = vsel %vm3458, %v3424, 0
  %v3517 = vsel %vm3458, %v3425, 0
  %v3520 = vsel %vm3458, %v3426, 0
  %v3523 = vsel %vm3458, %v3427, 0
  %v3526 = vsel %vm3458, %v3428, 0
  %v3529 = vsel %vm3458, %v3429, 0
  %v3532 = vsel %vm3458, %v3430, 0
  %v3535 = vsel %vm3458, %v3431, 0
  %v3538 = vsel %vm3458, %v3432, 0
  %v3541 = vsel %vm3458, %v3433, 0
  %v3544 = vsel %vm3458, %v3434, 0
  %v3547 = vsel %vm3458, %v3435, 0
  %v3550 = vsel %vm3458, %v3436, 0
  %v3553 = vsel %vm3458, %v3437, 0
  %vm3555 = vcmask 1041408
  %v3557 = vsel %vm3555, %v3455, 0
  %3559 = vmatprep.subr.bf16.mxu0 0
  %3560 = vmatpush1.bf16.msra.mxu0 %v3453
  %3561 = vmatprep.subr.bf16.mxu0 0
  %3562 = vmatpush1.bf16.msra.mxu0 %v3454
  %3563 = vmatprep.subr.bf16.mxu0 0
  %3564 = vmatpush1.bf16.msra.mxu0 %v3557
  %3565 = vmatprep.subr.bf16.mxu0 0
  %3566 = vmatpush1.bf16.msra.mxu0 0
  %3567 = vmatprep.subr.bf16.mxu0 0
  %3568 = vmatpush1.bf16.msra.mxu0 0
  %3569 = vmatprep.subr.bf16.mxu0 0
  %3570 = vmatpush1.bf16.msra.mxu0 0
  %3571 = vmatprep.subr.bf16.mxu0 0
  %3572 = vmatpush1.bf16.msra.mxu0 0
  %3573 = vmatprep.subr.bf16.mxu0 0
  %3574 = vmatpush1.bf16.msra.mxu0 0
  %3575 = vmatprep.subr.bf16.mxu0 0
  %3576 = vmatpush1.bf16.msra.mxu0 0
  %3577 = vmatprep.subr.bf16.mxu0 0
  %3578 = vmatpush1.bf16.msra.mxu0 0
  %3579 = vmatprep.subr.bf16.mxu0 0
  %3580 = vmatpush1.bf16.msra.mxu0 0
  %3581 = vmatprep.subr.bf16.mxu0 0
  %3582 = vmatpush1.bf16.msra.mxu0 0
  %3583 = vmatprep.subr.bf16.mxu0 0
  %3584 = vmatpush1.bf16.msra.mxu0 0
  %3585 = vmatprep.subr.bf16.mxu0 0
  %3586 = vmatpush1.bf16.msra.mxu0 0
  %3587 = vmatprep.subr.bf16.mxu0 0
  %3588 = vmatpush1.bf16.msra.mxu0 0
  %3589 = vmatprep.subr.bf16.mxu0 0
  %3590 = vmatpush1.bf16.msra.mxu0 0
  %3591 = vmatprep.mubr.bf16.mxu0 0
  %3592 = vmatmul.mubr.bf16.gmra.mrb[0].mxu0 %v3460
  %v3593 = vpop.f32.mrb[0].mxu0
  %v3594 = vadd.f32 0.0, %v3593
  %v3595 = vpop.f32.mrb[0].mxu0
  %v3596 = vpop.f32.mrb[0].mxu0
  %v3597 = vadd.f32 0.0, %v3596
  %v3598 = vpop.f32.mrb[0].mxu0
  %3599 = vmatprep.mubr.bf16.mxu0 0
  %3600 = vmatmul.mubr.bf16.gmra.mrb[0].mxu0 %v3463
  %v3601 = vpop.f32.mrb[0].mxu0
  %v3602 = vadd.f32 0.0, %v3601
  %v3603 = vpop.f32.mrb[0].mxu0
  %v3604 = vpop.f32.mrb[0].mxu0
  %v3605 = vadd.f32 0.0, %v3604
  %v3606 = vpop.f32.mrb[0].mxu0
  %3607 = vmatprep.mubr.bf16.mxu0 0
  %3608 = vmatmul.mubr.bf16.gmra.mrb[0].mxu0 %v3466
  %v3609 = vpop.f32.mrb[0].mxu0
  %v3610 = vadd.f32 0.0, %v3609
  %v3611 = vpop.f32.mrb[0].mxu0
  %v3612 = vpop.f32.mrb[0].mxu0
  %v3613 = vadd.f32 0.0, %v3612
  %v3614 = vpop.f32.mrb[0].mxu0
  %3615 = vmatprep.mubr.bf16.mxu0 0
  %3616 = vmatmul.mubr.bf16.gmra.mrb[0].mxu0 %v3469
  %v3617 = vpop.f32.mrb[0].mxu0
  %v3618 = vadd.f32 0.0, %v3617
  %v3619 = vpop.f32.mrb[0].mxu0
  %v3620 = vpop.f32.mrb[0].mxu0
  %v3621 = vadd.f32 0.0, %v3620
  %v3622 = vpop.f32.mrb[0].mxu0
  %3623 = vmatprep.mubr.bf16.mxu0 0
  %3624 = vmatmul.mubr.bf16.gmra.mrb[0].mxu0 %v3472
  %v3625 = vpop.f32.mrb[0].mxu0
  %v3626 = vadd.f32 0.0, %v3625
  %v3627 = vpop.f32.mrb[0].mxu0
  %v3628 = vpop.f32.mrb[0].mxu0
  %v3629 = vadd.f32 0.0, %v3628
  %v3630 = vpop.f32.mrb[0].mxu0
  %3631 = vmatprep.mubr.bf16.mxu0 0
  %3632 = vmatmul.mubr.bf16.gmra.mrb[0].mxu0 %v3475
  %v3633 = vpop.f32.mrb[0].mxu0
  %v3634 = vadd.f32 0.0, %v3633
  %v3635 = vpop.f32.mrb[0].mxu0
  %v3636 = vpop.f32.mrb[0].mxu0
  %v3637 = vadd.f32 0.0, %v3636
  %v3638 = vpop.f32.mrb[0].mxu0
  %3639 = vmatprep.mubr.bf16.mxu0 0
  %3640 = vmatmul.mubr.bf16.gmra.mrb[0].mxu0 %v3478
  %v3641 = vpop.f32.mrb[0].mxu0
  %v3642 = vadd.f32 0.0, %v3641
  %v3643 = vpop.f32.mrb[0].mxu0
  %v3644 = vpop.f32.mrb[0].mxu0
  %v3645 = vadd.f32 0.0, %v3644
  %v3646 = vpop.f32.mrb[0].mxu0
  %3647 = vmatprep.mubr.bf16.mxu0 0
  %3648 = vmatmul.mubr.bf16.gmra.mrb[0].mxu0 %v3481
  %v3649 = vpop.f32.mrb[0].mxu0
  %v3650 = vadd.f32 0.0, %v3649
  %v3651 = vpop.f32.mrb[0].mxu0
  %v3652 = vpop.f32.mrb[0].mxu0
  %v3653 = vadd.f32 0.0, %v3652
  %v3654 = vpop.f32.mrb[0].mxu0
  %3655 = vmatprep.mubr.bf16.mxu0 0
  %3656 = vmatmul.mubr.bf16.gmra.mrb[0].mxu0 %v3484
  %v3657 = vpop.f32.mrb[0].mxu0
  %v3658 = vadd.f32 0.0, %v3657
  %v3659 = vpop.f32.mrb[0].mxu0
  %v3660 = vpop.f32.mrb[0].mxu0
  %v3661 = vadd.f32 0.0, %v3660
  %v3662 = vpop.f32.mrb[0].mxu0
  %3663 = vmatprep.mubr.bf16.mxu0 0
  %3664 = vmatmul.mubr.bf16.gmra.mrb[0].mxu0 %v3487
  %v3665 = vpop.f32.mrb[0].mxu0
  %v3666 = vadd.f32 0.0, %v3665
  %v3667 = vpop.f32.mrb[0].mxu0
  %v3668 = vpop.f32.mrb[0].mxu0
  %v3669 = vadd.f32 0.0, %v3668
  %v3670 = vpop.f32.mrb[0].mxu0
  %3671 = vmatprep.mubr.bf16.mxu0 0
  %3672 = vmatmul.mubr.bf16.gmra.mrb[0].mxu0 %v3490
  %v3673 = vpop.f32.mrb[0].mxu0
  %v3674 = vadd.f32 0.0, %v3673
  %v3675 = vpop.f32.mrb[0].mxu0
  %v3676 = vpop.f32.mrb[0].mxu0
  %v3677 = vadd.f32 0.0, %v3676
  %v3678 = vpop.f32.mrb[0].mxu0
  %3679 = vmatprep.mubr.bf16.mxu0 0
  %3680 = vmatmul.mubr.bf16.gmra.mrb[0].mxu0 %v3493
  %v3681 = vpop.f32.mrb[0].mxu0
  %v3682 = vadd.f32 0.0, %v3681
  %v3683 = vpop.f32.mrb[0].mxu0
  %v3684 = vpop.f32.mrb[0].mxu0
  %v3685 = vadd.f32 0.0, %v3684
  %v3686 = vpop.f32.mrb[0].mxu0
  %3687 = vmatprep.mubr.bf16.mxu0 0
  %3688 = vmatmul.mubr.bf16.gmra.mrb[0].mxu0 %v3496
  %v3689 = vpop.f32.mrb[0].mxu0
  %v3690 = vadd.f32 0.0, %v3689
  %v3691 = vpop.f32.mrb[0].mxu0
  %v3692 = vpop.f32.mrb[0].mxu0
  %v3693 = vadd.f32 0.0, %v3692
  %v3694 = vpop.f32.mrb[0].mxu0
  %3695 = vmatprep.mubr.bf16.mxu0 0
  %3696 = vmatmul.mubr.bf16.gmra.mrb[0].mxu0 %v3499
  %v3697 = vpop.f32.mrb[0].mxu0
  %v3698 = vadd.f32 0.0, %v3697
  %v3699 = vpop.f32.mrb[0].mxu0
  %v3700 = vpop.f32.mrb[0].mxu0
  %v3701 = vadd.f32 0.0, %v3700
  %v3702 = vpop.f32.mrb[0].mxu0
  %3703 = vmatprep.mubr.bf16.mxu0 0
  %3704 = vmatmul.mubr.bf16.gmra.mrb[0].mxu0 %v3502
  %v3705 = vpop.f32.mrb[0].mxu0
  %v3706 = vadd.f32 0.0, %v3705
  %v3707 = vpop.f32.mrb[0].mxu0
  %v3708 = vpop.f32.mrb[0].mxu0
  %v3709 = vadd.f32 0.0, %v3708
  %v3710 = vpop.f32.mrb[0].mxu0
  %3711 = vmatprep.mubr.bf16.mxu0 0
  %3712 = vmatmul.mubr.bf16.gmra.mrb[0].mxu0 %v3505
  %v3713 = vpop.f32.mrb[0].mxu0
  %v3714 = vadd.f32 0.0, %v3713
  %v3715 = vpop.f32.mrb[0].mxu0
  %v3716 = vpop.f32.mrb[0].mxu0
  %v3717 = vadd.f32 0.0, %v3716
  %v3718 = vpop.f32.mrb[0].mxu0
  %3719 = vmatprep.mubr.bf16.mxu0 0
  %3720 = vmatmul.mubr.bf16.gmra.mrb[0].mxu0 %v3508
  %v3721 = vpop.f32.mrb[0].mxu0
  %v3722 = vadd.f32 0.0, %v3721
  %v3723 = vpop.f32.mrb[0].mxu0
  %v3724 = vpop.f32.mrb[0].mxu0
  %v3725 = vadd.f32 0.0, %v3724
  %v3726 = vpop.f32.mrb[0].mxu0
  %3727 = vmatprep.mubr.bf16.mxu0 0
  %3728 = vmatmul.mubr.bf16.gmra.mrb[0].mxu0 %v3511
  %v3729 = vpop.f32.mrb[0].mxu0
  %v3730 = vadd.f32 0.0, %v3729
  %v3731 = vpop.f32.mrb[0].mxu0
  %v3732 = vpop.f32.mrb[0].mxu0
  %v3733 = vadd.f32 0.0, %v3732
  %v3734 = vpop.f32.mrb[0].mxu0
  %3735 = vmatprep.mubr.bf16.mxu0 0
  %3736 = vmatmul.mubr.bf16.gmra.mrb[0].mxu0 %v3514
  %v3737 = vpop.f32.mrb[0].mxu0
  %v3738 = vadd.f32 0.0, %v3737
  %v3739 = vpop.f32.mrb[0].mxu0
  %v3740 = vpop.f32.mrb[0].mxu0
  %v3741 = vadd.f32 0.0, %v3740
  %v3742 = vpop.f32.mrb[0].mxu0
  %3743 = vmatprep.mubr.bf16.mxu0 0
  %3744 = vmatmul.mubr.bf16.gmra.mrb[0].mxu0 %v3517
  %v3745 = vpop.f32.mrb[0].mxu0
  %v3746 = vadd.f32 0.0, %v3745
  %v3747 = vpop.f32.mrb[0].mxu0
  %v3748 = vpop.f32.mrb[0].mxu0
  %v3749 = vadd.f32 0.0, %v3748
  %v3750 = vpop.f32.mrb[0].mxu0
  %3751 = vmatprep.mubr.bf16.mxu0 0
  %3752 = vmatmul.mubr.bf16.gmra.mrb[0].mxu0 %v3520
  %v3753 = vpop.f32.mrb[0].mxu0
  %v3754 = vadd.f32 0.0, %v3753
  %v3755 = vpop.f32.mrb[0].mxu0
  %v3756 = vpop.f32.mrb[0].mxu0
  %v3757 = vadd.f32 0.0, %v3756
  %v3758 = vpop.f32.mrb[0].mxu0
  %3759 = vmatprep.mubr.bf16.mxu0 0
  %3760 = vmatmul.mubr.bf16.gmra.mrb[0].mxu0 %v3523
  %v3761 = vpop.f32.mrb[0].mxu0
  %v3762 = vadd.f32 0.0, %v3761
  %v3763 = vpop.f32.mrb[0].mxu0
  %v3764 = vpop.f32.mrb[0].mxu0
  %v3765 = vadd.f32 0.0, %v3764
  %v3766 = vpop.f32.mrb[0].mxu0
  %3767 = vmatprep.mubr.bf16.mxu0 0
  %3768 = vmatmul.mubr.bf16.gmra.mrb[0].mxu0 %v3526
  %v3769 = vpop.f32.mrb[0].mxu0
  %v3770 = vadd.f32 0.0, %v3769
  %v3771 = vpop.f32.mrb[0].mxu0
  %v3772 = vpop.f32.mrb[0].mxu0
  %v3773 = vadd.f32 0.0, %v3772
  %v3774 = vpop.f32.mrb[0].mxu0
  %3775 = vmatprep.mubr.bf16.mxu0 0
  %3776 = vmatmul.mubr.bf16.gmra.mrb[0].mxu0 %v3529
  %v3777 = vpop.f32.mrb[0].mxu0
  %v3778 = vadd.f32 0.0, %v3777
  %v3779 = vpop.f32.mrb[0].mxu0
  %v3780 = vpop.f32.mrb[0].mxu0
  %v3781 = vadd.f32 0.0, %v3780
  %v3782 = vpop.f32.mrb[0].mxu0
  %3783 = vmatprep.mubr.bf16.mxu0 0
  %3784 = vmatmul.mubr.bf16.gmra.mrb[0].mxu0 %v3532
  %v3785 = vpop.f32.mrb[0].mxu0
  %v3786 = vadd.f32 0.0, %v3785
  %v3787 = vpop.f32.mrb[0].mxu0
  %v3788 = vpop.f32.mrb[0].mxu0
  %v3789 = vadd.f32 0.0, %v3788
  %v3790 = vpop.f32.mrb[0].mxu0
  %3791 = vmatprep.mubr.bf16.mxu0 0
  %3792 = vmatmul.mubr.bf16.gmra.mrb[0].mxu0 %v3535
  %v3793 = vpop.f32.mrb[0].mxu0
  %v3794 = vadd.f32 0.0, %v3793
  %v3795 = vpop.f32.mrb[0].mxu0
  %v3796 = vpop.f32.mrb[0].mxu0
  %v3797 = vadd.f32 0.0, %v3796
  %v3798 = vpop.f32.mrb[0].mxu0
  %3799 = vmatprep.mubr.bf16.mxu0 0
  %3800 = vmatmul.mubr.bf16.gmra.mrb[0].mxu0 %v3538
  %v3801 = vpop.f32.mrb[0].mxu0
  %v3802 = vadd.f32 0.0, %v3801
  %v3803 = vpop.f32.mrb[0].mxu0
  %v3804 = vpop.f32.mrb[0].mxu0
  %v3805 = vadd.f32 0.0, %v3804
  %v3806 = vpop.f32.mrb[0].mxu0
  %3807 = vmatprep.mubr.bf16.mxu0 0
  %3808 = vmatmul.mubr.bf16.gmra.mrb[0].mxu0 %v3541
  %v3809 = vpop.f32.mrb[0].mxu0
  %v3810 = vadd.f32 0.0, %v3809
  %v3811 = vpop.f32.mrb[0].mxu0
  %v3812 = vpop.f32.mrb[0].mxu0
  %v3813 = vadd.f32 0.0, %v3812
  %v3814 = vpop.f32.mrb[0].mxu0
  %3815 = vmatprep.mubr.bf16.mxu0 0
  %3816 = vmatmul.mubr.bf16.gmra.mrb[0].mxu0 %v3544
  %v3817 = vpop.f32.mrb[0].mxu0
  %v3818 = vadd.f32 0.0, %v3817
  %v3819 = vpop.f32.mrb[0].mxu0
  %v3820 = vpop.f32.mrb[0].mxu0
  %v3821 = vadd.f32 0.0, %v3820
  %v3822 = vpop.f32.mrb[0].mxu0
  %3823 = vmatprep.mubr.bf16.mxu0 0
  %3824 = vmatmul.mubr.bf16.gmra.mrb[0].mxu0 %v3547
  %v3825 = vpop.f32.mrb[0].mxu0
  %v3826 = vadd.f32 0.0, %v3825
  %v3827 = vpop.f32.mrb[0].mxu0
  %v3828 = vpop.f32.mrb[0].mxu0
  %v3829 = vadd.f32 0.0, %v3828
  %v3830 = vpop.f32.mrb[0].mxu0
  %3831 = vmatprep.mubr.bf16.mxu0 0
  %3832 = vmatmul.mubr.bf16.gmra.mrb[0].mxu0 %v3550
  %v3833 = vpop.f32.mrb[0].mxu0
  %v3834 = vadd.f32 0.0, %v3833
  %v3835 = vpop.f32.mrb[0].mxu0
  %v3836 = vpop.f32.mrb[0].mxu0
  %v3837 = vadd.f32 0.0, %v3836
  %v3838 = vpop.f32.mrb[0].mxu0
  %3839 = vmatprep.mubr.bf16.mxu0 0
  %3840 = vmatmul.mubr.bf16.gmra.mrb[0].mxu0 %v3553
  %v3841 = vpop.f32.mrb[0].mxu0
  %v3842 = vadd.f32 0.0, %v3841
  %v3843 = vpop.f32.mrb[0].mxu0
  %v3844 = vpop.f32.mrb[0].mxu0
  %v3845 = vadd.f32 0.0, %v3844
  %v3846 = vpop.f32.mrb[0].mxu0
  %3847 = vdwg.mxu0
  %v3848 = vld [vmem:[%s2] sm:$0x1]
  %v3849 = vld [vmem:[%s3] sm:$0x1]
  %v3850 = vsel %vm3341, %v3594, 0.0
  %v3851 = vsel %vm3341, %v3597, 0.0
  %v3852 = vadd.f32 %v3850, %v3851
  %v3853 = vsel %vm3341, %v3602, 0.0
  %v3854 = vadd.f32 %v3852, %v3853
  %v3855 = vsel %vm3341, %v3605, 0.0
  %v3856 = vadd.f32 %v3854, %v3855
  %v3857 = vsel %vm3341, %v3610, 0.0
  %v3858 = vadd.f32 %v3856, %v3857
  %v3859 = vsel %vm3341, %v3613, 0.0
  %v3860 = vadd.f32 %v3858, %v3859
  %v3861 = vsel %vm3341, %v3618, 0.0
  %v3862 = vadd.f32 %v3860, %v3861
  %v3863 = vsel %vm3341, %v3621, 0.0
  %v3864 = vadd.f32 %v3862, %v3863
  %v3865 = vsel %vm3341, %v3626, 0.0
  %v3866 = vadd.f32 %v3864, %v3865
  %v3867 = vsel %vm3341, %v3629, 0.0
  %v3868 = vadd.f32 %v3866, %v3867
  %v3869 = vsel %vm3341, %v3634, 0.0
  %v3870 = vadd.f32 %v3868, %v3869
  %v3871 = vsel %vm3341, %v3637, 0.0
  %v3872 = vadd.f32 %v3870, %v3871
  %v3873 = vsel %vm3341, %v3642, 0.0
  %v3874 = vadd.f32 %v3872, %v3873
  %v3875 = vsel %vm3341, %v3645, 0.0
  %v3876 = vadd.f32 %v3874, %v3875
  %v3877 = vsel %vm3341, %v3650, 0.0
  %v3878 = vadd.f32 %v3876, %v3877
  %v3879 = vsel %vm3341, %v3653, 0.0
  %v3880 = vadd.f32 %v3878, %v3879
  %v3881 = vsel %vm3341, %v3658, 0.0
  %v3882 = vadd.f32 %v3880, %v3881
  %v3883 = vsel %vm3341, %v3661, 0.0
  %v3884 = vadd.f32 %v3882, %v3883
  %v3885 = vsel %vm3341, %v3666, 0.0
  %v3886 = vadd.f32 %v3884, %v3885
  %v3887 = vsel %vm3341, %v3669, 0.0
  %v3888 = vadd.f32 %v3886, %v3887
  %v3889 = vsel %vm3341, %v3674, 0.0
  %v3890 = vadd.f32 %v3888, %v3889
  %v3891 = vsel %vm3341, %v3677, 0.0
  %v3892 = vadd.f32 %v3890, %v3891
  %v3893 = vsel %vm3341, %v3682, 0.0
  %v3894 = vadd.f32 %v3892, %v3893
  %v3895 = vsel %vm3341, %v3685, 0.0
  %v3896 = vadd.f32 %v3894, %v3895
  %v3897 = vsel %vm3341, %v3690, 0.0
  %v3898 = vadd.f32 %v3896, %v3897
  %v3899 = vsel %vm3341, %v3693, 0.0
  %v3900 = vadd.f32 %v3898, %v3899
  %v3901 = vsel %vm3341, %v3698, 0.0
  %v3902 = vadd.f32 %v3900, %v3901
  %v3903 = vsel %vm3341, %v3701, 0.0
  %v3904 = vadd.f32 %v3902, %v3903
  %v3905 = vsel %vm3341, %v3706, 0.0
  %v3906 = vadd.f32 %v3904, %v3905
  %v3907 = vsel %vm3341, %v3709, 0.0
  %v3908 = vadd.f32 %v3906, %v3907
  %v3909 = vsel %vm3341, %v3714, 0.0
  %v3910 = vadd.f32 %v3908, %v3909
  %v3911 = vsel %vm3341, %v3717, 0.0
  %v3912 = vadd.f32 %v3910, %v3911
  %v3913 = vsel %vm3341, %v3722, 0.0
  %v3914 = vadd.f32 %v3912, %v3913
  %v3915 = vsel %vm3341, %v3725, 0.0
  %v3916 = vadd.f32 %v3914, %v3915
  %v3917 = vsel %vm3341, %v3730, 0.0
  %v3918 = vadd.f32 %v3916, %v3917
  %v3919 = vsel %vm3341, %v3733, 0.0
  %v3920 = vadd.f32 %v3918, %v3919
  %v3921 = vsel %vm3341, %v3738, 0.0
  %v3922 = vadd.f32 %v3920, %v3921
  %v3923 = vsel %vm3341, %v3741, 0.0
  %v3924 = vadd.f32 %v3922, %v3923
  %v3925 = vsel %vm3341, %v3746, 0.0
  %v3926 = vadd.f32 %v3924, %v3925
  %v3927 = vsel %vm3341, %v3749, 0.0
  %v3928 = vadd.f32 %v3926, %v3927
  %v3929 = vsel %vm3341, %v3754, 0.0
  %v3930 = vadd.f32 %v3928, %v3929
  %v3931 = vsel %vm3341, %v3757, 0.0
  %v3932 = vadd.f32 %v3930, %v3931
  %v3933 = vsel %vm3341, %v3762, 0.0
  %v3934 = vadd.f32 %v3932, %v3933
  %v3935 = vsel %vm3341, %v3765, 0.0
  %v3936 = vadd.f32 %v3934, %v3935
  %v3937 = vsel %vm3341, %v3770, 0.0
  %v3938 = vadd.f32 %v3936, %v3937
  %v3939 = vsel %vm3341, %v3773, 0.0
  %v3940 = vadd.f32 %v3938, %v3939
  %v3941 = vsel %vm3341, %v3778, 0.0
  %v3942 = vadd.f32 %v3940, %v3941
  %v3943 = vsel %vm3341, %v3781, 0.0
  %v3944 = vadd.f32 %v3942, %v3943
  %v3945 = vsel %vm3341, %v3786, 0.0
  %v3946 = vadd.f32 %v3944, %v3945
  %v3947 = vsel %vm3341, %v3789, 0.0
  %v3948 = vadd.f32 %v3946, %v3947
  %v3949 = vsel %vm3341, %v3794, 0.0
  %v3950 = vadd.f32 %v3948, %v3949
  %v3951 = vsel %vm3341, %v3797, 0.0
  %v3952 = vadd.f32 %v3950, %v3951
  %v3953 = vsel %vm3341, %v3802, 0.0
  %v3954 = vadd.f32 %v3952, %v3953
  %v3955 = vsel %vm3341, %v3805, 0.0
  %v3956 = vadd.f32 %v3954, %v3955
  %v3957 = vsel %vm3341, %v3810, 0.0
  %v3958 = vadd.f32 %v3956, %v3957
  %v3959 = vsel %vm3341, %v3813, 0.0
  %v3960 = vadd.f32 %v3958, %v3959
  %v3961 = vsel %vm3341, %v3818, 0.0
  %v3962 = vadd.f32 %v3960, %v3961
  %v3963 = vsel %vm3341, %v3821, 0.0
  %v3964 = vadd.f32 %v3962, %v3963
  %v3965 = vsel %vm3341, %v3826, 0.0
  %v3966 = vadd.f32 %v3964, %v3965
  %v3967 = vsel %vm3341, %v3829, 0.0
  %v3968 = vadd.f32 %v3966, %v3967
  %v3969 = vsel %vm3341, %v3834, 0.0
  %v3970 = vadd.f32 %v3968, %v3969
  %v3971 = vsel %vm3341, %v3837, 0.0
  %v3972 = vadd.f32 %v3970, %v3971
  %v3973 = vsel %vm3341, %v3842, 0.0
  %v3974 = vadd.f32 %v3972, %v3973
  %v3975 = vsel %vm3341, %v3845, 0.0
  %v3976 = vadd.f32 %v3974, %v3975
  %v3977 = vrot.slane %v3976, 4
  %v3978 = vadd.f32 %v3976, %v3977
  %v3979 = vrot.slane %v3978, 2
  %v3980 = vadd.f32 %v3978, %v3979
  %v3981 = vrot.slane %v3980, 1
  %v3982 = vadd.f32 %v3980, %v3981
  %v3983 = vmul.f32 %v3594, %v3594
  %v3984 = vmul.f32 %v3597, %v3597
  %v3985 = vmul.f32 %v3602, %v3602
  %v3986 = vmul.f32 %v3605, %v3605
  %v3987 = vmul.f32 %v3610, %v3610
  %v3988 = vmul.f32 %v3613, %v3613
  %v3989 = vmul.f32 %v3618, %v3618
  %v3990 = vmul.f32 %v3621, %v3621
  %v3991 = vmul.f32 %v3626, %v3626
  %v3992 = vmul.f32 %v3629, %v3629
  %v3993 = vmul.f32 %v3634, %v3634
  %v3994 = vmul.f32 %v3637, %v3637
  %v3995 = vmul.f32 %v3642, %v3642
  %v3996 = vmul.f32 %v3645, %v3645
  %v3997 = vmul.f32 %v3650, %v3650
  %v3998 = vmul.f32 %v3653, %v3653
  %v3999 = vmul.f32 %v3658, %v3658
  %v4000 = vmul.f32 %v3661, %v3661
  %v4001 = vmul.f32 %v3666, %v3666
  %v4002 = vmul.f32 %v3669, %v3669
  %v4003 = vmul.f32 %v3674, %v3674
  %v4004 = vmul.f32 %v3677, %v3677
  %v4005 = vmul.f32 %v3682, %v3682
  %v4006 = vmul.f32 %v3685, %v3685
  %v4007 = vmul.f32 %v3690, %v3690
  %v4008 = vmul.f32 %v3693, %v3693
  %v4009 = vmul.f32 %v3698, %v3698
  %v4010 = vmul.f32 %v3701, %v3701
  %v4011 = vmul.f32 %v3706, %v3706
  %v4012 = vmul.f32 %v3709, %v3709
  %v4013 = vmul.f32 %v3714, %v3714
  %v4014 = vmul.f32 %v3717, %v3717
  %v4015 = vmul.f32 %v3722, %v3722
  %v4016 = vmul.f32 %v3725, %v3725
  %v4017 = vmul.f32 %v3730, %v3730
  %v4018 = vmul.f32 %v3733, %v3733
  %v4019 = vmul.f32 %v3738, %v3738
  %v4020 = vmul.f32 %v3741, %v3741
  %v4021 = vmul.f32 %v3746, %v3746
  %v4022 = vmul.f32 %v3749, %v3749
  %v4023 = vmul.f32 %v3754, %v3754
  %v4024 = vmul.f32 %v3757, %v3757
  %v4025 = vmul.f32 %v3762, %v3762
  %v4026 = vmul.f32 %v3765, %v3765
  %v4027 = vmul.f32 %v3770, %v3770
  %v4028 = vmul.f32 %v3773, %v3773
  %v4029 = vmul.f32 %v3778, %v3778
  %v4030 = vmul.f32 %v3781, %v3781
  %v4031 = vmul.f32 %v3786, %v3786
  %v4032 = vmul.f32 %v3789, %v3789
  %v4033 = vmul.f32 %v3794, %v3794
  %v4034 = vmul.f32 %v3797, %v3797
  %v4035 = vmul.f32 %v3802, %v3802
  %v4036 = vmul.f32 %v3805, %v3805
  %v4037 = vmul.f32 %v3810, %v3810
  %v4038 = vmul.f32 %v3813, %v3813
  %v4039 = vmul.f32 %v3818, %v3818
  %v4040 = vmul.f32 %v3821, %v3821
  %v4041 = vmul.f32 %v3826, %v3826
  %v4042 = vmul.f32 %v3829, %v3829
  %v4043 = vmul.f32 %v3834, %v3834
  %v4044 = vmul.f32 %v3837, %v3837
  %v4045 = vmul.f32 %v3842, %v3842
  %v4046 = vmul.f32 %v3845, %v3845
  %v4047 = vsel %vm3341, %v3983, 0.0
  %v4048 = vsel %vm3341, %v3984, 0.0
  %v4049 = vadd.f32 %v4047, %v4048
  %v4050 = vsel %vm3341, %v3985, 0.0
  %v4051 = vadd.f32 %v4049, %v4050
  %v4052 = vsel %vm3341, %v3986, 0.0
  %v4053 = vadd.f32 %v4051, %v4052
  %v4054 = vsel %vm3341, %v3987, 0.0
  %v4055 = vadd.f32 %v4053, %v4054
  %v4056 = vsel %vm3341, %v3988, 0.0
  %v4057 = vadd.f32 %v4055, %v4056
  %v4058 = vsel %vm3341, %v3989, 0.0
  %v4059 = vadd.f32 %v4057, %v4058
  %v4060 = vsel %vm3341, %v3990, 0.0
  %v4061 = vadd.f32 %v4059, %v4060
  %v4062 = vsel %vm3341, %v3991, 0.0
  %v4063 = vadd.f32 %v4061, %v4062
  %v4064 = vsel %vm3341, %v3992, 0.0
  %v4065 = vadd.f32 %v4063, %v4064
  %v4066 = vsel %vm3341, %v3993, 0.0
  %v4067 = vadd.f32 %v4065, %v4066
  %v4068 = vsel %vm3341, %v3994, 0.0
  %v4069 = vadd.f32 %v4067, %v4068
  %v4070 = vsel %vm3341, %v3995, 0.0
  %v4071 = vadd.f32 %v4069, %v4070
  %v4072 = vsel %vm3341, %v3996, 0.0
  %v4073 = vadd.f32 %v4071, %v4072
  %v4074 = vsel %vm3341, %v3997, 0.0
  %v4075 = vadd.f32 %v4073, %v4074
  %v4076 = vsel %vm3341, %v3998, 0.0
  %v4077 = vadd.f32 %v4075, %v4076
  %v4078 = vsel %vm3341, %v3999, 0.0
  %v4079 = vadd.f32 %v4077, %v4078
  %v4080 = vsel %vm3341, %v4000, 0.0
  %v4081 = vadd.f32 %v4079, %v4080
  %v4082 = vsel %vm3341, %v4001, 0.0
  %v4083 = vadd.f32 %v4081, %v4082
  %v4084 = vsel %vm3341, %v4002, 0.0
  %v4085 = vadd.f32 %v4083, %v4084
  %v4086 = vsel %vm3341, %v4003, 0.0
  %v4087 = vadd.f32 %v4085, %v4086
  %v4088 = vsel %vm3341, %v4004, 0.0
  %v4089 = vadd.f32 %v4087, %v4088
  %v4090 = vsel %vm3341, %v4005, 0.0
  %v4091 = vadd.f32 %v4089, %v4090
  %v4092 = vsel %vm3341, %v4006, 0.0
  %v4093 = vadd.f32 %v4091, %v4092
  %v4094 = vsel %vm3341, %v4007, 0.0
  %v4095 = vadd.f32 %v4093, %v4094
  %v4096 = vsel %vm3341, %v4008, 0.0
  %v4097 = vadd.f32 %v4095, %v4096
  %v4098 = vsel %vm3341, %v4009, 0.0
  %v4099 = vadd.f32 %v4097, %v4098
  %v4100 = vsel %vm3341, %v4010, 0.0
  %v4101 = vadd.f32 %v4099, %v4100
  %v4102 = vsel %vm3341, %v4011, 0.0
  %v4103 = vadd.f32 %v4101, %v4102
  %v4104 = vsel %vm3341, %v4012, 0.0
  %v4105 = vadd.f32 %v4103, %v4104
  %v4106 = vsel %vm3341, %v4013, 0.0
  %v4107 = vadd.f32 %v4105, %v4106
  %v4108 = vsel %vm3341, %v4014, 0.0
  %v4109 = vadd.f32 %v4107, %v4108
  %v4110 = vsel %vm3341, %v4015, 0.0
  %v4111 = vadd.f32 %v4109, %v4110
  %v4112 = vsel %vm3341, %v4016, 0.0
  %v4113 = vadd.f32 %v4111, %v4112
  %v4114 = vsel %vm3341, %v4017, 0.0
  %v4115 = vadd.f32 %v4113, %v4114
  %v4116 = vsel %vm3341, %v4018, 0.0
  %v4117 = vadd.f32 %v4115, %v4116
  %v4118 = vsel %vm3341, %v4019, 0.0
  %v4119 = vadd.f32 %v4117, %v4118
  %v4120 = vsel %vm3341, %v4020, 0.0
  %v4121 = vadd.f32 %v4119, %v4120
  %v4122 = vsel %vm3341, %v4021, 0.0
  %v4123 = vadd.f32 %v4121, %v4122
  %v4124 = vsel %vm3341, %v4022, 0.0
  %v4125 = vadd.f32 %v4123, %v4124
  %v4126 = vsel %vm3341, %v4023, 0.0
  %v4127 = vadd.f32 %v4125, %v4126
  %v4128 = vsel %vm3341, %v4024, 0.0
  %v4129 = vadd.f32 %v4127, %v4128
  %v4130 = vsel %vm3341, %v4025, 0.0
  %v4131 = vadd.f32 %v4129, %v4130
  %v4132 = vsel %vm3341, %v4026, 0.0
  %v4133 = vadd.f32 %v4131, %v4132
  %v4134 = vsel %vm3341, %v4027, 0.0
  %v4135 = vadd.f32 %v4133, %v4134
  %v4136 = vsel %vm3341, %v4028, 0.0
  %v4137 = vadd.f32 %v4135, %v4136
  %v4138 = vsel %vm3341, %v4029, 0.0
  %v4139 = vadd.f32 %v4137, %v4138
  %v4140 = vsel %vm3341, %v4030, 0.0
  %v4141 = vadd.f32 %v4139, %v4140
  %v4142 = vsel %vm3341, %v4031, 0.0
  %v4143 = vadd.f32 %v4141, %v4142
  %v4144 = vsel %vm3341, %v4032, 0.0
  %v4145 = vadd.f32 %v4143, %v4144
  %v4146 = vsel %vm3341, %v4033, 0.0
  %v4147 = vadd.f32 %v4145, %v4146
  %v4148 = vsel %vm3341, %v4034, 0.0
  %v4149 = vadd.f32 %v4147, %v4148
  %v4150 = vsel %vm3341, %v4035, 0.0
  %v4151 = vadd.f32 %v4149, %v4150
  %v4152 = vsel %vm3341, %v4036, 0.0
  %v4153 = vadd.f32 %v4151, %v4152
  %v4154 = vsel %vm3341, %v4037, 0.0
  %v4155 = vadd.f32 %v4153, %v4154
  %v4156 = vsel %vm3341, %v4038, 0.0
  %v4157 = vadd.f32 %v4155, %v4156
  %v4158 = vsel %vm3341, %v4039, 0.0
  %v4159 = vadd.f32 %v4157, %v4158
  %v4160 = vsel %vm3341, %v4040, 0.0
  %v4161 = vadd.f32 %v4159, %v4160
  %v4162 = vsel %vm3341, %v4041, 0.0
  %v4163 = vadd.f32 %v4161, %v4162
  %v4164 = vsel %vm3341, %v4042, 0.0
  %v4165 = vadd.f32 %v4163, %v4164
  %v4166 = vsel %vm3341, %v4043, 0.0
  %v4167 = vadd.f32 %v4165, %v4166
  %v4168 = vsel %vm3341, %v4044, 0.0
  %v4169 = vadd.f32 %v4167, %v4168
  %v4170 = vsel %vm3341, %v4045, 0.0
  %v4171 = vadd.f32 %v4169, %v4170
  %v4172 = vsel %vm3341, %v4046, 0.0
  %v4173 = vadd.f32 %v4171, %v4172
  %v4174 = vrot.slane %v4173, 4
  %v4175 = vadd.f32 %v4173, %v4174
  %v4176 = vrot.slane %v4175, 2
  %v4177 = vadd.f32 %v4175, %v4176
  %v4178 = vrot.slane %v4177, 1
  %v4179 = vadd.f32 %v4177, %v4178
  %v4180 = vmul.f32 %v3982, 0.001953125
  %v4181 = vmul.f32 %v4179, 0.001953125
  %v4182 = vmul.f32 %v4180, %v4180
  %v4183 = vsub.f32 %v4181, %v4182
  %v4184 = vadd.f32 %v4183, 1e-05
  %v4185 = vrsqrt.pop %v4184
  %v4186 = vmul.f32 %v3848, %v4185
  %v4187 = vmul.f32 %v4180, %v4186
  %v4188 = vsub.f32 %v3849, %v4187
  %v4190 = vlaneseq
  %v4191 = vshrl.u32 %v4190, 7
  %v4192 = vsub.s32 0, %v4191
  %v4193 = vrot.slane %v4186, %v4192
  %v4195 = vmul.f32 %v3594, %v4193
  %v4196 = vmul.f32 %v3597, %v4193
  %v4197 = vmul.f32 %v3602, %v4193
  %v4198 = vmul.f32 %v3605, %v4193
  %v4199 = vmul.f32 %v3610, %v4193
  %v4200 = vmul.f32 %v3613, %v4193
  %v4201 = vmul.f32 %v3618, %v4193
  %v4202 = vmul.f32 %v3621, %v4193
  %v4203 = vmul.f32 %v3626, %v4193
  %v4204 = vmul.f32 %v3629, %v4193
  %v4205 = vmul.f32 %v3634, %v4193
  %v4206 = vmul.f32 %v3637, %v4193
  %v4207 = vmul.f32 %v3642, %v4193
  %v4208 = vmul.f32 %v3645, %v4193
  %v4209 = vmul.f32 %v3650, %v4193
  %v4210 = vmul.f32 %v3653, %v4193
  %v4211 = vmul.f32 %v3658, %v4193
  %v4212 = vmul.f32 %v3661, %v4193
  %v4213 = vmul.f32 %v3666, %v4193
  %v4214 = vmul.f32 %v3669, %v4193
  %v4215 = vmul.f32 %v3674, %v4193
  %v4216 = vmul.f32 %v3677, %v4193
  %v4217 = vmul.f32 %v3682, %v4193
  %v4218 = vmul.f32 %v3685, %v4193
  %v4219 = vmul.f32 %v3690, %v4193
  %v4220 = vmul.f32 %v3693, %v4193
  %v4221 = vmul.f32 %v3698, %v4193
  %v4222 = vmul.f32 %v3701, %v4193
  %v4223 = vmul.f32 %v3706, %v4193
  %v4224 = vmul.f32 %v3709, %v4193
  %v4225 = vmul.f32 %v3714, %v4193
  %v4226 = vmul.f32 %v3717, %v4193
  %v4227 = vmul.f32 %v3722, %v4193
  %v4228 = vmul.f32 %v3725, %v4193
  %v4229 = vmul.f32 %v3730, %v4193
  %v4230 = vmul.f32 %v3733, %v4193
  %v4231 = vmul.f32 %v3738, %v4193
  %v4232 = vmul.f32 %v3741, %v4193
  %v4233 = vmul.f32 %v3746, %v4193
  %v4234 = vmul.f32 %v3749, %v4193
  %v4235 = vmul.f32 %v3754, %v4193
  %v4236 = vmul.f32 %v3757, %v4193
  %v4237 = vmul.f32 %v3762, %v4193
  %v4238 = vmul.f32 %v3765, %v4193
  %v4239 = vmul.f32 %v3770, %v4193
  %v4240 = vmul.f32 %v3773, %v4193
  %v4241 = vmul.f32 %v3778, %v4193
  %v4242 = vmul.f32 %v3781, %v4193
  %v4243 = vmul.f32 %v3786, %v4193
  %v4244 = vmul.f32 %v3789, %v4193
  %v4245 = vmul.f32 %v3794, %v4193
  %v4246 = vmul.f32 %v3797, %v4193
  %v4247 = vmul.f32 %v3802, %v4193
  %v4248 = vmul.f32 %v3805, %v4193
  %v4249 = vmul.f32 %v3810, %v4193
  %v4250 = vmul.f32 %v3813, %v4193
  %v4251 = vmul.f32 %v3818, %v4193
  %v4252 = vmul.f32 %v3821, %v4193
  %v4253 = vmul.f32 %v3826, %v4193
  %v4254 = vmul.f32 %v3829, %v4193
  %v4255 = vmul.f32 %v3834, %v4193
  %v4256 = vmul.f32 %v3837, %v4193
  %v4257 = vmul.f32 %v3842, %v4193
  %v4258 = vmul.f32 %v3845, %v4193
  %v4260 = vlaneseq
  %v4261 = vshrl.u32 %v4260, 7
  %v4262 = vsub.s32 0, %v4261
  %v4263 = vrot.slane %v4188, %v4262
  %v4265 = vadd.f32 %v4195, %v4263
  %v4266 = vadd.f32 %v4196, %v4263
  %v4267 = vadd.f32 %v4197, %v4263
  %v4268 = vadd.f32 %v4198, %v4263
  %v4269 = vadd.f32 %v4199, %v4263
  %v4270 = vadd.f32 %v4200, %v4263
  %v4271 = vadd.f32 %v4201, %v4263
  %v4272 = vadd.f32 %v4202, %v4263
  %v4273 = vadd.f32 %v4203, %v4263
  %v4274 = vadd.f32 %v4204, %v4263
  %v4275 = vadd.f32 %v4205, %v4263
  %v4276 = vadd.f32 %v4206, %v4263
  %v4277 = vadd.f32 %v4207, %v4263
  %v4278 = vadd.f32 %v4208, %v4263
  %v4279 = vadd.f32 %v4209, %v4263
  %v4280 = vadd.f32 %v4210, %v4263
  %v4281 = vadd.f32 %v4211, %v4263
  %v4282 = vadd.f32 %v4212, %v4263
  %v4283 = vadd.f32 %v4213, %v4263
  %v4284 = vadd.f32 %v4214, %v4263
  %v4285 = vadd.f32 %v4215, %v4263
  %v4286 = vadd.f32 %v4216, %v4263
  %v4287 = vadd.f32 %v4217, %v4263
  %v4288 = vadd.f32 %v4218, %v4263
  %v4289 = vadd.f32 %v4219, %v4263
  %v4290 = vadd.f32 %v4220, %v4263
  %v4291 = vadd.f32 %v4221, %v4263
  %v4292 = vadd.f32 %v4222, %v4263
  %v4293 = vadd.f32 %v4223, %v4263
  %v4294 = vadd.f32 %v4224, %v4263
  %v4295 = vadd.f32 %v4225, %v4263
  %v4296 = vadd.f32 %v4226, %v4263
  %v4297 = vadd.f32 %v4227, %v4263
  %v4298 = vadd.f32 %v4228, %v4263
  %v4299 = vadd.f32 %v4229, %v4263
  %v4300 = vadd.f32 %v4230, %v4263
  %v4301 = vadd.f32 %v4231, %v4263
  %v4302 = vadd.f32 %v4232, %v4263
  %v4303 = vadd.f32 %v4233, %v4263
  %v4304 = vadd.f32 %v4234, %v4263
  %v4305 = vadd.f32 %v4235, %v4263
  %v4306 = vadd.f32 %v4236, %v4263
  %v4307 = vadd.f32 %v4237, %v4263
  %v4308 = vadd.f32 %v4238, %v4263
  %v4309 = vadd.f32 %v4239, %v4263
  %v4310 = vadd.f32 %v4240, %v4263
  %v4311 = vadd.f32 %v4241, %v4263
  %v4312 = vadd.f32 %v4242, %v4263
  %v4313 = vadd.f32 %v4243, %v4263
  %v4314 = vadd.f32 %v4244, %v4263
  %v4315 = vadd.f32 %v4245, %v4263
  %v4316 = vadd.f32 %v4246, %v4263
  %v4317 = vadd.f32 %v4247, %v4263
  %v4318 = vadd.f32 %v4248, %v4263
  %v4319 = vadd.f32 %v4249, %v4263
  %v4320 = vadd.f32 %v4250, %v4263
  %v4321 = vadd.f32 %v4251, %v4263
  %v4322 = vadd.f32 %v4252, %v4263
  %v4323 = vadd.f32 %v4253, %v4263
  %v4324 = vadd.f32 %v4254, %v4263
  %v4325 = vadd.f32 %v4255, %v4263
  %v4326 = vadd.f32 %v4256, %v4263
  %v4327 = vadd.f32 %v4257, %v4263
  %v4328 = vadd.f32 %v4258, %v4263
  %v4329 = vmax.f32 %v4265, 0.0
  %v4330 = vmax.f32 %v4266, 0.0
  %v4331 = vmax.f32 %v4267, 0.0
  %v4332 = vmax.f32 %v4268, 0.0
  %v4333 = vmax.f32 %v4269, 0.0
  %v4334 = vmax.f32 %v4270, 0.0
  %v4335 = vmax.f32 %v4271, 0.0
  %v4336 = vmax.f32 %v4272, 0.0
  %v4337 = vmax.f32 %v4273, 0.0
  %v4338 = vmax.f32 %v4274, 0.0
  %v4339 = vmax.f32 %v4275, 0.0
  %v4340 = vmax.f32 %v4276, 0.0
  %v4341 = vmax.f32 %v4277, 0.0
  %v4342 = vmax.f32 %v4278, 0.0
  %v4343 = vmax.f32 %v4279, 0.0
  %v4344 = vmax.f32 %v4280, 0.0
  %v4345 = vmax.f32 %v4281, 0.0
  %v4346 = vmax.f32 %v4282, 0.0
  %v4347 = vmax.f32 %v4283, 0.0
  %v4348 = vmax.f32 %v4284, 0.0
  %v4349 = vmax.f32 %v4285, 0.0
  %v4350 = vmax.f32 %v4286, 0.0
  %v4351 = vmax.f32 %v4287, 0.0
  %v4352 = vmax.f32 %v4288, 0.0
  %v4353 = vmax.f32 %v4289, 0.0
  %v4354 = vmax.f32 %v4290, 0.0
  %v4355 = vmax.f32 %v4291, 0.0
  %v4356 = vmax.f32 %v4292, 0.0
  %v4357 = vmax.f32 %v4293, 0.0
  %v4358 = vmax.f32 %v4294, 0.0
  %v4359 = vmax.f32 %v4295, 0.0
  %v4360 = vmax.f32 %v4296, 0.0
  %v4361 = vmax.f32 %v4297, 0.0
  %v4362 = vmax.f32 %v4298, 0.0
  %v4363 = vmax.f32 %v4299, 0.0
  %v4364 = vmax.f32 %v4300, 0.0
  %v4365 = vmax.f32 %v4301, 0.0
  %v4366 = vmax.f32 %v4302, 0.0
  %v4367 = vmax.f32 %v4303, 0.0
  %v4368 = vmax.f32 %v4304, 0.0
  %v4369 = vmax.f32 %v4305, 0.0
  %v4370 = vmax.f32 %v4306, 0.0
  %v4371 = vmax.f32 %v4307, 0.0
  %v4372 = vmax.f32 %v4308, 0.0
  %v4373 = vmax.f32 %v4309, 0.0
  %v4374 = vmax.f32 %v4310, 0.0
  %v4375 = vmax.f32 %v4311, 0.0
  %v4376 = vmax.f32 %v4312, 0.0
  %v4377 = vmax.f32 %v4313, 0.0
  %v4378 = vmax.f32 %v4314, 0.0
  %v4379 = vmax.f32 %v4315, 0.0
  %v4380 = vmax.f32 %v4316, 0.0
  %v4381 = vmax.f32 %v4317, 0.0
  %v4382 = vmax.f32 %v4318, 0.0
  %v4383 = vmax.f32 %v4319, 0.0
  %v4384 = vmax.f32 %v4320, 0.0
  %v4385 = vmax.f32 %v4321, 0.0
  %v4386 = vmax.f32 %v4322, 0.0
  %v4387 = vmax.f32 %v4323, 0.0
  %v4388 = vmax.f32 %v4324, 0.0
  %v4389 = vmax.f32 %v4325, 0.0
  %v4390 = vmax.f32 %v4326, 0.0
  %v4391 = vmax.f32 %v4327, 0.0
  %v4392 = vmax.f32 %v4328, 0.0
  %v4393 = vpack.c.bf16 %v4330, %v4329
  %v4394 = vpack.c.bf16 %v4332, %v4331
  %v4395 = vpack.c.bf16 %v4334, %v4333
  %v4396 = vpack.c.bf16 %v4336, %v4335
  %v4397 = vpack.c.bf16 %v4338, %v4337
  %v4398 = vpack.c.bf16 %v4340, %v4339
  %v4399 = vpack.c.bf16 %v4342, %v4341
  %v4400 = vpack.c.bf16 %v4344, %v4343
  %v4401 = vpack.c.bf16 %v4346, %v4345
  %v4402 = vpack.c.bf16 %v4348, %v4347
  %v4403 = vpack.c.bf16 %v4350, %v4349
  %v4404 = vpack.c.bf16 %v4352, %v4351
  %v4405 = vpack.c.bf16 %v4354, %v4353
  %v4406 = vpack.c.bf16 %v4356, %v4355
  %v4407 = vpack.c.bf16 %v4358, %v4357
  %v4408 = vpack.c.bf16 %v4360, %v4359
  %v4409 = vpack.c.bf16 %v4362, %v4361
  %v4410 = vpack.c.bf16 %v4364, %v4363
  %v4411 = vpack.c.bf16 %v4366, %v4365
  %v4412 = vpack.c.bf16 %v4368, %v4367
  %v4413 = vpack.c.bf16 %v4370, %v4369
  %v4414 = vpack.c.bf16 %v4372, %v4371
  %v4415 = vpack.c.bf16 %v4374, %v4373
  %v4416 = vpack.c.bf16 %v4376, %v4375
  %v4417 = vpack.c.bf16 %v4378, %v4377
  %v4418 = vpack.c.bf16 %v4380, %v4379
  %v4419 = vpack.c.bf16 %v4382, %v4381
  %v4420 = vpack.c.bf16 %v4384, %v4383
  %v4421 = vpack.c.bf16 %v4386, %v4385
  %v4422 = vpack.c.bf16 %v4388, %v4387
  %v4423 = vpack.c.bf16 %v4390, %v4389
  %v4424 = vpack.c.bf16 %v4392, %v4391
  %v4425 = vld [vmem:[%s4] sm:$0xf]
  %v4426 = vld [vmem:[%s4 + $0x4] sm:$0xf]
  %v4427 = vld [vmem:[%s4 + $0x8] sm:$0xf]
  %v4428 = vld [vmem:[%s4 + $0xc] sm:$0xf]
  %v4433 = vunpack.c.l.b16 %v4425
  %v4434 = vunpack.c.l.b16 %v4426
  %v4435 = vunpack.c.l.b16 %v4427
  %v4436 = vunpack.c.l.b16 %v4428
  %v4437 = vpack.c.b16 %v4434, %v4433
  %v4438 = vpack.c.b16 %v4436, %v4435
  %v4442 = vsel %vm3341, %v4393, 0
  %v4445 = vsel %vm3341, %v4394, 0
  %v4448 = vsel %vm3341, %v4395, 0
  %v4451 = vsel %vm3341, %v4396, 0
  %v4454 = vsel %vm3341, %v4397, 0
  %v4457 = vsel %vm3341, %v4398, 0
  %v4460 = vsel %vm3341, %v4399, 0
  %v4463 = vsel %vm3341, %v4400, 0
  %v4466 = vsel %vm3341, %v4401, 0
  %v4469 = vsel %vm3341, %v4402, 0
  %v4472 = vsel %vm3341, %v4403, 0
  %v4475 = vsel %vm3341, %v4404, 0
  %v4478 = vsel %vm3341, %v4405, 0
  %v4481 = vsel %vm3341, %v4406, 0
  %v4484 = vsel %vm3341, %v4407, 0
  %v4487 = vsel %vm3341, %v4408, 0
  %v4490 = vsel %vm3341, %v4409, 0
  %v4493 = vsel %vm3341, %v4410, 0
  %v4496 = vsel %vm3341, %v4411, 0
  %v4499 = vsel %vm3341, %v4412, 0
  %v4502 = vsel %vm3341, %v4413, 0
  %v4505 = vsel %vm3341, %v4414, 0
  %v4508 = vsel %vm3341, %v4415, 0
  %v4511 = vsel %vm3341, %v4416, 0
  %v4514 = vsel %vm3341, %v4417, 0
  %v4517 = vsel %vm3341, %v4418, 0
  %v4520 = vsel %vm3341, %v4419, 0
  %v4523 = vsel %vm3341, %v4420, 0
  %v4526 = vsel %vm3341, %v4421, 0
  %v4529 = vsel %vm3341, %v4422, 0
  %v4532 = vsel %vm3341, %v4423, 0
  %v4535 = vsel %vm3341, %v4424, 0
  %4537 = vmatprep.subr.bf16.mxu0 0
  %4538 = vmatpush1.bf16.msra.mxu0 %v4437
  %4539 = vmatprep.subr.bf16.mxu0 0
  %4540 = vmatpush1.bf16.msra.mxu0 %v4438
  %4541 = vmatprep.subr.bf16.mxu0 0
  %4542 = vmatpush1.bf16.msra.mxu0 0
  %4543 = vmatprep.subr.bf16.mxu0 0
  %4544 = vmatpush1.bf16.msra.mxu0 0
  %4545 = vmatprep.subr.bf16.mxu0 0
  %4546 = vmatpush1.bf16.msra.mxu0 0
  %4547 = vmatprep.subr.bf16.mxu0 0
  %4548 = vmatpush1.bf16.msra.mxu0 0
  %4549 = vmatprep.subr.bf16.mxu0 0
  %4550 = vmatpush1.bf16.msra.mxu0 0
  %4551 = vmatprep.subr.bf16.mxu0 0
  %4552 = vmatpush1.bf16.msra.mxu0 0
  %4553 = vmatprep.subr.bf16.mxu0 0
  %4554 = vmatpush1.bf16.msra.mxu0 0
  %4555 = vmatprep.subr.bf16.mxu0 0
  %4556 = vmatpush1.bf16.msra.mxu0 0
  %4557 = vmatprep.subr.bf16.mxu0 0
  %4558 = vmatpush1.bf16.msra.mxu0 0
  %4559 = vmatprep.subr.bf16.mxu0 0
  %4560 = vmatpush1.bf16.msra.mxu0 0
  %4561 = vmatprep.subr.bf16.mxu0 0
  %4562 = vmatpush1.bf16.msra.mxu0 0
  %4563 = vmatprep.subr.bf16.mxu0 0
  %4564 = vmatpush1.bf16.msra.mxu0 0
  %4565 = vmatprep.subr.bf16.mxu0 0
  %4566 = vmatpush1.bf16.msra.mxu0 0
  %4567 = vmatprep.subr.bf16.mxu0 0
  %4568 = vmatpush1.bf16.msra.mxu0 0
  %4569 = vmatprep.mubr.bf16.mxu0 0
  %4570 = vmatmul.mubr.bf16.gmra.mrb[0].mxu0 %v4442
  %v4571 = vpop.f32.mrb[0].mxu0
  %v4572 = vadd.f32 0.0, %v4571
  %v4573 = vpop.f32.mrb[0].mxu0
  %v4574 = vpop.f32.mrb[0].mxu0
  %v4575 = vadd.f32 0.0, %v4574
  %v4576 = vpop.f32.mrb[0].mxu0
  %4577 = vmatprep.mubr.bf16.mxu0 0
  %4578 = vmatmul.mubr.bf16.gmra.mrb[0].mxu0 %v4445
  %v4579 = vpop.f32.mrb[0].mxu0
  %v4580 = vadd.f32 0.0, %v4579
  %v4581 = vpop.f32.mrb[0].mxu0
  %v4582 = vpop.f32.mrb[0].mxu0
  %v4583 = vadd.f32 0.0, %v4582
  %v4584 = vpop.f32.mrb[0].mxu0
  %4585 = vmatprep.mubr.bf16.mxu0 0
  %4586 = vmatmul.mubr.bf16.gmra.mrb[0].mxu0 %v4448
  %v4587 = vpop.f32.mrb[0].mxu0
  %v4588 = vadd.f32 0.0, %v4587
  %v4589 = vpop.f32.mrb[0].mxu0
  %v4590 = vpop.f32.mrb[0].mxu0
  %v4591 = vadd.f32 0.0, %v4590
  %v4592 = vpop.f32.mrb[0].mxu0
  %4593 = vmatprep.mubr.bf16.mxu0 0
  %4594 = vmatmul.mubr.bf16.gmra.mrb[0].mxu0 %v4451
  %v4595 = vpop.f32.mrb[0].mxu0
  %v4596 = vadd.f32 0.0, %v4595
  %v4597 = vpop.f32.mrb[0].mxu0
  %v4598 = vpop.f32.mrb[0].mxu0
  %v4599 = vadd.f32 0.0, %v4598
  %v4600 = vpop.f32.mrb[0].mxu0
  %4601 = vmatprep.mubr.bf16.mxu0 0
  %4602 = vmatmul.mubr.bf16.gmra.mrb[0].mxu0 %v4454
  %v4603 = vpop.f32.mrb[0].mxu0
  %v4604 = vadd.f32 0.0, %v4603
  %v4605 = vpop.f32.mrb[0].mxu0
  %v4606 = vpop.f32.mrb[0].mxu0
  %v4607 = vadd.f32 0.0, %v4606
  %v4608 = vpop.f32.mrb[0].mxu0
  %4609 = vmatprep.mubr.bf16.mxu0 0
  %4610 = vmatmul.mubr.bf16.gmra.mrb[0].mxu0 %v4457
  %v4611 = vpop.f32.mrb[0].mxu0
  %v4612 = vadd.f32 0.0, %v4611
  %v4613 = vpop.f32.mrb[0].mxu0
  %v4614 = vpop.f32.mrb[0].mxu0
  %v4615 = vadd.f32 0.0, %v4614
  %v4616 = vpop.f32.mrb[0].mxu0
  %4617 = vmatprep.mubr.bf16.mxu0 0
  %4618 = vmatmul.mubr.bf16.gmra.mrb[0].mxu0 %v4460
  %v4619 = vpop.f32.mrb[0].mxu0
  %v4620 = vadd.f32 0.0, %v4619
  %v4621 = vpop.f32.mrb[0].mxu0
  %v4622 = vpop.f32.mrb[0].mxu0
  %v4623 = vadd.f32 0.0, %v4622
  %v4624 = vpop.f32.mrb[0].mxu0
  %4625 = vmatprep.mubr.bf16.mxu0 0
  %4626 = vmatmul.mubr.bf16.gmra.mrb[0].mxu0 %v4463
  %v4627 = vpop.f32.mrb[0].mxu0
  %v4628 = vadd.f32 0.0, %v4627
  %v4629 = vpop.f32.mrb[0].mxu0
  %v4630 = vpop.f32.mrb[0].mxu0
  %v4631 = vadd.f32 0.0, %v4630
  %v4632 = vpop.f32.mrb[0].mxu0
  %4633 = vmatprep.mubr.bf16.mxu0 0
  %4634 = vmatmul.mubr.bf16.gmra.mrb[0].mxu0 %v4466
  %v4635 = vpop.f32.mrb[0].mxu0
  %v4636 = vadd.f32 0.0, %v4635
  %v4637 = vpop.f32.mrb[0].mxu0
  %v4638 = vpop.f32.mrb[0].mxu0
  %v4639 = vadd.f32 0.0, %v4638
  %v4640 = vpop.f32.mrb[0].mxu0
  %4641 = vmatprep.mubr.bf16.mxu0 0
  %4642 = vmatmul.mubr.bf16.gmra.mrb[0].mxu0 %v4469
  %v4643 = vpop.f32.mrb[0].mxu0
  %v4644 = vadd.f32 0.0, %v4643
  %v4645 = vpop.f32.mrb[0].mxu0
  %v4646 = vpop.f32.mrb[0].mxu0
  %v4647 = vadd.f32 0.0, %v4646
  %v4648 = vpop.f32.mrb[0].mxu0
  %4649 = vmatprep.mubr.bf16.mxu0 0
  %4650 = vmatmul.mubr.bf16.gmra.mrb[0].mxu0 %v4472
  %v4651 = vpop.f32.mrb[0].mxu0
  %v4652 = vadd.f32 0.0, %v4651
  %v4653 = vpop.f32.mrb[0].mxu0
  %v4654 = vpop.f32.mrb[0].mxu0
  %v4655 = vadd.f32 0.0, %v4654
  %v4656 = vpop.f32.mrb[0].mxu0
  %4657 = vmatprep.mubr.bf16.mxu0 0
  %4658 = vmatmul.mubr.bf16.gmra.mrb[0].mxu0 %v4475
  %v4659 = vpop.f32.mrb[0].mxu0
  %v4660 = vadd.f32 0.0, %v4659
  %v4661 = vpop.f32.mrb[0].mxu0
  %v4662 = vpop.f32.mrb[0].mxu0
  %v4663 = vadd.f32 0.0, %v4662
  %v4664 = vpop.f32.mrb[0].mxu0
  %4665 = vmatprep.mubr.bf16.mxu0 0
  %4666 = vmatmul.mubr.bf16.gmra.mrb[0].mxu0 %v4478
  %v4667 = vpop.f32.mrb[0].mxu0
  %v4668 = vadd.f32 0.0, %v4667
  %v4669 = vpop.f32.mrb[0].mxu0
  %v4670 = vpop.f32.mrb[0].mxu0
  %v4671 = vadd.f32 0.0, %v4670
  %v4672 = vpop.f32.mrb[0].mxu0
  %4673 = vmatprep.mubr.bf16.mxu0 0
  %4674 = vmatmul.mubr.bf16.gmra.mrb[0].mxu0 %v4481
  %v4675 = vpop.f32.mrb[0].mxu0
  %v4676 = vadd.f32 0.0, %v4675
  %v4677 = vpop.f32.mrb[0].mxu0
  %v4678 = vpop.f32.mrb[0].mxu0
  %v4679 = vadd.f32 0.0, %v4678
  %v4680 = vpop.f32.mrb[0].mxu0
  %4681 = vmatprep.mubr.bf16.mxu0 0
  %4682 = vmatmul.mubr.bf16.gmra.mrb[0].mxu0 %v4484
  %v4683 = vpop.f32.mrb[0].mxu0
  %v4684 = vadd.f32 0.0, %v4683
  %v4685 = vpop.f32.mrb[0].mxu0
  %v4686 = vpop.f32.mrb[0].mxu0
  %v4687 = vadd.f32 0.0, %v4686
  %v4688 = vpop.f32.mrb[0].mxu0
  %4689 = vmatprep.mubr.bf16.mxu0 0
  %4690 = vmatmul.mubr.bf16.gmra.mrb[0].mxu0 %v4487
  %v4691 = vpop.f32.mrb[0].mxu0
  %v4692 = vadd.f32 0.0, %v4691
  %v4693 = vpop.f32.mrb[0].mxu0
  %v4694 = vpop.f32.mrb[0].mxu0
  %v4695 = vadd.f32 0.0, %v4694
  %v4696 = vpop.f32.mrb[0].mxu0
  %4697 = vmatprep.mubr.bf16.mxu0 0
  %4698 = vmatmul.mubr.bf16.gmra.mrb[0].mxu0 %v4490
  %v4699 = vpop.f32.mrb[0].mxu0
  %v4700 = vadd.f32 0.0, %v4699
  %v4701 = vpop.f32.mrb[0].mxu0
  %v4702 = vpop.f32.mrb[0].mxu0
  %v4703 = vadd.f32 0.0, %v4702
  %v4704 = vpop.f32.mrb[0].mxu0
  %4705 = vmatprep.mubr.bf16.mxu0 0
  %4706 = vmatmul.mubr.bf16.gmra.mrb[0].mxu0 %v4493
  %v4707 = vpop.f32.mrb[0].mxu0
  %v4708 = vadd.f32 0.0, %v4707
  %v4709 = vpop.f32.mrb[0].mxu0
  %v4710 = vpop.f32.mrb[0].mxu0
  %v4711 = vadd.f32 0.0, %v4710
  %v4712 = vpop.f32.mrb[0].mxu0
  %4713 = vmatprep.mubr.bf16.mxu0 0
  %4714 = vmatmul.mubr.bf16.gmra.mrb[0].mxu0 %v4496
  %v4715 = vpop.f32.mrb[0].mxu0
  %v4716 = vadd.f32 0.0, %v4715
  %v4717 = vpop.f32.mrb[0].mxu0
  %v4718 = vpop.f32.mrb[0].mxu0
  %v4719 = vadd.f32 0.0, %v4718
  %v4720 = vpop.f32.mrb[0].mxu0
  %4721 = vmatprep.mubr.bf16.mxu0 0
  %4722 = vmatmul.mubr.bf16.gmra.mrb[0].mxu0 %v4499
  %v4723 = vpop.f32.mrb[0].mxu0
  %v4724 = vadd.f32 0.0, %v4723
  %v4725 = vpop.f32.mrb[0].mxu0
  %v4726 = vpop.f32.mrb[0].mxu0
  %v4727 = vadd.f32 0.0, %v4726
  %v4728 = vpop.f32.mrb[0].mxu0
  %4729 = vmatprep.mubr.bf16.mxu0 0
  %4730 = vmatmul.mubr.bf16.gmra.mrb[0].mxu0 %v4502
  %v4731 = vpop.f32.mrb[0].mxu0
  %v4732 = vadd.f32 0.0, %v4731
  %v4733 = vpop.f32.mrb[0].mxu0
  %v4734 = vpop.f32.mrb[0].mxu0
  %v4735 = vadd.f32 0.0, %v4734
  %v4736 = vpop.f32.mrb[0].mxu0
  %4737 = vmatprep.mubr.bf16.mxu0 0
  %4738 = vmatmul.mubr.bf16.gmra.mrb[0].mxu0 %v4505
  %v4739 = vpop.f32.mrb[0].mxu0
  %v4740 = vadd.f32 0.0, %v4739
  %v4741 = vpop.f32.mrb[0].mxu0
  %v4742 = vpop.f32.mrb[0].mxu0
  %v4743 = vadd.f32 0.0, %v4742
  %v4744 = vpop.f32.mrb[0].mxu0
  %4745 = vmatprep.mubr.bf16.mxu0 0
  %4746 = vmatmul.mubr.bf16.gmra.mrb[0].mxu0 %v4508
  %v4747 = vpop.f32.mrb[0].mxu0
  %v4748 = vadd.f32 0.0, %v4747
  %v4749 = vpop.f32.mrb[0].mxu0
  %v4750 = vpop.f32.mrb[0].mxu0
  %v4751 = vadd.f32 0.0, %v4750
  %v4752 = vpop.f32.mrb[0].mxu0
  %4753 = vmatprep.mubr.bf16.mxu0 0
  %4754 = vmatmul.mubr.bf16.gmra.mrb[0].mxu0 %v4511
  %v4755 = vpop.f32.mrb[0].mxu0
  %v4756 = vadd.f32 0.0, %v4755
  %v4757 = vpop.f32.mrb[0].mxu0
  %v4758 = vpop.f32.mrb[0].mxu0
  %v4759 = vadd.f32 0.0, %v4758
  %v4760 = vpop.f32.mrb[0].mxu0
  %4761 = vmatprep.mubr.bf16.mxu0 0
  %4762 = vmatmul.mubr.bf16.gmra.mrb[0].mxu0 %v4514
  %v4763 = vpop.f32.mrb[0].mxu0
  %v4764 = vadd.f32 0.0, %v4763
  %v4765 = vpop.f32.mrb[0].mxu0
  %v4766 = vpop.f32.mrb[0].mxu0
  %v4767 = vadd.f32 0.0, %v4766
  %v4768 = vpop.f32.mrb[0].mxu0
  %4769 = vmatprep.mubr.bf16.mxu0 0
  %4770 = vmatmul.mubr.bf16.gmra.mrb[0].mxu0 %v4517
  %v4771 = vpop.f32.mrb[0].mxu0
  %v4772 = vadd.f32 0.0, %v4771
  %v4773 = vpop.f32.mrb[0].mxu0
  %v4774 = vpop.f32.mrb[0].mxu0
  %v4775 = vadd.f32 0.0, %v4774
  %v4776 = vpop.f32.mrb[0].mxu0
  %4777 = vmatprep.mubr.bf16.mxu0 0
  %4778 = vmatmul.mubr.bf16.gmra.mrb[0].mxu0 %v4520
  %v4779 = vpop.f32.mrb[0].mxu0
  %v4780 = vadd.f32 0.0, %v4779
  %v4781 = vpop.f32.mrb[0].mxu0
  %v4782 = vpop.f32.mrb[0].mxu0
  %v4783 = vadd.f32 0.0, %v4782
  %v4784 = vpop.f32.mrb[0].mxu0
  %4785 = vmatprep.mubr.bf16.mxu0 0
  %4786 = vmatmul.mubr.bf16.gmra.mrb[0].mxu0 %v4523
  %v4787 = vpop.f32.mrb[0].mxu0
  %v4788 = vadd.f32 0.0, %v4787
  %v4789 = vpop.f32.mrb[0].mxu0
  %v4790 = vpop.f32.mrb[0].mxu0
  %v4791 = vadd.f32 0.0, %v4790
  %v4792 = vpop.f32.mrb[0].mxu0
  %4793 = vmatprep.mubr.bf16.mxu0 0
  %4794 = vmatmul.mubr.bf16.gmra.mrb[0].mxu0 %v4526
  %v4795 = vpop.f32.mrb[0].mxu0
  %v4796 = vadd.f32 0.0, %v4795
  %v4797 = vpop.f32.mrb[0].mxu0
  %v4798 = vpop.f32.mrb[0].mxu0
  %v4799 = vadd.f32 0.0, %v4798
  %v4800 = vpop.f32.mrb[0].mxu0
  %4801 = vmatprep.mubr.bf16.mxu0 0
  %4802 = vmatmul.mubr.bf16.gmra.mrb[0].mxu0 %v4529
  %v4803 = vpop.f32.mrb[0].mxu0
  %v4804 = vadd.f32 0.0, %v4803
  %v4805 = vpop.f32.mrb[0].mxu0
  %v4806 = vpop.f32.mrb[0].mxu0
  %v4807 = vadd.f32 0.0, %v4806
  %v4808 = vpop.f32.mrb[0].mxu0
  %4809 = vmatprep.mubr.bf16.mxu0 0
  %4810 = vmatmul.mubr.bf16.gmra.mrb[0].mxu0 %v4532
  %v4811 = vpop.f32.mrb[0].mxu0
  %v4812 = vadd.f32 0.0, %v4811
  %v4813 = vpop.f32.mrb[0].mxu0
  %v4814 = vpop.f32.mrb[0].mxu0
  %v4815 = vadd.f32 0.0, %v4814
  %v4816 = vpop.f32.mrb[0].mxu0
  %4817 = vmatprep.mubr.bf16.mxu0 0
  %4818 = vmatmul.mubr.bf16.gmra.mrb[0].mxu0 %v4535
  %v4819 = vpop.f32.mrb[0].mxu0
  %v4820 = vadd.f32 0.0, %v4819
  %v4821 = vpop.f32.mrb[0].mxu0
  %v4822 = vpop.f32.mrb[0].mxu0
  %v4823 = vadd.f32 0.0, %v4822
  %v4824 = vpop.f32.mrb[0].mxu0
  %4825 = vdwg.mxu0
  %v4826 = vld [vmem:[%s5] sm:$0x1]
  %v4827 = vld [vmem:[%s6] sm:$0x1]
  %v4828 = vsel %vm3081, %v4572, 0.0
  %v4829 = vsel %vm3081, %v4575, 0.0
  %v4830 = vadd.f32 %v4828, %v4829
  %v4831 = vsel %vm3081, %v4580, 0.0
  %v4832 = vadd.f32 %v4830, %v4831
  %v4833 = vsel %vm3081, %v4583, 0.0
  %v4834 = vadd.f32 %v4832, %v4833
  %v4835 = vsel %vm3081, %v4588, 0.0
  %v4836 = vadd.f32 %v4834, %v4835
  %v4837 = vsel %vm3081, %v4591, 0.0
  %v4838 = vadd.f32 %v4836, %v4837
  %v4839 = vsel %vm3081, %v4596, 0.0
  %v4840 = vadd.f32 %v4838, %v4839
  %v4841 = vsel %vm3081, %v4599, 0.0
  %v4842 = vadd.f32 %v4840, %v4841
  %v4843 = vsel %vm3081, %v4604, 0.0
  %v4844 = vadd.f32 %v4842, %v4843
  %v4845 = vsel %vm3081, %v4607, 0.0
  %v4846 = vadd.f32 %v4844, %v4845
  %v4847 = vsel %vm3081, %v4612, 0.0
  %v4848 = vadd.f32 %v4846, %v4847
  %v4849 = vsel %vm3081, %v4615, 0.0
  %v4850 = vadd.f32 %v4848, %v4849
  %v4851 = vsel %vm3081, %v4620, 0.0
  %v4852 = vadd.f32 %v4850, %v4851
  %v4853 = vsel %vm3081, %v4623, 0.0
  %v4854 = vadd.f32 %v4852, %v4853
  %v4855 = vsel %vm3081, %v4628, 0.0
  %v4856 = vadd.f32 %v4854, %v4855
  %v4857 = vsel %vm3081, %v4631, 0.0
  %v4858 = vadd.f32 %v4856, %v4857
  %v4859 = vsel %vm3081, %v4636, 0.0
  %v4860 = vadd.f32 %v4858, %v4859
  %v4861 = vsel %vm3081, %v4639, 0.0
  %v4862 = vadd.f32 %v4860, %v4861
  %v4863 = vsel %vm3081, %v4644, 0.0
  %v4864 = vadd.f32 %v4862, %v4863
  %v4865 = vsel %vm3081, %v4647, 0.0
  %v4866 = vadd.f32 %v4864, %v4865
  %v4867 = vsel %vm3081, %v4652, 0.0
  %v4868 = vadd.f32 %v4866, %v4867
  %v4869 = vsel %vm3081, %v4655, 0.0
  %v4870 = vadd.f32 %v4868, %v4869
  %v4871 = vsel %vm3081, %v4660, 0.0
  %v4872 = vadd.f32 %v4870, %v4871
  %v4873 = vsel %vm3081, %v4663, 0.0
  %v4874 = vadd.f32 %v4872, %v4873
  %v4875 = vsel %vm3081, %v4668, 0.0
  %v4876 = vadd.f32 %v4874, %v4875
  %v4877 = vsel %vm3081, %v4671, 0.0
  %v4878 = vadd.f32 %v4876, %v4877
  %v4879 = vsel %vm3081, %v4676, 0.0
  %v4880 = vadd.f32 %v4878, %v4879
  %v4881 = vsel %vm3081, %v4679, 0.0
  %v4882 = vadd.f32 %v4880, %v4881
  %v4883 = vsel %vm3081, %v4684, 0.0
  %v4884 = vadd.f32 %v4882, %v4883
  %v4885 = vsel %vm3081, %v4687, 0.0
  %v4886 = vadd.f32 %v4884, %v4885
  %v4887 = vsel %vm3081, %v4692, 0.0
  %v4888 = vadd.f32 %v4886, %v4887
  %v4889 = vsel %vm3081, %v4695, 0.0
  %v4890 = vadd.f32 %v4888, %v4889
  %v4891 = vsel %vm3081, %v4700, 0.0
  %v4892 = vadd.f32 %v4890, %v4891
  %v4893 = vsel %vm3081, %v4703, 0.0
  %v4894 = vadd.f32 %v4892, %v4893
  %v4895 = vsel %vm3081, %v4708, 0.0
  %v4896 = vadd.f32 %v4894, %v4895
  %v4897 = vsel %vm3081, %v4711, 0.0
  %v4898 = vadd.f32 %v4896, %v4897
  %v4899 = vsel %vm3081, %v4716, 0.0
  %v4900 = vadd.f32 %v4898, %v4899
  %v4901 = vsel %vm3081, %v4719, 0.0
  %v4902 = vadd.f32 %v4900, %v4901
  %v4903 = vsel %vm3081, %v4724, 0.0
  %v4904 = vadd.f32 %v4902, %v4903
  %v4905 = vsel %vm3081, %v4727, 0.0
  %v4906 = vadd.f32 %v4904, %v4905
  %v4907 = vsel %vm3081, %v4732, 0.0
  %v4908 = vadd.f32 %v4906, %v4907
  %v4909 = vsel %vm3081, %v4735, 0.0
  %v4910 = vadd.f32 %v4908, %v4909
  %v4911 = vsel %vm3081, %v4740, 0.0
  %v4912 = vadd.f32 %v4910, %v4911
  %v4913 = vsel %vm3081, %v4743, 0.0
  %v4914 = vadd.f32 %v4912, %v4913
  %v4915 = vsel %vm3081, %v4748, 0.0
  %v4916 = vadd.f32 %v4914, %v4915
  %v4917 = vsel %vm3081, %v4751, 0.0
  %v4918 = vadd.f32 %v4916, %v4917
  %v4919 = vsel %vm3081, %v4756, 0.0
  %v4920 = vadd.f32 %v4918, %v4919
  %v4921 = vsel %vm3081, %v4759, 0.0
  %v4922 = vadd.f32 %v4920, %v4921
  %v4923 = vsel %vm3081, %v4764, 0.0
  %v4924 = vadd.f32 %v4922, %v4923
  %v4925 = vsel %vm3081, %v4767, 0.0
  %v4926 = vadd.f32 %v4924, %v4925
  %v4927 = vsel %vm3081, %v4772, 0.0
  %v4928 = vadd.f32 %v4926, %v4927
  %v4929 = vsel %vm3081, %v4775, 0.0
  %v4930 = vadd.f32 %v4928, %v4929
  %v4931 = vsel %vm3081, %v4780, 0.0
  %v4932 = vadd.f32 %v4930, %v4931
  %v4933 = vsel %vm3081, %v4783, 0.0
  %v4934 = vadd.f32 %v4932, %v4933
  %v4935 = vsel %vm3081, %v4788, 0.0
  %v4936 = vadd.f32 %v4934, %v4935
  %v4937 = vsel %vm3081, %v4791, 0.0
  %v4938 = vadd.f32 %v4936, %v4937
  %v4939 = vsel %vm3081, %v4796, 0.0
  %v4940 = vadd.f32 %v4938, %v4939
  %v4941 = vsel %vm3081, %v4799, 0.0
  %v4942 = vadd.f32 %v4940, %v4941
  %v4943 = vsel %vm3081, %v4804, 0.0
  %v4944 = vadd.f32 %v4942, %v4943
  %v4945 = vsel %vm3081, %v4807, 0.0
  %v4946 = vadd.f32 %v4944, %v4945
  %v4947 = vsel %vm3081, %v4812, 0.0
  %v4948 = vadd.f32 %v4946, %v4947
  %v4949 = vsel %vm3081, %v4815, 0.0
  %v4950 = vadd.f32 %v4948, %v4949
  %v4951 = vsel %vm3081, %v4820, 0.0
  %v4952 = vadd.f32 %v4950, %v4951
  %v4953 = vsel %vm3081, %v4823, 0.0
  %v4954 = vadd.f32 %v4952, %v4953
  %v4955 = vrot.slane %v4954, 4
  %v4956 = vadd.f32 %v4954, %v4955
  %v4957 = vrot.slane %v4956, 2
  %v4958 = vadd.f32 %v4956, %v4957
  %v4959 = vrot.slane %v4958, 1
  %v4960 = vadd.f32 %v4958, %v4959
  %v4961 = vmul.f32 %v4572, %v4572
  %v4962 = vmul.f32 %v4575, %v4575
  %v4963 = vmul.f32 %v4580, %v4580
  %v4964 = vmul.f32 %v4583, %v4583
  %v4965 = vmul.f32 %v4588, %v4588
  %v4966 = vmul.f32 %v4591, %v4591
  %v4967 = vmul.f32 %v4596, %v4596
  %v4968 = vmul.f32 %v4599, %v4599
  %v4969 = vmul.f32 %v4604, %v4604
  %v4970 = vmul.f32 %v4607, %v4607
  %v4971 = vmul.f32 %v4612, %v4612
  %v4972 = vmul.f32 %v4615, %v4615
  %v4973 = vmul.f32 %v4620, %v4620
  %v4974 = vmul.f32 %v4623, %v4623
  %v4975 = vmul.f32 %v4628, %v4628
  %v4976 = vmul.f32 %v4631, %v4631
  %v4977 = vmul.f32 %v4636, %v4636
  %v4978 = vmul.f32 %v4639, %v4639
  %v4979 = vmul.f32 %v4644, %v4644
  %v4980 = vmul.f32 %v4647, %v4647
  %v4981 = vmul.f32 %v4652, %v4652
  %v4982 = vmul.f32 %v4655, %v4655
  %v4983 = vmul.f32 %v4660, %v4660
  %v4984 = vmul.f32 %v4663, %v4663
  %v4985 = vmul.f32 %v4668, %v4668
  %v4986 = vmul.f32 %v4671, %v4671
  %v4987 = vmul.f32 %v4676, %v4676
  %v4988 = vmul.f32 %v4679, %v4679
  %v4989 = vmul.f32 %v4684, %v4684
  %v4990 = vmul.f32 %v4687, %v4687
  %v4991 = vmul.f32 %v4692, %v4692
  %v4992 = vmul.f32 %v4695, %v4695
  %v4993 = vmul.f32 %v4700, %v4700
  %v4994 = vmul.f32 %v4703, %v4703
  %v4995 = vmul.f32 %v4708, %v4708
  %v4996 = vmul.f32 %v4711, %v4711
  %v4997 = vmul.f32 %v4716, %v4716
  %v4998 = vmul.f32 %v4719, %v4719
  %v4999 = vmul.f32 %v4724, %v4724
  %v5000 = vmul.f32 %v4727, %v4727
  %v5001 = vmul.f32 %v4732, %v4732
  %v5002 = vmul.f32 %v4735, %v4735
  %v5003 = vmul.f32 %v4740, %v4740
  %v5004 = vmul.f32 %v4743, %v4743
  %v5005 = vmul.f32 %v4748, %v4748
  %v5006 = vmul.f32 %v4751, %v4751
  %v5007 = vmul.f32 %v4756, %v4756
  %v5008 = vmul.f32 %v4759, %v4759
  %v5009 = vmul.f32 %v4764, %v4764
  %v5010 = vmul.f32 %v4767, %v4767
  %v5011 = vmul.f32 %v4772, %v4772
  %v5012 = vmul.f32 %v4775, %v4775
  %v5013 = vmul.f32 %v4780, %v4780
  %v5014 = vmul.f32 %v4783, %v4783
  %v5015 = vmul.f32 %v4788, %v4788
  %v5016 = vmul.f32 %v4791, %v4791
  %v5017 = vmul.f32 %v4796, %v4796
  %v5018 = vmul.f32 %v4799, %v4799
  %v5019 = vmul.f32 %v4804, %v4804
  %v5020 = vmul.f32 %v4807, %v4807
  %v5021 = vmul.f32 %v4812, %v4812
  %v5022 = vmul.f32 %v4815, %v4815
  %v5023 = vmul.f32 %v4820, %v4820
  %v5024 = vmul.f32 %v4823, %v4823
  %v5025 = vsel %vm3081, %v4961, 0.0
  %v5026 = vsel %vm3081, %v4962, 0.0
  %v5027 = vadd.f32 %v5025, %v5026
  %v5028 = vsel %vm3081, %v4963, 0.0
  %v5029 = vadd.f32 %v5027, %v5028
  %v5030 = vsel %vm3081, %v4964, 0.0
  %v5031 = vadd.f32 %v5029, %v5030
  %v5032 = vsel %vm3081, %v4965, 0.0
  %v5033 = vadd.f32 %v5031, %v5032
  %v5034 = vsel %vm3081, %v4966, 0.0
  %v5035 = vadd.f32 %v5033, %v5034
  %v5036 = vsel %vm3081, %v4967, 0.0
  %v5037 = vadd.f32 %v5035, %v5036
  %v5038 = vsel %vm3081, %v4968, 0.0
  %v5039 = vadd.f32 %v5037, %v5038
  %v5040 = vsel %vm3081, %v4969, 0.0
  %v5041 = vadd.f32 %v5039, %v5040
  %v5042 = vsel %vm3081, %v4970, 0.0
  %v5043 = vadd.f32 %v5041, %v5042
  %v5044 = vsel %vm3081, %v4971, 0.0
  %v5045 = vadd.f32 %v5043, %v5044
  %v5046 = vsel %vm3081, %v4972, 0.0
  %v5047 = vadd.f32 %v5045, %v5046
  %v5048 = vsel %vm3081, %v4973, 0.0
  %v5049 = vadd.f32 %v5047, %v5048
  %v5050 = vsel %vm3081, %v4974, 0.0
  %v5051 = vadd.f32 %v5049, %v5050
  %v5052 = vsel %vm3081, %v4975, 0.0
  %v5053 = vadd.f32 %v5051, %v5052
  %v5054 = vsel %vm3081, %v4976, 0.0
  %v5055 = vadd.f32 %v5053, %v5054
  %v5056 = vsel %vm3081, %v4977, 0.0
  %v5057 = vadd.f32 %v5055, %v5056
  %v5058 = vsel %vm3081, %v4978, 0.0
  %v5059 = vadd.f32 %v5057, %v5058
  %v5060 = vsel %vm3081, %v4979, 0.0
  %v5061 = vadd.f32 %v5059, %v5060
  %v5062 = vsel %vm3081, %v4980, 0.0
  %v5063 = vadd.f32 %v5061, %v5062
  %v5064 = vsel %vm3081, %v4981, 0.0
  %v5065 = vadd.f32 %v5063, %v5064
  %v5066 = vsel %vm3081, %v4982, 0.0
  %v5067 = vadd.f32 %v5065, %v5066
  %v5068 = vsel %vm3081, %v4983, 0.0
  %v5069 = vadd.f32 %v5067, %v5068
  %v5070 = vsel %vm3081, %v4984, 0.0
  %v5071 = vadd.f32 %v5069, %v5070
  %v5072 = vsel %vm3081, %v4985, 0.0
  %v5073 = vadd.f32 %v5071, %v5072
  %v5074 = vsel %vm3081, %v4986, 0.0
  %v5075 = vadd.f32 %v5073, %v5074
  %v5076 = vsel %vm3081, %v4987, 0.0
  %v5077 = vadd.f32 %v5075, %v5076
  %v5078 = vsel %vm3081, %v4988, 0.0
  %v5079 = vadd.f32 %v5077, %v5078
  %v5080 = vsel %vm3081, %v4989, 0.0
  %v5081 = vadd.f32 %v5079, %v5080
  %v5082 = vsel %vm3081, %v4990, 0.0
  %v5083 = vadd.f32 %v5081, %v5082
  %v5084 = vsel %vm3081, %v4991, 0.0
  %v5085 = vadd.f32 %v5083, %v5084
  %v5086 = vsel %vm3081, %v4992, 0.0
  %v5087 = vadd.f32 %v5085, %v5086
  %v5088 = vsel %vm3081, %v4993, 0.0
  %v5089 = vadd.f32 %v5087, %v5088
  %v5090 = vsel %vm3081, %v4994, 0.0
  %v5091 = vadd.f32 %v5089, %v5090
  %v5092 = vsel %vm3081, %v4995, 0.0
  %v5093 = vadd.f32 %v5091, %v5092
  %v5094 = vsel %vm3081, %v4996, 0.0
  %v5095 = vadd.f32 %v5093, %v5094
  %v5096 = vsel %vm3081, %v4997, 0.0
  %v5097 = vadd.f32 %v5095, %v5096
  %v5098 = vsel %vm3081, %v4998, 0.0
  %v5099 = vadd.f32 %v5097, %v5098
  %v5100 = vsel %vm3081, %v4999, 0.0
  %v5101 = vadd.f32 %v5099, %v5100
  %v5102 = vsel %vm3081, %v5000, 0.0
  %v5103 = vadd.f32 %v5101, %v5102
  %v5104 = vsel %vm3081, %v5001, 0.0
  %v5105 = vadd.f32 %v5103, %v5104
  %v5106 = vsel %vm3081, %v5002, 0.0
  %v5107 = vadd.f32 %v5105, %v5106
  %v5108 = vsel %vm3081, %v5003, 0.0
  %v5109 = vadd.f32 %v5107, %v5108
  %v5110 = vsel %vm3081, %v5004, 0.0
  %v5111 = vadd.f32 %v5109, %v5110
  %v5112 = vsel %vm3081, %v5005, 0.0
  %v5113 = vadd.f32 %v5111, %v5112
  %v5114 = vsel %vm3081, %v5006, 0.0
  %v5115 = vadd.f32 %v5113, %v5114
  %v5116 = vsel %vm3081, %v5007, 0.0
  %v5117 = vadd.f32 %v5115, %v5116
  %v5118 = vsel %vm3081, %v5008, 0.0
  %v5119 = vadd.f32 %v5117, %v5118
  %v5120 = vsel %vm3081, %v5009, 0.0
  %v5121 = vadd.f32 %v5119, %v5120
  %v5122 = vsel %vm3081, %v5010, 0.0
  %v5123 = vadd.f32 %v5121, %v5122
  %v5124 = vsel %vm3081, %v5011, 0.0
  %v5125 = vadd.f32 %v5123, %v5124
  %v5126 = vsel %vm3081, %v5012, 0.0
  %v5127 = vadd.f32 %v5125, %v5126
  %v5128 = vsel %vm3081, %v5013, 0.0
  %v5129 = vadd.f32 %v5127, %v5128
  %v5130 = vsel %vm3081, %v5014, 0.0
  %v5131 = vadd.f32 %v5129, %v5130
  %v5132 = vsel %vm3081, %v5015, 0.0
  %v5133 = vadd.f32 %v5131, %v5132
  %v5134 = vsel %vm3081, %v5016, 0.0
  %v5135 = vadd.f32 %v5133, %v5134
  %v5136 = vsel %vm3081, %v5017, 0.0
  %v5137 = vadd.f32 %v5135, %v5136
  %v5138 = vsel %vm3081, %v5018, 0.0
  %v5139 = vadd.f32 %v5137, %v5138
  %v5140 = vsel %vm3081, %v5019, 0.0
  %v5141 = vadd.f32 %v5139, %v5140
  %v5142 = vsel %vm3081, %v5020, 0.0
  %v5143 = vadd.f32 %v5141, %v5142
  %v5144 = vsel %vm3081, %v5021, 0.0
  %v5145 = vadd.f32 %v5143, %v5144
  %v5146 = vsel %vm3081, %v5022, 0.0
  %v5147 = vadd.f32 %v5145, %v5146
  %v5148 = vsel %vm3081, %v5023, 0.0
  %v5149 = vadd.f32 %v5147, %v5148
  %v5150 = vsel %vm3081, %v5024, 0.0
  %v5151 = vadd.f32 %v5149, %v5150
  %v5152 = vrot.slane %v5151, 4
  %v5153 = vadd.f32 %v5151, %v5152
  %v5154 = vrot.slane %v5153, 2
  %v5155 = vadd.f32 %v5153, %v5154
  %v5156 = vrot.slane %v5155, 1
  %v5157 = vadd.f32 %v5155, %v5156
  %v5158 = vmul.f32 %v4960, 0.001953125
  %v5159 = vmul.f32 %v5157, 0.001953125
  %v5160 = vmul.f32 %v5158, %v5158
  %v5161 = vsub.f32 %v5159, %v5160
  %v5162 = vadd.f32 %v5161, 1e-05
  %v5163 = vrsqrt.pop %v5162
  %v5164 = vmul.f32 %v4826, %v5163
  %v5165 = vmul.f32 %v5158, %v5164
  %v5166 = vsub.f32 %v4827, %v5165
  %v5168 = vlaneseq
  %v5169 = vshrl.u32 %v5168, 7
  %v5170 = vsub.s32 0, %v5169
  %v5171 = vrot.slane %v5164, %v5170
  %v5173 = vmul.f32 %v4572, %v5171
  %v5174 = vmul.f32 %v4575, %v5171
  %v5175 = vmul.f32 %v4580, %v5171
  %v5176 = vmul.f32 %v4583, %v5171
  %v5177 = vmul.f32 %v4588, %v5171
  %v5178 = vmul.f32 %v4591, %v5171
  %v5179 = vmul.f32 %v4596, %v5171
  %v5180 = vmul.f32 %v4599, %v5171
  %v5181 = vmul.f32 %v4604, %v5171
  %v5182 = vmul.f32 %v4607, %v5171
  %v5183 = vmul.f32 %v4612, %v5171
  %v5184 = vmul.f32 %v4615, %v5171
  %v5185 = vmul.f32 %v4620, %v5171
  %v5186 = vmul.f32 %v4623, %v5171
  %v5187 = vmul.f32 %v4628, %v5171
  %v5188 = vmul.f32 %v4631, %v5171
  %v5189 = vmul.f32 %v4636, %v5171
  %v5190 = vmul.f32 %v4639, %v5171
  %v5191 = vmul.f32 %v4644, %v5171
  %v5192 = vmul.f32 %v4647, %v5171
  %v5193 = vmul.f32 %v4652, %v5171
  %v5194 = vmul.f32 %v4655, %v5171
  %v5195 = vmul.f32 %v4660, %v5171
  %v5196 = vmul.f32 %v4663, %v5171
  %v5197 = vmul.f32 %v4668, %v5171
  %v5198 = vmul.f32 %v4671, %v5171
  %v5199 = vmul.f32 %v4676, %v5171
  %v5200 = vmul.f32 %v4679, %v5171
  %v5201 = vmul.f32 %v4684, %v5171
  %v5202 = vmul.f32 %v4687, %v5171
  %v5203 = vmul.f32 %v4692, %v5171
  %v5204 = vmul.f32 %v4695, %v5171
  %v5205 = vmul.f32 %v4700, %v5171
  %v5206 = vmul.f32 %v4703, %v5171
  %v5207 = vmul.f32 %v4708, %v5171
  %v5208 = vmul.f32 %v4711, %v5171
  %v5209 = vmul.f32 %v4716, %v5171
  %v5210 = vmul.f32 %v4719, %v5171
  %v5211 = vmul.f32 %v4724, %v5171
  %v5212 = vmul.f32 %v4727, %v5171
  %v5213 = vmul.f32 %v4732, %v5171
  %v5214 = vmul.f32 %v4735, %v5171
  %v5215 = vmul.f32 %v4740, %v5171
  %v5216 = vmul.f32 %v4743, %v5171
  %v5217 = vmul.f32 %v4748, %v5171
  %v5218 = vmul.f32 %v4751, %v5171
  %v5219 = vmul.f32 %v4756, %v5171
  %v5220 = vmul.f32 %v4759, %v5171
  %v5221 = vmul.f32 %v4764, %v5171
  %v5222 = vmul.f32 %v4767, %v5171
  %v5223 = vmul.f32 %v4772, %v5171
  %v5224 = vmul.f32 %v4775, %v5171
  %v5225 = vmul.f32 %v4780, %v5171
  %v5226 = vmul.f32 %v4783, %v5171
  %v5227 = vmul.f32 %v4788, %v5171
  %v5228 = vmul.f32 %v4791, %v5171
  %v5229 = vmul.f32 %v4796, %v5171
  %v5230 = vmul.f32 %v4799, %v5171
  %v5231 = vmul.f32 %v4804, %v5171
  %v5232 = vmul.f32 %v4807, %v5171
  %v5233 = vmul.f32 %v4812, %v5171
  %v5234 = vmul.f32 %v4815, %v5171
  %v5235 = vmul.f32 %v4820, %v5171
  %v5236 = vmul.f32 %v4823, %v5171
  %v5238 = vlaneseq
  %v5239 = vshrl.u32 %v5238, 7
  %v5240 = vsub.s32 0, %v5239
  %v5241 = vrot.slane %v5166, %v5240
  %v5243 = vadd.f32 %v5173, %v5241
  %v5244 = vadd.f32 %v5174, %v5241
  %v5245 = vadd.f32 %v5175, %v5241
  %v5246 = vadd.f32 %v5176, %v5241
  %v5247 = vadd.f32 %v5177, %v5241
  %v5248 = vadd.f32 %v5178, %v5241
  %v5249 = vadd.f32 %v5179, %v5241
  %v5250 = vadd.f32 %v5180, %v5241
  %v5251 = vadd.f32 %v5181, %v5241
  %v5252 = vadd.f32 %v5182, %v5241
  %v5253 = vadd.f32 %v5183, %v5241
  %v5254 = vadd.f32 %v5184, %v5241
  %v5255 = vadd.f32 %v5185, %v5241
  %v5256 = vadd.f32 %v5186, %v5241
  %v5257 = vadd.f32 %v5187, %v5241
  %v5258 = vadd.f32 %v5188, %v5241
  %v5259 = vadd.f32 %v5189, %v5241
  %v5260 = vadd.f32 %v5190, %v5241
  %v5261 = vadd.f32 %v5191, %v5241
  %v5262 = vadd.f32 %v5192, %v5241
  %v5263 = vadd.f32 %v5193, %v5241
  %v5264 = vadd.f32 %v5194, %v5241
  %v5265 = vadd.f32 %v5195, %v5241
  %v5266 = vadd.f32 %v5196, %v5241
  %v5267 = vadd.f32 %v5197, %v5241
  %v5268 = vadd.f32 %v5198, %v5241
  %v5269 = vadd.f32 %v5199, %v5241
  %v5270 = vadd.f32 %v5200, %v5241
  %v5271 = vadd.f32 %v5201, %v5241
  %v5272 = vadd.f32 %v5202, %v5241
  %v5273 = vadd.f32 %v5203, %v5241
  %v5274 = vadd.f32 %v5204, %v5241
  %v5275 = vadd.f32 %v5205, %v5241
  %v5276 = vadd.f32 %v5206, %v5241
  %v5277 = vadd.f32 %v5207, %v5241
  %v5278 = vadd.f32 %v5208, %v5241
  %v5279 = vadd.f32 %v5209, %v5241
  %v5280 = vadd.f32 %v5210, %v5241
  %v5281 = vadd.f32 %v5211, %v5241
  %v5282 = vadd.f32 %v5212, %v5241
  %v5283 = vadd.f32 %v5213, %v5241
  %v5284 = vadd.f32 %v5214, %v5241
  %v5285 = vadd.f32 %v5215, %v5241
  %v5286 = vadd.f32 %v5216, %v5241
  %v5287 = vadd.f32 %v5217, %v5241
  %v5288 = vadd.f32 %v5218, %v5241
  %v5289 = vadd.f32 %v5219, %v5241
  %v5290 = vadd.f32 %v5220, %v5241
  %v5291 = vadd.f32 %v5221, %v5241
  %v5292 = vadd.f32 %v5222, %v5241
  %v5293 = vadd.f32 %v5223, %v5241
  %v5294 = vadd.f32 %v5224, %v5241
  %v5295 = vadd.f32 %v5225, %v5241
  %v5296 = vadd.f32 %v5226, %v5241
  %v5297 = vadd.f32 %v5227, %v5241
  %v5298 = vadd.f32 %v5228, %v5241
  %v5299 = vadd.f32 %v5229, %v5241
  %v5300 = vadd.f32 %v5230, %v5241
  %v5301 = vadd.f32 %v5231, %v5241
  %v5302 = vadd.f32 %v5232, %v5241
  %v5303 = vadd.f32 %v5233, %v5241
  %v5304 = vadd.f32 %v5234, %v5241
  %v5305 = vadd.f32 %v5235, %v5241
  %v5306 = vadd.f32 %v5236, %v5241
  %v5307 = vmax.f32 %v5243, 0.0
  %v5308 = vmax.f32 %v5244, 0.0
  %v5309 = vmax.f32 %v5245, 0.0
  %v5310 = vmax.f32 %v5246, 0.0
  %v5311 = vmax.f32 %v5247, 0.0
  %v5312 = vmax.f32 %v5248, 0.0
  %v5313 = vmax.f32 %v5249, 0.0
  %v5314 = vmax.f32 %v5250, 0.0
  %v5315 = vmax.f32 %v5251, 0.0
  %v5316 = vmax.f32 %v5252, 0.0
  %v5317 = vmax.f32 %v5253, 0.0
  %v5318 = vmax.f32 %v5254, 0.0
  %v5319 = vmax.f32 %v5255, 0.0
  %v5320 = vmax.f32 %v5256, 0.0
  %v5321 = vmax.f32 %v5257, 0.0
  %v5322 = vmax.f32 %v5258, 0.0
  %v5323 = vmax.f32 %v5259, 0.0
  %v5324 = vmax.f32 %v5260, 0.0
  %v5325 = vmax.f32 %v5261, 0.0
  %v5326 = vmax.f32 %v5262, 0.0
  %v5327 = vmax.f32 %v5263, 0.0
  %v5328 = vmax.f32 %v5264, 0.0
  %v5329 = vmax.f32 %v5265, 0.0
  %v5330 = vmax.f32 %v5266, 0.0
  %v5331 = vmax.f32 %v5267, 0.0
  %v5332 = vmax.f32 %v5268, 0.0
  %v5333 = vmax.f32 %v5269, 0.0
  %v5334 = vmax.f32 %v5270, 0.0
  %v5335 = vmax.f32 %v5271, 0.0
  %v5336 = vmax.f32 %v5272, 0.0
  %v5337 = vmax.f32 %v5273, 0.0
  %v5338 = vmax.f32 %v5274, 0.0
  %v5339 = vmax.f32 %v5275, 0.0
  %v5340 = vmax.f32 %v5276, 0.0
  %v5341 = vmax.f32 %v5277, 0.0
  %v5342 = vmax.f32 %v5278, 0.0
  %v5343 = vmax.f32 %v5279, 0.0
  %v5344 = vmax.f32 %v5280, 0.0
  %v5345 = vmax.f32 %v5281, 0.0
  %v5346 = vmax.f32 %v5282, 0.0
  %v5347 = vmax.f32 %v5283, 0.0
  %v5348 = vmax.f32 %v5284, 0.0
  %v5349 = vmax.f32 %v5285, 0.0
  %v5350 = vmax.f32 %v5286, 0.0
  %v5351 = vmax.f32 %v5287, 0.0
  %v5352 = vmax.f32 %v5288, 0.0
  %v5353 = vmax.f32 %v5289, 0.0
  %v5354 = vmax.f32 %v5290, 0.0
  %v5355 = vmax.f32 %v5291, 0.0
  %v5356 = vmax.f32 %v5292, 0.0
  %v5357 = vmax.f32 %v5293, 0.0
  %v5358 = vmax.f32 %v5294, 0.0
  %v5359 = vmax.f32 %v5295, 0.0
  %v5360 = vmax.f32 %v5296, 0.0
  %v5361 = vmax.f32 %v5297, 0.0
  %v5362 = vmax.f32 %v5298, 0.0
  %v5363 = vmax.f32 %v5299, 0.0
  %v5364 = vmax.f32 %v5300, 0.0
  %v5365 = vmax.f32 %v5301, 0.0
  %v5366 = vmax.f32 %v5302, 0.0
  %v5367 = vmax.f32 %v5303, 0.0
  %v5368 = vmax.f32 %v5304, 0.0
  %v5369 = vmax.f32 %v5305, 0.0
  %v5370 = vmax.f32 %v5306, 0.0
  %5371 = vst.msk [vmem:[#allocation3] sm:$0xff] %vm3081, 0.0
  %5372 = vst.msk [vmem:[#allocation3 + $0x8] sm:$0xff] %vm3081, 0.0
  %vm5373 = vcmask 123904
  %5374 = vst.msk [vmem:[#allocation3 + $0x10] sm:$0x3] %vm5373, 0.0
  %5375 = vst.msk [vmem:[#allocation3 + $0x1b0] sm:$0xff] %vm3081, 0.0
  %5376 = vst.msk [vmem:[#allocation3 + $0x1b8] sm:$0xff] %vm3081, 0.0
  %5377 = vst.msk [vmem:[#allocation3 + $0x1c0] sm:$0x3] %vm5373, 0.0
  %s5378 = scalar_lea.vmem [#allocation3], 408
  %5379 = vst.msk [vmem:[%s5378] sm:$0xff] %vm3081, 0.0
  %5380 = vst.msk [vmem:[%s5378 + $0x8] sm:$0xff] %vm3081, 0.0
  %5381 = vst.msk [vmem:[%s5378 + $0x10] sm:$0x3] %vm5373, 0.0
  %5382 = vst.msk [vmem:[%s5378 + $0x1b0] sm:$0xff] %vm3081, 0.0
  %5383 = vst.msk [vmem:[%s5378 + $0x1b8] sm:$0xff] %vm3081, 0.0
  %5384 = vst.msk [vmem:[%s5378 + $0x1c0] sm:$0x3] %vm5373, 0.0
  %vm5385 = vcmask 122880
  %5386 = vst.msk [vmem:[#allocation3] sm:$0x1] %vm5385, 0.0
  %5387 = vst.msk [vmem:[#allocation3 + $0x18] sm:$0x1] %vm5385, 0.0
  %5388 = vst.msk [vmem:[#allocation3 + $0x30] sm:$0x1] %vm5385, 0.0
  %5389 = vst.msk [vmem:[#allocation3 + $0x48] sm:$0x1] %vm5385, 0.0
  %5390 = vst.msk [vmem:[#allocation3 + $0x60] sm:$0x1] %vm5385, 0.0
  %5391 = vst.msk [vmem:[#allocation3 + $0x78] sm:$0x1] %vm5385, 0.0
  %5392 = vst.msk [vmem:[#allocation3 + $0x90] sm:$0x1] %vm5385, 0.0
  %5393 = vst.msk [vmem:[#allocation3 + $0xa8] sm:$0x1] %vm5385, 0.0
  %5394 = vst.msk [vmem:[#allocation3 + $0xc0] sm:$0x1] %vm5385, 0.0
  %5395 = vst.msk [vmem:[#allocation3 + $0xd8] sm:$0x1] %vm5385, 0.0
  %5396 = vst.msk [vmem:[#allocation3 + $0xf0] sm:$0x1] %vm5385, 0.0
  %5397 = vst.msk [vmem:[#allocation3 + $0x108] sm:$0x1] %vm5385, 0.0
  %5398 = vst.msk [vmem:[#allocation3 + $0x120] sm:$0x1] %vm5385, 0.0
  %5399 = vst.msk [vmem:[#allocation3 + $0x138] sm:$0x1] %vm5385, 0.0
  %5400 = vst.msk [vmem:[#allocation3 + $0x150] sm:$0x1] %vm5385, 0.0
  %5401 = vst.msk [vmem:[#allocation3 + $0x168] sm:$0x1] %vm5385, 0.0
  %5402 = vst.msk [vmem:[#allocation3 + $0x180] sm:$0x1] %vm5385, 0.0
  %5403 = vst.msk [vmem:[#allocation3 + $0x198] sm:$0x1] %vm5385, 0.0
  %5404 = vst.msk [vmem:[#allocation3 + $0x1b0] sm:$0x1] %vm5385, 0.0
  %5405 = vst.msk [vmem:[#allocation3 + $0x1c8] sm:$0x1] %vm5385, 0.0
  %5406 = vst.msk [vmem:[#allocation3 + $0x1e0] sm:$0x1] %vm5385, 0.0
  %5407 = vst.msk [vmem:[#allocation3 + $0x1f8] sm:$0x1] %vm5385, 0.0
  %5408 = vst.msk [vmem:[#allocation3 + $0x210] sm:$0x1] %vm5385, 0.0
  %5409 = vst.msk [vmem:[#allocation3 + $0x228] sm:$0x1] %vm5385, 0.0
  %5410 = vst.msk [vmem:[#allocation3 + $0x240] sm:$0x1] %vm5385, 0.0
  %5411 = vst.msk [vmem:[#allocation3 + $0x258] sm:$0x1] %vm5385, 0.0
  %5412 = vst.msk [vmem:[#allocation3 + $0x270] sm:$0x1] %vm5385, 0.0
  %5413 = vst.msk [vmem:[#allocation3 + $0x288] sm:$0x1] %vm5385, 0.0
  %5414 = vst.msk [vmem:[#allocation3 + $0x2a0] sm:$0x1] %vm5385, 0.0
  %5415 = vst.msk [vmem:[#allocation3 + $0x2b8] sm:$0x1] %vm5385, 0.0
  %5416 = vst.msk [vmem:[#allocation3 + $0x2d0] sm:$0x1] %vm5385, 0.0
  %5417 = vst.msk [vmem:[#allocation3 + $0x2e8] sm:$0x1] %vm5385, 0.0
  %5418 = vst.msk [vmem:[#allocation3 + $0x300] sm:$0x1] %vm5385, 0.0
  %5419 = vst.msk [vmem:[#allocation3 + $0x318] sm:$0x1] %vm5385, 0.0
  %5420 = vst.msk [vmem:[#allocation3 + $0x330] sm:$0x1] %vm5385, 0.0
  %5421 = vst.msk [vmem:[#allocation3 + $0x348] sm:$0x1] %vm5385, 0.0
  %5422 = vst.msk [vmem:[#allocation3 + $0x11] sm:$0x1] %vm5385, 0.0
  %5423 = vst.msk [vmem:[#allocation3 + $0x29] sm:$0x1] %vm5385, 0.0
  %5424 = vst.msk [vmem:[#allocation3 + $0x41] sm:$0x1] %vm5385, 0.0
  %5425 = vst.msk [vmem:[#allocation3 + $0x59] sm:$0x1] %vm5385, 0.0
  %5426 = vst.msk [vmem:[#allocation3 + $0x71] sm:$0x1] %vm5385, 0.0
  %5427 = vst.msk [vmem:[#allocation3 + $0x89] sm:$0x1] %vm5385, 0.0
  %5428 = vst.msk [vmem:[#allocation3 + $0xa1] sm:$0x1] %vm5385, 0.0
  %5429 = vst.msk [vmem:[#allocation3 + $0xb9] sm:$0x1] %vm5385, 0.0
  %5430 = vst.msk [vmem:[#allocation3 + $0xd1] sm:$0x1] %vm5385, 0.0
  %5431 = vst.msk [vmem:[#allocation3 + $0xe9] sm:$0x1] %vm5385, 0.0
  %5432 = vst.msk [vmem:[#allocation3 + $0x101] sm:$0x1] %vm5385, 0.0
  %5433 = vst.msk [vmem:[#allocation3 + $0x119] sm:$0x1] %vm5385, 0.0
  %5434 = vst.msk [vmem:[#allocation3 + $0x131] sm:$0x1] %vm5385, 0.0
  %5435 = vst.msk [vmem:[#allocation3 + $0x149] sm:$0x1] %vm5385, 0.0
  %5436 = vst.msk [vmem:[#allocation3 + $0x161] sm:$0x1] %vm5385, 0.0
  %5437 = vst.msk [vmem:[#allocation3 + $0x179] sm:$0x1] %vm5385, 0.0
  %5438 = vst.msk [vmem:[#allocation3 + $0x191] sm:$0x1] %vm5385, 0.0
  %5439 = vst.msk [vmem:[#allocation3 + $0x1a9] sm:$0x1] %vm5385, 0.0
  %5440 = vst.msk [vmem:[#allocation3 + $0x1c1] sm:$0x1] %vm5385, 0.0
  %5441 = vst.msk [vmem:[#allocation3 + $0x1d9] sm:$0x1] %vm5385, 0.0
  %5442 = vst.msk [vmem:[#allocation3 + $0x1f1] sm:$0x1] %vm5385, 0.0
  %5443 = vst.msk [vmem:[#allocation3 + $0x209] sm:$0x1] %vm5385, 0.0
  %5444 = vst.msk [vmem:[#allocation3 + $0x221] sm:$0x1] %vm5385, 0.0
  %5445 = vst.msk [vmem:[#allocation3 + $0x239] sm:$0x1] %vm5385, 0.0
  %5446 = vst.msk [vmem:[#allocation3 + $0x251] sm:$0x1] %vm5385, 0.0
  %5447 = vst.msk [vmem:[#allocation3 + $0x269] sm:$0x1] %vm5385, 0.0
  %5448 = vst.msk [vmem:[#allocation3 + $0x281] sm:$0x1] %vm5385, 0.0
  %5449 = vst.msk [vmem:[#allocation3 + $0x299] sm:$0x1] %vm5385, 0.0
  %5450 = vst.msk [vmem:[#allocation3 + $0x2b1] sm:$0x1] %vm5385, 0.0
  %5451 = vst.msk [vmem:[#allocation3 + $0x2c9] sm:$0x1] %vm5385, 0.0
  %5452 = vst.msk [vmem:[#allocation3 + $0x2e1] sm:$0x1] %vm5385, 0.0
  %5453 = vst.msk [vmem:[#allocation3 + $0x2f9] sm:$0x1] %vm5385, 0.0
  %5454 = vst.msk [vmem:[#allocation3 + $0x311] sm:$0x1] %vm5385, 0.0
  %5455 = vst.msk [vmem:[#allocation3 + $0x329] sm:$0x1] %vm5385, 0.0
  %5456 = vst.msk [vmem:[#allocation3 + $0x341] sm:$0x1] %vm5385, 0.0
  %5457 = vst.msk [vmem:[#allocation3 + $0x359] sm:$0x1] %vm5385, 0.0
  %s5458 = scalar_lea.vmem [#allocation3], 24
  %5459 = vst.msk [vmem:[%s5458 + $0x1] sm:$0xff] %vm3081, %v5307
  %5460 = vst.msk [vmem:[%s5458 + $0x9] sm:$0xff] %vm3081, %v5308
  %5461 = vst.msk [vmem:[%s5458 + $0x19] sm:$0xff] %vm3081, %v5309
  %5462 = vst.msk [vmem:[%s5458 + $0x21] sm:$0xff] %vm3081, %v5310
  %5463 = vst.msk [vmem:[%s5458 + $0x31] sm:$0xff] %vm3081, %v5311
  %5464 = vst.msk [vmem:[%s5458 + $0x39] sm:$0xff] %vm3081, %v5312
  %5465 = vst.msk [vmem:[%s5458 + $0x49] sm:$0xff] %vm3081, %v5313
  %5466 = vst.msk [vmem:[%s5458 + $0x51] sm:$0xff] %vm3081, %v5314
  %5467 = vst.msk [vmem:[%s5458 + $0x61] sm:$0xff] %vm3081, %v5315
  %5468 = vst.msk [vmem:[%s5458 + $0x69] sm:$0xff] %vm3081, %v5316
  %5469 = vst.msk [vmem:[%s5458 + $0x79] sm:$0xff] %vm3081, %v5317
  %5470 = vst.msk [vmem:[%s5458 + $0x81] sm:$0xff] %vm3081, %v5318
  %5471 = vst.msk [vmem:[%s5458 + $0x91] sm:$0xff] %vm3081, %v5319
  %5472 = vst.msk [vmem:[%s5458 + $0x99] sm:$0xff] %vm3081, %v5320
  %5473 = vst.msk [vmem:[%s5458 + $0xa9] sm:$0xff] %vm3081, %v5321
  %5474 = vst.msk [vmem:[%s5458 + $0xb1] sm:$0xff] %vm3081, %v5322
  %5475 = vst.msk [vmem:[%s5458 + $0xc1] sm:$0xff] %vm3081, %v5323
  %5476 = vst.msk [vmem:[%s5458 + $0xc9] sm:$0xff] %vm3081, %v5324
  %5477 = vst.msk [vmem:[%s5458 + $0xd9] sm:$0xff] %vm3081, %v5325
  %5478 = vst.msk [vmem:[%s5458 + $0xe1] sm:$0xff] %vm3081, %v5326
  %5479 = vst.msk [vmem:[%s5458 + $0xf1] sm:$0xff] %vm3081, %v5327
  %5480 = vst.msk [vmem:[%s5458 + $0xf9] sm:$0xff] %vm3081, %v5328
  %5481 = vst.msk [vmem:[%s5458 + $0x109] sm:$0xff] %vm3081, %v5329
  %5482 = vst.msk [vmem:[%s5458 + $0x111] sm:$0xff] %vm3081, %v5330
  %5483 = vst.msk [vmem:[%s5458 + $0x121] sm:$0xff] %vm3081, %v5331
  %5484 = vst.msk [vmem:[%s5458 + $0x129] sm:$0xff] %vm3081, %v5332
  %5485 = vst.msk [vmem:[%s5458 + $0x139] sm:$0xff] %vm3081, %v5333
  %5486 = vst.msk [vmem:[%s5458 + $0x141] sm:$0xff] %vm3081, %v5334
  %5487 = vst.msk [vmem:[%s5458 + $0x151] sm:$0xff] %vm3081, %v5335
  %5488 = vst.msk [vmem:[%s5458 + $0x159] sm:$0xff] %vm3081, %v5336
  %5489 = vst.msk [vmem:[%s5458 + $0x169] sm:$0xff] %vm3081, %v5337
  %5490 = vst.msk [vmem:[%s5458 + $0x171] sm:$0xff] %vm3081, %v5338
  %5491 = vst.msk [vmem:[%s5458 + $0x1b1] sm:$0xff] %vm3081, %v5339
  %5492 = vst.msk [vmem:[%s5458 + $0x1b9] sm:$0xff] %vm3081, %v5340
  %5493 = vst.msk [vmem:[%s5458 + $0x1c9] sm:$0xff] %vm3081, %v5341
  %5494 = vst.msk [vmem:[%s5458 + $0x1d1] sm:$0xff] %vm3081, %v5342
  %5495 = vst.msk [vmem:[%s5458 + $0x1e1] sm:$0xff] %vm3081, %v5343
  %5496 = vst.msk [vmem:[%s5458 + $0x1e9] sm:$0xff] %vm3081, %v5344
  %5497 = vst.msk [vmem:[%s5458 + $0x1f9] sm:$0xff] %vm3081, %v5345
  %5498 = vst.msk [vmem:[%s5458 + $0x201] sm:$0xff] %vm3081, %v5346
  %5499 = vst.msk [vmem:[%s5458 + $0x211] sm:$0xff] %vm3081, %v5347
  %5500 = vst.msk [vmem:[%s5458 + $0x219] sm:$0xff] %vm3081, %v5348
  %5501 = vst.msk [vmem:[%s5458 + $0x229] sm:$0xff] %vm3081, %v5349
  %5502 = vst.msk [vmem:[%s5458 + $0x231] sm:$0xff] %vm3081, %v5350
  %5503 = vst.msk [vmem:[%s5458 + $0x241] sm:$0xff] %vm3081, %v5351
  %5504 = vst.msk [vmem:[%s5458 + $0x249] sm:$0xff] %vm3081, %v5352
  %5505 = vst.msk [vmem:[%s5458 + $0x259] sm:$0xff] %vm3081, %v5353
  %5506 = vst.msk [vmem:[%s5458 + $0x261] sm:$0xff] %vm3081, %v5354
  %5507 = vst.msk [vmem:[%s5458 + $0x271] sm:$0xff] %vm3081, %v5355
  %5508 = vst.msk [vmem:[%s5458 + $0x279] sm:$0xff] %vm3081, %v5356
  %5509 = vst.msk [vmem:[%s5458 + $0x289] sm:$0xff] %vm3081, %v5357
  %5510 = vst.msk [vmem:[%s5458 + $0x291] sm:$0xff] %vm3081, %v5358
  %5511 = vst.msk [vmem:[%s5458 + $0x2a1] sm:$0xff] %vm3081, %v5359
  %5512 = vst.msk [vmem:[%s5458 + $0x2a9] sm:$0xff] %vm3081, %v5360
  %5513 = vst.msk [vmem:[%s5458 + $0x2b9] sm:$0xff] %vm3081, %v5361
  %5514 = vst.msk [vmem:[%s5458 + $0x2c1] sm:$0xff] %vm3081, %v5362
  %5515 = vst.msk [vmem:[%s5458 + $0x2d1] sm:$0xff] %vm3081, %v5363
  %5516 = vst.msk [vmem:[%s5458 + $0x2d9] sm:$0xff] %vm3081, %v5364
  %5517 = vst.msk [vmem:[%s5458 + $0x2e9] sm:$0xff] %vm3081, %v5365
  %5518 = vst.msk [vmem:[%s5458 + $0x2f1] sm:$0xff] %vm3081, %v5366
  %5519 = vst.msk [vmem:[%s5458 + $0x301] sm:$0xff] %vm3081, %v5367
  %5520 = vst.msk [vmem:[%s5458 + $0x309] sm:$0xff] %vm3081, %v5368
  %5521 = vst.msk [vmem:[%s5458 + $0x319] sm:$0xff] %vm3081, %v5369
  %5522 = vst.msk [vmem:[%s5458 + $0x321] sm:$0xff] %vm3081, %v5370
  %v5523 = vld [vmem:[#allocation3] sm:$0xff]
  %v5524 = vld [vmem:[#allocation3 + $0x8] sm:$0xff]
  %v5525 = vld [vmem:[#allocation3 + $0x18] sm:$0xff]
  %v5526 = vld [vmem:[#allocation3 + $0x20] sm:$0xff]
  %v5527 = vld [vmem:[#allocation3 + $0x30] sm:$0xff]
  %v5528 = vld [vmem:[#allocation3 + $0x38] sm:$0xff]
  %v5529 = vld [vmem:[#allocation3 + $0x48] sm:$0xff]
  %v5530 = vld [vmem:[#allocation3 + $0x50] sm:$0xff]
  %v5531 = vld [vmem:[#allocation3 + $0x60] sm:$0xff]
  %v5532 = vld [vmem:[#allocation3 + $0x68] sm:$0xff]
  %v5533 = vld [vmem:[#allocation3 + $0x78] sm:$0xff]
  %v5534 = vld [vmem:[#allocation3 + $0x80] sm:$0xff]
  %v5535 = vld [vmem:[#allocation3 + $0x90] sm:$0xff]
  %v5536 = vld [vmem:[#allocation3 + $0x98] sm:$0xff]
  %v5537 = vld [vmem:[#allocation3 + $0xa8] sm:$0xff]
  %v5538 = vld [vmem:[#allocation3 + $0xb0] sm:$0xff]
  %v5539 = vld [vmem:[#allocation3 + $0xc0] sm:$0xff]
  %v5540 = vld [vmem:[#allocation3 + $0xc8] sm:$0xff]
  %v5541 = vld [vmem:[#allocation3 + $0xd8] sm:$0xff]
  %v5542 = vld [vmem:[#allocation3 + $0xe0] sm:$0xff]
  %v5543 = vld [vmem:[#allocation3 + $0xf0] sm:$0xff]
  %v5544 = vld [vmem:[#allocation3 + $0xf8] sm:$0xff]
  %v5545 = vld [vmem:[#allocation3 + $0x108] sm:$0xff]
  %v5546 = vld [vmem:[#allocation3 + $0x110] sm:$0xff]
  %v5547 = vld [vmem:[#allocation3 + $0x120] sm:$0xff]
  %v5548 = vld [vmem:[#allocation3 + $0x128] sm:$0xff]
  %v5549 = vld [vmem:[#allocation3 + $0x138] sm:$0xff]
  %v5550 = vld [vmem:[#allocation3 + $0x140] sm:$0xff]
  %v5551 = vld [vmem:[#allocation3 + $0x150] sm:$0xff]
  %v5552 = vld [vmem:[#allocation3 + $0x158] sm:$0xff]
  %v5553 = vld [vmem:[#allocation3 + $0x168] sm:$0xff]
  %v5554 = vld [vmem:[#allocation3 + $0x170] sm:$0xff]
  %v5555 = vld [vmem:[#allocation3 + $0x1b0] sm:$0xff]
  %v5556 = vld [vmem:[#allocation3 + $0x1b8] sm:$0xff]
  %v5557 = vld [vmem:[#allocation3 + $0x1c8] sm:$0xff]
  %v5558 = vld [vmem:[#allocation3 + $0x1d0] sm:$0xff]
  %v5559 = vld [vmem:[#allocation3 + $0x1e0] sm:$0xff]
  %v5560 = vld [vmem:[#allocation3 + $0x1e8] sm:$0xff]
  %v5561 = vld [vmem:[#allocation3 + $0x1f8] sm:$0xff]
  %v5562 = vld [vmem:[#allocation3 + $0x200] sm:$0xff]
  %v5563 = vld [vmem:[#allocation3 + $0x210] sm:$0xff]
  %v5564 = vld [vmem:[#allocation3 + $0x218] sm:$0xff]
  %v5565 = vld [vmem:[#allocation3 + $0x228] sm:$0xff]
  %v5566 = vld [vmem:[#allocation3 + $0x230] sm:$0xff]
  %v5567 = vld [vmem:[#allocation3 + $0x240] sm:$0xff]
  %v5568 = vld [vmem:[#allocation3 + $0x248] sm:$0xff]
  %v5569 = vld [vmem:[#allocation3 + $0x258] sm:$0xff]
  %v5570 = vld [vmem:[#allocation3 + $0x260] sm:$0xff]
  %v5571 = vld [vmem:[#allocation3 + $0x270] sm:$0xff]
  %v5572 = vld [vmem:[#allocation3 + $0x278] sm:$0xff]
  %v5573 = vld [vmem:[#allocation3 + $0x288] sm:$0xff]
  %v5574 = vld [vmem:[#allocation3 + $0x290] sm:$0xff]
  %v5575 = vld [vmem:[#allocation3 + $0x2a0] sm:$0xff]
  %v5576 = vld [vmem:[#allocation3 + $0x2a8] sm:$0xff]
  %v5577 = vld [vmem:[#allocation3 + $0x2b8] sm:$0xff]
  %v5578 = vld [vmem:[#allocation3 + $0x2c0] sm:$0xff]
  %v5579 = vld [vmem:[#allocation3 + $0x2d0] sm:$0xff]
  %v5580 = vld [vmem:[#allocation3 + $0x2d8] sm:$0xff]
  %v5581 = vld [vmem:[#allocation3 + $0x2e8] sm:$0xff]
  %v5582 = vld [vmem:[#allocation3 + $0x2f0] sm:$0xff]
  %v5583 = vld [vmem:[#allocation3 + $0x300] sm:$0xff]
  %v5584 = vld [vmem:[#allocation3 + $0x308] sm:$0xff]
  %v5585 = vld [vmem:[#allocation3 + $0x318] sm:$0xff]
  %v5586 = vld [vmem:[#allocation3 + $0x320] sm:$0xff]
  %v5587 = vld [vmem:[#allocation3 + $0x1] sm:$0xff]
  %v5588 = vld [vmem:[#allocation3 + $0x9] sm:$0xff]
  %v5589 = vld [vmem:[#allocation3 + $0x19] sm:$0xff]
  %v5590 = vld [vmem:[#allocation3 + $0x21] sm:$0xff]
  %v5591 = vld [vmem:[#allocation3 + $0x31] sm:$0xff]
  %v5592 = vld [vmem:[#allocation3 + $0x39] sm:$0xff]
  %v5593 = vld [vmem:[#allocation3 + $0x49] sm:$0xff]
  %v5594 = vld [vmem:[#allocation3 + $0x51] sm:$0xff]
  %v5595 = vld [vmem:[#allocation3 + $0x61] sm:$0xff]
  %v5596 = vld [vmem:[#allocation3 + $0x69] sm:$0xff]
  %v5597 = vld [vmem:[#allocation3 + $0x79] sm:$0xff]
  %v5598 = vld [vmem:[#allocation3 + $0x81] sm:$0xff]
  %v5599 = vld [vmem:[#allocation3 + $0x91] sm:$0xff]
  %v5600 = vld [vmem:[#allocation3 + $0x99] sm:$0xff]
  %v5601 = vld [vmem:[#allocation3 + $0xa9] sm:$0xff]
  %v5602 = vld [vmem:[#allocation3 + $0xb1] sm:$0xff]
  %v5603 = vld [vmem:[#allocation3 + $0xc1] sm:$0xff]
  %v5604 = vld [vmem:[#allocation3 + $0xc9] sm:$0xff]
  %v5605 = vld [vmem:[#allocation3 + $0xd9] sm:$0xff]
  %v5606 = vld [vmem:[#allocation3 + $0xe1] sm:$0xff]
  %v5607 = vld [vmem:[#allocation3 + $0xf1] sm:$0xff]
  %v5608 = vld [vmem:[#allocation3 + $0xf9] sm:$0xff]
  %v5609 = vld [vmem:[#allocation3 + $0x109] sm:$0xff]
  %v5610 = vld [vmem:[#allocation3 + $0x111] sm:$0xff]
  %v5611 = vld [vmem:[#allocation3 + $0x121] sm:$0xff]
  %v5612 = vld [vmem:[#allocation3 + $0x129] sm:$0xff]
  %v5613 = vld [vmem:[#allocation3 + $0x139] sm:$0xff]
  %v5614 = vld [vmem:[#allocation3 + $0x141] sm:$0xff]
  %v5615 = vld [vmem:[#allocation3 + $0x151] sm:$0xff]
  %v5616 = vld [vmem:[#allocation3 + $0x159] sm:$0xff]
  %v5617 = vld [vmem:[#allocation3 + $0x169] sm:$0xff]
  %v5618 = vld [vmem:[#allocation3 + $0x171] sm:$0xff]
  %v5619 = vld [vmem:[#allocation3 + $0x1b1] sm:$0xff]
  %v5620 = vld [vmem:[#allocation3 + $0x1b9] sm:$0xff]
  %v5621 = vld [vmem:[#allocation3 + $0x1c9] sm:$0xff]
  %v5622 = vld [vmem:[#allocation3 + $0x1d1] sm:$0xff]
  %v5623 = vld [vmem:[#allocation3 + $0x1e1] sm:$0xff]
  %v5624 = vld [vmem:[#allocation3 + $0x1e9] sm:$0xff]
  %v5625 = vld [vmem:[#allocation3 + $0x1f9] sm:$0xff]
  %v5626 = vld [vmem:[#allocation3 + $0x201] sm:$0xff]
  %v5627 = vld [vmem:[#allocation3 + $0x211] sm:$0xff]
  %v5628 = vld [vmem:[#allocation3 + $0x219] sm:$0xff]
  %v5629 = vld [vmem:[#allocation3 + $0x229] sm:$0xff]
  %v5630 = vld [vmem:[#allocation3 + $0x231] sm:$0xff]
  %v5631 = vld [vmem:[#allocation3 + $0x241] sm:$0xff]
  %v5632 = vld [vmem:[#allocation3 + $0x249] sm:$0xff]
  %v5633 = vld [vmem:[#allocation3 + $0x259] sm:$0xff]
  %v5634 = vld [vmem:[#allocation3 + $0x261] sm:$0xff]
  %v5635 = vld [vmem:[#allocation3 + $0x271] sm:$0xff]
  %v5636 = vld [vmem:[#allocation3 + $0x279] sm:$0xff]
  %v5637 = vld [vmem:[#allocation3 + $0x289] sm:$0xff]
  %v5638 = vld [vmem:[#allocation3 + $0x291] sm:$0xff]
  %v5639 = vld [vmem:[#allocation3 + $0x2a1] sm:$0xff]
  %v5640 = vld [vmem:[#allocation3 + $0x2a9] sm:$0xff]
  %v5641 = vld [vmem:[#allocation3 + $0x2b9] sm:$0xff]
  %v5642 = vld [vmem:[#allocation3 + $0x2c1] sm:$0xff]
  %v5643 = vld [vmem:[#allocation3 + $0x2d1] sm:$0xff]
  %v5644 = vld [vmem:[#allocation3 + $0x2d9] sm:$0xff]
  %v5645 = vld [vmem:[#allocation3 + $0x2e9] sm:$0xff]
  %v5646 = vld [vmem:[#allocation3 + $0x2f1] sm:$0xff]
  %v5647 = vld [vmem:[#allocation3 + $0x301] sm:$0xff]
  %v5648 = vld [vmem:[#allocation3 + $0x309] sm:$0xff]
  %v5649 = vld [vmem:[#allocation3 + $0x319] sm:$0xff]
  %v5650 = vld [vmem:[#allocation3 + $0x321] sm:$0xff]
  %v5651 = vld [vmem:[#allocation3 + $0x2] sm:$0xff]
  %v5652 = vld [vmem:[#allocation3 + $0xa] sm:$0xff]
  %v5653 = vld [vmem:[#allocation3 + $0x1a] sm:$0xff]
  %v5654 = vld [vmem:[#allocation3 + $0x22] sm:$0xff]
  %v5655 = vld [vmem:[#allocation3 + $0x32] sm:$0xff]
  %v5656 = vld [vmem:[#allocation3 + $0x3a] sm:$0xff]
  %v5657 = vld [vmem:[#allocation3 + $0x4a] sm:$0xff]
  %v5658 = vld [vmem:[#allocation3 + $0x52] sm:$0xff]
  %v5659 = vld [vmem:[#allocation3 + $0x62] sm:$0xff]
  %v5660 = vld [vmem:[#allocation3 + $0x6a] sm:$0xff]
  %v5661 = vld [vmem:[#allocation3 + $0x7a] sm:$0xff]
  %v5662 = vld [vmem:[#allocation3 + $0x82] sm:$0xff]
  %v5663 = vld [vmem:[#allocation3 + $0x92] sm:$0xff]
  %v5664 = vld [vmem:[#allocation3 + $0x9a] sm:$0xff]
  %v5665 = vld [vmem:[#allocation3 + $0xaa] sm:$0xff]
  %v5666 = vld [vmem:[#allocation3 + $0xb2] sm:$0xff]
  %v5667 = vld [vmem:[#allocation3 + $0xc2] sm:$0xff]
  %v5668 = vld [vmem:[#allocation3 + $0xca] sm:$0xff]
  %v5669 = vld [vmem:[#allocation3 + $0xda] sm:$0xff]
  %v5670 = vld [vmem:[#allocation3 + $0xe2] sm:$0xff]
  %v5671 = vld [vmem:[#allocation3 + $0xf2] sm:$0xff]
  %v5672 = vld [vmem:[#allocation3 + $0xfa] sm:$0xff]
  %v5673 = vld [vmem:[#allocation3 + $0x10a] sm:$0xff]
  %v5674 = vld [vmem:[#allocation3 + $0x112] sm:$0xff]
  %v5675 = vld [vmem:[#allocation3 + $0x122] sm:$0xff]
  %v5676 = vld [vmem:[#allocation3 + $0x12a] sm:$0xff]
  %v5677 = vld [vmem:[#allocation3 + $0x13a] sm:$0xff]
  %v5678 = vld [vmem:[#allocation3 + $0x142] sm:$0xff]
  %v5679 = vld [vmem:[#allocation3 + $0x152] sm:$0xff]
  %v5680 = vld [vmem:[#allocation3 + $0x15a] sm:$0xff]
  %v5681 = vld [vmem:[#allocation3 + $0x16a] sm:$0xff]
  %v5682 = vld [vmem:[#allocation3 + $0x172] sm:$0xff]
  %v5683 = vld [vmem:[#allocation3 + $0x1b2] sm:$0xff]
  %v5684 = vld [vmem:[#allocation3 + $0x1ba] sm:$0xff]
  %v5685 = vld [vmem:[#allocation3 + $0x1ca] sm:$0xff]
  %v5686 = vld [vmem:[#allocation3 + $0x1d2] sm:$0xff]
  %v5687 = vld [vmem:[#allocation3 + $0x1e2] sm:$0xff]
  %v5688 = vld [vmem:[#allocation3 + $0x1ea] sm:$0xff]
  %v5689 = vld [vmem:[#allocation3 + $0x1fa] sm:$0xff]
  %v5690 = vld [vmem:[#allocation3 + $0x202] sm:$0xff]
  %v5691 = vld [vmem:[#allocation3 + $0x212] sm:$0xff]
  %v5692 = vld [vmem:[#allocation3 + $0x21a] sm:$0xff]
  %v5693 = vld [vmem:[#allocation3 + $0x22a] sm:$0xff]
  %v5694 = vld [vmem:[#allocation3 + $0x232] sm:$0xff]
  %v5695 = vld [vmem:[#allocation3 + $0x242] sm:$0xff]
  %v5696 = vld [vmem:[#allocation3 + $0x24a] sm:$0xff]
  %v5697 = vld [vmem:[#allocation3 + $0x25a] sm:$0xff]
  %v5698 = vld [vmem:[#allocation3 + $0x262] sm:$0xff]
  %v5699 = vld [vmem:[#allocation3 + $0x272] sm:$0xff]
  %v5700 = vld [vmem:[#allocation3 + $0x27a] sm:$0xff]
  %v5701 = vld [vmem:[#allocation3 + $0x28a] sm:$0xff]
  %v5702 = vld [vmem:[#allocation3 + $0x292] sm:$0xff]
  %v5703 = vld [vmem:[#allocation3 + $0x2a2] sm:$0xff]
  %v5704 = vld [vmem:[#allocation3 + $0x2aa] sm:$0xff]
  %v5705 = vld [vmem:[#allocation3 + $0x2ba] sm:$0xff]
  %v5706 = vld [vmem:[#allocation3 + $0x2c2] sm:$0xff]
  %v5707 = vld [vmem:[#allocation3 + $0x2d2] sm:$0xff]
  %v5708 = vld [vmem:[#allocation3 + $0x2da] sm:$0xff]
  %v5709 = vld [vmem:[#allocation3 + $0x2ea] sm:$0xff]
  %v5710 = vld [vmem:[#allocation3 + $0x2f2] sm:$0xff]
  %v5711 = vld [vmem:[#allocation3 + $0x302] sm:$0xff]
  %v5712 = vld [vmem:[#allocation3 + $0x30a] sm:$0xff]
  %v5713 = vld [vmem:[#allocation3 + $0x31a] sm:$0xff]
  %v5714 = vld [vmem:[#allocation3 + $0x322] sm:$0xff]
  %v5715 = vld [vmem:[%s5458] sm:$0xff]
  %v5716 = vld [vmem:[%s5458 + $0x8] sm:$0xff]
  %v5717 = vld [vmem:[%s5458 + $0x18] sm:$0xff]
  %v5718 = vld [vmem:[%s5458 + $0x20] sm:$0xff]
  %v5719 = vld [vmem:[%s5458 + $0x30] sm:$0xff]
  %v5720 = vld [vmem:[%s5458 + $0x38] sm:$0xff]
  %v5721 = vld [vmem:[%s5458 + $0x48] sm:$0xff]
  %v5722 = vld [vmem:[%s5458 + $0x50] sm:$0xff]
  %v5723 = vld [vmem:[%s5458 + $0x60] sm:$0xff]
  %v5724 = vld [vmem:[%s5458 + $0x68] sm:$0xff]
  %v5725 = vld [vmem:[%s5458 + $0x78] sm:$0xff]
  %v5726 = vld [vmem:[%s5458 + $0x80] sm:$0xff]
  %v5727 = vld [vmem:[%s5458 + $0x90] sm:$0xff]
  %v5728 = vld [vmem:[%s5458 + $0x98] sm:$0xff]
  %v5729 = vld [vmem:[%s5458 + $0xa8] sm:$0xff]
  %v5730 = vld [vmem:[%s5458 + $0xb0] sm:$0xff]
  %v5731 = vld [vmem:[%s5458 + $0xc0] sm:$0xff]
  %v5732 = vld [vmem:[%s5458 + $0xc8] sm:$0xff]
  %v5733 = vld [vmem:[%s5458 + $0xd8] sm:$0xff]
  %v5734 = vld [vmem:[%s5458 + $0xe0] sm:$0xff]
  %v5735 = vld [vmem:[%s5458 + $0xf0] sm:$0xff]
  %v5736 = vld [vmem:[%s5458 + $0xf8] sm:$0xff]
  %v5737 = vld [vmem:[%s5458 + $0x108] sm:$0xff]
  %v5738 = vld [vmem:[%s5458 + $0x110] sm:$0xff]
  %v5739 = vld [vmem:[%s5458 + $0x120] sm:$0xff]
  %v5740 = vld [vmem:[%s5458 + $0x128] sm:$0xff]
  %v5741 = vld [vmem:[%s5458 + $0x138] sm:$0xff]
  %v5742 = vld [vmem:[%s5458 + $0x140] sm:$0xff]
  %v5743 = vld [vmem:[%s5458 + $0x150] sm:$0xff]
  %v5744 = vld [vmem:[%s5458 + $0x158] sm:$0xff]
  %v5745 = vld [vmem:[%s5458 + $0x168] sm:$0xff]
  %v5746 = vld [vmem:[%s5458 + $0x170] sm:$0xff]
  %v5747 = vld [vmem:[%s5458 + $0x1b0] sm:$0xff]
  %v5748 = vld [vmem:[%s5458 + $0x1b8] sm:$0xff]
  %v5749 = vld [vmem:[%s5458 + $0x1c8] sm:$0xff]
  %v5750 = vld [vmem:[%s5458 + $0x1d0] sm:$0xff]
  %v5751 = vld [vmem:[%s5458 + $0x1e0] sm:$0xff]
  %v5752 = vld [vmem:[%s5458 + $0x1e8] sm:$0xff]
  %v5753 = vld [vmem:[%s5458 + $0x1f8] sm:$0xff]
  %v5754 = vld [vmem:[%s5458 + $0x200] sm:$0xff]
  %v5755 = vld [vmem:[%s5458 + $0x210] sm:$0xff]
  %v5756 = vld [vmem:[%s5458 + $0x218] sm:$0xff]
  %v5757 = vld [vmem:[%s5458 + $0x228] sm:$0xff]
  %v5758 = vld [vmem:[%s5458 + $0x230] sm:$0xff]
  %v5759 = vld [vmem:[%s5458 + $0x240] sm:$0xff]
  %v5760 = vld [vmem:[%s5458 + $0x248] sm:$0xff]
  %v5761 = vld [vmem:[%s5458 + $0x258] sm:$0xff]
  %v5762 = vld [vmem:[%s5458 + $0x260] sm:$0xff]
  %v5763 = vld [vmem:[%s5458 + $0x270] sm:$0xff]
  %v5764 = vld [vmem:[%s5458 + $0x278] sm:$0xff]
  %v5765 = vld [vmem:[%s5458 + $0x288] sm:$0xff]
  %v5766 = vld [vmem:[%s5458 + $0x290] sm:$0xff]
  %v5767 = vld [vmem:[%s5458 + $0x2a0] sm:$0xff]
  %v5768 = vld [vmem:[%s5458 + $0x2a8] sm:$0xff]
  %v5769 = vld [vmem:[%s5458 + $0x2b8] sm:$0xff]
  %v5770 = vld [vmem:[%s5458 + $0x2c0] sm:$0xff]
  %v5771 = vld [vmem:[%s5458 + $0x2d0] sm:$0xff]
  %v5772 = vld [vmem:[%s5458 + $0x2d8] sm:$0xff]
  %v5773 = vld [vmem:[%s5458 + $0x2e8] sm:$0xff]
  %v5774 = vld [vmem:[%s5458 + $0x2f0] sm:$0xff]
  %v5775 = vld [vmem:[%s5458 + $0x300] sm:$0xff]
  %v5776 = vld [vmem:[%s5458 + $0x308] sm:$0xff]
  %v5777 = vld [vmem:[%s5458 + $0x318] sm:$0xff]
  %v5778 = vld [vmem:[%s5458 + $0x320] sm:$0xff]
  %v5779 = vld [vmem:[%s5458 + $0x1] sm:$0xff]
  %v5780 = vld [vmem:[%s5458 + $0x9] sm:$0xff]
  %v5781 = vld [vmem:[%s5458 + $0x19] sm:$0xff]
  %v5782 = vld [vmem:[%s5458 + $0x21] sm:$0xff]
  %v5783 = vld [vmem:[%s5458 + $0x31] sm:$0xff]
  %v5784 = vld [vmem:[%s5458 + $0x39] sm:$0xff]
  %v5785 = vld [vmem:[%s5458 + $0x49] sm:$0xff]
  %v5786 = vld [vmem:[%s5458 + $0x51] sm:$0xff]
  %v5787 = vld [vmem:[%s5458 + $0x61] sm:$0xff]
  %v5788 = vld [vmem:[%s5458 + $0x69] sm:$0xff]
  %v5789 = vld [vmem:[%s5458 + $0x79] sm:$0xff]
  %v5790 = vld [vmem:[%s5458 + $0x81] sm:$0xff]
  %v5791 = vld [vmem:[%s5458 + $0x91] sm:$0xff]
  %v5792 = vld [vmem:[%s5458 + $0x99] sm:$0xff]
  %v5793 = vld [vmem:[%s5458 + $0xa9] sm:$0xff]
  %v5794 = vld [vmem:[%s5458 + $0xb1] sm:$0xff]
  %v5795 = vld [vmem:[%s5458 + $0xc1] sm:$0xff]
  %v5796 = vld [vmem:[%s5458 + $0xc9] sm:$0xff]
  %v5797 = vld [vmem:[%s5458 + $0xd9] sm:$0xff]
  %v5798 = vld [vmem:[%s5458 + $0xe1] sm:$0xff]
  %v5799 = vld [vmem:[%s5458 + $0xf1] sm:$0xff]
  %v5800 = vld [vmem:[%s5458 + $0xf9] sm:$0xff]
  %v5801 = vld [vmem:[%s5458 + $0x109] sm:$0xff]
  %v5802 = vld [vmem:[%s5458 + $0x111] sm:$0xff]
  %v5803 = vld [vmem:[%s5458 + $0x121] sm:$0xff]
  %v5804 = vld [vmem:[%s5458 + $0x129] sm:$0xff]
  %v5805 = vld [vmem:[%s5458 + $0x139] sm:$0xff]
  %v5806 = vld [vmem:[%s5458 + $0x141] sm:$0xff]
  %v5807 = vld [vmem:[%s5458 + $0x151] sm:$0xff]
  %v5808 = vld [vmem:[%s5458 + $0x159] sm:$0xff]
  %v5809 = vld [vmem:[%s5458 + $0x169] sm:$0xff]
  %v5810 = vld [vmem:[%s5458 + $0x171] sm:$0xff]
  %v5811 = vld [vmem:[%s5458 + $0x1b1] sm:$0xff]
  %v5812 = vld [vmem:[%s5458 + $0x1b9] sm:$0xff]
  %v5813 = vld [vmem:[%s5458 + $0x1c9] sm:$0xff]
  %v5814 = vld [vmem:[%s5458 + $0x1d1] sm:$0xff]
  %v5815 = vld [vmem:[%s5458 + $0x1e1] sm:$0xff]
  %v5816 = vld [vmem:[%s5458 + $0x1e9] sm:$0xff]
  %v5817 = vld [vmem:[%s5458 + $0x1f9] sm:$0xff]
  %v5818 = vld [vmem:[%s5458 + $0x201] sm:$0xff]
  %v5819 = vld [vmem:[%s5458 + $0x211] sm:$0xff]
  %v5820 = vld [vmem:[%s5458 + $0x219] sm:$0xff]
  %v5821 = vld [vmem:[%s5458 + $0x229] sm:$0xff]
  %v5822 = vld [vmem:[%s5458 + $0x231] sm:$0xff]
  %v5823 = vld [vmem:[%s5458 + $0x241] sm:$0xff]
  %v5824 = vld [vmem:[%s5458 + $0x249] sm:$0xff]
  %v5825 = vld [vmem:[%s5458 + $0x259] sm:$0xff]
  %v5826 = vld [vmem:[%s5458 + $0x261] sm:$0xff]
  %v5827 = vld [vmem:[%s5458 + $0x271] sm:$0xff]
  %v5828 = vld [vmem:[%s5458 + $0x279] sm:$0xff]
  %v5829 = vld [vmem:[%s5458 + $0x289] sm:$0xff]
  %v5830 = vld [vmem:[%s5458 + $0x291] sm:$0xff]
  %v5831 = vld [vmem:[%s5458 + $0x2a1] sm:$0xff]
  %v5832 = vld [vmem:[%s5458 + $0x2a9] sm:$0xff]
  %v5833 = vld [vmem:[%s5458 + $0x2b9] sm:$0xff]
  %v5834 = vld [vmem:[%s5458 + $0x2c1] sm:$0xff]
  %v5835 = vld [vmem:[%s5458 + $0x2d1] sm:$0xff]
  %v5836 = vld [vmem:[%s5458 + $0x2d9] sm:$0xff]
  %v5837 = vld [vmem:[%s5458 + $0x2e9] sm:$0xff]
  %v5838 = vld [vmem:[%s5458 + $0x2f1] sm:$0xff]
  %v5839 = vld [vmem:[%s5458 + $0x301] sm:$0xff]
  %v5840 = vld [vmem:[%s5458 + $0x309] sm:$0xff]
  %v5841 = vld [vmem:[%s5458 + $0x319] sm:$0xff]
  %v5842 = vld [vmem:[%s5458 + $0x321] sm:$0xff]
  %v5843 = vld [vmem:[%s5458 + $0x2] sm:$0xff]
  %v5844 = vld [vmem:[%s5458 + $0xa] sm:$0xff]
  %v5845 = vld [vmem:[%s5458 + $0x1a] sm:$0xff]
  %v5846 = vld [vmem:[%s5458 + $0x22] sm:$0xff]
  %v5847 = vld [vmem:[%s5458 + $0x32] sm:$0xff]
  %v5848 = vld [vmem:[%s5458 + $0x3a] sm:$0xff]
  %v5849 = vld [vmem:[%s5458 + $0x4a] sm:$0xff]
  %v5850 = vld [vmem:[%s5458 + $0x52] sm:$0xff]
  %v5851 = vld [vmem:[%s5458 + $0x62] sm:$0xff]
  %v5852 = vld [vmem:[%s5458 + $0x6a] sm:$0xff]
  %v5853 = vld [vmem:[%s5458 + $0x7a] sm:$0xff]
  %v5854 = vld [vmem:[%s5458 + $0x82] sm:$0xff]
  %v5855 = vld [vmem:[%s5458 + $0x92] sm:$0xff]
  %v5856 = vld [vmem:[%s5458 + $0x9a] sm:$0xff]
  %v5857 = vld [vmem:[%s5458 + $0xaa] sm:$0xff]
  %v5858 = vld [vmem:[%s5458 + $0xb2] sm:$0xff]
  %v5859 = vld [vmem:[%s5458 + $0xc2] sm:$0xff]
  %v5860 = vld [vmem:[%s5458 + $0xca] sm:$0xff]
  %v5861 = vld [vmem:[%s5458 + $0xda] sm:$0xff]
  %v5862 = vld [vmem:[%s5458 + $0xe2] sm:$0xff]
  %v5863 = vld [vmem:[%s5458 + $0xf2] sm:$0xff]
  %v5864 = vld [vmem:[%s5458 + $0xfa] sm:$0xff]
  %v5865 = vld [vmem:[%s5458 + $0x10a] sm:$0xff]
  %v5866 = vld [vmem:[%s5458 + $0x112] sm:$0xff]
  %v5867 = vld [vmem:[%s5458 + $0x122] sm:$0xff]
  %v5868 = vld [vmem:[%s5458 + $0x12a] sm:$0xff]
  %v5869 = vld [vmem:[%s5458 + $0x13a] sm:$0xff]
  %v5870 = vld [vmem:[%s5458 + $0x142] sm:$0xff]
  %v5871 = vld [vmem:[%s5458 + $0x152] sm:$0xff]
  %v5872 = vld [vmem:[%s5458 + $0x15a] sm:$0xff]
  %v5873 = vld [vmem:[%s5458 + $0x16a] sm:$0xff]
  %v5874 = vld [vmem:[%s5458 + $0x172] sm:$0xff]
  %v5875 = vld [vmem:[%s5458 + $0x1b2] sm:$0xff]
  %v5876 = vld [vmem:[%s5458 + $0x1ba] sm:$0xff]
  %v5877 = vld [vmem:[%s5458 + $0x1ca] sm:$0xff]
  %v5878 = vld [vmem:[%s5458 + $0x1d2] sm:$0xff]
  %v5879 = vld [vmem:[%s5458 + $0x1e2] sm:$0xff]
  %v5880 = vld [vmem:[%s5458 + $0x1ea] sm:$0xff]
  %v5881 = vld [vmem:[%s5458 + $0x1fa] sm:$0xff]
  %v5882 = vld [vmem:[%s5458 + $0x202] sm:$0xff]
  %v5883 = vld [vmem:[%s5458 + $0x212] sm:$0xff]
  %v5884 = vld [vmem:[%s5458 + $0x21a] sm:$0xff]
  %v5885 = vld [vmem:[%s5458 + $0x22a] sm:$0xff]
  %v5886 = vld [vmem:[%s5458 + $0x232] sm:$0xff]
  %v5887 = vld [vmem:[%s5458 + $0x242] sm:$0xff]
  %v5888 = vld [vmem:[%s5458 + $0x24a] sm:$0xff]
  %v5889 = vld [vmem:[%s5458 + $0x25a] sm:$0xff]
  %v5890 = vld [vmem:[%s5458 + $0x262] sm:$0xff]
  %v5891 = vld [vmem:[%s5458 + $0x272] sm:$0xff]
  %v5892 = vld [vmem:[%s5458 + $0x27a] sm:$0xff]
  %v5893 = vld [vmem:[%s5458 + $0x28a] sm:$0xff]
  %v5894 = vld [vmem:[%s5458 + $0x292] sm:$0xff]
  %v5895 = vld [vmem:[%s5458 + $0x2a2] sm:$0xff]
  %v5896 = vld [vmem:[%s5458 + $0x2aa] sm:$0xff]
  %v5897 = vld [vmem:[%s5458 + $0x2ba] sm:$0xff]
  %v5898 = vld [vmem:[%s5458 + $0x2c2] sm:$0xff]
  %v5899 = vld [vmem:[%s5458 + $0x2d2] sm:$0xff]
  %v5900 = vld [vmem:[%s5458 + $0x2da] sm:$0xff]
  %v5901 = vld [vmem:[%s5458 + $0x2ea] sm:$0xff]
  %v5902 = vld [vmem:[%s5458 + $0x2f2] sm:$0xff]
  %v5903 = vld [vmem:[%s5458 + $0x302] sm:$0xff]
  %v5904 = vld [vmem:[%s5458 + $0x30a] sm:$0xff]
  %v5905 = vld [vmem:[%s5458 + $0x31a] sm:$0xff]
  %v5906 = vld [vmem:[%s5458 + $0x322] sm:$0xff]
  %s5907 = scalar_lea.vmem [#allocation3], 48
  %v5908 = vld [vmem:[%s5907] sm:$0xff]
  %v5909 = vld [vmem:[%s5907 + $0x8] sm:$0xff]
  %v5910 = vld [vmem:[%s5907 + $0x18] sm:$0xff]
  %v5911 = vld [vmem:[%s5907 + $0x20] sm:$0xff]
  %v5912 = vld [vmem:[%s5907 + $0x30] sm:$0xff]
  %v5913 = vld [vmem:[%s5907 + $0x38] sm:$0xff]
  %v5914 = vld [vmem:[%s5907 + $0x48] sm:$0xff]
  %v5915 = vld [vmem:[%s5907 + $0x50] sm:$0xff]
  %v5916 = vld [vmem:[%s5907 + $0x60] sm:$0xff]
  %v5917 = vld [vmem:[%s5907 + $0x68] sm:$0xff]
  %v5918 = vld [vmem:[%s5907 + $0x78] sm:$0xff]
  %v5919 = vld [vmem:[%s5907 + $0x80] sm:$0xff]
  %v5920 = vld [vmem:[%s5907 + $0x90] sm:$0xff]
  %v5921 = vld [vmem:[%s5907 + $0x98] sm:$0xff]
  %v5922 = vld [vmem:[%s5907 + $0xa8] sm:$0xff]
  %v5923 = vld [vmem:[%s5907 + $0xb0] sm:$0xff]
  %v5924 = vld [vmem:[%s5907 + $0xc0] sm:$0xff]
  %v5925 = vld [vmem:[%s5907 + $0xc8] sm:$0xff]
  %v5926 = vld [vmem:[%s5907 + $0xd8] sm:$0xff]
  %v5927 = vld [vmem:[%s5907 + $0xe0] sm:$0xff]
  %v5928 = vld [vmem:[%s5907 + $0xf0] sm:$0xff]
  %v5929 = vld [vmem:[%s5907 + $0xf8] sm:$0xff]
  %v5930 = vld [vmem:[%s5907 + $0x108] sm:$0xff]
  %v5931 = vld [vmem:[%s5907 + $0x110] sm:$0xff]
  %v5932 = vld [vmem:[%s5907 + $0x120] sm:$0xff]
  %v5933 = vld [vmem:[%s5907 + $0x128] sm:$0xff]
  %v5934 = vld [vmem:[%s5907 + $0x138] sm:$0xff]
  %v5935 = vld [vmem:[%s5907 + $0x140] sm:$0xff]
  %v5936 = vld [vmem:[%s5907 + $0x150] sm:$0xff]
  %v5937 = vld [vmem:[%s5907 + $0x158] sm:$0xff]
  %v5938 = vld [vmem:[%s5907 + $0x168] sm:$0xff]
  %v5939 = vld [vmem:[%s5907 + $0x170] sm:$0xff]
  %v5940 = vld [vmem:[%s5907 + $0x1b0] sm:$0xff]
  %v5941 = vld [vmem:[%s5907 + $0x1b8] sm:$0xff]
  %v5942 = vld [vmem:[%s5907 + $0x1c8] sm:$0xff]
  %v5943 = vld [vmem:[%s5907 + $0x1d0] sm:$0xff]
  %v5944 = vld [vmem:[%s5907 + $0x1e0] sm:$0xff]
  %v5945 = vld [vmem:[%s5907 + $0x1e8] sm:$0xff]
  %v5946 = vld [vmem:[%s5907 + $0x1f8] sm:$0xff]
  %v5947 = vld [vmem:[%s5907 + $0x200] sm:$0xff]
  %v5948 = vld [vmem:[%s5907 + $0x210] sm:$0xff]
  %v5949 = vld [vmem:[%s5907 + $0x218] sm:$0xff]
  %v5950 = vld [vmem:[%s5907 + $0x228] sm:$0xff]
  %v5951 = vld [vmem:[%s5907 + $0x230] sm:$0xff]
  %v5952 = vld [vmem:[%s5907 + $0x240] sm:$0xff]
  %v5953 = vld [vmem:[%s5907 + $0x248] sm:$0xff]
  %v5954 = vld [vmem:[%s5907 + $0x258] sm:$0xff]
  %v5955 = vld [vmem:[%s5907 + $0x260] sm:$0xff]
  %v5956 = vld [vmem:[%s5907 + $0x270] sm:$0xff]
  %v5957 = vld [vmem:[%s5907 + $0x278] sm:$0xff]
  %v5958 = vld [vmem:[%s5907 + $0x288] sm:$0xff]
  %v5959 = vld [vmem:[%s5907 + $0x290] sm:$0xff]
  %v5960 = vld [vmem:[%s5907 + $0x2a0] sm:$0xff]
  %v5961 = vld [vmem:[%s5907 + $0x2a8] sm:$0xff]
  %v5962 = vld [vmem:[%s5907 + $0x2b8] sm:$0xff]
  %v5963 = vld [vmem:[%s5907 + $0x2c0] sm:$0xff]
  %v5964 = vld [vmem:[%s5907 + $0x2d0] sm:$0xff]
  %v5965 = vld [vmem:[%s5907 + $0x2d8] sm:$0xff]
  %v5966 = vld [vmem:[%s5907 + $0x2e8] sm:$0xff]
  %v5967 = vld [vmem:[%s5907 + $0x2f0] sm:$0xff]
  %v5968 = vld [vmem:[%s5907 + $0x300] sm:$0xff]
  %v5969 = vld [vmem:[%s5907 + $0x308] sm:$0xff]
  %v5970 = vld [vmem:[%s5907 + $0x318] sm:$0xff]
  %v5971 = vld [vmem:[%s5907 + $0x320] sm:$0xff]
  %v5972 = vld [vmem:[%s5907 + $0x1] sm:$0xff]
  %v5973 = vld [vmem:[%s5907 + $0x9] sm:$0xff]
  %v5974 = vld [vmem:[%s5907 + $0x19] sm:$0xff]
  %v5975 = vld [vmem:[%s5907 + $0x21] sm:$0xff]
  %v5976 = vld [vmem:[%s5907 + $0x31] sm:$0xff]
  %v5977 = vld [vmem:[%s5907 + $0x39] sm:$0xff]
  %v5978 = vld [vmem:[%s5907 + $0x49] sm:$0xff]
  %v5979 = vld [vmem:[%s5907 + $0x51] sm:$0xff]
  %v5980 = vld [vmem:[%s5907 + $0x61] sm:$0xff]
  %v5981 = vld [vmem:[%s5907 + $0x69] sm:$0xff]
  %v5982 = vld [vmem:[%s5907 + $0x79] sm:$0xff]
  %v5983 = vld [vmem:[%s5907 + $0x81] sm:$0xff]
  %v5984 = vld [vmem:[%s5907 + $0x91] sm:$0xff]
  %v5985 = vld [vmem:[%s5907 + $0x99] sm:$0xff]
  %v5986 = vld [vmem:[%s5907 + $0xa9] sm:$0xff]
  %v5987 = vld [vmem:[%s5907 + $0xb1] sm:$0xff]
  %v5988 = vld [vmem:[%s5907 + $0xc1] sm:$0xff]
  %v5989 = vld [vmem:[%s5907 + $0xc9] sm:$0xff]
  %v5990 = vld [vmem:[%s5907 + $0xd9] sm:$0xff]
  %v5991 = vld [vmem:[%s5907 + $0xe1] sm:$0xff]
  %v5992 = vld [vmem:[%s5907 + $0xf1] sm:$0xff]
  %v5993 = vld [vmem:[%s5907 + $0xf9] sm:$0xff]
  %v5994 = vld [vmem:[%s5907 + $0x109] sm:$0xff]
  %v5995 = vld [vmem:[%s5907 + $0x111] sm:$0xff]
  %v5996 = vld [vmem:[%s5907 + $0x121] sm:$0xff]
  %v5997 = vld [vmem:[%s5907 + $0x129] sm:$0xff]
  %v5998 = vld [vmem:[%s5907 + $0x139] sm:$0xff]
  %v5999 = vld [vmem:[%s5907 + $0x141] sm:$0xff]
  %v6000 = vld [vmem:[%s5907 + $0x151] sm:$0xff]
  %v6001 = vld [vmem:[%s5907 + $0x159] sm:$0xff]
  %v6002 = vld [vmem:[%s5907 + $0x169] sm:$0xff]
  %v6003 = vld [vmem:[%s5907 + $0x171] sm:$0xff]
  %v6004 = vld [vmem:[%s5907 + $0x1b1] sm:$0xff]
  %v6005 = vld [vmem:[%s5907 + $0x1b9] sm:$0xff]
  %v6006 = vld [vmem:[%s5907 + $0x1c9] sm:$0xff]
  %v6007 = vld [vmem:[%s5907 + $0x1d1] sm:$0xff]
  %v6008 = vld [vmem:[%s5907 + $0x1e1] sm:$0xff]
  %v6009 = vld [vmem:[%s5907 + $0x1e9] sm:$0xff]
  %v6010 = vld [vmem:[%s5907 + $0x1f9] sm:$0xff]
  %v6011 = vld [vmem:[%s5907 + $0x201] sm:$0xff]
  %v6012 = vld [vmem:[%s5907 + $0x211] sm:$0xff]
  %v6013 = vld [vmem:[%s5907 + $0x219] sm:$0xff]
  %v6014 = vld [vmem:[%s5907 + $0x229] sm:$0xff]
  %v6015 = vld [vmem:[%s5907 + $0x231] sm:$0xff]
  %v6016 = vld [vmem:[%s5907 + $0x241] sm:$0xff]
  %v6017 = vld [vmem:[%s5907 + $0x249] sm:$0xff]
  %v6018 = vld [vmem:[%s5907 + $0x259] sm:$0xff]
  %v6019 = vld [vmem:[%s5907 + $0x261] sm:$0xff]
  %v6020 = vld [vmem:[%s5907 + $0x271] sm:$0xff]
  %v6021 = vld [vmem:[%s5907 + $0x279] sm:$0xff]
  %v6022 = vld [vmem:[%s5907 + $0x289] sm:$0xff]
  %v6023 = vld [vmem:[%s5907 + $0x291] sm:$0xff]
  %v6024 = vld [vmem:[%s5907 + $0x2a1] sm:$0xff]
  %v6025 = vld [vmem:[%s5907 + $0x2a9] sm:$0xff]
  %v6026 = vld [vmem:[%s5907 + $0x2b9] sm:$0xff]
  %v6027 = vld [vmem:[%s5907 + $0x2c1] sm:$0xff]
  %v6028 = vld [vmem:[%s5907 + $0x2d1] sm:$0xff]
  %v6029 = vld [vmem:[%s5907 + $0x2d9] sm:$0xff]
  %v6030 = vld [vmem:[%s5907 + $0x2e9] sm:$0xff]
  %v6031 = vld [vmem:[%s5907 + $0x2f1] sm:$0xff]
  %v6032 = vld [vmem:[%s5907 + $0x301] sm:$0xff]
  %v6033 = vld [vmem:[%s5907 + $0x309] sm:$0xff]
  %v6034 = vld [vmem:[%s5907 + $0x319] sm:$0xff]
  %v6035 = vld [vmem:[%s5907 + $0x321] sm:$0xff]
  %v6036 = vld [vmem:[%s5907 + $0x2] sm:$0xff]
  %v6037 = vld [vmem:[%s5907 + $0xa] sm:$0xff]
  %v6038 = vld [vmem:[%s5907 + $0x1a] sm:$0xff]
  %v6039 = vld [vmem:[%s5907 + $0x22] sm:$0xff]
  %v6040 = vld [vmem:[%s5907 + $0x32] sm:$0xff]
  %v6041 = vld [vmem:[%s5907 + $0x3a] sm:$0xff]
  %v6042 = vld [vmem:[%s5907 + $0x4a] sm:$0xff]
  %v6043 = vld [vmem:[%s5907 + $0x52] sm:$0xff]
  %v6044 = vld [vmem:[%s5907 + $0x62] sm:$0xff]
  %v6045 = vld [vmem:[%s5907 + $0x6a] sm:$0xff]
  %v6046 = vld [vmem:[%s5907 + $0x7a] sm:$0xff]
  %v6047 = vld [vmem:[%s5907 + $0x82] sm:$0xff]
  %v6048 = vld [vmem:[%s5907 + $0x92] sm:$0xff]
  %v6049 = vld [vmem:[%s5907 + $0x9a] sm:$0xff]
  %v6050 = vld [vmem:[%s5907 + $0xaa] sm:$0xff]
  %v6051 = vld [vmem:[%s5907 + $0xb2] sm:$0xff]
  %v6052 = vld [vmem:[%s5907 + $0xc2] sm:$0xff]
  %v6053 = vld [vmem:[%s5907 + $0xca] sm:$0xff]
  %v6054 = vld [vmem:[%s5907 + $0xda] sm:$0xff]
  %v6055 = vld [vmem:[%s5907 + $0xe2] sm:$0xff]
  %v6056 = vld [vmem:[%s5907 + $0xf2] sm:$0xff]
  %v6057 = vld [vmem:[%s5907 + $0xfa] sm:$0xff]
  %v6058 = vld [vmem:[%s5907 + $0x10a] sm:$0xff]
  %v6059 = vld [vmem:[%s5907 + $0x112] sm:$0xff]
  %v6060 = vld [vmem:[%s5907 + $0x122] sm:$0xff]
  %v6061 = vld [vmem:[%s5907 + $0x12a] sm:$0xff]
  %v6062 = vld [vmem:[%s5907 + $0x13a] sm:$0xff]
  %v6063 = vld [vmem:[%s5907 + $0x142] sm:$0xff]
  %v6064 = vld [vmem:[%s5907 + $0x152] sm:$0xff]
  %v6065 = vld [vmem:[%s5907 + $0x15a] sm:$0xff]
  %v6066 = vld [vmem:[%s5907 + $0x16a] sm:$0xff]
  %v6067 = vld [vmem:[%s5907 + $0x172] sm:$0xff]
  %v6068 = vld [vmem:[%s5907 + $0x1b2] sm:$0xff]
  %v6069 = vld [vmem:[%s5907 + $0x1ba] sm:$0xff]
  %v6070 = vld [vmem:[%s5907 + $0x1ca] sm:$0xff]
  %v6071 = vld [vmem:[%s5907 + $0x1d2] sm:$0xff]
  %v6072 = vld [vmem:[%s5907 + $0x1e2] sm:$0xff]
  %v6073 = vld [vmem:[%s5907 + $0x1ea] sm:$0xff]
  %v6074 = vld [vmem:[%s5907 + $0x1fa] sm:$0xff]
  %v6075 = vld [vmem:[%s5907 + $0x202] sm:$0xff]
  %v6076 = vld [vmem:[%s5907 + $0x212] sm:$0xff]
  %v6077 = vld [vmem:[%s5907 + $0x21a] sm:$0xff]
  %v6078 = vld [vmem:[%s5907 + $0x22a] sm:$0xff]
  %v6079 = vld [vmem:[%s5907 + $0x232] sm:$0xff]
  %v6080 = vld [vmem:[%s5907 + $0x242] sm:$0xff]
  %v6081 = vld [vmem:[%s5907 + $0x24a] sm:$0xff]
  %v6082 = vld [vmem:[%s5907 + $0x25a] sm:$0xff]
  %v6083 = vld [vmem:[%s5907 + $0x262] sm:$0xff]
  %v6084 = vld [vmem:[%s5907 + $0x272] sm:$0xff]
  %v6085 = vld [vmem:[%s5907 + $0x27a] sm:$0xff]
  %v6086 = vld [vmem:[%s5907 + $0x28a] sm:$0xff]
  %v6087 = vld [vmem:[%s5907 + $0x292] sm:$0xff]
  %v6088 = vld [vmem:[%s5907 + $0x2a2] sm:$0xff]
  %v6089 = vld [vmem:[%s5907 + $0x2aa] sm:$0xff]
  %v6090 = vld [vmem:[%s5907 + $0x2ba] sm:$0xff]
  %v6091 = vld [vmem:[%s5907 + $0x2c2] sm:$0xff]
  %v6092 = vld [vmem:[%s5907 + $0x2d2] sm:$0xff]
  %v6093 = vld [vmem:[%s5907 + $0x2da] sm:$0xff]
  %v6094 = vld [vmem:[%s5907 + $0x2ea] sm:$0xff]
  %v6095 = vld [vmem:[%s5907 + $0x2f2] sm:$0xff]
  %v6096 = vld [vmem:[%s5907 + $0x302] sm:$0xff]
  %v6097 = vld [vmem:[%s5907 + $0x30a] sm:$0xff]
  %v6098 = vld [vmem:[%s5907 + $0x31a] sm:$0xff]
  %v6099 = vld [vmem:[%s5907 + $0x322] sm:$0xff]
  %6164 = vrot.lane.b32.xlu0 %v5587, 16
  %v6165 = vpop.permute.xlu0 %6164
  %6166 = vrot.lane.b32.xlu0 %v5588, 16
  %v6167 = vpop.permute.xlu0 %6166
  %6168 = vrot.lane.b32.xlu0 %v5589, 16
  %v6169 = vpop.permute.xlu0 %6168
  %6170 = vrot.lane.b32.xlu0 %v5590, 16
  %v6171 = vpop.permute.xlu0 %6170
  %6172 = vrot.lane.b32.xlu0 %v5591, 16
  %v6173 = vpop.permute.xlu0 %6172
  %6174 = vrot.lane.b32.xlu0 %v5592, 16
  %v6175 = vpop.permute.xlu0 %6174
  %6176 = vrot.lane.b32.xlu0 %v5593, 16
  %v6177 = vpop.permute.xlu0 %6176
  %6178 = vrot.lane.b32.xlu0 %v5594, 16
  %v6179 = vpop.permute.xlu0 %6178
  %6180 = vrot.lane.b32.xlu0 %v5595, 16
  %v6181 = vpop.permute.xlu0 %6180
  %6182 = vrot.lane.b32.xlu0 %v5596, 16
  %v6183 = vpop.permute.xlu0 %6182
  %6184 = vrot.lane.b32.xlu0 %v5597, 16
  %v6185 = vpop.permute.xlu0 %6184
  %6186 = vrot.lane.b32.xlu0 %v5598, 16
  %v6187 = vpop.permute.xlu0 %6186
  %6188 = vrot.lane.b32.xlu0 %v5599, 16
  %v6189 = vpop.permute.xlu0 %6188
  %6190 = vrot.lane.b32.xlu0 %v5600, 16
  %v6191 = vpop.permute.xlu0 %6190
  %6192 = vrot.lane.b32.xlu0 %v5601, 16
  %v6193 = vpop.permute.xlu0 %6192
  %6194 = vrot.lane.b32.xlu0 %v5602, 16
  %v6195 = vpop.permute.xlu0 %6194
  %6196 = vrot.lane.b32.xlu0 %v5603, 16
  %v6197 = vpop.permute.xlu0 %6196
  %6198 = vrot.lane.b32.xlu0 %v5604, 16
  %v6199 = vpop.permute.xlu0 %6198
  %6200 = vrot.lane.b32.xlu0 %v5605, 16
  %v6201 = vpop.permute.xlu0 %6200
  %6202 = vrot.lane.b32.xlu0 %v5606, 16
  %v6203 = vpop.permute.xlu0 %6202
  %6204 = vrot.lane.b32.xlu0 %v5607, 16
  %v6205 = vpop.permute.xlu0 %6204
  %6206 = vrot.lane.b32.xlu0 %v5608, 16
  %v6207 = vpop.permute.xlu0 %6206
  %6208 = vrot.lane.b32.xlu0 %v5609, 16
  %v6209 = vpop.permute.xlu0 %6208
  %6210 = vrot.lane.b32.xlu0 %v5610, 16
  %v6211 = vpop.permute.xlu0 %6210
  %6212 = vrot.lane.b32.xlu0 %v5611, 16
  %v6213 = vpop.permute.xlu0 %6212
  %6214 = vrot.lane.b32.xlu0 %v5612, 16
  %v6215 = vpop.permute.xlu0 %6214
  %6216 = vrot.lane.b32.xlu0 %v5613, 16
  %v6217 = vpop.permute.xlu0 %6216
  %6218 = vrot.lane.b32.xlu0 %v5614, 16
  %v6219 = vpop.permute.xlu0 %6218
  %6220 = vrot.lane.b32.xlu0 %v5615, 16
  %v6221 = vpop.permute.xlu0 %6220
  %6222 = vrot.lane.b32.xlu0 %v5616, 16
  %v6223 = vpop.permute.xlu0 %6222
  %6224 = vrot.lane.b32.xlu0 %v5617, 16
  %v6225 = vpop.permute.xlu0 %6224
  %6226 = vrot.lane.b32.xlu0 %v5618, 16
  %v6227 = vpop.permute.xlu0 %6226
  %6228 = vrot.lane.b32.xlu0 %v5619, 16
  %v6229 = vpop.permute.xlu0 %6228
  %6230 = vrot.lane.b32.xlu0 %v5620, 16
  %v6231 = vpop.permute.xlu0 %6230
  %6232 = vrot.lane.b32.xlu0 %v5621, 16
  %v6233 = vpop.permute.xlu0 %6232
  %6234 = vrot.lane.b32.xlu0 %v5622, 16
  %v6235 = vpop.permute.xlu0 %6234
  %6236 = vrot.lane.b32.xlu0 %v5623, 16
  %v6237 = vpop.permute.xlu0 %6236
  %6238 = vrot.lane.b32.xlu0 %v5624, 16
  %v6239 = vpop.permute.xlu0 %6238
  %6240 = vrot.lane.b32.xlu0 %v5625, 16
  %v6241 = vpop.permute.xlu0 %6240
  %6242 = vrot.lane.b32.xlu0 %v5626, 16
  %v6243 = vpop.permute.xlu0 %6242
  %6244 = vrot.lane.b32.xlu0 %v5627, 16
  %v6245 = vpop.permute.xlu0 %6244
  %6246 = vrot.lane.b32.xlu0 %v5628, 16
  %v6247 = vpop.permute.xlu0 %6246
  %6248 = vrot.lane.b32.xlu0 %v5629, 16
  %v6249 = vpop.permute.xlu0 %6248
  %6250 = vrot.lane.b32.xlu0 %v5630, 16
  %v6251 = vpop.permute.xlu0 %6250
  %6252 = vrot.lane.b32.xlu0 %v5631, 16
  %v6253 = vpop.permute.xlu0 %6252
  %6254 = vrot.lane.b32.xlu0 %v5632, 16
  %v6255 = vpop.permute.xlu0 %6254
  %6256 = vrot.lane.b32.xlu0 %v5633, 16
  %v6257 = vpop.permute.xlu0 %6256
  %6258 = vrot.lane.b32.xlu0 %v5634, 16
  %v6259 = vpop.permute.xlu0 %6258
  %6260 = vrot.lane.b32.xlu0 %v5635, 16
  %v6261 = vpop.permute.xlu0 %6260
  %6262 = vrot.lane.b32.xlu0 %v5636, 16
  %v6263 = vpop.permute.xlu0 %6262
  %6264 = vrot.lane.b32.xlu0 %v5637, 16
  %v6265 = vpop.permute.xlu0 %6264
  %6266 = vrot.lane.b32.xlu0 %v5638, 16
  %v6267 = vpop.permute.xlu0 %6266
  %6268 = vrot.lane.b32.xlu0 %v5639, 16
  %v6269 = vpop.permute.xlu0 %6268
  %6270 = vrot.lane.b32.xlu0 %v5640, 16
  %v6271 = vpop.permute.xlu0 %6270
  %6272 = vrot.lane.b32.xlu0 %v5641, 16
  %v6273 = vpop.permute.xlu0 %6272
  %6274 = vrot.lane.b32.xlu0 %v5642, 16
  %v6275 = vpop.permute.xlu0 %6274
  %6276 = vrot.lane.b32.xlu0 %v5643, 16
  %v6277 = vpop.permute.xlu0 %6276
  %6278 = vrot.lane.b32.xlu0 %v5644, 16
  %v6279 = vpop.permute.xlu0 %6278
  %6280 = vrot.lane.b32.xlu0 %v5645, 16
  %v6281 = vpop.permute.xlu0 %6280
  %6282 = vrot.lane.b32.xlu0 %v5646, 16
  %v6283 = vpop.permute.xlu0 %6282
  %6284 = vrot.lane.b32.xlu0 %v5647, 16
  %v6285 = vpop.permute.xlu0 %6284
  %6286 = vrot.lane.b32.xlu0 %v5648, 16
  %v6287 = vpop.permute.xlu0 %6286
  %6288 = vrot.lane.b32.xlu0 %v5649, 16
  %v6289 = vpop.permute.xlu0 %6288
  %6290 = vrot.lane.b32.xlu0 %v5650, 16
  %v6291 = vpop.permute.xlu0 %6290
  %6420 = vrot.lane.b32.xlu0 %v5651, 32
  %v6421 = vpop.permute.xlu0 %6420
  %6422 = vrot.lane.b32.xlu0 %v5652, 32
  %v6423 = vpop.permute.xlu0 %6422
  %6424 = vrot.lane.b32.xlu0 %v5653, 32
  %v6425 = vpop.permute.xlu0 %6424
  %6426 = vrot.lane.b32.xlu0 %v5654, 32
  %v6427 = vpop.permute.xlu0 %6426
  %6428 = vrot.lane.b32.xlu0 %v5655, 32
  %v6429 = vpop.permute.xlu0 %6428
  %6430 = vrot.lane.b32.xlu0 %v5656, 32
  %v6431 = vpop.permute.xlu0 %6430
  %6432 = vrot.lane.b32.xlu0 %v5657, 32
  %v6433 = vpop.permute.xlu0 %6432
  %6434 = vrot.lane.b32.xlu0 %v5658, 32
  %v6435 = vpop.permute.xlu0 %6434
  %6436 = vrot.lane.b32.xlu0 %v5659, 32
  %v6437 = vpop.permute.xlu0 %6436
  %6438 = vrot.lane.b32.xlu0 %v5660, 32
  %v6439 = vpop.permute.xlu0 %6438
  %6440 = vrot.lane.b32.xlu0 %v5661, 32
  %v6441 = vpop.permute.xlu0 %6440
  %6442 = vrot.lane.b32.xlu0 %v5662, 32
  %v6443 = vpop.permute.xlu0 %6442
  %6444 = vrot.lane.b32.xlu0 %v5663, 32
  %v6445 = vpop.permute.xlu0 %6444
  %6446 = vrot.lane.b32.xlu0 %v5664, 32
  %v6447 = vpop.permute.xlu0 %6446
  %6448 = vrot.lane.b32.xlu0 %v5665, 32
  %v6449 = vpop.permute.xlu0 %6448
  %6450 = vrot.lane.b32.xlu0 %v5666, 32
  %v6451 = vpop.permute.xlu0 %6450
  %6452 = vrot.lane.b32.xlu0 %v5667, 32
  %v6453 = vpop.permute.xlu0 %6452
  %6454 = vrot.lane.b32.xlu0 %v5668, 32
  %v6455 = vpop.permute.xlu0 %6454
  %6456 = vrot.lane.b32.xlu0 %v5669, 32
  %v6457 = vpop.permute.xlu0 %6456
  %6458 = vrot.lane.b32.xlu0 %v5670, 32
  %v6459 = vpop.permute.xlu0 %6458
  %6460 = vrot.lane.b32.xlu0 %v5671, 32
  %v6461 = vpop.permute.xlu0 %6460
  %6462 = vrot.lane.b32.xlu0 %v5672, 32
  %v6463 = vpop.permute.xlu0 %6462
  %6464 = vrot.lane.b32.xlu0 %v5673, 32
  %v6465 = vpop.permute.xlu0 %6464
  %6466 = vrot.lane.b32.xlu0 %v5674, 32
  %v6467 = vpop.permute.xlu0 %6466
  %6468 = vrot.lane.b32.xlu0 %v5675, 32
  %v6469 = vpop.permute.xlu0 %6468
  %6470 = vrot.lane.b32.xlu0 %v5676, 32
  %v6471 = vpop.permute.xlu0 %6470
  %6472 = vrot.lane.b32.xlu0 %v5677, 32
  %v6473 = vpop.permute.xlu0 %6472
  %6474 = vrot.lane.b32.xlu0 %v5678, 32
  %v6475 = vpop.permute.xlu0 %6474
  %6476 = vrot.lane.b32.xlu0 %v5679, 32
  %v6477 = vpop.permute.xlu0 %6476
  %6478 = vrot.lane.b32.xlu0 %v5680, 32
  %v6479 = vpop.permute.xlu0 %6478
  %6480 = vrot.lane.b32.xlu0 %v5681, 32
  %v6481 = vpop.permute.xlu0 %6480
  %6482 = vrot.lane.b32.xlu0 %v5682, 32
  %v6483 = vpop.permute.xlu0 %6482
  %6484 = vrot.lane.b32.xlu0 %v5683, 32
  %v6485 = vpop.permute.xlu0 %6484
  %6486 = vrot.lane.b32.xlu0 %v5684, 32
  %v6487 = vpop.permute.xlu0 %6486
  %6488 = vrot.lane.b32.xlu0 %v5685, 32
  %v6489 = vpop.permute.xlu0 %6488
  %6490 = vrot.lane.b32.xlu0 %v5686, 32
  %v6491 = vpop.permute.xlu0 %6490
  %6492 = vrot.lane.b32.xlu0 %v5687, 32
  %v6493 = vpop.permute.xlu0 %6492
  %6494 = vrot.lane.b32.xlu0 %v5688, 32
  %v6495 = vpop.permute.xlu0 %6494
  %6496 = vrot.lane.b32.xlu0 %v5689, 32
  %v6497 = vpop.permute.xlu0 %6496
  %6498 = vrot.lane.b32.xlu0 %v5690, 32
  %v6499 = vpop.permute.xlu0 %6498
  %6500 = vrot.lane.b32.xlu0 %v5691, 32
  %v6501 = vpop.permute.xlu0 %6500
  %6502 = vrot.lane.b32.xlu0 %v5692, 32
  %v6503 = vpop.permute.xlu0 %6502
  %6504 = vrot.lane.b32.xlu0 %v5693, 32
  %v6505 = vpop.permute.xlu0 %6504
  %6506 = vrot.lane.b32.xlu0 %v5694, 32
  %v6507 = vpop.permute.xlu0 %6506
  %6508 = vrot.lane.b32.xlu0 %v5695, 32
  %v6509 = vpop.permute.xlu0 %6508
  %6510 = vrot.lane.b32.xlu0 %v5696, 32
  %v6511 = vpop.permute.xlu0 %6510
  %6512 = vrot.lane.b32.xlu0 %v5697, 32
  %v6513 = vpop.permute.xlu0 %6512
  %6514 = vrot.lane.b32.xlu0 %v5698, 32
  %v6515 = vpop.permute.xlu0 %6514
  %6516 = vrot.lane.b32.xlu0 %v5699, 32
  %v6517 = vpop.permute.xlu0 %6516
  %6518 = vrot.lane.b32.xlu0 %v5700, 32
  %v6519 = vpop.permute.xlu0 %6518
  %6520 = vrot.lane.b32.xlu0 %v5701, 32
  %v6521 = vpop.permute.xlu0 %6520
  %6522 = vrot.lane.b32.xlu0 %v5702, 32
  %v6523 = vpop.permute.xlu0 %6522
  %6524 = vrot.lane.b32.xlu0 %v5703, 32
  %v6525 = vpop.permute.xlu0 %6524
  %6526 = vrot.lane.b32.xlu0 %v5704, 32
  %v6527 = vpop.permute.xlu0 %6526
  %6528 = vrot.lane.b32.xlu0 %v5705, 32
  %v6529 = vpop.permute.xlu0 %6528
  %6530 = vrot.lane.b32.xlu0 %v5706, 32
  %v6531 = vpop.permute.xlu0 %6530
  %6532 = vrot.lane.b32.xlu0 %v5707, 32
  %v6533 = vpop.permute.xlu0 %6532
  %6534 = vrot.lane.b32.xlu0 %v5708, 32
  %v6535 = vpop.permute.xlu0 %6534
  %6536 = vrot.lane.b32.xlu0 %v5709, 32
  %v6537 = vpop.permute.xlu0 %6536
  %6538 = vrot.lane.b32.xlu0 %v5710, 32
  %v6539 = vpop.permute.xlu0 %6538
  %6540 = vrot.lane.b32.xlu0 %v5711, 32
  %v6541 = vpop.permute.xlu0 %6540
  %6542 = vrot.lane.b32.xlu0 %v5712, 32
  %v6543 = vpop.permute.xlu0 %6542
  %6544 = vrot.lane.b32.xlu0 %v5713, 32
  %v6545 = vpop.permute.xlu0 %6544
  %6546 = vrot.lane.b32.xlu0 %v5714, 32
  %v6547 = vpop.permute.xlu0 %6546
  %6676 = vrot.lane.b32.xlu0 %v5715, 48
  %v6677 = vpop.permute.xlu0 %6676
  %6678 = vrot.lane.b32.xlu0 %v5716, 48
  %v6679 = vpop.permute.xlu0 %6678
  %6680 = vrot.lane.b32.xlu0 %v5717, 48
  %v6681 = vpop.permute.xlu0 %6680
  %6682 = vrot.lane.b32.xlu0 %v5718, 48
  %v6683 = vpop.permute.xlu0 %6682
  %6684 = vrot.lane.b32.xlu0 %v5719, 48
  %v6685 = vpop.permute.xlu0 %6684
  %6686 = vrot.lane.b32.xlu0 %v5720, 48
  %v6687 = vpop.permute.xlu0 %6686
  %6688 = vrot.lane.b32.xlu0 %v5721, 48
  %v6689 = vpop.permute.xlu0 %6688
  %6690 = vrot.lane.b32.xlu0 %v5722, 48
  %v6691 = vpop.permute.xlu0 %6690
  %6692 = vrot.lane.b32.xlu0 %v5723, 48
  %v6693 = vpop.permute.xlu0 %6692
  %6694 = vrot.lane.b32.xlu0 %v5724, 48
  %v6695 = vpop.permute.xlu0 %6694
  %6696 = vrot.lane.b32.xlu0 %v5725, 48
  %v6697 = vpop.permute.xlu0 %6696
  %6698 = vrot.lane.b32.xlu0 %v5726, 48
  %v6699 = vpop.permute.xlu0 %6698
  %6700 = vrot.lane.b32.xlu0 %v5727, 48
  %v6701 = vpop.permute.xlu0 %6700
  %6702 = vrot.lane.b32.xlu0 %v5728, 48
  %v6703 = vpop.permute.xlu0 %6702
  %6704 = vrot.lane.b32.xlu0 %v5729, 48
  %v6705 = vpop.permute.xlu0 %6704
  %6706 = vrot.lane.b32.xlu0 %v5730, 48
  %v6707 = vpop.permute.xlu0 %6706
  %6708 = vrot.lane.b32.xlu0 %v5731, 48
  %v6709 = vpop.permute.xlu0 %6708
  %6710 = vrot.lane.b32.xlu0 %v5732, 48
  %v6711 = vpop.permute.xlu0 %6710
  %6712 = vrot.lane.b32.xlu0 %v5733, 48
  %v6713 = vpop.permute.xlu0 %6712
  %6714 = vrot.lane.b32.xlu0 %v5734, 48
  %v6715 = vpop.permute.xlu0 %6714
  %6716 = vrot.lane.b32.xlu0 %v5735, 48
  %v6717 = vpop.permute.xlu0 %6716
  %6718 = vrot.lane.b32.xlu0 %v5736, 48
  %v6719 = vpop.permute.xlu0 %6718
  %6720 = vrot.lane.b32.xlu0 %v5737, 48
  %v6721 = vpop.permute.xlu0 %6720
  %6722 = vrot.lane.b32.xlu0 %v5738, 48
  %v6723 = vpop.permute.xlu0 %6722
  %6724 = vrot.lane.b32.xlu0 %v5739, 48
  %v6725 = vpop.permute.xlu0 %6724
  %6726 = vrot.lane.b32.xlu0 %v5740, 48
  %v6727 = vpop.permute.xlu0 %6726
  %6728 = vrot.lane.b32.xlu0 %v5741, 48
  %v6729 = vpop.permute.xlu0 %6728
  %6730 = vrot.lane.b32.xlu0 %v5742, 48
  %v6731 = vpop.permute.xlu0 %6730
  %6732 = vrot.lane.b32.xlu0 %v5743, 48
  %v6733 = vpop.permute.xlu0 %6732
  %6734 = vrot.lane.b32.xlu0 %v5744, 48
  %v6735 = vpop.permute.xlu0 %6734
  %6736 = vrot.lane.b32.xlu0 %v5745, 48
  %v6737 = vpop.permute.xlu0 %6736
  %6738 = vrot.lane.b32.xlu0 %v5746, 48
  %v6739 = vpop.permute.xlu0 %6738
  %6740 = vrot.lane.b32.xlu0 %v5747, 48
  %v6741 = vpop.permute.xlu0 %6740
  %6742 = vrot.lane.b32.xlu0 %v5748, 48
  %v6743 = vpop.permute.xlu0 %6742
  %6744 = vrot.lane.b32.xlu0 %v5749, 48
  %v6745 = vpop.permute.xlu0 %6744
  %6746 = vrot.lane.b32.xlu0 %v5750, 48
  %v6747 = vpop.permute.xlu0 %6746
  %6748 = vrot.lane.b32.xlu0 %v5751, 48
  %v6749 = vpop.permute.xlu0 %6748
  %6750 = vrot.lane.b32.xlu0 %v5752, 48
  %v6751 = vpop.permute.xlu0 %6750
  %6752 = vrot.lane.b32.xlu0 %v5753, 48
  %v6753 = vpop.permute.xlu0 %6752
  %6754 = vrot.lane.b32.xlu0 %v5754, 48
  %v6755 = vpop.permute.xlu0 %6754
  %6756 = vrot.lane.b32.xlu0 %v5755, 48
  %v6757 = vpop.permute.xlu0 %6756
  %6758 = vrot.lane.b32.xlu0 %v5756, 48
  %v6759 = vpop.permute.xlu0 %6758
  %6760 = vrot.lane.b32.xlu0 %v5757, 48
  %v6761 = vpop.permute.xlu0 %6760
  %6762 = vrot.lane.b32.xlu0 %v5758, 48
  %v6763 = vpop.permute.xlu0 %6762
  %6764 = vrot.lane.b32.xlu0 %v5759, 48
  %v6765 = vpop.permute.xlu0 %6764
  %6766 = vrot.lane.b32.xlu0 %v5760, 48
  %v6767 = vpop.permute.xlu0 %6766
  %6768 = vrot.lane.b32.xlu0 %v5761, 48
  %v6769 = vpop.permute.xlu0 %6768
  %6770 = vrot.lane.b32.xlu0 %v5762, 48
  %v6771 = vpop.permute.xlu0 %6770
  %6772 = vrot.lane.b32.xlu0 %v5763, 48
  %v6773 = vpop.permute.xlu0 %6772
  %6774 = vrot.lane.b32.xlu0 %v5764, 48
  %v6775 = vpop.permute.xlu0 %6774
  %6776 = vrot.lane.b32.xlu0 %v5765, 48
  %v6777 = vpop.permute.xlu0 %6776
  %6778 = vrot.lane.b32.xlu0 %v5766, 48
  %v6779 = vpop.permute.xlu0 %6778
  %6780 = vrot.lane.b32.xlu0 %v5767, 48
  %v6781 = vpop.permute.xlu0 %6780
  %6782 = vrot.lane.b32.xlu0 %v5768, 48
  %v6783 = vpop.permute.xlu0 %6782
  %6784 = vrot.lane.b32.xlu0 %v5769, 48
  %v6785 = vpop.permute.xlu0 %6784
  %6786 = vrot.lane.b32.xlu0 %v5770, 48
  %v6787 = vpop.permute.xlu0 %6786
  %6788 = vrot.lane.b32.xlu0 %v5771, 48
  %v6789 = vpop.permute.xlu0 %6788
  %6790 = vrot.lane.b32.xlu0 %v5772, 48
  %v6791 = vpop.permute.xlu0 %6790
  %6792 = vrot.lane.b32.xlu0 %v5773, 48
  %v6793 = vpop.permute.xlu0 %6792
  %6794 = vrot.lane.b32.xlu0 %v5774, 48
  %v6795 = vpop.permute.xlu0 %6794
  %6796 = vrot.lane.b32.xlu0 %v5775, 48
  %v6797 = vpop.permute.xlu0 %6796
  %6798 = vrot.lane.b32.xlu0 %v5776, 48
  %v6799 = vpop.permute.xlu0 %6798
  %6800 = vrot.lane.b32.xlu0 %v5777, 48
  %v6801 = vpop.permute.xlu0 %6800
  %6802 = vrot.lane.b32.xlu0 %v5778, 48
  %v6803 = vpop.permute.xlu0 %6802
  %6932 = vrot.lane.b32.xlu0 %v5779, 64
  %v6933 = vpop.permute.xlu0 %6932
  %6934 = vrot.lane.b32.xlu0 %v5780, 64
  %v6935 = vpop.permute.xlu0 %6934
  %6936 = vrot.lane.b32.xlu0 %v5781, 64
  %v6937 = vpop.permute.xlu0 %6936
  %6938 = vrot.lane.b32.xlu0 %v5782, 64
  %v6939 = vpop.permute.xlu0 %6938
  %6940 = vrot.lane.b32.xlu0 %v5783, 64
  %v6941 = vpop.permute.xlu0 %6940
  %6942 = vrot.lane.b32.xlu0 %v5784, 64
  %v6943 = vpop.permute.xlu0 %6942
  %6944 = vrot.lane.b32.xlu0 %v5785, 64
  %v6945 = vpop.permute.xlu0 %6944
  %6946 = vrot.lane.b32.xlu0 %v5786, 64
  %v6947 = vpop.permute.xlu0 %6946
  %6948 = vrot.lane.b32.xlu0 %v5787, 64
  %v6949 = vpop.permute.xlu0 %6948
  %6950 = vrot.lane.b32.xlu0 %v5788, 64
  %v6951 = vpop.permute.xlu0 %6950
  %6952 = vrot.lane.b32.xlu0 %v5789, 64
  %v6953 = vpop.permute.xlu0 %6952
  %6954 = vrot.lane.b32.xlu0 %v5790, 64
  %v6955 = vpop.permute.xlu0 %6954
  %6956 = vrot.lane.b32.xlu0 %v5791, 64
  %v6957 = vpop.permute.xlu0 %6956
  %6958 = vrot.lane.b32.xlu0 %v5792, 64
  %v6959 = vpop.permute.xlu0 %6958
  %6960 = vrot.lane.b32.xlu0 %v5793, 64
  %v6961 = vpop.permute.xlu0 %6960
  %6962 = vrot.lane.b32.xlu0 %v5794, 64
  %v6963 = vpop.permute.xlu0 %6962
  %6964 = vrot.lane.b32.xlu0 %v5795, 64
  %v6965 = vpop.permute.xlu0 %6964
  %6966 = vrot.lane.b32.xlu0 %v5796, 64
  %v6967 = vpop.permute.xlu0 %6966
  %6968 = vrot.lane.b32.xlu0 %v5797, 64
  %v6969 = vpop.permute.xlu0 %6968
  %6970 = vrot.lane.b32.xlu0 %v5798, 64
  %v6971 = vpop.permute.xlu0 %6970
  %6972 = vrot.lane.b32.xlu0 %v5799, 64
  %v6973 = vpop.permute.xlu0 %6972
  %6974 = vrot.lane.b32.xlu0 %v5800, 64
  %v6975 = vpop.permute.xlu0 %6974
  %6976 = vrot.lane.b32.xlu0 %v5801, 64
  %v6977 = vpop.permute.xlu0 %6976
  %6978 = vrot.lane.b32.xlu0 %v5802, 64
  %v6979 = vpop.permute.xlu0 %6978
  %6980 = vrot.lane.b32.xlu0 %v5803, 64
  %v6981 = vpop.permute.xlu0 %6980
  %6982 = vrot.lane.b32.xlu0 %v5804, 64
  %v6983 = vpop.permute.xlu0 %6982
  %6984 = vrot.lane.b32.xlu0 %v5805, 64
  %v6985 = vpop.permute.xlu0 %6984
  %6986 = vrot.lane.b32.xlu0 %v5806, 64
  %v6987 = vpop.permute.xlu0 %6986
  %6988 = vrot.lane.b32.xlu0 %v5807, 64
  %v6989 = vpop.permute.xlu0 %6988
  %6990 = vrot.lane.b32.xlu0 %v5808, 64
  %v6991 = vpop.permute.xlu0 %6990
  %6992 = vrot.lane.b32.xlu0 %v5809, 64
  %v6993 = vpop.permute.xlu0 %6992
  %6994 = vrot.lane.b32.xlu0 %v5810, 64
  %v6995 = vpop.permute.xlu0 %6994
  %6996 = vrot.lane.b32.xlu0 %v5811, 64
  %v6997 = vpop.permute.xlu0 %6996
  %6998 = vrot.lane.b32.xlu0 %v5812, 64
  %v6999 = vpop.permute.xlu0 %6998
  %7000 = vrot.lane.b32.xlu0 %v5813, 64
  %v7001 = vpop.permute.xlu0 %7000
  %7002 = vrot.lane.b32.xlu0 %v5814, 64
  %v7003 = vpop.permute.xlu0 %7002
  %7004 = vrot.lane.b32.xlu0 %v5815, 64
  %v7005 = vpop.permute.xlu0 %7004
  %7006 = vrot.lane.b32.xlu0 %v5816, 64
  %v7007 = vpop.permute.xlu0 %7006
  %7008 = vrot.lane.b32.xlu0 %v5817, 64
  %v7009 = vpop.permute.xlu0 %7008
  %7010 = vrot.lane.b32.xlu0 %v5818, 64
  %v7011 = vpop.permute.xlu0 %7010
  %7012 = vrot.lane.b32.xlu0 %v5819, 64
  %v7013 = vpop.permute.xlu0 %7012
  %7014 = vrot.lane.b32.xlu0 %v5820, 64
  %v7015 = vpop.permute.xlu0 %7014
  %7016 = vrot.lane.b32.xlu0 %v5821, 64
  %v7017 = vpop.permute.xlu0 %7016
  %7018 = vrot.lane.b32.xlu0 %v5822, 64
  %v7019 = vpop.permute.xlu0 %7018
  %7020 = vrot.lane.b32.xlu0 %v5823, 64
  %v7021 = vpop.permute.xlu0 %7020
  %7022 = vrot.lane.b32.xlu0 %v5824, 64
  %v7023 = vpop.permute.xlu0 %7022
  %7024 = vrot.lane.b32.xlu0 %v5825, 64
  %v7025 = vpop.permute.xlu0 %7024
  %7026 = vrot.lane.b32.xlu0 %v5826, 64
  %v7027 = vpop.permute.xlu0 %7026
  %7028 = vrot.lane.b32.xlu0 %v5827, 64
  %v7029 = vpop.permute.xlu0 %7028
  %7030 = vrot.lane.b32.xlu0 %v5828, 64
  %v7031 = vpop.permute.xlu0 %7030
  %7032 = vrot.lane.b32.xlu0 %v5829, 64
  %v7033 = vpop.permute.xlu0 %7032
  %7034 = vrot.lane.b32.xlu0 %v5830, 64
  %v7035 = vpop.permute.xlu0 %7034
  %7036 = vrot.lane.b32.xlu0 %v5831, 64
  %v7037 = vpop.permute.xlu0 %7036
  %7038 = vrot.lane.b32.xlu0 %v5832, 64
  %v7039 = vpop.permute.xlu0 %7038
  %7040 = vrot.lane.b32.xlu0 %v5833, 64
  %v7041 = vpop.permute.xlu0 %7040
  %7042 = vrot.lane.b32.xlu0 %v5834, 64
  %v7043 = vpop.permute.xlu0 %7042
  %7044 = vrot.lane.b32.xlu0 %v5835, 64
  %v7045 = vpop.permute.xlu0 %7044
  %7046 = vrot.lane.b32.xlu0 %v5836, 64
  %v7047 = vpop.permute.xlu0 %7046
  %7048 = vrot.lane.b32.xlu0 %v5837, 64
  %v7049 = vpop.permute.xlu0 %7048
  %7050 = vrot.lane.b32.xlu0 %v5838, 64
  %v7051 = vpop.permute.xlu0 %7050
  %7052 = vrot.lane.b32.xlu0 %v5839, 64
  %v7053 = vpop.permute.xlu0 %7052
  %7054 = vrot.lane.b32.xlu0 %v5840, 64
  %v7055 = vpop.permute.xlu0 %7054
  %7056 = vrot.lane.b32.xlu0 %v5841, 64
  %v7057 = vpop.permute.xlu0 %7056
  %7058 = vrot.lane.b32.xlu0 %v5842, 64
  %v7059 = vpop.permute.xlu0 %7058
  %7188 = vrot.lane.b32.xlu0 %v5843, 80
  %v7189 = vpop.permute.xlu0 %7188
  %7190 = vrot.lane.b32.xlu0 %v5844, 80
  %v7191 = vpop.permute.xlu0 %7190
  %7192 = vrot.lane.b32.xlu0 %v5845, 80
  %v7193 = vpop.permute.xlu0 %7192
  %7194 = vrot.lane.b32.xlu0 %v5846, 80
  %v7195 = vpop.permute.xlu0 %7194
  %7196 = vrot.lane.b32.xlu0 %v5847, 80
  %v7197 = vpop.permute.xlu0 %7196
  %7198 = vrot.lane.b32.xlu0 %v5848, 80
  %v7199 = vpop.permute.xlu0 %7198
  %7200 = vrot.lane.b32.xlu0 %v5849, 80
  %v7201 = vpop.permute.xlu0 %7200
  %7202 = vrot.lane.b32.xlu0 %v5850, 80
  %v7203 = vpop.permute.xlu0 %7202
  %7204 = vrot.lane.b32.xlu0 %v5851, 80
  %v7205 = vpop.permute.xlu0 %7204
  %7206 = vrot.lane.b32.xlu0 %v5852, 80
  %v7207 = vpop.permute.xlu0 %7206
  %7208 = vrot.lane.b32.xlu0 %v5853, 80
  %v7209 = vpop.permute.xlu0 %7208
  %7210 = vrot.lane.b32.xlu0 %v5854, 80
  %v7211 = vpop.permute.xlu0 %7210
  %7212 = vrot.lane.b32.xlu0 %v5855, 80
  %v7213 = vpop.permute.xlu0 %7212
  %7214 = vrot.lane.b32.xlu0 %v5856, 80
  %v7215 = vpop.permute.xlu0 %7214
  %7216 = vrot.lane.b32.xlu0 %v5857, 80
  %v7217 = vpop.permute.xlu0 %7216
  %7218 = vrot.lane.b32.xlu0 %v5858, 80
  %v7219 = vpop.permute.xlu0 %7218
  %7220 = vrot.lane.b32.xlu0 %v5859, 80
  %v7221 = vpop.permute.xlu0 %7220
  %7222 = vrot.lane.b32.xlu0 %v5860, 80
  %v7223 = vpop.permute.xlu0 %7222
  %7224 = vrot.lane.b32.xlu0 %v5861, 80
  %v7225 = vpop.permute.xlu0 %7224
  %7226 = vrot.lane.b32.xlu0 %v5862, 80
  %v7227 = vpop.permute.xlu0 %7226
  %7228 = vrot.lane.b32.xlu0 %v5863, 80
  %v7229 = vpop.permute.xlu0 %7228
  %7230 = vrot.lane.b32.xlu0 %v5864, 80
  %v7231 = vpop.permute.xlu0 %7230
  %7232 = vrot.lane.b32.xlu0 %v5865, 80
  %v7233 = vpop.permute.xlu0 %7232
  %7234 = vrot.lane.b32.xlu0 %v5866, 80
  %v7235 = vpop.permute.xlu0 %7234
  %7236 = vrot.lane.b32.xlu0 %v5867, 80
  %v7237 = vpop.permute.xlu0 %7236
  %7238 = vrot.lane.b32.xlu0 %v5868, 80
  %v7239 = vpop.permute.xlu0 %7238
  %7240 = vrot.lane.b32.xlu0 %v5869, 80
  %v7241 = vpop.permute.xlu0 %7240
  %7242 = vrot.lane.b32.xlu0 %v5870, 80
  %v7243 = vpop.permute.xlu0 %7242
  %7244 = vrot.lane.b32.xlu0 %v5871, 80
  %v7245 = vpop.permute.xlu0 %7244
  %7246 = vrot.lane.b32.xlu0 %v5872, 80
  %v7247 = vpop.permute.xlu0 %7246
  %7248 = vrot.lane.b32.xlu0 %v5873, 80
  %v7249 = vpop.permute.xlu0 %7248
  %7250 = vrot.lane.b32.xlu0 %v5874, 80
  %v7251 = vpop.permute.xlu0 %7250
  %7252 = vrot.lane.b32.xlu0 %v5875, 80
  %v7253 = vpop.permute.xlu0 %7252
  %7254 = vrot.lane.b32.xlu0 %v5876, 80
  %v7255 = vpop.permute.xlu0 %7254
  %7256 = vrot.lane.b32.xlu0 %v5877, 80
  %v7257 = vpop.permute.xlu0 %7256
  %7258 = vrot.lane.b32.xlu0 %v5878, 80
  %v7259 = vpop.permute.xlu0 %7258
  %7260 = vrot.lane.b32.xlu0 %v5879, 80
  %v7261 = vpop.permute.xlu0 %7260
  %7262 = vrot.lane.b32.xlu0 %v5880, 80
  %v7263 = vpop.permute.xlu0 %7262
  %7264 = vrot.lane.b32.xlu0 %v5881, 80
  %v7265 = vpop.permute.xlu0 %7264
  %7266 = vrot.lane.b32.xlu0 %v5882, 80
  %v7267 = vpop.permute.xlu0 %7266
  %7268 = vrot.lane.b32.xlu0 %v5883, 80
  %v7269 = vpop.permute.xlu0 %7268
  %7270 = vrot.lane.b32.xlu0 %v5884, 80
  %v7271 = vpop.permute.xlu0 %7270
  %7272 = vrot.lane.b32.xlu0 %v5885, 80
  %v7273 = vpop.permute.xlu0 %7272
  %7274 = vrot.lane.b32.xlu0 %v5886, 80
  %v7275 = vpop.permute.xlu0 %7274
  %7276 = vrot.lane.b32.xlu0 %v5887, 80
  %v7277 = vpop.permute.xlu0 %7276
  %7278 = vrot.lane.b32.xlu0 %v5888, 80
  %v7279 = vpop.permute.xlu0 %7278
  %7280 = vrot.lane.b32.xlu0 %v5889, 80
  %v7281 = vpop.permute.xlu0 %7280
  %7282 = vrot.lane.b32.xlu0 %v5890, 80
  %v7283 = vpop.permute.xlu0 %7282
  %7284 = vrot.lane.b32.xlu0 %v5891, 80
  %v7285 = vpop.permute.xlu0 %7284
  %7286 = vrot.lane.b32.xlu0 %v5892, 80
  %v7287 = vpop.permute.xlu0 %7286
  %7288 = vrot.lane.b32.xlu0 %v5893, 80
  %v7289 = vpop.permute.xlu0 %7288
  %7290 = vrot.lane.b32.xlu0 %v5894, 80
  %v7291 = vpop.permute.xlu0 %7290
  %7292 = vrot.lane.b32.xlu0 %v5895, 80
  %v7293 = vpop.permute.xlu0 %7292
  %7294 = vrot.lane.b32.xlu0 %v5896, 80
  %v7295 = vpop.permute.xlu0 %7294
  %7296 = vrot.lane.b32.xlu0 %v5897, 80
  %v7297 = vpop.permute.xlu0 %7296
  %7298 = vrot.lane.b32.xlu0 %v5898, 80
  %v7299 = vpop.permute.xlu0 %7298
  %7300 = vrot.lane.b32.xlu0 %v5899, 80
  %v7301 = vpop.permute.xlu0 %7300
  %7302 = vrot.lane.b32.xlu0 %v5900, 80
  %v7303 = vpop.permute.xlu0 %7302
  %7304 = vrot.lane.b32.xlu0 %v5901, 80
  %v7305 = vpop.permute.xlu0 %7304
  %7306 = vrot.lane.b32.xlu0 %v5902, 80
  %v7307 = vpop.permute.xlu0 %7306
  %7308 = vrot.lane.b32.xlu0 %v5903, 80
  %v7309 = vpop.permute.xlu0 %7308
  %7310 = vrot.lane.b32.xlu0 %v5904, 80
  %v7311 = vpop.permute.xlu0 %7310
  %7312 = vrot.lane.b32.xlu0 %v5905, 80
  %v7313 = vpop.permute.xlu0 %7312
  %7314 = vrot.lane.b32.xlu0 %v5906, 80
  %v7315 = vpop.permute.xlu0 %7314
  %7444 = vrot.lane.b32.xlu0 %v5908, 96
  %v7445 = vpop.permute.xlu0 %7444
  %7446 = vrot.lane.b32.xlu0 %v5909, 96
  %v7447 = vpop.permute.xlu0 %7446
  %7448 = vrot.lane.b32.xlu0 %v5910, 96
  %v7449 = vpop.permute.xlu0 %7448
  %7450 = vrot.lane.b32.xlu0 %v5911, 96
  %v7451 = vpop.permute.xlu0 %7450
  %7452 = vrot.lane.b32.xlu0 %v5912, 96
  %v7453 = vpop.permute.xlu0 %7452
  %7454 = vrot.lane.b32.xlu0 %v5913, 96
  %v7455 = vpop.permute.xlu0 %7454
  %7456 = vrot.lane.b32.xlu0 %v5914, 96
  %v7457 = vpop.permute.xlu0 %7456
  %7458 = vrot.lane.b32.xlu0 %v5915, 96
  %v7459 = vpop.permute.xlu0 %7458
  %7460 = vrot.lane.b32.xlu0 %v5916, 96
  %v7461 = vpop.permute.xlu0 %7460
  %7462 = vrot.lane.b32.xlu0 %v5917, 96
  %v7463 = vpop.permute.xlu0 %7462
  %7464 = vrot.lane.b32.xlu0 %v5918, 96
  %v7465 = vpop.permute.xlu0 %7464
  %7466 = vrot.lane.b32.xlu0 %v5919, 96
  %v7467 = vpop.permute.xlu0 %7466
  %7468 = vrot.lane.b32.xlu0 %v5920, 96
  %v7469 = vpop.permute.xlu0 %7468
  %7470 = vrot.lane.b32.xlu0 %v5921, 96
  %v7471 = vpop.permute.xlu0 %7470
  %7472 = vrot.lane.b32.xlu0 %v5922, 96
  %v7473 = vpop.permute.xlu0 %7472
  %7474 = vrot.lane.b32.xlu0 %v5923, 96
  %v7475 = vpop.permute.xlu0 %7474
  %7476 = vrot.lane.b32.xlu0 %v5924, 96
  %v7477 = vpop.permute.xlu0 %7476
  %7478 = vrot.lane.b32.xlu0 %v5925, 96
  %v7479 = vpop.permute.xlu0 %7478
  %7480 = vrot.lane.b32.xlu0 %v5926, 96
  %v7481 = vpop.permute.xlu0 %7480
  %7482 = vrot.lane.b32.xlu0 %v5927, 96
  %v7483 = vpop.permute.xlu0 %7482
  %7484 = vrot.lane.b32.xlu0 %v5928, 96
  %v7485 = vpop.permute.xlu0 %7484
  %7486 = vrot.lane.b32.xlu0 %v5929, 96
  %v7487 = vpop.permute.xlu0 %7486
  %7488 = vrot.lane.b32.xlu0 %v5930, 96
  %v7489 = vpop.permute.xlu0 %7488
  %7490 = vrot.lane.b32.xlu0 %v5931, 96
  %v7491 = vpop.permute.xlu0 %7490
  %7492 = vrot.lane.b32.xlu0 %v5932, 96
  %v7493 = vpop.permute.xlu0 %7492
  %7494 = vrot.lane.b32.xlu0 %v5933, 96
  %v7495 = vpop.permute.xlu0 %7494
  %7496 = vrot.lane.b32.xlu0 %v5934, 96
  %v7497 = vpop.permute.xlu0 %7496
  %7498 = vrot.lane.b32.xlu0 %v5935, 96
  %v7499 = vpop.permute.xlu0 %7498
  %7500 = vrot.lane.b32.xlu0 %v5936, 96
  %v7501 = vpop.permute.xlu0 %7500
  %7502 = vrot.lane.b32.xlu0 %v5937, 96
  %v7503 = vpop.permute.xlu0 %7502
  %7504 = vrot.lane.b32.xlu0 %v5938, 96
  %v7505 = vpop.permute.xlu0 %7504
  %7506 = vrot.lane.b32.xlu0 %v5939, 96
  %v7507 = vpop.permute.xlu0 %7506
  %7508 = vrot.lane.b32.xlu0 %v5940, 96
  %v7509 = vpop.permute.xlu0 %7508
  %7510 = vrot.lane.b32.xlu0 %v5941, 96
  %v7511 = vpop.permute.xlu0 %7510
  %7512 = vrot.lane.b32.xlu0 %v5942, 96
  %v7513 = vpop.permute.xlu0 %7512
  %7514 = vrot.lane.b32.xlu0 %v5943, 96
  %v7515 = vpop.permute.xlu0 %7514
  %7516 = vrot.lane.b32.xlu0 %v5944, 96
  %v7517 = vpop.permute.xlu0 %7516
  %7518 = vrot.lane.b32.xlu0 %v5945, 96
  %v7519 = vpop.permute.xlu0 %7518
  %7520 = vrot.lane.b32.xlu0 %v5946, 96
  %v7521 = vpop.permute.xlu0 %7520
  %7522 = vrot.lane.b32.xlu0 %v5947, 96
  %v7523 = vpop.permute.xlu0 %7522
  %7524 = vrot.lane.b32.xlu0 %v5948, 96
  %v7525 = vpop.permute.xlu0 %7524
  %7526 = vrot.lane.b32.xlu0 %v5949, 96
  %v7527 = vpop.permute.xlu0 %7526
  %7528 = vrot.lane.b32.xlu0 %v5950, 96
  %v7529 = vpop.permute.xlu0 %7528
  %7530 = vrot.lane.b32.xlu0 %v5951, 96
  %v7531 = vpop.permute.xlu0 %7530
  %7532 = vrot.lane.b32.xlu0 %v5952, 96
  %v7533 = vpop.permute.xlu0 %7532
  %7534 = vrot.lane.b32.xlu0 %v5953, 96
  %v7535 = vpop.permute.xlu0 %7534
  %7536 = vrot.lane.b32.xlu0 %v5954, 96
  %v7537 = vpop.permute.xlu0 %7536
  %7538 = vrot.lane.b32.xlu0 %v5955, 96
  %v7539 = vpop.permute.xlu0 %7538
  %7540 = vrot.lane.b32.xlu0 %v5956, 96
  %v7541 = vpop.permute.xlu0 %7540
  %7542 = vrot.lane.b32.xlu0 %v5957, 96
  %v7543 = vpop.permute.xlu0 %7542
  %7544 = vrot.lane.b32.xlu0 %v5958, 96
  %v7545 = vpop.permute.xlu0 %7544
  %7546 = vrot.lane.b32.xlu0 %v5959, 96
  %v7547 = vpop.permute.xlu0 %7546
  %7548 = vrot.lane.b32.xlu0 %v5960, 96
  %v7549 = vpop.permute.xlu0 %7548
  %7550 = vrot.lane.b32.xlu0 %v5961, 96
  %v7551 = vpop.permute.xlu0 %7550
  %7552 = vrot.lane.b32.xlu0 %v5962, 96
  %v7553 = vpop.permute.xlu0 %7552
  %7554 = vrot.lane.b32.xlu0 %v5963, 96
  %v7555 = vpop.permute.xlu0 %7554
  %7556 = vrot.lane.b32.xlu0 %v5964, 96
  %v7557 = vpop.permute.xlu0 %7556
  %7558 = vrot.lane.b32.xlu0 %v5965, 96
  %v7559 = vpop.permute.xlu0 %7558
  %7560 = vrot.lane.b32.xlu0 %v5966, 96
  %v7561 = vpop.permute.xlu0 %7560
  %7562 = vrot.lane.b32.xlu0 %v5967, 96
  %v7563 = vpop.permute.xlu0 %7562
  %7564 = vrot.lane.b32.xlu0 %v5968, 96
  %v7565 = vpop.permute.xlu0 %7564
  %7566 = vrot.lane.b32.xlu0 %v5969, 96
  %v7567 = vpop.permute.xlu0 %7566
  %7568 = vrot.lane.b32.xlu0 %v5970, 96
  %v7569 = vpop.permute.xlu0 %7568
  %7570 = vrot.lane.b32.xlu0 %v5971, 96
  %v7571 = vpop.permute.xlu0 %7570
  %7700 = vrot.lane.b32.xlu0 %v5972, 112
  %v7701 = vpop.permute.xlu0 %7700
  %7702 = vrot.lane.b32.xlu0 %v5973, 112
  %v7703 = vpop.permute.xlu0 %7702
  %7704 = vrot.lane.b32.xlu0 %v5974, 112
  %v7705 = vpop.permute.xlu0 %7704
  %7706 = vrot.lane.b32.xlu0 %v5975, 112
  %v7707 = vpop.permute.xlu0 %7706
  %7708 = vrot.lane.b32.xlu0 %v5976, 112
  %v7709 = vpop.permute.xlu0 %7708
  %7710 = vrot.lane.b32.xlu0 %v5977, 112
  %v7711 = vpop.permute.xlu0 %7710
  %7712 = vrot.lane.b32.xlu0 %v5978, 112
  %v7713 = vpop.permute.xlu0 %7712
  %7714 = vrot.lane.b32.xlu0 %v5979, 112
  %v7715 = vpop.permute.xlu0 %7714
  %7716 = vrot.lane.b32.xlu0 %v5980, 112
  %v7717 = vpop.permute.xlu0 %7716
  %7718 = vrot.lane.b32.xlu0 %v5981, 112
  %v7719 = vpop.permute.xlu0 %7718
  %7720 = vrot.lane.b32.xlu0 %v5982, 112
  %v7721 = vpop.permute.xlu0 %7720
  %7722 = vrot.lane.b32.xlu0 %v5983, 112
  %v7723 = vpop.permute.xlu0 %7722
  %7724 = vrot.lane.b32.xlu0 %v5984, 112
  %v7725 = vpop.permute.xlu0 %7724
  %7726 = vrot.lane.b32.xlu0 %v5985, 112
  %v7727 = vpop.permute.xlu0 %7726
  %7728 = vrot.lane.b32.xlu0 %v5986, 112
  %v7729 = vpop.permute.xlu0 %7728
  %7730 = vrot.lane.b32.xlu0 %v5987, 112
  %v7731 = vpop.permute.xlu0 %7730
  %7732 = vrot.lane.b32.xlu0 %v5988, 112
  %v7733 = vpop.permute.xlu0 %7732
  %7734 = vrot.lane.b32.xlu0 %v5989, 112
  %v7735 = vpop.permute.xlu0 %7734
  %7736 = vrot.lane.b32.xlu0 %v5990, 112
  %v7737 = vpop.permute.xlu0 %7736
  %7738 = vrot.lane.b32.xlu0 %v5991, 112
  %v7739 = vpop.permute.xlu0 %7738
  %7740 = vrot.lane.b32.xlu0 %v5992, 112
  %v7741 = vpop.permute.xlu0 %7740
  %7742 = vrot.lane.b32.xlu0 %v5993, 112
  %v7743 = vpop.permute.xlu0 %7742
  %7744 = vrot.lane.b32.xlu0 %v5994, 112
  %v7745 = vpop.permute.xlu0 %7744
  %7746 = vrot.lane.b32.xlu0 %v5995, 112
  %v7747 = vpop.permute.xlu0 %7746
  %7748 = vrot.lane.b32.xlu0 %v5996, 112
  %v7749 = vpop.permute.xlu0 %7748
  %7750 = vrot.lane.b32.xlu0 %v5997, 112
  %v7751 = vpop.permute.xlu0 %7750
  %7752 = vrot.lane.b32.xlu0 %v5998, 112
  %v7753 = vpop.permute.xlu0 %7752
  %7754 = vrot.lane.b32.xlu0 %v5999, 112
  %v7755 = vpop.permute.xlu0 %7754
  %7756 = vrot.lane.b32.xlu0 %v6000, 112
  %v7757 = vpop.permute.xlu0 %7756
  %7758 = vrot.lane.b32.xlu0 %v6001, 112
  %v7759 = vpop.permute.xlu0 %7758
  %7760 = vrot.lane.b32.xlu0 %v6002, 112
  %v7761 = vpop.permute.xlu0 %7760
  %7762 = vrot.lane.b32.xlu0 %v6003, 112
  %v7763 = vpop.permute.xlu0 %7762
  %7764 = vrot.lane.b32.xlu0 %v6004, 112
  %v7765 = vpop.permute.xlu0 %7764
  %7766 = vrot.lane.b32.xlu0 %v6005, 112
  %v7767 = vpop.permute.xlu0 %7766
  %7768 = vrot.lane.b32.xlu0 %v6006, 112
  %v7769 = vpop.permute.xlu0 %7768
  %7770 = vrot.lane.b32.xlu0 %v6007, 112
  %v7771 = vpop.permute.xlu0 %7770
  %7772 = vrot.lane.b32.xlu0 %v6008, 112
  %v7773 = vpop.permute.xlu0 %7772
  %7774 = vrot.lane.b32.xlu0 %v6009, 112
  %v7775 = vpop.permute.xlu0 %7774
  %7776 = vrot.lane.b32.xlu0 %v6010, 112
  %v7777 = vpop.permute.xlu0 %7776
  %7778 = vrot.lane.b32.xlu0 %v6011, 112
  %v7779 = vpop.permute.xlu0 %7778
  %7780 = vrot.lane.b32.xlu0 %v6012, 112
  %v7781 = vpop.permute.xlu0 %7780
  %7782 = vrot.lane.b32.xlu0 %v6013, 112
  %v7783 = vpop.permute.xlu0 %7782
  %7784 = vrot.lane.b32.xlu0 %v6014, 112
  %v7785 = vpop.permute.xlu0 %7784
  %7786 = vrot.lane.b32.xlu0 %v6015, 112
  %v7787 = vpop.permute.xlu0 %7786
  %7788 = vrot.lane.b32.xlu0 %v6016, 112
  %v7789 = vpop.permute.xlu0 %7788
  %7790 = vrot.lane.b32.xlu0 %v6017, 112
  %v7791 = vpop.permute.xlu0 %7790
  %7792 = vrot.lane.b32.xlu0 %v6018, 112
  %v7793 = vpop.permute.xlu0 %7792
  %7794 = vrot.lane.b32.xlu0 %v6019, 112
  %v7795 = vpop.permute.xlu0 %7794
  %7796 = vrot.lane.b32.xlu0 %v6020, 112
  %v7797 = vpop.permute.xlu0 %7796
  %7798 = vrot.lane.b32.xlu0 %v6021, 112
  %v7799 = vpop.permute.xlu0 %7798
  %7800 = vrot.lane.b32.xlu0 %v6022, 112
  %v7801 = vpop.permute.xlu0 %7800
  %7802 = vrot.lane.b32.xlu0 %v6023, 112
  %v7803 = vpop.permute.xlu0 %7802
  %7804 = vrot.lane.b32.xlu0 %v6024, 112
  %v7805 = vpop.permute.xlu0 %7804
  %7806 = vrot.lane.b32.xlu0 %v6025, 112
  %v7807 = vpop.permute.xlu0 %7806
  %7808 = vrot.lane.b32.xlu0 %v6026, 112
  %v7809 = vpop.permute.xlu0 %7808
  %7810 = vrot.lane.b32.xlu0 %v6027, 112
  %v7811 = vpop.permute.xlu0 %7810
  %7812 = vrot.lane.b32.xlu0 %v6028, 112
  %v7813 = vpop.permute.xlu0 %7812
  %7814 = vrot.lane.b32.xlu0 %v6029, 112
  %v7815 = vpop.permute.xlu0 %7814
  %7816 = vrot.lane.b32.xlu0 %v6030, 112
  %v7817 = vpop.permute.xlu0 %7816
  %7818 = vrot.lane.b32.xlu0 %v6031, 112
  %v7819 = vpop.permute.xlu0 %7818
  %7820 = vrot.lane.b32.xlu0 %v6032, 112
  %v7821 = vpop.permute.xlu0 %7820
  %7822 = vrot.lane.b32.xlu0 %v6033, 112
  %v7823 = vpop.permute.xlu0 %7822
  %7824 = vrot.lane.b32.xlu0 %v6034, 112
  %v7825 = vpop.permute.xlu0 %7824
  %7826 = vrot.lane.b32.xlu0 %v6035, 112
  %v7827 = vpop.permute.xlu0 %7826
  %v7892 = vsel %vm3081, %v5523, %v6165
  %v7893 = vsel %vm3081, %v5524, %v6167
  %v7894 = vsel %vm3081, %v5525, %v6169
  %v7895 = vsel %vm3081, %v5526, %v6171
  %v7896 = vsel %vm3081, %v5527, %v6173
  %v7897 = vsel %vm3081, %v5528, %v6175
  %v7898 = vsel %vm3081, %v5529, %v6177
  %v7899 = vsel %vm3081, %v5530, %v6179
  %v7900 = vsel %vm3081, %v5531, %v6181
  %v7901 = vsel %vm3081, %v5532, %v6183
  %v7902 = vsel %vm3081, %v5533, %v6185
  %v7903 = vsel %vm3081, %v5534, %v6187
  %v7904 = vsel %vm3081, %v5535, %v6189
  %v7905 = vsel %vm3081, %v5536, %v6191
  %v7906 = vsel %vm3081, %v5537, %v6193
  %v7907 = vsel %vm3081, %v5538, %v6195
  %v7908 = vsel %vm3081, %v5539, %v6197
  %v7909 = vsel %vm3081, %v5540, %v6199
  %v7910 = vsel %vm3081, %v5541, %v6201
  %v7911 = vsel %vm3081, %v5542, %v6203
  %v7912 = vsel %vm3081, %v5543, %v6205
  %v7913 = vsel %vm3081, %v5544, %v6207
  %v7914 = vsel %vm3081, %v5545, %v6209
  %v7915 = vsel %vm3081, %v5546, %v6211
  %v7916 = vsel %vm3081, %v5547, %v6213
  %v7917 = vsel %vm3081, %v5548, %v6215
  %v7918 = vsel %vm3081, %v5549, %v6217
  %v7919 = vsel %vm3081, %v5550, %v6219
  %v7920 = vsel %vm3081, %v5551, %v6221
  %v7921 = vsel %vm3081, %v5552, %v6223
  %v7922 = vsel %vm3081, %v5553, %v6225
  %v7923 = vsel %vm3081, %v5554, %v6227
  %v7924 = vsel %vm3081, %v5555, %v6229
  %v7925 = vsel %vm3081, %v5556, %v6231
  %v7926 = vsel %vm3081, %v5557, %v6233
  %v7927 = vsel %vm3081, %v5558, %v6235
  %v7928 = vsel %vm3081, %v5559, %v6237
  %v7929 = vsel %vm3081, %v5560, %v6239
  %v7930 = vsel %vm3081, %v5561, %v6241
  %v7931 = vsel %vm3081, %v5562, %v6243
  %v7932 = vsel %vm3081, %v5563, %v6245
  %v7933 = vsel %vm3081, %v5564, %v6247
  %v7934 = vsel %vm3081, %v5565, %v6249
  %v7935 = vsel %vm3081, %v5566, %v6251
  %v7936 = vsel %vm3081, %v5567, %v6253
  %v7937 = vsel %vm3081, %v5568, %v6255
  %v7938 = vsel %vm3081, %v5569, %v6257
  %v7939 = vsel %vm3081, %v5570, %v6259
  %v7940 = vsel %vm3081, %v5571, %v6261
  %v7941 = vsel %vm3081, %v5572, %v6263
  %v7942 = vsel %vm3081, %v5573, %v6265
  %v7943 = vsel %vm3081, %v5574, %v6267
  %v7944 = vsel %vm3081, %v5575, %v6269
  %v7945 = vsel %vm3081, %v5576, %v6271
  %v7946 = vsel %vm3081, %v5577, %v6273
  %v7947 = vsel %vm3081, %v5578, %v6275
  %v7948 = vsel %vm3081, %v5579, %v6277
  %v7949 = vsel %vm3081, %v5580, %v6279
  %v7950 = vsel %vm3081, %v5581, %v6281
  %v7951 = vsel %vm3081, %v5582, %v6283
  %v7952 = vsel %vm3081, %v5583, %v6285
  %v7953 = vsel %vm3081, %v5584, %v6287
  %v7954 = vsel %vm3081, %v5585, %v6289
  %v7955 = vsel %vm3081, %v5586, %v6291
  %v7956 = vsel %vm3341, %v7892, %v6421
  %v7957 = vsel %vm3341, %v7893, %v6423
  %v7958 = vsel %vm3341, %v7894, %v6425
  %v7959 = vsel %vm3341, %v7895, %v6427
  %v7960 = vsel %vm3341, %v7896, %v6429
  %v7961 = vsel %vm3341, %v7897, %v6431
  %v7962 = vsel %vm3341, %v7898, %v6433
  %v7963 = vsel %vm3341, %v7899, %v6435
  %v7964 = vsel %vm3341, %v7900, %v6437
  %v7965 = vsel %vm3341, %v7901, %v6439
  %v7966 = vsel %vm3341, %v7902, %v6441
  %v7967 = vsel %vm3341, %v7903, %v6443
  %v7968 = vsel %vm3341, %v7904, %v6445
  %v7969 = vsel %vm3341, %v7905, %v6447
  %v7970 = vsel %vm3341, %v7906, %v6449
  %v7971 = vsel %vm3341, %v7907, %v6451
  %v7972 = vsel %vm3341, %v7908, %v6453
  %v7973 = vsel %vm3341, %v7909, %v6455
  %v7974 = vsel %vm3341, %v7910, %v6457
  %v7975 = vsel %vm3341, %v7911, %v6459
  %v7976 = vsel %vm3341, %v7912, %v6461
  %v7977 = vsel %vm3341, %v7913, %v6463
  %v7978 = vsel %vm3341, %v7914, %v6465
  %v7979 = vsel %vm3341, %v7915, %v6467
  %v7980 = vsel %vm3341, %v7916, %v6469
  %v7981 = vsel %vm3341, %v7917, %v6471
  %v7982 = vsel %vm3341, %v7918, %v6473
  %v7983 = vsel %vm3341, %v7919, %v6475
  %v7984 = vsel %vm3341, %v7920, %v6477
  %v7985 = vsel %vm3341, %v7921, %v6479
  %v7986 = vsel %vm3341, %v7922, %v6481
  %v7987 = vsel %vm3341, %v7923, %v6483
  %v7988 = vsel %vm3341, %v7924, %v6485
  %v7989 = vsel %vm3341, %v7925, %v6487
  %v7990 = vsel %vm3341, %v7926, %v6489
  %v7991 = vsel %vm3341, %v7927, %v6491
  %v7992 = vsel %vm3341, %v7928, %v6493
  %v7993 = vsel %vm3341, %v7929, %v6495
  %v7994 = vsel %vm3341, %v7930, %v6497
  %v7995 = vsel %vm3341, %v7931, %v6499
  %v7996 = vsel %vm3341, %v7932, %v6501
  %v7997 = vsel %vm3341, %v7933, %v6503
  %v7998 = vsel %vm3341, %v7934, %v6505
  %v7999 = vsel %vm3341, %v7935, %v6507
  %v8000 = vsel %vm3341, %v7936, %v6509
  %v8001 = vsel %vm3341, %v7937, %v6511
  %v8002 = vsel %vm3341, %v7938, %v6513
  %v8003 = vsel %vm3341, %v7939, %v6515
  %v8004 = vsel %vm3341, %v7940, %v6517
  %v8005 = vsel %vm3341, %v7941, %v6519
  %v8006 = vsel %vm3341, %v7942, %v6521
  %v8007 = vsel %vm3341, %v7943, %v6523
  %v8008 = vsel %vm3341, %v7944, %v6525
  %v8009 = vsel %vm3341, %v7945, %v6527
  %v8010 = vsel %vm3341, %v7946, %v6529
  %v8011 = vsel %vm3341, %v7947, %v6531
  %v8012 = vsel %vm3341, %v7948, %v6533
  %v8013 = vsel %vm3341, %v7949, %v6535
  %v8014 = vsel %vm3341, %v7950, %v6537
  %v8015 = vsel %vm3341, %v7951, %v6539
  %v8016 = vsel %vm3341, %v7952, %v6541
  %v8017 = vsel %vm3341, %v7953, %v6543
  %v8018 = vsel %vm3341, %v7954, %v6545
  %v8019 = vsel %vm3341, %v7955, %v6547
  %vm8020 = vcmask 392192
  %v8021 = vsel %vm8020, %v7956, %v6677
  %v8022 = vsel %vm8020, %v7957, %v6679
  %v8023 = vsel %vm8020, %v7958, %v6681
  %v8024 = vsel %vm8020, %v7959, %v6683
  %v8025 = vsel %vm8020, %v7960, %v6685
  %v8026 = vsel %vm8020, %v7961, %v6687
  %v8027 = vsel %vm8020, %v7962, %v6689
  %v8028 = vsel %vm8020, %v7963, %v6691
  %v8029 = vsel %vm8020, %v7964, %v6693
  %v8030 = vsel %vm8020, %v7965, %v6695
  %v8031 = vsel %vm8020, %v7966, %v6697
  %v8032 = vsel %vm8020, %v7967, %v6699
  %v8033 = vsel %vm8020, %v7968, %v6701
  %v8034 = vsel %vm8020, %v7969, %v6703
  %v8035 = vsel %vm8020, %v7970, %v6705
  %v8036 = vsel %vm8020, %v7971, %v6707
  %v8037 = vsel %vm8020, %v7972, %v6709
  %v8038 = vsel %vm8020, %v7973, %v6711
  %v8039 = vsel %vm8020, %v7974, %v6713
  %v8040 = vsel %vm8020, %v7975, %v6715
  %v8041 = vsel %vm8020, %v7976, %v6717
  %v8042 = vsel %vm8020, %v7977, %v6719
  %v8043 = vsel %vm8020, %v7978, %v6721
  %v8044 = vsel %vm8020, %v7979, %v6723
  %v8045 = vsel %vm8020, %v7980, %v6725
  %v8046 = vsel %vm8020, %v7981, %v6727
  %v8047 = vsel %vm8020, %v7982, %v6729
  %v8048 = vsel %vm8020, %v7983, %v6731
  %v8049 = vsel %vm8020, %v7984, %v6733
  %v8050 = vsel %vm8020, %v7985, %v6735
  %v8051 = vsel %vm8020, %v7986, %v6737
  %v8052 = vsel %vm8020, %v7987, %v6739
  %v8053 = vsel %vm8020, %v7988, %v6741
  %v8054 = vsel %vm8020, %v7989, %v6743
  %v8055 = vsel %vm8020, %v7990, %v6745
  %v8056 = vsel %vm8020, %v7991, %v6747
  %v8057 = vsel %vm8020, %v7992, %v6749
  %v8058 = vsel %vm8020, %v7993, %v6751
  %v8059 = vsel %vm8020, %v7994, %v6753
  %v8060 = vsel %vm8020, %v7995, %v6755
  %v8061 = vsel %vm8020, %v7996, %v6757
  %v8062 = vsel %vm8020, %v7997, %v6759
  %v8063 = vsel %vm8020, %v7998, %v6761
  %v8064 = vsel %vm8020, %v7999, %v6763
  %v8065 = vsel %vm8020, %v8000, %v6765
  %v8066 = vsel %vm8020, %v8001, %v6767
  %v8067 = vsel %vm8020, %v8002, %v6769
  %v8068 = vsel %vm8020, %v8003, %v6771
  %v8069 = vsel %vm8020, %v8004, %v6773
  %v8070 = vsel %vm8020, %v8005, %v6775
  %v8071 = vsel %vm8020, %v8006, %v6777
  %v8072 = vsel %vm8020, %v8007, %v6779
  %v8073 = vsel %vm8020, %v8008, %v6781
  %v8074 = vsel %vm8020, %v8009, %v6783
  %v8075 = vsel %vm8020, %v8010, %v6785
  %v8076 = vsel %vm8020, %v8011, %v6787
  %v8077 = vsel %vm8020, %v8012, %v6789
  %v8078 = vsel %vm8020, %v8013, %v6791
  %v8079 = vsel %vm8020, %v8014, %v6793
  %v8080 = vsel %vm8020, %v8015, %v6795
  %v8081 = vsel %vm8020, %v8016, %v6797
  %v8082 = vsel %vm8020, %v8017, %v6799
  %v8083 = vsel %vm8020, %v8018, %v6801
  %v8084 = vsel %vm8020, %v8019, %v6803
  %vm8085 = vcmask 523264
  %v8086 = vsel %vm8085, %v8021, %v6933
  %v8087 = vsel %vm8085, %v8022, %v6935
  %v8088 = vsel %vm8085, %v8023, %v6937
  %v8089 = vsel %vm8085, %v8024, %v6939
  %v8090 = vsel %vm8085, %v8025, %v6941
  %v8091 = vsel %vm8085, %v8026, %v6943
  %v8092 = vsel %vm8085, %v8027, %v6945
  %v8093 = vsel %vm8085, %v8028, %v6947
  %v8094 = vsel %vm8085, %v8029, %v6949
  %v8095 = vsel %vm8085, %v8030, %v6951
  %v8096 = vsel %vm8085, %v8031, %v6953
  %v8097 = vsel %vm8085, %v8032, %v6955
  %v8098 = vsel %vm8085, %v8033, %v6957
  %v8099 = vsel %vm8085, %v8034, %v6959
  %v8100 = vsel %vm8085, %v8035, %v6961
  %v8101 = vsel %vm8085, %v8036, %v6963
  %v8102 = vsel %vm8085, %v8037, %v6965
  %v8103 = vsel %vm8085, %v8038, %v6967
  %v8104 = vsel %vm8085, %v8039, %v6969
  %v8105 = vsel %vm8085, %v8040, %v6971
  %v8106 = vsel %vm8085, %v8041, %v6973
  %v8107 = vsel %vm8085, %v8042, %v6975
  %v8108 = vsel %vm8085, %v8043, %v6977
  %v8109 = vsel %vm8085, %v8044, %v6979
  %v8110 = vsel %vm8085, %v8045, %v6981
  %v8111 = vsel %vm8085, %v8046, %v6983
  %v8112 = vsel %vm8085, %v8047, %v6985
  %v8113 = vsel %vm8085, %v8048, %v6987
  %v8114 = vsel %vm8085, %v8049, %v6989
  %v8115 = vsel %vm8085, %v8050, %v6991
  %v8116 = vsel %vm8085, %v8051, %v6993
  %v8117 = vsel %vm8085, %v8052, %v6995
  %v8118 = vsel %vm8085, %v8053, %v6997
  %v8119 = vsel %vm8085, %v8054, %v6999
  %v8120 = vsel %vm8085, %v8055, %v7001
  %v8121 = vsel %vm8085, %v8056, %v7003
  %v8122 = vsel %vm8085, %v8057, %v7005
  %v8123 = vsel %vm8085, %v8058, %v7007
  %v8124 = vsel %vm8085, %v8059, %v7009
  %v8125 = vsel %vm8085, %v8060, %v7011
  %v8126 = vsel %vm8085, %v8061, %v7013
  %v8127 = vsel %vm8085, %v8062, %v7015
  %v8128 = vsel %vm8085, %v8063, %v7017
  %v8129 = vsel %vm8085, %v8064, %v7019
  %v8130 = vsel %vm8085, %v8065, %v7021
  %v8131 = vsel %vm8085, %v8066, %v7023
  %v8132 = vsel %vm8085, %v8067, %v7025
  %v8133 = vsel %vm8085, %v8068, %v7027
  %v8134 = vsel %vm8085, %v8069, %v7029
  %v8135 = vsel %vm8085, %v8070, %v7031
  %v8136 = vsel %vm8085, %v8071, %v7033
  %v8137 = vsel %vm8085, %v8072, %v7035
  %v8138 = vsel %vm8085, %v8073, %v7037
  %v8139 = vsel %vm8085, %v8074, %v7039
  %v8140 = vsel %vm8085, %v8075, %v7041
  %v8141 = vsel %vm8085, %v8076, %v7043
  %v8142 = vsel %vm8085, %v8077, %v7045
  %v8143 = vsel %vm8085, %v8078, %v7047
  %v8144 = vsel %vm8085, %v8079, %v7049
  %v8145 = vsel %vm8085, %v8080, %v7051
  %v8146 = vsel %vm8085, %v8081, %v7053
  %v8147 = vsel %vm8085, %v8082, %v7055
  %v8148 = vsel %vm8085, %v8083, %v7057
  %v8149 = vsel %vm8085, %v8084, %v7059
  %vm8150 = vcmask 654336
  %v8151 = vsel %vm8150, %v8086, %v7189
  %v8152 = vsel %vm8150, %v8087, %v7191
  %v8153 = vsel %vm8150, %v8088, %v7193
  %v8154 = vsel %vm8150, %v8089, %v7195
  %v8155 = vsel %vm8150, %v8090, %v7197
  %v8156 = vsel %vm8150, %v8091, %v7199
  %v8157 = vsel %vm8150, %v8092, %v7201
  %v8158 = vsel %vm8150, %v8093, %v7203
  %v8159 = vsel %vm8150, %v8094, %v7205
  %v8160 = vsel %vm8150, %v8095, %v7207
  %v8161 = vsel %vm8150, %v8096, %v7209
  %v8162 = vsel %vm8150, %v8097, %v7211
  %v8163 = vsel %vm8150, %v8098, %v7213
  %v8164 = vsel %vm8150, %v8099, %v7215
  %v8165 = vsel %vm8150, %v8100, %v7217
  %v8166 = vsel %vm8150, %v8101, %v7219
  %v8167 = vsel %vm8150, %v8102, %v7221
  %v8168 = vsel %vm8150, %v8103, %v7223
  %v8169 = vsel %vm8150, %v8104, %v7225
  %v8170 = vsel %vm8150, %v8105, %v7227
  %v8171 = vsel %vm8150, %v8106, %v7229
  %v8172 = vsel %vm8150, %v8107, %v7231
  %v8173 = vsel %vm8150, %v8108, %v7233
  %v8174 = vsel %vm8150, %v8109, %v7235
  %v8175 = vsel %vm8150, %v8110, %v7237
  %v8176 = vsel %vm8150, %v8111, %v7239
  %v8177 = vsel %vm8150, %v8112, %v7241
  %v8178 = vsel %vm8150, %v8113, %v7243
  %v8179 = vsel %vm8150, %v8114, %v7245
  %v8180 = vsel %vm8150, %v8115, %v7247
  %v8181 = vsel %vm8150, %v8116, %v7249
  %v8182 = vsel %vm8150, %v8117, %v7251
  %v8183 = vsel %vm8150, %v8118, %v7253
  %v8184 = vsel %vm8150, %v8119, %v7255
  %v8185 = vsel %vm8150, %v8120, %v7257
  %v8186 = vsel %vm8150, %v8121, %v7259
  %v8187 = vsel %vm8150, %v8122, %v7261
  %v8188 = vsel %vm8150, %v8123, %v7263
  %v8189 = vsel %vm8150, %v8124, %v7265
  %v8190 = vsel %vm8150, %v8125, %v7267
  %v8191 = vsel %vm8150, %v8126, %v7269
  %v8192 = vsel %vm8150, %v8127, %v7271
  %v8193 = vsel %vm8150, %v8128, %v7273
  %v8194 = vsel %vm8150, %v8129, %v7275
  %v8195 = vsel %vm8150, %v8130, %v7277
  %v8196 = vsel %vm8150, %v8131, %v7279
  %v8197 = vsel %vm8150, %v8132, %v7281
  %v8198 = vsel %vm8150, %v8133, %v7283
  %v8199 = vsel %vm8150, %v8134, %v7285
  %v8200 = vsel %vm8150, %v8135, %v7287
  %v8201 = vsel %vm8150, %v8136, %v7289
  %v8202 = vsel %vm8150, %v8137, %v7291
  %v8203 = vsel %vm8150, %v8138, %v7293
  %v8204 = vsel %vm8150, %v8139, %v7295
  %v8205 = vsel %vm8150, %v8140, %v7297
  %v8206 = vsel %vm8150, %v8141, %v7299
  %v8207 = vsel %vm8150, %v8142, %v7301
  %v8208 = vsel %vm8150, %v8143, %v7303
  %v8209 = vsel %vm8150, %v8144, %v7305
  %v8210 = vsel %vm8150, %v8145, %v7307
  %v8211 = vsel %vm8150, %v8146, %v7309
  %v8212 = vsel %vm8150, %v8147, %v7311
  %v8213 = vsel %vm8150, %v8148, %v7313
  %v8214 = vsel %vm8150, %v8149, %v7315
  %vm8215 = vcmask 785408
  %v8216 = vsel %vm8215, %v8151, %v7445
  %v8217 = vsel %vm8215, %v8152, %v7447
  %v8218 = vsel %vm8215, %v8153, %v7449
  %v8219 = vsel %vm8215, %v8154, %v7451
  %v8220 = vsel %vm8215, %v8155, %v7453
  %v8221 = vsel %vm8215, %v8156, %v7455
  %v8222 = vsel %vm8215, %v8157, %v7457
  %v8223 = vsel %vm8215, %v8158, %v7459
  %v8224 = vsel %vm8215, %v8159, %v7461
  %v8225 = vsel %vm8215, %v8160, %v7463
  %v8226 = vsel %vm8215, %v8161, %v7465
  %v8227 = vsel %vm8215, %v8162, %v7467
  %v8228 = vsel %vm8215, %v8163, %v7469
  %v8229 = vsel %vm8215, %v8164, %v7471
  %v8230 = vsel %vm8215, %v8165, %v7473
  %v8231 = vsel %vm8215, %v8166, %v7475
  %v8232 = vsel %vm8215, %v8167, %v7477
  %v8233 = vsel %vm8215, %v8168, %v7479
  %v8234 = vsel %vm8215, %v8169, %v7481
  %v8235 = vsel %vm8215, %v8170, %v7483
  %v8236 = vsel %vm8215, %v8171, %v7485
  %v8237 = vsel %vm8215, %v8172, %v7487
  %v8238 = vsel %vm8215, %v8173, %v7489
  %v8239 = vsel %vm8215, %v8174, %v7491
  %v8240 = vsel %vm8215, %v8175, %v7493
  %v8241 = vsel %vm8215, %v8176, %v7495
  %v8242 = vsel %vm8215, %v8177, %v7497
  %v8243 = vsel %vm8215, %v8178, %v7499
  %v8244 = vsel %vm8215, %v8179, %v7501
  %v8245 = vsel %vm8215, %v8180, %v7503
  %v8246 = vsel %vm8215, %v8181, %v7505
  %v8247 = vsel %vm8215, %v8182, %v7507
  %v8248 = vsel %vm8215, %v8183, %v7509
  %v8249 = vsel %vm8215, %v8184, %v7511
  %v8250 = vsel %vm8215, %v8185, %v7513
  %v8251 = vsel %vm8215, %v8186, %v7515
  %v8252 = vsel %vm8215, %v8187, %v7517
  %v8253 = vsel %vm8215, %v8188, %v7519
  %v8254 = vsel %vm8215, %v8189, %v7521
  %v8255 = vsel %vm8215, %v8190, %v7523
  %v8256 = vsel %vm8215, %v8191, %v7525
  %v8257 = vsel %vm8215, %v8192, %v7527
  %v8258 = vsel %vm8215, %v8193, %v7529
  %v8259 = vsel %vm8215, %v8194, %v7531
  %v8260 = vsel %vm8215, %v8195, %v7533
  %v8261 = vsel %vm8215, %v8196, %v7535
  %v8262 = vsel %vm8215, %v8197, %v7537
  %v8263 = vsel %vm8215, %v8198, %v7539
  %v8264 = vsel %vm8215, %v8199, %v7541
  %v8265 = vsel %vm8215, %v8200, %v7543
  %v8266 = vsel %vm8215, %v8201, %v7545
  %v8267 = vsel %vm8215, %v8202, %v7547
  %v8268 = vsel %vm8215, %v8203, %v7549
  %v8269 = vsel %vm8215, %v8204, %v7551
  %v8270 = vsel %vm8215, %v8205, %v7553
  %v8271 = vsel %vm8215, %v8206, %v7555
  %v8272 = vsel %vm8215, %v8207, %v7557
  %v8273 = vsel %vm8215, %v8208, %v7559
  %v8274 = vsel %vm8215, %v8209, %v7561
  %v8275 = vsel %vm8215, %v8210, %v7563
  %v8276 = vsel %vm8215, %v8211, %v7565
  %v8277 = vsel %vm8215, %v8212, %v7567
  %v8278 = vsel %vm8215, %v8213, %v7569
  %v8279 = vsel %vm8215, %v8214, %v7571
  %vm8280 = vcmask 916480
  %v8281 = vsel %vm8280, %v8216, %v7701
  %v8282 = vsel %vm8280, %v8217, %v7703
  %v8283 = vsel %vm8280, %v8218, %v7705
  %v8284 = vsel %vm8280, %v8219, %v7707
  %v8285 = vsel %vm8280, %v8220, %v7709
  %v8286 = vsel %vm8280, %v8221, %v7711
  %v8287 = vsel %vm8280, %v8222, %v7713
  %v8288 = vsel %vm8280, %v8223, %v7715
  %v8289 = vsel %vm8280, %v8224, %v7717
  %v8290 = vsel %vm8280, %v8225, %v7719
  %v8291 = vsel %vm8280, %v8226, %v7721
  %v8292 = vsel %vm8280, %v8227, %v7723
  %v8293 = vsel %vm8280, %v8228, %v7725
  %v8294 = vsel %vm8280, %v8229, %v7727
  %v8295 = vsel %vm8280, %v8230, %v7729
  %v8296 = vsel %vm8280, %v8231, %v7731
  %v8297 = vsel %vm8280, %v8232, %v7733
  %v8298 = vsel %vm8280, %v8233, %v7735
  %v8299 = vsel %vm8280, %v8234, %v7737
  %v8300 = vsel %vm8280, %v8235, %v7739
  %v8301 = vsel %vm8280, %v8236, %v7741
  %v8302 = vsel %vm8280, %v8237, %v7743
  %v8303 = vsel %vm8280, %v8238, %v7745
  %v8304 = vsel %vm8280, %v8239, %v7747
  %v8305 = vsel %vm8280, %v8240, %v7749
  %v8306 = vsel %vm8280, %v8241, %v7751
  %v8307 = vsel %vm8280, %v8242, %v7753
  %v8308 = vsel %vm8280, %v8243, %v7755
  %v8309 = vsel %vm8280, %v8244, %v7757
  %v8310 = vsel %vm8280, %v8245, %v7759
  %v8311 = vsel %vm8280, %v8246, %v7761
  %v8312 = vsel %vm8280, %v8247, %v7763
  %v8313 = vsel %vm8280, %v8248, %v7765
  %v8314 = vsel %vm8280, %v8249, %v7767
  %v8315 = vsel %vm8280, %v8250, %v7769
  %v8316 = vsel %vm8280, %v8251, %v7771
  %v8317 = vsel %vm8280, %v8252, %v7773
  %v8318 = vsel %vm8280, %v8253, %v7775
  %v8319 = vsel %vm8280, %v8254, %v7777
  %v8320 = vsel %vm8280, %v8255, %v7779
  %v8321 = vsel %vm8280, %v8256, %v7781
  %v8322 = vsel %vm8280, %v8257, %v7783
  %v8323 = vsel %vm8280, %v8258, %v7785
  %v8324 = vsel %vm8280, %v8259, %v7787
  %v8325 = vsel %vm8280, %v8260, %v7789
  %v8326 = vsel %vm8280, %v8261, %v7791
  %v8327 = vsel %vm8280, %v8262, %v7793
  %v8328 = vsel %vm8280, %v8263, %v7795
  %v8329 = vsel %vm8280, %v8264, %v7797
  %v8330 = vsel %vm8280, %v8265, %v7799
  %v8331 = vsel %vm8280, %v8266, %v7801
  %v8332 = vsel %vm8280, %v8267, %v7803
  %v8333 = vsel %vm8280, %v8268, %v7805
  %v8334 = vsel %vm8280, %v8269, %v7807
  %v8335 = vsel %vm8280, %v8270, %v7809
  %v8336 = vsel %vm8280, %v8271, %v7811
  %v8337 = vsel %vm8280, %v8272, %v7813
  %v8338 = vsel %vm8280, %v8273, %v7815
  %v8339 = vsel %vm8280, %v8274, %v7817
  %v8340 = vsel %vm8280, %v8275, %v7819
  %v8341 = vsel %vm8280, %v8276, %v7821
  %v8342 = vsel %vm8280, %v8277, %v7823
  %v8343 = vsel %vm8280, %v8278, %v7825
  %v8344 = vsel %vm8280, %v8279, %v7827
  %v8345 = vpack.c.bf16 %v8282, %v8281
  %v8346 = vpack.c.bf16 %v6037, %v6036
  %v8347 = vpack.c.bf16 %v8284, %v8283
  %v8348 = vpack.c.bf16 %v6039, %v6038
  %v8349 = vpack.c.bf16 %v8286, %v8285
  %v8350 = vpack.c.bf16 %v6041, %v6040
  %v8351 = vpack.c.bf16 %v8288, %v8287
  %v8352 = vpack.c.bf16 %v6043, %v6042
  %v8353 = vpack.c.bf16 %v8290, %v8289
  %v8354 = vpack.c.bf16 %v6045, %v6044
  %v8355 = vpack.c.bf16 %v8292, %v8291
  %v8356 = vpack.c.bf16 %v6047, %v6046
  %v8357 = vpack.c.bf16 %v8294, %v8293
  %v8358 = vpack.c.bf16 %v6049, %v6048
  %v8359 = vpack.c.bf16 %v8296, %v8295
  %v8360 = vpack.c.bf16 %v6051, %v6050
  %v8361 = vpack.c.bf16 %v8298, %v8297
  %v8362 = vpack.c.bf16 %v6053, %v6052
  %v8363 = vpack.c.bf16 %v8300, %v8299
  %v8364 = vpack.c.bf16 %v6055, %v6054
  %v8365 = vpack.c.bf16 %v8302, %v8301
  %v8366 = vpack.c.bf16 %v6057, %v6056
  %v8367 = vpack.c.bf16 %v8304, %v8303
  %v8368 = vpack.c.bf16 %v6059, %v6058
  %v8369 = vpack.c.bf16 %v8306, %v8305
  %v8370 = vpack.c.bf16 %v6061, %v6060
  %v8371 = vpack.c.bf16 %v8308, %v8307
  %v8372 = vpack.c.bf16 %v6063, %v6062
  %v8373 = vpack.c.bf16 %v8310, %v8309
  %v8374 = vpack.c.bf16 %v6065, %v6064
  %v8375 = vpack.c.bf16 %v8312, %v8311
  %v8376 = vpack.c.bf16 %v6067, %v6066
  %v8377 = vpack.c.bf16 %v8314, %v8313
  %v8378 = vpack.c.bf16 %v6069, %v6068
  %v8379 = vpack.c.bf16 %v8316, %v8315
  %v8380 = vpack.c.bf16 %v6071, %v6070
  %v8381 = vpack.c.bf16 %v8318, %v8317
  %v8382 = vpack.c.bf16 %v6073, %v6072
  %v8383 = vpack.c.bf16 %v8320, %v8319
  %v8384 = vpack.c.bf16 %v6075, %v6074
  %v8385 = vpack.c.bf16 %v8322, %v8321
  %v8386 = vpack.c.bf16 %v6077, %v6076
  %v8387 = vpack.c.bf16 %v8324, %v8323
  %v8388 = vpack.c.bf16 %v6079, %v6078
  %v8389 = vpack.c.bf16 %v8326, %v8325
  %v8390 = vpack.c.bf16 %v6081, %v6080
  %v8391 = vpack.c.bf16 %v8328, %v8327
  %v8392 = vpack.c.bf16 %v6083, %v6082
  %v8393 = vpack.c.bf16 %v8330, %v8329
  %v8394 = vpack.c.bf16 %v6085, %v6084
  %v8395 = vpack.c.bf16 %v8332, %v8331
  %v8396 = vpack.c.bf16 %v6087, %v6086
  %v8397 = vpack.c.bf16 %v8334, %v8333
  %v8398 = vpack.c.bf16 %v6089, %v6088
  %v8399 = vpack.c.bf16 %v8336, %v8335
  %v8400 = vpack.c.bf16 %v6091, %v6090
  %v8401 = vpack.c.bf16 %v8338, %v8337
  %v8402 = vpack.c.bf16 %v6093, %v6092
  %v8403 = vpack.c.bf16 %v8340, %v8339
  %v8404 = vpack.c.bf16 %v6095, %v6094
  %v8405 = vpack.c.bf16 %v8342, %v8341
  %v8406 = vpack.c.bf16 %v6097, %v6096
  %v8407 = vpack.c.bf16 %v8344, %v8343
  %v8408 = vpack.c.bf16 %v6099, %v6098
  %v8409 = vld [vmem:[%s7] sm:$0xf]
  %v8410 = vld [vmem:[%s7 + $0x4] sm:$0xf]
  %v8411 = vld [vmem:[%s7 + $0x8] sm:$0xf]
  %v8412 = vld [vmem:[%s7 + $0xc] sm:$0xf]
  %v8413 = vld [vmem:[%s7 + $0x10] sm:$0xf]
  %v8414 = vld [vmem:[%s7 + $0x14] sm:$0xf]
  %v8415 = vld [vmem:[%s7 + $0x18] sm:$0xf]
  %v8416 = vld [vmem:[%s7 + $0x1c] sm:$0xf]
  %v8417 = vld [vmem:[%s7 + $0x20] sm:$0xf]
  %v8418 = vld [vmem:[%s7 + $0x24] sm:$0xf]
  %v8419 = vld [vmem:[%s7 + $0x28] sm:$0xf]
  %v8420 = vld [vmem:[%s7 + $0x2c] sm:$0xf]
  %v8421 = vld [vmem:[%s7 + $0x30] sm:$0xf]
  %v8422 = vld [vmem:[%s7 + $0x34] sm:$0xf]
  %v8423 = vld [vmem:[%s7 + $0x38] sm:$0xf]
  %v8424 = vld [vmem:[%s7 + $0x3c] sm:$0xf]
  %v8425 = vld [vmem:[%s7 + $0x40] sm:$0xf]
  %v8426 = vld [vmem:[%s7 + $0x44] sm:$0xf]
  %v8445 = vunpack.c.l.b16 %v8409
  %v8446 = vunpack.c.l.b16 %v8410
  %v8447 = vunpack.c.l.b16 %v8411
  %v8448 = vunpack.c.l.b16 %v8412
  %v8449 = vunpack.c.l.b16 %v8413
  %v8450 = vunpack.c.l.b16 %v8414
  %v8451 = vunpack.c.l.b16 %v8415
  %v8452 = vunpack.c.l.b16 %v8416
  %v8453 = vunpack.c.l.b16 %v8417
  %v8454 = vunpack.c.l.b16 %v8418
  %v8455 = vunpack.c.l.b16 %v8419
  %v8456 = vunpack.c.l.b16 %v8420
  %v8457 = vunpack.c.l.b16 %v8421
  %v8458 = vunpack.c.l.b16 %v8422
  %v8459 = vunpack.c.l.b16 %v8423
  %v8460 = vunpack.c.l.b16 %v8424
  %v8461 = vunpack.c.l.b16 %v8425
  %v8462 = vunpack.c.l.b16 %v8426
  %v8463 = vpack.c.b16 %v8446, %v8445
  %v8464 = vpack.c.b16 %v8448, %v8447
  %v8465 = vpack.c.b16 %v8450, %v8449
  %v8466 = vpack.c.b16 %v8452, %v8451
  %v8467 = vpack.c.b16 %v8454, %v8453
  %v8468 = vpack.c.b16 %v8456, %v8455
  %v8469 = vpack.c.b16 %v8458, %v8457
  %v8470 = vpack.c.b16 %v8460, %v8459
  %v8471 = vpack.c.b16 %v8462, %v8461
  %v8482 = vsel %vm3081, %v8346, 0
  %v8485 = vsel %vm3081, %v8348, 0
  %v8488 = vsel %vm3081, %v8350, 0
  %v8491 = vsel %vm3081, %v8352, 0
  %v8494 = vsel %vm3081, %v8354, 0
  %v8497 = vsel %vm3081, %v8356, 0
  %v8500 = vsel %vm3081, %v8358, 0
  %v8503 = vsel %vm3081, %v8360, 0
  %v8506 = vsel %vm3081, %v8362, 0
  %v8509 = vsel %vm3081, %v8364, 0
  %v8512 = vsel %vm3081, %v8366, 0
  %v8515 = vsel %vm3081, %v8368, 0
  %v8518 = vsel %vm3081, %v8370, 0
  %v8521 = vsel %vm3081, %v8372, 0
  %v8524 = vsel %vm3081, %v8374, 0
  %v8527 = vsel %vm3081, %v8376, 0
  %v8530 = vsel %vm3081, %v8378, 0
  %v8533 = vsel %vm3081, %v8380, 0
  %v8536 = vsel %vm3081, %v8382, 0
  %v8539 = vsel %vm3081, %v8384, 0
  %v8542 = vsel %vm3081, %v8386, 0
  %v8545 = vsel %vm3081, %v8388, 0
  %v8548 = vsel %vm3081, %v8390, 0
  %v8551 = vsel %vm3081, %v8392, 0
  %v8554 = vsel %vm3081, %v8394, 0
  %v8557 = vsel %vm3081, %v8396, 0
  %v8560 = vsel %vm3081, %v8398, 0
  %v8563 = vsel %vm3081, %v8400, 0
  %v8566 = vsel %vm3081, %v8402, 0
  %v8569 = vsel %vm3081, %v8404, 0
  %v8572 = vsel %vm3081, %v8406, 0
  %v8575 = vsel %vm3081, %v8408, 0
  %8577 = vmatprep.subr.bf16.mxu0 0
  %8578 = vmatpush1.bf16.msra.mxu0 %v8463
  %8579 = vmatprep.subr.bf16.mxu0 0
  %8580 = vmatpush1.bf16.msra.mxu0 %v8464
  %8581 = vmatprep.subr.bf16.mxu0 0
  %8582 = vmatpush1.bf16.msra.mxu0 %v8465
  %8583 = vmatprep.subr.bf16.mxu0 0
  %8584 = vmatpush1.bf16.msra.mxu0 %v8466
  %8585 = vmatprep.subr.bf16.mxu0 0
  %8586 = vmatpush1.bf16.msra.mxu0 %v8467
  %8587 = vmatprep.subr.bf16.mxu0 0
  %8588 = vmatpush1.bf16.msra.mxu0 %v8468
  %8589 = vmatprep.subr.bf16.mxu0 0
  %8590 = vmatpush1.bf16.msra.mxu0 %v8469
  %8591 = vmatprep.subr.bf16.mxu0 0
  %8592 = vmatpush1.bf16.msra.mxu0 %v8470
  %8593 = vmatprep.subr.bf16.mxu0 0
  %8594 = vmatpush1.bf16.msra.mxu0 %v8471
  %8595 = vmatprep.subr.bf16.mxu0 0
  %8596 = vmatpush1.bf16.msra.mxu0 0
  %8597 = vmatprep.subr.bf16.mxu0 0
  %8598 = vmatpush1.bf16.msra.mxu0 0
  %8599 = vmatprep.subr.bf16.mxu0 0
  %8600 = vmatpush1.bf16.msra.mxu0 0
  %8601 = vmatprep.subr.bf16.mxu0 0
  %8602 = vmatpush1.bf16.msra.mxu0 0
  %8603 = vmatprep.subr.bf16.mxu0 0
  %8604 = vmatpush1.bf16.msra.mxu0 0
  %8605 = vmatprep.subr.bf16.mxu0 0
  %8606 = vmatpush1.bf16.msra.mxu0 0
  %8607 = vmatprep.subr.bf16.mxu0 0
  %8608 = vmatpush1.bf16.msra.mxu0 0
  %8609 = vmatprep.mubr.bf16.mxu0 %v8482
  %8610 = vmatmul.mubr.bf16.gmra.mrb[0].mxu0 %v8345
  %v8611 = vpop.f32.mrb[0].mxu0
  %v8612 = vadd.f32 0.0, %v8611
  %v8613 = vpop.f32.mrb[0].mxu0
  %v8614 = vpop.f32.mrb[0].mxu0
  %v8615 = vadd.f32 0.0, %v8614
  %v8616 = vpop.f32.mrb[0].mxu0
  %8617 = vmatprep.mubr.bf16.mxu0 %v8485
  %8618 = vmatmul.mubr.bf16.gmra.mrb[0].mxu0 %v8347
  %v8619 = vpop.f32.mrb[0].mxu0
  %v8620 = vadd.f32 0.0, %v8619
  %v8621 = vpop.f32.mrb[0].mxu0
  %v8622 = vpop.f32.mrb[0].mxu0
  %v8623 = vadd.f32 0.0, %v8622
  %v8624 = vpop.f32.mrb[0].mxu0
  %8625 = vmatprep.mubr.bf16.mxu0 %v8488
  %8626 = vmatmul.mubr.bf16.gmra.mrb[0].mxu0 %v8349
  %v8627 = vpop.f32.mrb[0].mxu0
  %v8628 = vadd.f32 0.0, %v8627
  %v8629 = vpop.f32.mrb[0].mxu0
  %v8630 = vpop.f32.mrb[0].mxu0
  %v8631 = vadd.f32 0.0, %v8630
  %v8632 = vpop.f32.mrb[0].mxu0
  %8633 = vmatprep.mubr.bf16.mxu0 %v8491
  %8634 = vmatmul.mubr.bf16.gmra.mrb[0].mxu0 %v8351
  %v8635 = vpop.f32.mrb[0].mxu0
  %v8636 = vadd.f32 0.0, %v8635
  %v8637 = vpop.f32.mrb[0].mxu0
  %v8638 = vpop.f32.mrb[0].mxu0
  %v8639 = vadd.f32 0.0, %v8638
  %v8640 = vpop.f32.mrb[0].mxu0
  %8641 = vmatprep.mubr.bf16.mxu0 %v8494
  %8642 = vmatmul.mubr.bf16.gmra.mrb[0].mxu0 %v8353
  %v8643 = vpop.f32.mrb[0].mxu0
  %v8644 = vadd.f32 0.0, %v8643
  %v8645 = vpop.f32.mrb[0].mxu0
  %v8646 = vpop.f32.mrb[0].mxu0
  %v8647 = vadd.f32 0.0, %v8646
  %v8648 = vpop.f32.mrb[0].mxu0
  %8649 = vmatprep.mubr.bf16.mxu0 %v8497
  %8650 = vmatmul.mubr.bf16.gmra.mrb[0].mxu0 %v8355
  %v8651 = vpop.f32.mrb[0].mxu0
  %v8652 = vadd.f32 0.0, %v8651
  %v8653 = vpop.f32.mrb[0].mxu0
  %v8654 = vpop.f32.mrb[0].mxu0
  %v8655 = vadd.f32 0.0, %v8654
  %v8656 = vpop.f32.mrb[0].mxu0
  %8657 = vmatprep.mubr.bf16.mxu0 %v8500
  %8658 = vmatmul.mubr.bf16.gmra.mrb[0].mxu0 %v8357
  %v8659 = vpop.f32.mrb[0].mxu0
  %v8660 = vadd.f32 0.0, %v8659
  %v8661 = vpop.f32.mrb[0].mxu0
  %v8662 = vpop.f32.mrb[0].mxu0
  %v8663 = vadd.f32 0.0, %v8662
  %v8664 = vpop.f32.mrb[0].mxu0
  %8665 = vmatprep.mubr.bf16.mxu0 %v8503
  %8666 = vmatmul.mubr.bf16.gmra.mrb[0].mxu0 %v8359
  %v8667 = vpop.f32.mrb[0].mxu0
  %v8668 = vadd.f32 0.0, %v8667
  %v8669 = vpop.f32.mrb[0].mxu0
  %v8670 = vpop.f32.mrb[0].mxu0
  %v8671 = vadd.f32 0.0, %v8670
  %v8672 = vpop.f32.mrb[0].mxu0
  %8673 = vmatprep.mubr.bf16.mxu0 %v8506
  %8674 = vmatmul.mubr.bf16.gmra.mrb[0].mxu0 %v8361
  %v8675 = vpop.f32.mrb[0].mxu0
  %v8676 = vadd.f32 0.0, %v8675
  %v8677 = vpop.f32.mrb[0].mxu0
  %v8678 = vpop.f32.mrb[0].mxu0
  %v8679 = vadd.f32 0.0, %v8678
  %v8680 = vpop.f32.mrb[0].mxu0
  %8681 = vmatprep.mubr.bf16.mxu0 %v8509
  %8682 = vmatmul.mubr.bf16.gmra.mrb[0].mxu0 %v8363
  %v8683 = vpop.f32.mrb[0].mxu0
  %v8684 = vadd.f32 0.0, %v8683
  %v8685 = vpop.f32.mrb[0].mxu0
  %v8686 = vpop.f32.mrb[0].mxu0
  %v8687 = vadd.f32 0.0, %v8686
  %v8688 = vpop.f32.mrb[0].mxu0
  %8689 = vmatprep.mubr.bf16.mxu0 %v8512
  %8690 = vmatmul.mubr.bf16.gmra.mrb[0].mxu0 %v8365
  %v8691 = vpop.f32.mrb[0].mxu0
  %v8692 = vadd.f32 0.0, %v8691
  %v8693 = vpop.f32.mrb[0].mxu0
  %v8694 = vpop.f32.mrb[0].mxu0
  %v8695 = vadd.f32 0.0, %v8694
  %v8696 = vpop.f32.mrb[0].mxu0
  %8697 = vmatprep.mubr.bf16.mxu0 %v8515
  %8698 = vmatmul.mubr.bf16.gmra.mrb[0].mxu0 %v8367
  %v8699 = vpop.f32.mrb[0].mxu0
  %v8700 = vadd.f32 0.0, %v8699
  %v8701 = vpop.f32.mrb[0].mxu0
  %v8702 = vpop.f32.mrb[0].mxu0
  %v8703 = vadd.f32 0.0, %v8702
  %v8704 = vpop.f32.mrb[0].mxu0
  %8705 = vmatprep.mubr.bf16.mxu0 %v8518
  %8706 = vmatmul.mubr.bf16.gmra.mrb[0].mxu0 %v8369
  %v8707 = vpop.f32.mrb[0].mxu0
  %v8708 = vadd.f32 0.0, %v8707
  %v8709 = vpop.f32.mrb[0].mxu0
  %v8710 = vpop.f32.mrb[0].mxu0
  %v8711 = vadd.f32 0.0, %v8710
  %v8712 = vpop.f32.mrb[0].mxu0
  %8713 = vmatprep.mubr.bf16.mxu0 %v8521
  %8714 = vmatmul.mubr.bf16.gmra.mrb[0].mxu0 %v8371
  %v8715 = vpop.f32.mrb[0].mxu0
  %v8716 = vadd.f32 0.0, %v8715
  %v8717 = vpop.f32.mrb[0].mxu0
  %v8718 = vpop.f32.mrb[0].mxu0
  %v8719 = vadd.f32 0.0, %v8718
  %v8720 = vpop.f32.mrb[0].mxu0
  %8721 = vmatprep.mubr.bf16.mxu0 %v8524
  %8722 = vmatmul.mubr.bf16.gmra.mrb[0].mxu0 %v8373
  %v8723 = vpop.f32.mrb[0].mxu0
  %v8724 = vadd.f32 0.0, %v8723
  %v8725 = vpop.f32.mrb[0].mxu0
  %v8726 = vpop.f32.mrb[0].mxu0
  %v8727 = vadd.f32 0.0, %v8726
  %v8728 = vpop.f32.mrb[0].mxu0
  %8729 = vmatprep.mubr.bf16.mxu0 %v8527
  %8730 = vmatmul.mubr.bf16.gmra.mrb[0].mxu0 %v8375
  %v8731 = vpop.f32.mrb[0].mxu0
  %v8732 = vadd.f32 0.0, %v8731
  %v8733 = vpop.f32.mrb[0].mxu0
  %v8734 = vpop.f32.mrb[0].mxu0
  %v8735 = vadd.f32 0.0, %v8734
  %v8736 = vpop.f32.mrb[0].mxu0
  %8737 = vmatprep.mubr.bf16.mxu0 %v8530
  %8738 = vmatmul.mubr.bf16.gmra.mrb[0].mxu0 %v8377
  %v8739 = vpop.f32.mrb[0].mxu0
  %v8740 = vadd.f32 0.0, %v8739
  %v8741 = vpop.f32.mrb[0].mxu0
  %v8742 = vpop.f32.mrb[0].mxu0
  %v8743 = vadd.f32 0.0, %v8742
  %v8744 = vpop.f32.mrb[0].mxu0
  %8745 = vmatprep.mubr.bf16.mxu0 %v8533
  %8746 = vmatmul.mubr.bf16.gmra.mrb[0].mxu0 %v8379
  %v8747 = vpop.f32.mrb[0].mxu0
  %v8748 = vadd.f32 0.0, %v8747
  %v8749 = vpop.f32.mrb[0].mxu0
  %v8750 = vpop.f32.mrb[0].mxu0
  %v8751 = vadd.f32 0.0, %v8750
  %v8752 = vpop.f32.mrb[0].mxu0
  %8753 = vmatprep.mubr.bf16.mxu0 %v8536
  %8754 = vmatmul.mubr.bf16.gmra.mrb[0].mxu0 %v8381
  %v8755 = vpop.f32.mrb[0].mxu0
  %v8756 = vadd.f32 0.0, %v8755
  %v8757 = vpop.f32.mrb[0].mxu0
  %v8758 = vpop.f32.mrb[0].mxu0
  %v8759 = vadd.f32 0.0, %v8758
  %v8760 = vpop.f32.mrb[0].mxu0
  %8761 = vmatprep.mubr.bf16.mxu0 %v8539
  %8762 = vmatmul.mubr.bf16.gmra.mrb[0].mxu0 %v8383
  %v8763 = vpop.f32.mrb[0].mxu0
  %v8764 = vadd.f32 0.0, %v8763
  %v8765 = vpop.f32.mrb[0].mxu0
  %v8766 = vpop.f32.mrb[0].mxu0
  %v8767 = vadd.f32 0.0, %v8766
  %v8768 = vpop.f32.mrb[0].mxu0
  %8769 = vmatprep.mubr.bf16.mxu0 %v8542
  %8770 = vmatmul.mubr.bf16.gmra.mrb[0].mxu0 %v8385
  %v8771 = vpop.f32.mrb[0].mxu0
  %v8772 = vadd.f32 0.0, %v8771
  %v8773 = vpop.f32.mrb[0].mxu0
  %v8774 = vpop.f32.mrb[0].mxu0
  %v8775 = vadd.f32 0.0, %v8774
  %v8776 = vpop.f32.mrb[0].mxu0
  %8777 = vmatprep.mubr.bf16.mxu0 %v8545
  %8778 = vmatmul.mubr.bf16.gmra.mrb[0].mxu0 %v8387
  %v8779 = vpop.f32.mrb[0].mxu0
  %v8780 = vadd.f32 0.0, %v8779
  %v8781 = vpop.f32.mrb[0].mxu0
  %v8782 = vpop.f32.mrb[0].mxu0
  %v8783 = vadd.f32 0.0, %v8782
  %v8784 = vpop.f32.mrb[0].mxu0
  %8785 = vmatprep.mubr.bf16.mxu0 %v8548
  %8786 = vmatmul.mubr.bf16.gmra.mrb[0].mxu0 %v8389
  %v8787 = vpop.f32.mrb[0].mxu0
  %v8788 = vadd.f32 0.0, %v8787
  %v8789 = vpop.f32.mrb[0].mxu0
  %v8790 = vpop.f32.mrb[0].mxu0
  %v8791 = vadd.f32 0.0, %v8790
  %v8792 = vpop.f32.mrb[0].mxu0
  %8793 = vmatprep.mubr.bf16.mxu0 %v8551
  %8794 = vmatmul.mubr.bf16.gmra.mrb[0].mxu0 %v8391
  %v8795 = vpop.f32.mrb[0].mxu0
  %v8796 = vadd.f32 0.0, %v8795
  %v8797 = vpop.f32.mrb[0].mxu0
  %v8798 = vpop.f32.mrb[0].mxu0
  %v8799 = vadd.f32 0.0, %v8798
  %v8800 = vpop.f32.mrb[0].mxu0
  %8801 = vmatprep.mubr.bf16.mxu0 %v8554
  %8802 = vmatmul.mubr.bf16.gmra.mrb[0].mxu0 %v8393
  %v8803 = vpop.f32.mrb[0].mxu0
  %v8804 = vadd.f32 0.0, %v8803
  %v8805 = vpop.f32.mrb[0].mxu0
  %v8806 = vpop.f32.mrb[0].mxu0
  %v8807 = vadd.f32 0.0, %v8806
  %v8808 = vpop.f32.mrb[0].mxu0
  %8809 = vmatprep.mubr.bf16.mxu0 %v8557
  %8810 = vmatmul.mubr.bf16.gmra.mrb[0].mxu0 %v8395
  %v8811 = vpop.f32.mrb[0].mxu0
  %v8812 = vadd.f32 0.0, %v8811
  %v8813 = vpop.f32.mrb[0].mxu0
  %v8814 = vpop.f32.mrb[0].mxu0
  %v8815 = vadd.f32 0.0, %v8814
  %v8816 = vpop.f32.mrb[0].mxu0
  %8817 = vmatprep.mubr.bf16.mxu0 %v8560
  %8818 = vmatmul.mubr.bf16.gmra.mrb[0].mxu0 %v8397
  %v8819 = vpop.f32.mrb[0].mxu0
  %v8820 = vadd.f32 0.0, %v8819
  %v8821 = vpop.f32.mrb[0].mxu0
  %v8822 = vpop.f32.mrb[0].mxu0
  %v8823 = vadd.f32 0.0, %v8822
  %v8824 = vpop.f32.mrb[0].mxu0
  %8825 = vmatprep.mubr.bf16.mxu0 %v8563
  %8826 = vmatmul.mubr.bf16.gmra.mrb[0].mxu0 %v8399
  %v8827 = vpop.f32.mrb[0].mxu0
  %v8828 = vadd.f32 0.0, %v8827
  %v8829 = vpop.f32.mrb[0].mxu0
  %v8830 = vpop.f32.mrb[0].mxu0
  %v8831 = vadd.f32 0.0, %v8830
  %v8832 = vpop.f32.mrb[0].mxu0
  %8833 = vmatprep.mubr.bf16.mxu0 %v8566
  %8834 = vmatmul.mubr.bf16.gmra.mrb[0].mxu0 %v8401
  %v8835 = vpop.f32.mrb[0].mxu0
  %v8836 = vadd.f32 0.0, %v8835
  %v8837 = vpop.f32.mrb[0].mxu0
  %v8838 = vpop.f32.mrb[0].mxu0
  %v8839 = vadd.f32 0.0, %v8838
  %v8840 = vpop.f32.mrb[0].mxu0
  %8841 = vmatprep.mubr.bf16.mxu0 %v8569
  %8842 = vmatmul.mubr.bf16.gmra.mrb[0].mxu0 %v8403
  %v8843 = vpop.f32.mrb[0].mxu0
  %v8844 = vadd.f32 0.0, %v8843
  %v8845 = vpop.f32.mrb[0].mxu0
  %v8846 = vpop.f32.mrb[0].mxu0
  %v8847 = vadd.f32 0.0, %v8846
  %v8848 = vpop.f32.mrb[0].mxu0
  %8849 = vmatprep.mubr.bf16.mxu0 %v8572
  %8850 = vmatmul.mubr.bf16.gmra.mrb[0].mxu0 %v8405
  %v8851 = vpop.f32.mrb[0].mxu0
  %v8852 = vadd.f32 0.0, %v8851
  %v8853 = vpop.f32.mrb[0].mxu0
  %v8854 = vpop.f32.mrb[0].mxu0
  %v8855 = vadd.f32 0.0, %v8854
  %v8856 = vpop.f32.mrb[0].mxu0
  %8857 = vmatprep.mubr.bf16.mxu0 %v8575
  %8858 = vmatmul.mubr.bf16.gmra.mrb[0].mxu0 %v8407
  %v8859 = vpop.f32.mrb[0].mxu0
  %v8860 = vadd.f32 0.0, %v8859
  %v8861 = vpop.f32.mrb[0].mxu0
  %v8862 = vpop.f32.mrb[0].mxu0
  %v8863 = vadd.f32 0.0, %v8862
  %v8864 = vpop.f32.mrb[0].mxu0
  %8865 = vdwg.mxu0
  %v8866 = vld [vmem:[%s8] sm:$0x1]
  %v8867 = vld [vmem:[%s9] sm:$0x1]
  %v8868 = vsel %vm3341, %v8612, 0.0
  %v8869 = vsel %vm3341, %v8615, 0.0
  %v8870 = vadd.f32 %v8868, %v8869
  %v8871 = vsel %vm3341, %v8620, 0.0
  %v8872 = vadd.f32 %v8870, %v8871
  %v8873 = vsel %vm3341, %v8623, 0.0
  %v8874 = vadd.f32 %v8872, %v8873
  %v8875 = vsel %vm3341, %v8628, 0.0
  %v8876 = vadd.f32 %v8874, %v8875
  %v8877 = vsel %vm3341, %v8631, 0.0
  %v8878 = vadd.f32 %v8876, %v8877
  %v8879 = vsel %vm3341, %v8636, 0.0
  %v8880 = vadd.f32 %v8878, %v8879
  %v8881 = vsel %vm3341, %v8639, 0.0
  %v8882 = vadd.f32 %v8880, %v8881
  %v8883 = vsel %vm3341, %v8644, 0.0
  %v8884 = vadd.f32 %v8882, %v8883
  %v8885 = vsel %vm3341, %v8647, 0.0
  %v8886 = vadd.f32 %v8884, %v8885
  %v8887 = vsel %vm3341, %v8652, 0.0
  %v8888 = vadd.f32 %v8886, %v8887
  %v8889 = vsel %vm3341, %v8655, 0.0
  %v8890 = vadd.f32 %v8888, %v8889
  %v8891 = vsel %vm3341, %v8660, 0.0
  %v8892 = vadd.f32 %v8890, %v8891
  %v8893 = vsel %vm3341, %v8663, 0.0
  %v8894 = vadd.f32 %v8892, %v8893
  %v8895 = vsel %vm3341, %v8668, 0.0
  %v8896 = vadd.f32 %v8894, %v8895
  %v8897 = vsel %vm3341, %v8671, 0.0
  %v8898 = vadd.f32 %v8896, %v8897
  %v8899 = vsel %vm3341, %v8676, 0.0
  %v8900 = vadd.f32 %v8898, %v8899
  %v8901 = vsel %vm3341, %v8679, 0.0
  %v8902 = vadd.f32 %v8900, %v8901
  %v8903 = vsel %vm3341, %v8684, 0.0
  %v8904 = vadd.f32 %v8902, %v8903
  %v8905 = vsel %vm3341, %v8687, 0.0
  %v8906 = vadd.f32 %v8904, %v8905
  %v8907 = vsel %vm3341, %v8692, 0.0
  %v8908 = vadd.f32 %v8906, %v8907
  %v8909 = vsel %vm3341, %v8695, 0.0
  %v8910 = vadd.f32 %v8908, %v8909
  %v8911 = vsel %vm3341, %v8700, 0.0
  %v8912 = vadd.f32 %v8910, %v8911
  %v8913 = vsel %vm3341, %v8703, 0.0
  %v8914 = vadd.f32 %v8912, %v8913
  %v8915 = vsel %vm3341, %v8708, 0.0
  %v8916 = vadd.f32 %v8914, %v8915
  %v8917 = vsel %vm3341, %v8711, 0.0
  %v8918 = vadd.f32 %v8916, %v8917
  %v8919 = vsel %vm3341, %v8716, 0.0
  %v8920 = vadd.f32 %v8918, %v8919
  %v8921 = vsel %vm3341, %v8719, 0.0
  %v8922 = vadd.f32 %v8920, %v8921
  %v8923 = vsel %vm3341, %v8724, 0.0
  %v8924 = vadd.f32 %v8922, %v8923
  %v8925 = vsel %vm3341, %v8727, 0.0
  %v8926 = vadd.f32 %v8924, %v8925
  %v8927 = vsel %vm3341, %v8732, 0.0
  %v8928 = vadd.f32 %v8926, %v8927
  %v8929 = vsel %vm3341, %v8735, 0.0
  %v8930 = vadd.f32 %v8928, %v8929
  %v8931 = vsel %vm3341, %v8740, 0.0
  %v8932 = vadd.f32 %v8930, %v8931
  %v8933 = vsel %vm3341, %v8743, 0.0
  %v8934 = vadd.f32 %v8932, %v8933
  %v8935 = vsel %vm3341, %v8748, 0.0
  %v8936 = vadd.f32 %v8934, %v8935
  %v8937 = vsel %vm3341, %v8751, 0.0
  %v8938 = vadd.f32 %v8936, %v8937
  %v8939 = vsel %vm3341, %v8756, 0.0
  %v8940 = vadd.f32 %v8938, %v8939
  %v8941 = vsel %vm3341, %v8759, 0.0
  %v8942 = vadd.f32 %v8940, %v8941
  %v8943 = vsel %vm3341, %v8764, 0.0
  %v8944 = vadd.f32 %v8942, %v8943
  %v8945 = vsel %vm3341, %v8767, 0.0
  %v8946 = vadd.f32 %v8944, %v8945
  %v8947 = vsel %vm3341, %v8772, 0.0
  %v8948 = vadd.f32 %v8946, %v8947
  %v8949 = vsel %vm3341, %v8775, 0.0
  %v8950 = vadd.f32 %v8948, %v8949
  %v8951 = vsel %vm3341, %v8780, 0.0
  %v8952 = vadd.f32 %v8950, %v8951
  %v8953 = vsel %vm3341, %v8783, 0.0
  %v8954 = vadd.f32 %v8952, %v8953
  %v8955 = vsel %vm3341, %v8788, 0.0
  %v8956 = vadd.f32 %v8954, %v8955
  %v8957 = vsel %vm3341, %v8791, 0.0
  %v8958 = vadd.f32 %v8956, %v8957
  %v8959 = vsel %vm3341, %v8796, 0.0
  %v8960 = vadd.f32 %v8958, %v8959
  %v8961 = vsel %vm3341, %v8799, 0.0
  %v8962 = vadd.f32 %v8960, %v8961
  %v8963 = vsel %vm3341, %v8804, 0.0
  %v8964 = vadd.f32 %v8962, %v8963
  %v8965 = vsel %vm3341, %v8807, 0.0
  %v8966 = vadd.f32 %v8964, %v8965
  %v8967 = vsel %vm3341, %v8812, 0.0
  %v8968 = vadd.f32 %v8966, %v8967
  %v8969 = vsel %vm3341, %v8815, 0.0
  %v8970 = vadd.f32 %v8968, %v8969
  %v8971 = vsel %vm3341, %v8820, 0.0
  %v8972 = vadd.f32 %v8970, %v8971
  %v8973 = vsel %vm3341, %v8823, 0.0
  %v8974 = vadd.f32 %v8972, %v8973
  %v8975 = vsel %vm3341, %v8828, 0.0
  %v8976 = vadd.f32 %v8974, %v8975
  %v8977 = vsel %vm3341, %v8831, 0.0
  %v8978 = vadd.f32 %v8976, %v8977
  %v8979 = vsel %vm3341, %v8836, 0.0
  %v8980 = vadd.f32 %v8978, %v8979
  %v8981 = vsel %vm3341, %v8839, 0.0
  %v8982 = vadd.f32 %v8980, %v8981
  %v8983 = vsel %vm3341, %v8844, 0.0
  %v8984 = vadd.f32 %v8982, %v8983
  %v8985 = vsel %vm3341, %v8847, 0.0
  %v8986 = vadd.f32 %v8984, %v8985
  %v8987 = vsel %vm3341, %v8852, 0.0
  %v8988 = vadd.f32 %v8986, %v8987
  %v8989 = vsel %vm3341, %v8855, 0.0
  %v8990 = vadd.f32 %v8988, %v8989
  %v8991 = vsel %vm3341, %v8860, 0.0
  %v8992 = vadd.f32 %v8990, %v8991
  %v8993 = vsel %vm3341, %v8863, 0.0
  %v8994 = vadd.f32 %v8992, %v8993
  %v8995 = vrot.slane %v8994, 4
  %v8996 = vadd.f32 %v8994, %v8995
  %v8997 = vrot.slane %v8996, 2
  %v8998 = vadd.f32 %v8996, %v8997
  %v8999 = vrot.slane %v8998, 1
  %v9000 = vadd.f32 %v8998, %v8999
  %v9001 = vmul.f32 %v8612, %v8612
  %v9002 = vmul.f32 %v8615, %v8615
  %v9003 = vmul.f32 %v8620, %v8620
  %v9004 = vmul.f32 %v8623, %v8623
  %v9005 = vmul.f32 %v8628, %v8628
  %v9006 = vmul.f32 %v8631, %v8631
  %v9007 = vmul.f32 %v8636, %v8636
  %v9008 = vmul.f32 %v8639, %v8639
  %v9009 = vmul.f32 %v8644, %v8644
  %v9010 = vmul.f32 %v8647, %v8647
  %v9011 = vmul.f32 %v8652, %v8652
  %v9012 = vmul.f32 %v8655, %v8655
  %v9013 = vmul.f32 %v8660, %v8660
  %v9014 = vmul.f32 %v8663, %v8663
  %v9015 = vmul.f32 %v8668, %v8668
  %v9016 = vmul.f32 %v8671, %v8671
  %v9017 = vmul.f32 %v8676, %v8676
  %v9018 = vmul.f32 %v8679, %v8679
  %v9019 = vmul.f32 %v8684, %v8684
  %v9020 = vmul.f32 %v8687, %v8687
  %v9021 = vmul.f32 %v8692, %v8692
  %v9022 = vmul.f32 %v8695, %v8695
  %v9023 = vmul.f32 %v8700, %v8700
  %v9024 = vmul.f32 %v8703, %v8703
  %v9025 = vmul.f32 %v8708, %v8708
  %v9026 = vmul.f32 %v8711, %v8711
  %v9027 = vmul.f32 %v8716, %v8716
  %v9028 = vmul.f32 %v8719, %v8719
  %v9029 = vmul.f32 %v8724, %v8724
  %v9030 = vmul.f32 %v8727, %v8727
  %v9031 = vmul.f32 %v8732, %v8732
  %v9032 = vmul.f32 %v8735, %v8735
  %v9033 = vmul.f32 %v8740, %v8740
  %v9034 = vmul.f32 %v8743, %v8743
  %v9035 = vmul.f32 %v8748, %v8748
  %v9036 = vmul.f32 %v8751, %v8751
  %v9037 = vmul.f32 %v8756, %v8756
  %v9038 = vmul.f32 %v8759, %v8759
  %v9039 = vmul.f32 %v8764, %v8764
  %v9040 = vmul.f32 %v8767, %v8767
  %v9041 = vmul.f32 %v8772, %v8772
  %v9042 = vmul.f32 %v8775, %v8775
  %v9043 = vmul.f32 %v8780, %v8780
  %v9044 = vmul.f32 %v8783, %v8783
  %v9045 = vmul.f32 %v8788, %v8788
  %v9046 = vmul.f32 %v8791, %v8791
  %v9047 = vmul.f32 %v8796, %v8796
  %v9048 = vmul.f32 %v8799, %v8799
  %v9049 = vmul.f32 %v8804, %v8804
  %v9050 = vmul.f32 %v8807, %v8807
  %v9051 = vmul.f32 %v8812, %v8812
  %v9052 = vmul.f32 %v8815, %v8815
  %v9053 = vmul.f32 %v8820, %v8820
  %v9054 = vmul.f32 %v8823, %v8823
  %v9055 = vmul.f32 %v8828, %v8828
  %v9056 = vmul.f32 %v8831, %v8831
  %v9057 = vmul.f32 %v8836, %v8836
  %v9058 = vmul.f32 %v8839, %v8839
  %v9059 = vmul.f32 %v8844, %v8844
  %v9060 = vmul.f32 %v8847, %v8847
  %v9061 = vmul.f32 %v8852, %v8852
  %v9062 = vmul.f32 %v8855, %v8855
  %v9063 = vmul.f32 %v8860, %v8860
  %v9064 = vmul.f32 %v8863, %v8863
  %v9065 = vsel %vm3341, %v9001, 0.0
  %v9066 = vsel %vm3341, %v9002, 0.0
  %v9067 = vadd.f32 %v9065, %v9066
  %v9068 = vsel %vm3341, %v9003, 0.0
  %v9069 = vadd.f32 %v9067, %v9068
  %v9070 = vsel %vm3341, %v9004, 0.0
  %v9071 = vadd.f32 %v9069, %v9070
  %v9072 = vsel %vm3341, %v9005, 0.0
  %v9073 = vadd.f32 %v9071, %v9072
  %v9074 = vsel %vm3341, %v9006, 0.0
  %v9075 = vadd.f32 %v9073, %v9074
  %v9076 = vsel %vm3341, %v9007, 0.0
  %v9077 = vadd.f32 %v9075, %v9076
  %v9078 = vsel %vm3341, %v9008, 0.0
  %v9079 = vadd.f32 %v9077, %v9078
  %v9080 = vsel %vm3341, %v9009, 0.0
  %v9081 = vadd.f32 %v9079, %v9080
  %v9082 = vsel %vm3341, %v9010, 0.0
  %v9083 = vadd.f32 %v9081, %v9082
  %v9084 = vsel %vm3341, %v9011, 0.0
  %v9085 = vadd.f32 %v9083, %v9084
  %v9086 = vsel %vm3341, %v9012, 0.0
  %v9087 = vadd.f32 %v9085, %v9086
  %v9088 = vsel %vm3341, %v9013, 0.0
  %v9089 = vadd.f32 %v9087, %v9088
  %v9090 = vsel %vm3341, %v9014, 0.0
  %v9091 = vadd.f32 %v9089, %v9090
  %v9092 = vsel %vm3341, %v9015, 0.0
  %v9093 = vadd.f32 %v9091, %v9092
  %v9094 = vsel %vm3341, %v9016, 0.0
  %v9095 = vadd.f32 %v9093, %v9094
  %v9096 = vsel %vm3341, %v9017, 0.0
  %v9097 = vadd.f32 %v9095, %v9096
  %v9098 = vsel %vm3341, %v9018, 0.0
  %v9099 = vadd.f32 %v9097, %v9098
  %v9100 = vsel %vm3341, %v9019, 0.0
  %v9101 = vadd.f32 %v9099, %v9100
  %v9102 = vsel %vm3341, %v9020, 0.0
  %v9103 = vadd.f32 %v9101, %v9102
  %v9104 = vsel %vm3341, %v9021, 0.0
  %v9105 = vadd.f32 %v9103, %v9104
  %v9106 = vsel %vm3341, %v9022, 0.0
  %v9107 = vadd.f32 %v9105, %v9106
  %v9108 = vsel %vm3341, %v9023, 0.0
  %v9109 = vadd.f32 %v9107, %v9108
  %v9110 = vsel %vm3341, %v9024, 0.0
  %v9111 = vadd.f32 %v9109, %v9110
  %v9112 = vsel %vm3341, %v9025, 0.0
  %v9113 = vadd.f32 %v9111, %v9112
  %v9114 = vsel %vm3341, %v9026, 0.0
  %v9115 = vadd.f32 %v9113, %v9114
  %v9116 = vsel %vm3341, %v9027, 0.0
  %v9117 = vadd.f32 %v9115, %v9116
  %v9118 = vsel %vm3341, %v9028, 0.0
  %v9119 = vadd.f32 %v9117, %v9118
  %v9120 = vsel %vm3341, %v9029, 0.0
  %v9121 = vadd.f32 %v9119, %v9120
  %v9122 = vsel %vm3341, %v9030, 0.0
  %v9123 = vadd.f32 %v9121, %v9122
  %v9124 = vsel %vm3341, %v9031, 0.0
  %v9125 = vadd.f32 %v9123, %v9124
  %v9126 = vsel %vm3341, %v9032, 0.0
  %v9127 = vadd.f32 %v9125, %v9126
  %v9128 = vsel %vm3341, %v9033, 0.0
  %v9129 = vadd.f32 %v9127, %v9128
  %v9130 = vsel %vm3341, %v9034, 0.0
  %v9131 = vadd.f32 %v9129, %v9130
  %v9132 = vsel %vm3341, %v9035, 0.0
  %v9133 = vadd.f32 %v9131, %v9132
  %v9134 = vsel %vm3341, %v9036, 0.0
  %v9135 = vadd.f32 %v9133, %v9134
  %v9136 = vsel %vm3341, %v9037, 0.0
  %v9137 = vadd.f32 %v9135, %v9136
  %v9138 = vsel %vm3341, %v9038, 0.0
  %v9139 = vadd.f32 %v9137, %v9138
  %v9140 = vsel %vm3341, %v9039, 0.0
  %v9141 = vadd.f32 %v9139, %v9140
  %v9142 = vsel %vm3341, %v9040, 0.0
  %v9143 = vadd.f32 %v9141, %v9142
  %v9144 = vsel %vm3341, %v9041, 0.0
  %v9145 = vadd.f32 %v9143, %v9144
  %v9146 = vsel %vm3341, %v9042, 0.0
  %v9147 = vadd.f32 %v9145, %v9146
  %v9148 = vsel %vm3341, %v9043, 0.0
  %v9149 = vadd.f32 %v9147, %v9148
  %v9150 = vsel %vm3341, %v9044, 0.0
  %v9151 = vadd.f32 %v9149, %v9150
  %v9152 = vsel %vm3341, %v9045, 0.0
  %v9153 = vadd.f32 %v9151, %v9152
  %v9154 = vsel %vm3341, %v9046, 0.0
  %v9155 = vadd.f32 %v9153, %v9154
  %v9156 = vsel %vm3341, %v9047, 0.0
  %v9157 = vadd.f32 %v9155, %v9156
  %v9158 = vsel %vm3341, %v9048, 0.0
  %v9159 = vadd.f32 %v9157, %v9158
  %v9160 = vsel %vm3341, %v9049, 0.0
  %v9161 = vadd.f32 %v9159, %v9160
  %v9162 = vsel %vm3341, %v9050, 0.0
  %v9163 = vadd.f32 %v9161, %v9162
  %v9164 = vsel %vm3341, %v9051, 0.0
  %v9165 = vadd.f32 %v9163, %v9164
  %v9166 = vsel %vm3341, %v9052, 0.0
  %v9167 = vadd.f32 %v9165, %v9166
  %v9168 = vsel %vm3341, %v9053, 0.0
  %v9169 = vadd.f32 %v9167, %v9168
  %v9170 = vsel %vm3341, %v9054, 0.0
  %v9171 = vadd.f32 %v9169, %v9170
  %v9172 = vsel %vm3341, %v9055, 0.0
  %v9173 = vadd.f32 %v9171, %v9172
  %v9174 = vsel %vm3341, %v9056, 0.0
  %v9175 = vadd.f32 %v9173, %v9174
  %v9176 = vsel %vm3341, %v9057, 0.0
  %v9177 = vadd.f32 %v9175, %v9176
  %v9178 = vsel %vm3341, %v9058, 0.0
  %v9179 = vadd.f32 %v9177, %v9178
  %v9180 = vsel %vm3341, %v9059, 0.0
  %v9181 = vadd.f32 %v9179, %v9180
  %v9182 = vsel %vm3341, %v9060, 0.0
  %v9183 = vadd.f32 %v9181, %v9182
  %v9184 = vsel %vm3341, %v9061, 0.0
  %v9185 = vadd.f32 %v9183, %v9184
  %v9186 = vsel %vm3341, %v9062, 0.0
  %v9187 = vadd.f32 %v9185, %v9186
  %v9188 = vsel %vm3341, %v9063, 0.0
  %v9189 = vadd.f32 %v9187, %v9188
  %v9190 = vsel %vm3341, %v9064, 0.0
  %v9191 = vadd.f32 %v9189, %v9190
  %v9192 = vrot.slane %v9191, 4
  %v9193 = vadd.f32 %v9191, %v9192
  %v9194 = vrot.slane %v9193, 2
  %v9195 = vadd.f32 %v9193, %v9194
  %v9196 = vrot.slane %v9195, 1
  %v9197 = vadd.f32 %v9195, %v9196
  %v9198 = vmul.f32 %v9000, 0.001953125
  %v9199 = vmul.f32 %v9197, 0.001953125
  %v9200 = vmul.f32 %v9198, %v9198
  %v9201 = vsub.f32 %v9199, %v9200
  %v9202 = vadd.f32 %v9201, 1e-05
  %v9203 = vrsqrt.pop %v9202
  %v9204 = vmul.f32 %v8866, %v9203
  %v9205 = vmul.f32 %v9198, %v9204
  %v9206 = vsub.f32 %v8867, %v9205
  %v9208 = vlaneseq
  %v9209 = vshrl.u32 %v9208, 7
  %v9210 = vsub.s32 0, %v9209
  %v9211 = vrot.slane %v9204, %v9210
  %v9213 = vmul.f32 %v8612, %v9211
  %v9214 = vmul.f32 %v8615, %v9211
  %v9215 = vmul.f32 %v8620, %v9211
  %v9216 = vmul.f32 %v8623, %v9211
  %v9217 = vmul.f32 %v8628, %v9211
  %v9218 = vmul.f32 %v8631, %v9211
  %v9219 = vmul.f32 %v8636, %v9211
  %v9220 = vmul.f32 %v8639, %v9211
  %v9221 = vmul.f32 %v8644, %v9211
  %v9222 = vmul.f32 %v8647, %v9211
  %v9223 = vmul.f32 %v8652, %v9211
  %v9224 = vmul.f32 %v8655, %v9211
  %v9225 = vmul.f32 %v8660, %v9211
  %v9226 = vmul.f32 %v8663, %v9211
  %v9227 = vmul.f32 %v8668, %v9211
  %v9228 = vmul.f32 %v8671, %v9211
  %v9229 = vmul.f32 %v8676, %v9211
  %v9230 = vmul.f32 %v8679, %v9211
  %v9231 = vmul.f32 %v8684, %v9211
  %v9232 = vmul.f32 %v8687, %v9211
  %v9233 = vmul.f32 %v8692, %v9211
  %v9234 = vmul.f32 %v8695, %v9211
  %v9235 = vmul.f32 %v8700, %v9211
  %v9236 = vmul.f32 %v8703, %v9211
  %v9237 = vmul.f32 %v8708, %v9211
  %v9238 = vmul.f32 %v8711, %v9211
  %v9239 = vmul.f32 %v8716, %v9211
  %v9240 = vmul.f32 %v8719, %v9211
  %v9241 = vmul.f32 %v8724, %v9211
  %v9242 = vmul.f32 %v8727, %v9211
  %v9243 = vmul.f32 %v8732, %v9211
  %v9244 = vmul.f32 %v8735, %v9211
  %v9245 = vmul.f32 %v8740, %v9211
  %v9246 = vmul.f32 %v8743, %v9211
  %v9247 = vmul.f32 %v8748, %v9211
  %v9248 = vmul.f32 %v8751, %v9211
  %v9249 = vmul.f32 %v8756, %v9211
  %v9250 = vmul.f32 %v8759, %v9211
  %v9251 = vmul.f32 %v8764, %v9211
  %v9252 = vmul.f32 %v8767, %v9211
  %v9253 = vmul.f32 %v8772, %v9211
  %v9254 = vmul.f32 %v8775, %v9211
  %v9255 = vmul.f32 %v8780, %v9211
  %v9256 = vmul.f32 %v8783, %v9211
  %v9257 = vmul.f32 %v8788, %v9211
  %v9258 = vmul.f32 %v8791, %v9211
  %v9259 = vmul.f32 %v8796, %v9211
  %v9260 = vmul.f32 %v8799, %v9211
  %v9261 = vmul.f32 %v8804, %v9211
  %v9262 = vmul.f32 %v8807, %v9211
  %v9263 = vmul.f32 %v8812, %v9211
  %v9264 = vmul.f32 %v8815, %v9211
  %v9265 = vmul.f32 %v8820, %v9211
  %v9266 = vmul.f32 %v8823, %v9211
  %v9267 = vmul.f32 %v8828, %v9211
  %v9268 = vmul.f32 %v8831, %v9211
  %v9269 = vmul.f32 %v8836, %v9211
  %v9270 = vmul.f32 %v8839, %v9211
  %v9271 = vmul.f32 %v8844, %v9211
  %v9272 = vmul.f32 %v8847, %v9211
  %v9273 = vmul.f32 %v8852, %v9211
  %v9274 = vmul.f32 %v8855, %v9211
  %v9275 = vmul.f32 %v8860, %v9211
  %v9276 = vmul.f32 %v8863, %v9211
  %v9278 = vlaneseq
  %v9279 = vshrl.u32 %v9278, 7
  %v9280 = vsub.s32 0, %v9279
  %v9281 = vrot.slane %v9206, %v9280
  %v9283 = vadd.f32 %v9213, %v9281
  %v9284 = vadd.f32 %v9214, %v9281
  %v9285 = vadd.f32 %v9215, %v9281
  %v9286 = vadd.f32 %v9216, %v9281
  %v9287 = vadd.f32 %v9217, %v9281
  %v9288 = vadd.f32 %v9218, %v9281
  %v9289 = vadd.f32 %v9219, %v9281
  %v9290 = vadd.f32 %v9220, %v9281
  %v9291 = vadd.f32 %v9221, %v9281
  %v9292 = vadd.f32 %v9222, %v9281
  %v9293 = vadd.f32 %v9223, %v9281
  %v9294 = vadd.f32 %v9224, %v9281
  %v9295 = vadd.f32 %v9225, %v9281
  %v9296 = vadd.f32 %v9226, %v9281
  %v9297 = vadd.f32 %v9227, %v9281
  %v9298 = vadd.f32 %v9228, %v9281
  %v9299 = vadd.f32 %v9229, %v9281
  %v9300 = vadd.f32 %v9230, %v9281
  %v9301 = vadd.f32 %v9231, %v9281
  %v9302 = vadd.f32 %v9232, %v9281
  %v9303 = vadd.f32 %v9233, %v9281
  %v9304 = vadd.f32 %v9234, %v9281
  %v9305 = vadd.f32 %v9235, %v9281
  %v9306 = vadd.f32 %v9236, %v9281
  %v9307 = vadd.f32 %v9237, %v9281
  %v9308 = vadd.f32 %v9238, %v9281
  %v9309 = vadd.f32 %v9239, %v9281
  %v9310 = vadd.f32 %v9240, %v9281
  %v9311 = vadd.f32 %v9241, %v9281
  %v9312 = vadd.f32 %v9242, %v9281
  %v9313 = vadd.f32 %v9243, %v9281
  %v9314 = vadd.f32 %v9244, %v9281
  %v9315 = vadd.f32 %v9245, %v9281
  %v9316 = vadd.f32 %v9246, %v9281
  %v9317 = vadd.f32 %v9247, %v9281
  %v9318 = vadd.f32 %v9248, %v9281
  %v9319 = vadd.f32 %v9249, %v9281
  %v9320 = vadd.f32 %v9250, %v9281
  %v9321 = vadd.f32 %v9251, %v9281
  %v9322 = vadd.f32 %v9252, %v9281
  %v9323 = vadd.f32 %v9253, %v9281
  %v9324 = vadd.f32 %v9254, %v9281
  %v9325 = vadd.f32 %v9255, %v9281
  %v9326 = vadd.f32 %v9256, %v9281
  %v9327 = vadd.f32 %v9257, %v9281
  %v9328 = vadd.f32 %v9258, %v9281
  %v9329 = vadd.f32 %v9259, %v9281
  %v9330 = vadd.f32 %v9260, %v9281
  %v9331 = vadd.f32 %v9261, %v9281
  %v9332 = vadd.f32 %v9262, %v9281
  %v9333 = vadd.f32 %v9263, %v9281
  %v9334 = vadd.f32 %v9264, %v9281
  %v9335 = vadd.f32 %v9265, %v9281
  %v9336 = vadd.f32 %v9266, %v9281
  %v9337 = vadd.f32 %v9267, %v9281
  %v9338 = vadd.f32 %v9268, %v9281
  %v9339 = vadd.f32 %v9269, %v9281
  %v9340 = vadd.f32 %v9270, %v9281
  %v9341 = vadd.f32 %v9271, %v9281
  %v9342 = vadd.f32 %v9272, %v9281
  %v9343 = vadd.f32 %v9273, %v9281
  %v9344 = vadd.f32 %v9274, %v9281
  %v9345 = vadd.f32 %v9275, %v9281
  %v9346 = vadd.f32 %v9276, %v9281
  %v9347 = vmax.f32 %v9283, 0.0
  %v9348 = vmax.f32 %v9284, 0.0
  %v9349 = vmax.f32 %v9285, 0.0
  %v9350 = vmax.f32 %v9286, 0.0
  %v9351 = vmax.f32 %v9287, 0.0
  %v9352 = vmax.f32 %v9288, 0.0
  %v9353 = vmax.f32 %v9289, 0.0
  %v9354 = vmax.f32 %v9290, 0.0
  %v9355 = vmax.f32 %v9291, 0.0
  %v9356 = vmax.f32 %v9292, 0.0
  %v9357 = vmax.f32 %v9293, 0.0
  %v9358 = vmax.f32 %v9294, 0.0
  %v9359 = vmax.f32 %v9295, 0.0
  %v9360 = vmax.f32 %v9296, 0.0
  %v9361 = vmax.f32 %v9297, 0.0
  %v9362 = vmax.f32 %v9298, 0.0
  %v9363 = vmax.f32 %v9299, 0.0
  %v9364 = vmax.f32 %v9300, 0.0
  %v9365 = vmax.f32 %v9301, 0.0
  %v9366 = vmax.f32 %v9302, 0.0
  %v9367 = vmax.f32 %v9303, 0.0
  %v9368 = vmax.f32 %v9304, 0.0
  %v9369 = vmax.f32 %v9305, 0.0
  %v9370 = vmax.f32 %v9306, 0.0
  %v9371 = vmax.f32 %v9307, 0.0
  %v9372 = vmax.f32 %v9308, 0.0
  %v9373 = vmax.f32 %v9309, 0.0
  %v9374 = vmax.f32 %v9310, 0.0
  %v9375 = vmax.f32 %v9311, 0.0
  %v9376 = vmax.f32 %v9312, 0.0
  %v9377 = vmax.f32 %v9313, 0.0
  %v9378 = vmax.f32 %v9314, 0.0
  %v9379 = vmax.f32 %v9315, 0.0
  %v9380 = vmax.f32 %v9316, 0.0
  %v9381 = vmax.f32 %v9317, 0.0
  %v9382 = vmax.f32 %v9318, 0.0
  %v9383 = vmax.f32 %v9319, 0.0
  %v9384 = vmax.f32 %v9320, 0.0
  %v9385 = vmax.f32 %v9321, 0.0
  %v9386 = vmax.f32 %v9322, 0.0
  %v9387 = vmax.f32 %v9323, 0.0
  %v9388 = vmax.f32 %v9324, 0.0
  %v9389 = vmax.f32 %v9325, 0.0
  %v9390 = vmax.f32 %v9326, 0.0
  %v9391 = vmax.f32 %v9327, 0.0
  %v9392 = vmax.f32 %v9328, 0.0
  %v9393 = vmax.f32 %v9329, 0.0
  %v9394 = vmax.f32 %v9330, 0.0
  %v9395 = vmax.f32 %v9331, 0.0
  %v9396 = vmax.f32 %v9332, 0.0
  %v9397 = vmax.f32 %v9333, 0.0
  %v9398 = vmax.f32 %v9334, 0.0
  %v9399 = vmax.f32 %v9335, 0.0
  %v9400 = vmax.f32 %v9336, 0.0
  %v9401 = vmax.f32 %v9337, 0.0
  %v9402 = vmax.f32 %v9338, 0.0
  %v9403 = vmax.f32 %v9339, 0.0
  %v9404 = vmax.f32 %v9340, 0.0
  %v9405 = vmax.f32 %v9341, 0.0
  %v9406 = vmax.f32 %v9342, 0.0
  %v9407 = vmax.f32 %v9343, 0.0
  %v9408 = vmax.f32 %v9344, 0.0
  %v9409 = vmax.f32 %v9345, 0.0
  %v9410 = vmax.f32 %v9346, 0.0
  %v9411 = vpack.c.bf16 %v9348, %v9347
  %v9412 = vpack.c.bf16 %v9350, %v9349
  %v9413 = vpack.c.bf16 %v9352, %v9351
  %v9414 = vpack.c.bf16 %v9354, %v9353
  %v9415 = vpack.c.bf16 %v9356, %v9355
  %v9416 = vpack.c.bf16 %v9358, %v9357
  %v9417 = vpack.c.bf16 %v9360, %v9359
  %v9418 = vpack.c.bf16 %v9362, %v9361
  %v9419 = vpack.c.bf16 %v9364, %v9363
  %v9420 = vpack.c.bf16 %v9366, %v9365
  %v9421 = vpack.c.bf16 %v9368, %v9367
  %v9422 = vpack.c.bf16 %v9370, %v9369
  %v9423 = vpack.c.bf16 %v9372, %v9371
  %v9424 = vpack.c.bf16 %v9374, %v9373
  %v9425 = vpack.c.bf16 %v9376, %v9375
  %v9426 = vpack.c.bf16 %v9378, %v9377
  %v9427 = vpack.c.bf16 %v9380, %v9379
  %v9428 = vpack.c.bf16 %v9382, %v9381
  %v9429 = vpack.c.bf16 %v9384, %v9383
  %v9430 = vpack.c.bf16 %v9386, %v9385
  %v9431 = vpack.c.bf16 %v9388, %v9387
  %v9432 = vpack.c.bf16 %v9390, %v9389
  %v9433 = vpack.c.bf16 %v9392, %v9391
  %v9434 = vpack.c.bf16 %v9394, %v9393
  %v9435 = vpack.c.bf16 %v9396, %v9395
  %v9436 = vpack.c.bf16 %v9398, %v9397
  %v9437 = vpack.c.bf16 %v9400, %v9399
  %v9438 = vpack.c.bf16 %v9402, %v9401
  %v9439 = vpack.c.bf16 %v9404, %v9403
  %v9440 = vpack.c.bf16 %v9406, %v9405
  %v9441 = vpack.c.bf16 %v9408, %v9407
  %v9442 = vpack.c.bf16 %v9410, %v9409
  %v9443 = vld [vmem:[%s10] sm:$0xf]
  %v9444 = vld [vmem:[%s10 + $0x4] sm:$0xf]
  %v9445 = vld [vmem:[%s10 + $0x8] sm:$0xf]
  %v9446 = vld [vmem:[%s10 + $0xc] sm:$0xf]
  %v9451 = vunpack.c.l.b16 %v9443
  %v9452 = vunpack.c.l.b16 %v9444
  %v9453 = vunpack.c.l.b16 %v9445
  %v9454 = vunpack.c.l.b16 %v9446
  %v9455 = vpack.c.b16 %v9452, %v9451
  %v9456 = vpack.c.b16 %v9454, %v9453
  %v9460 = vsel %vm3341, %v9411, 0
  %v9463 = vsel %vm3341, %v9412, 0
  %v9466 = vsel %vm3341, %v9413, 0
  %v9469 = vsel %vm3341, %v9414, 0
  %v9472 = vsel %vm3341, %v9415, 0
  %v9475 = vsel %vm3341, %v9416, 0
  %v9478 = vsel %vm3341, %v9417, 0
  %v9481 = vsel %vm3341, %v9418, 0
  %v9484 = vsel %vm3341, %v9419, 0
  %v9487 = vsel %vm3341, %v9420, 0
  %v9490 = vsel %vm3341, %v9421, 0
  %v9493 = vsel %vm3341, %v9422, 0
  %v9496 = vsel %vm3341, %v9423, 0
  %v9499 = vsel %vm3341, %v9424, 0
  %v9502 = vsel %vm3341, %v9425, 0
  %v9505 = vsel %vm3341, %v9426, 0
  %v9508 = vsel %vm3341, %v9427, 0
  %v9511 = vsel %vm3341, %v9428, 0
  %v9514 = vsel %vm3341, %v9429, 0
  %v9517 = vsel %vm3341, %v9430, 0
  %v9520 = vsel %vm3341, %v9431, 0
  %v9523 = vsel %vm3341, %v9432, 0
  %v9526 = vsel %vm3341, %v9433, 0
  %v9529 = vsel %vm3341, %v9434, 0
  %v9532 = vsel %vm3341, %v9435, 0
  %v9535 = vsel %vm3341, %v9436, 0
  %v9538 = vsel %vm3341, %v9437, 0
  %v9541 = vsel %vm3341, %v9438, 0
  %v9544 = vsel %vm3341, %v9439, 0
  %v9547 = vsel %vm3341, %v9440, 0
  %v9550 = vsel %vm3341, %v9441, 0
  %v9553 = vsel %vm3341, %v9442, 0
  %9555 = vmatprep.subr.bf16.mxu0 0
  %9556 = vmatpush1.bf16.msra.mxu0 %v9455
  %9557 = vmatprep.subr.bf16.mxu0 0
  %9558 = vmatpush1.bf16.msra.mxu0 %v9456
  %9559 = vmatprep.subr.bf16.mxu0 0
  %9560 = vmatpush1.bf16.msra.mxu0 0
  %9561 = vmatprep.subr.bf16.mxu0 0
  %9562 = vmatpush1.bf16.msra.mxu0 0
  %9563 = vmatprep.subr.bf16.mxu0 0
  %9564 = vmatpush1.bf16.msra.mxu0 0
  %9565 = vmatprep.subr.bf16.mxu0 0
  %9566 = vmatpush1.bf16.msra.mxu0 0
  %9567 = vmatprep.subr.bf16.mxu0 0
  %9568 = vmatpush1.bf16.msra.mxu0 0
  %9569 = vmatprep.subr.bf16.mxu0 0
  %9570 = vmatpush1.bf16.msra.mxu0 0
  %9571 = vmatprep.subr.bf16.mxu0 0
  %9572 = vmatpush1.bf16.msra.mxu0 0
  %9573 = vmatprep.subr.bf16.mxu0 0
  %9574 = vmatpush1.bf16.msra.mxu0 0
  %9575 = vmatprep.subr.bf16.mxu0 0
  %9576 = vmatpush1.bf16.msra.mxu0 0
  %9577 = vmatprep.subr.bf16.mxu0 0
  %9578 = vmatpush1.bf16.msra.mxu0 0
  %9579 = vmatprep.subr.bf16.mxu0 0
  %9580 = vmatpush1.bf16.msra.mxu0 0
  %9581 = vmatprep.subr.bf16.mxu0 0
  %9582 = vmatpush1.bf16.msra.mxu0 0
  %9583 = vmatprep.subr.bf16.mxu0 0
  %9584 = vmatpush1.bf16.msra.mxu0 0
  %9585 = vmatprep.subr.bf16.mxu0 0
  %9586 = vmatpush1.bf16.msra.mxu0 0
  %9587 = vmatprep.mubr.bf16.mxu0 0
  %9588 = vmatmul.mubr.bf16.gmra.mrb[0].mxu0 %v9460
  %v9589 = vpop.f32.mrb[0].mxu0
  %v9590 = vadd.f32 0.0, %v9589
  %v9591 = vpop.f32.mrb[0].mxu0
  %v9592 = vpop.f32.mrb[0].mxu0
  %v9593 = vadd.f32 0.0, %v9592
  %v9594 = vpop.f32.mrb[0].mxu0
  %9595 = vmatprep.mubr.bf16.mxu0 0
  %9596 = vmatmul.mubr.bf16.gmra.mrb[0].mxu0 %v9463
  %v9597 = vpop.f32.mrb[0].mxu0
  %v9598 = vadd.f32 0.0, %v9597
  %v9599 = vpop.f32.mrb[0].mxu0
  %v9600 = vpop.f32.mrb[0].mxu0
  %v9601 = vadd.f32 0.0, %v9600
  %v9602 = vpop.f32.mrb[0].mxu0
  %9603 = vmatprep.mubr.bf16.mxu0 0
  %9604 = vmatmul.mubr.bf16.gmra.mrb[0].mxu0 %v9466
  %v9605 = vpop.f32.mrb[0].mxu0
  %v9606 = vadd.f32 0.0, %v9605
  %v9607 = vpop.f32.mrb[0].mxu0
  %v9608 = vpop.f32.mrb[0].mxu0
  %v9609 = vadd.f32 0.0, %v9608
  %v9610 = vpop.f32.mrb[0].mxu0
  %9611 = vmatprep.mubr.bf16.mxu0 0
  %9612 = vmatmul.mubr.bf16.gmra.mrb[0].mxu0 %v9469
  %v9613 = vpop.f32.mrb[0].mxu0
  %v9614 = vadd.f32 0.0, %v9613
  %v9615 = vpop.f32.mrb[0].mxu0
  %v9616 = vpop.f32.mrb[0].mxu0
  %v9617 = vadd.f32 0.0, %v9616
  %v9618 = vpop.f32.mrb[0].mxu0
  %9619 = vmatprep.mubr.bf16.mxu0 0
  %9620 = vmatmul.mubr.bf16.gmra.mrb[0].mxu0 %v9472
  %v9621 = vpop.f32.mrb[0].mxu0
  %v9622 = vadd.f32 0.0, %v9621
  %v9623 = vpop.f32.mrb[0].mxu0
  %v9624 = vpop.f32.mrb[0].mxu0
  %v9625 = vadd.f32 0.0, %v9624
  %v9626 = vpop.f32.mrb[0].mxu0
  %9627 = vmatprep.mubr.bf16.mxu0 0
  %9628 = vmatmul.mubr.bf16.gmra.mrb[0].mxu0 %v9475
  %v9629 = vpop.f32.mrb[0].mxu0
  %v9630 = vadd.f32 0.0, %v9629
  %v9631 = vpop.f32.mrb[0].mxu0
  %v9632 = vpop.f32.mrb[0].mxu0
  %v9633 = vadd.f32 0.0, %v9632
  %v9634 = vpop.f32.mrb[0].mxu0
  %9635 = vmatprep.mubr.bf16.mxu0 0
  %9636 = vmatmul.mubr.bf16.gmra.mrb[0].mxu0 %v9478
  %v9637 = vpop.f32.mrb[0].mxu0
  %v9638 = vadd.f32 0.0, %v9637
  %v9639 = vpop.f32.mrb[0].mxu0
  %v9640 = vpop.f32.mrb[0].mxu0
  %v9641 = vadd.f32 0.0, %v9640
  %v9642 = vpop.f32.mrb[0].mxu0
  %9643 = vmatprep.mubr.bf16.mxu0 0
  %9644 = vmatmul.mubr.bf16.gmra.mrb[0].mxu0 %v9481
  %v9645 = vpop.f32.mrb[0].mxu0
  %v9646 = vadd.f32 0.0, %v9645
  %v9647 = vpop.f32.mrb[0].mxu0
  %v9648 = vpop.f32.mrb[0].mxu0
  %v9649 = vadd.f32 0.0, %v9648
  %v9650 = vpop.f32.mrb[0].mxu0
  %9651 = vmatprep.mubr.bf16.mxu0 0
  %9652 = vmatmul.mubr.bf16.gmra.mrb[0].mxu0 %v9484
  %v9653 = vpop.f32.mrb[0].mxu0
  %v9654 = vadd.f32 0.0, %v9653
  %v9655 = vpop.f32.mrb[0].mxu0
  %v9656 = vpop.f32.mrb[0].mxu0
  %v9657 = vadd.f32 0.0, %v9656
  %v9658 = vpop.f32.mrb[0].mxu0
  %9659 = vmatprep.mubr.bf16.mxu0 0
  %9660 = vmatmul.mubr.bf16.gmra.mrb[0].mxu0 %v9487
  %v9661 = vpop.f32.mrb[0].mxu0
  %v9662 = vadd.f32 0.0, %v9661
  %v9663 = vpop.f32.mrb[0].mxu0
  %v9664 = vpop.f32.mrb[0].mxu0
  %v9665 = vadd.f32 0.0, %v9664
  %v9666 = vpop.f32.mrb[0].mxu0
  %9667 = vmatprep.mubr.bf16.mxu0 0
  %9668 = vmatmul.mubr.bf16.gmra.mrb[0].mxu0 %v9490
  %v9669 = vpop.f32.mrb[0].mxu0
  %v9670 = vadd.f32 0.0, %v9669
  %v9671 = vpop.f32.mrb[0].mxu0
  %v9672 = vpop.f32.mrb[0].mxu0
  %v9673 = vadd.f32 0.0, %v9672
  %v9674 = vpop.f32.mrb[0].mxu0
  %9675 = vmatprep.mubr.bf16.mxu0 0
  %9676 = vmatmul.mubr.bf16.gmra.mrb[0].mxu0 %v9493
  %v9677 = vpop.f32.mrb[0].mxu0
  %v9678 = vadd.f32 0.0, %v9677
  %v9679 = vpop.f32.mrb[0].mxu0
  %v9680 = vpop.f32.mrb[0].mxu0
  %v9681 = vadd.f32 0.0, %v9680
  %v9682 = vpop.f32.mrb[0].mxu0
  %9683 = vmatprep.mubr.bf16.mxu0 0
  %9684 = vmatmul.mubr.bf16.gmra.mrb[0].mxu0 %v9496
  %v9685 = vpop.f32.mrb[0].mxu0
  %v9686 = vadd.f32 0.0, %v9685
  %v9687 = vpop.f32.mrb[0].mxu0
  %v9688 = vpop.f32.mrb[0].mxu0
  %v9689 = vadd.f32 0.0, %v9688
  %v9690 = vpop.f32.mrb[0].mxu0
  %9691 = vmatprep.mubr.bf16.mxu0 0
  %9692 = vmatmul.mubr.bf16.gmra.mrb[0].mxu0 %v9499
  %v9693 = vpop.f32.mrb[0].mxu0
  %v9694 = vadd.f32 0.0, %v9693
  %v9695 = vpop.f32.mrb[0].mxu0
  %v9696 = vpop.f32.mrb[0].mxu0
  %v9697 = vadd.f32 0.0, %v9696
  %v9698 = vpop.f32.mrb[0].mxu0
  %9699 = vmatprep.mubr.bf16.mxu0 0
  %9700 = vmatmul.mubr.bf16.gmra.mrb[0].mxu0 %v9502
  %v9701 = vpop.f32.mrb[0].mxu0
  %v9702 = vadd.f32 0.0, %v9701
  %v9703 = vpop.f32.mrb[0].mxu0
  %v9704 = vpop.f32.mrb[0].mxu0
  %v9705 = vadd.f32 0.0, %v9704
  %v9706 = vpop.f32.mrb[0].mxu0
  %9707 = vmatprep.mubr.bf16.mxu0 0
  %9708 = vmatmul.mubr.bf16.gmra.mrb[0].mxu0 %v9505
  %v9709 = vpop.f32.mrb[0].mxu0
  %v9710 = vadd.f32 0.0, %v9709
  %v9711 = vpop.f32.mrb[0].mxu0
  %v9712 = vpop.f32.mrb[0].mxu0
  %v9713 = vadd.f32 0.0, %v9712
  %v9714 = vpop.f32.mrb[0].mxu0
  %9715 = vmatprep.mubr.bf16.mxu0 0
  %9716 = vmatmul.mubr.bf16.gmra.mrb[0].mxu0 %v9508
  %v9717 = vpop.f32.mrb[0].mxu0
  %v9718 = vadd.f32 0.0, %v9717
  %v9719 = vpop.f32.mrb[0].mxu0
  %v9720 = vpop.f32.mrb[0].mxu0
  %v9721 = vadd.f32 0.0, %v9720
  %v9722 = vpop.f32.mrb[0].mxu0
  %9723 = vmatprep.mubr.bf16.mxu0 0
  %9724 = vmatmul.mubr.bf16.gmra.mrb[0].mxu0 %v9511
  %v9725 = vpop.f32.mrb[0].mxu0
  %v9726 = vadd.f32 0.0, %v9725
  %v9727 = vpop.f32.mrb[0].mxu0
  %v9728 = vpop.f32.mrb[0].mxu0
  %v9729 = vadd.f32 0.0, %v9728
  %v9730 = vpop.f32.mrb[0].mxu0
  %9731 = vmatprep.mubr.bf16.mxu0 0
  %9732 = vmatmul.mubr.bf16.gmra.mrb[0].mxu0 %v9514
  %v9733 = vpop.f32.mrb[0].mxu0
  %v9734 = vadd.f32 0.0, %v9733
  %v9735 = vpop.f32.mrb[0].mxu0
  %v9736 = vpop.f32.mrb[0].mxu0
  %v9737 = vadd.f32 0.0, %v9736
  %v9738 = vpop.f32.mrb[0].mxu0
  %9739 = vmatprep.mubr.bf16.mxu0 0
  %9740 = vmatmul.mubr.bf16.gmra.mrb[0].mxu0 %v9517
  %v9741 = vpop.f32.mrb[0].mxu0
  %v9742 = vadd.f32 0.0, %v9741
  %v9743 = vpop.f32.mrb[0].mxu0
  %v9744 = vpop.f32.mrb[0].mxu0
  %v9745 = vadd.f32 0.0, %v9744
  %v9746 = vpop.f32.mrb[0].mxu0
  %9747 = vmatprep.mubr.bf16.mxu0 0
  %9748 = vmatmul.mubr.bf16.gmra.mrb[0].mxu0 %v9520
  %v9749 = vpop.f32.mrb[0].mxu0
  %v9750 = vadd.f32 0.0, %v9749
  %v9751 = vpop.f32.mrb[0].mxu0
  %v9752 = vpop.f32.mrb[0].mxu0
  %v9753 = vadd.f32 0.0, %v9752
  %v9754 = vpop.f32.mrb[0].mxu0
  %9755 = vmatprep.mubr.bf16.mxu0 0
  %9756 = vmatmul.mubr.bf16.gmra.mrb[0].mxu0 %v9523
  %v9757 = vpop.f32.mrb[0].mxu0
  %v9758 = vadd.f32 0.0, %v9757
  %v9759 = vpop.f32.mrb[0].mxu0
  %v9760 = vpop.f32.mrb[0].mxu0
  %v9761 = vadd.f32 0.0, %v9760
  %v9762 = vpop.f32.mrb[0].mxu0
  %9763 = vmatprep.mubr.bf16.mxu0 0
  %9764 = vmatmul.mubr.bf16.gmra.mrb[0].mxu0 %v9526
  %v9765 = vpop.f32.mrb[0].mxu0
  %v9766 = vadd.f32 0.0, %v9765
  %v9767 = vpop.f32.mrb[0].mxu0
  %v9768 = vpop.f32.mrb[0].mxu0
  %v9769 = vadd.f32 0.0, %v9768
  %v9770 = vpop.f32.mrb[0].mxu0
  %9771 = vmatprep.mubr.bf16.mxu0 0
  %9772 = vmatmul.mubr.bf16.gmra.mrb[0].mxu0 %v9529
  %v9773 = vpop.f32.mrb[0].mxu0
  %v9774 = vadd.f32 0.0, %v9773
  %v9775 = vpop.f32.mrb[0].mxu0
  %v9776 = vpop.f32.mrb[0].mxu0
  %v9777 = vadd.f32 0.0, %v9776
  %v9778 = vpop.f32.mrb[0].mxu0
  %9779 = vmatprep.mubr.bf16.mxu0 0
  %9780 = vmatmul.mubr.bf16.gmra.mrb[0].mxu0 %v9532
  %v9781 = vpop.f32.mrb[0].mxu0
  %v9782 = vadd.f32 0.0, %v9781
  %v9783 = vpop.f32.mrb[0].mxu0
  %v9784 = vpop.f32.mrb[0].mxu0
  %v9785 = vadd.f32 0.0, %v9784
  %v9786 = vpop.f32.mrb[0].mxu0
  %9787 = vmatprep.mubr.bf16.mxu0 0
  %9788 = vmatmul.mubr.bf16.gmra.mrb[0].mxu0 %v9535
  %v9789 = vpop.f32.mrb[0].mxu0
  %v9790 = vadd.f32 0.0, %v9789
  %v9791 = vpop.f32.mrb[0].mxu0
  %v9792 = vpop.f32.mrb[0].mxu0
  %v9793 = vadd.f32 0.0, %v9792
  %v9794 = vpop.f32.mrb[0].mxu0
  %9795 = vmatprep.mubr.bf16.mxu0 0
  %9796 = vmatmul.mubr.bf16.gmra.mrb[0].mxu0 %v9538
  %v9797 = vpop.f32.mrb[0].mxu0
  %v9798 = vadd.f32 0.0, %v9797
  %v9799 = vpop.f32.mrb[0].mxu0
  %v9800 = vpop.f32.mrb[0].mxu0
  %v9801 = vadd.f32 0.0, %v9800
  %v9802 = vpop.f32.mrb[0].mxu0
  %9803 = vmatprep.mubr.bf16.mxu0 0
  %9804 = vmatmul.mubr.bf16.gmra.mrb[0].mxu0 %v9541
  %v9805 = vpop.f32.mrb[0].mxu0
  %v9806 = vadd.f32 0.0, %v9805
  %v9807 = vpop.f32.mrb[0].mxu0
  %v9808 = vpop.f32.mrb[0].mxu0
  %v9809 = vadd.f32 0.0, %v9808
  %v9810 = vpop.f32.mrb[0].mxu0
  %9811 = vmatprep.mubr.bf16.mxu0 0
  %9812 = vmatmul.mubr.bf16.gmra.mrb[0].mxu0 %v9544
  %v9813 = vpop.f32.mrb[0].mxu0
  %v9814 = vadd.f32 0.0, %v9813
  %v9815 = vpop.f32.mrb[0].mxu0
  %v9816 = vpop.f32.mrb[0].mxu0
  %v9817 = vadd.f32 0.0, %v9816
  %v9818 = vpop.f32.mrb[0].mxu0
  %9819 = vmatprep.mubr.bf16.mxu0 0
  %9820 = vmatmul.mubr.bf16.gmra.mrb[0].mxu0 %v9547
  %v9821 = vpop.f32.mrb[0].mxu0
  %v9822 = vadd.f32 0.0, %v9821
  %v9823 = vpop.f32.mrb[0].mxu0
  %v9824 = vpop.f32.mrb[0].mxu0
  %v9825 = vadd.f32 0.0, %v9824
  %v9826 = vpop.f32.mrb[0].mxu0
  %9827 = vmatprep.mubr.bf16.mxu0 0
  %9828 = vmatmul.mubr.bf16.gmra.mrb[0].mxu0 %v9550
  %v9829 = vpop.f32.mrb[0].mxu0
  %v9830 = vadd.f32 0.0, %v9829
  %v9831 = vpop.f32.mrb[0].mxu0
  %v9832 = vpop.f32.mrb[0].mxu0
  %v9833 = vadd.f32 0.0, %v9832
  %v9834 = vpop.f32.mrb[0].mxu0
  %9835 = vmatprep.mubr.bf16.mxu0 0
  %9836 = vmatmul.mubr.bf16.gmra.mrb[0].mxu0 %v9553
  %v9837 = vpop.f32.mrb[0].mxu0
  %v9838 = vadd.f32 0.0, %v9837
  %v9839 = vpop.f32.mrb[0].mxu0
  %v9840 = vpop.f32.mrb[0].mxu0
  %v9841 = vadd.f32 0.0, %v9840
  %v9842 = vpop.f32.mrb[0].mxu0
  %9843 = vdwg.mxu0
  %v9844 = vld [vmem:[%s11] sm:$0x1]
  %v9845 = vld [vmem:[%s12] sm:$0x1]
  %v9846 = vsel %vm2951, %v9590, 0.0
  %v9847 = vsel %vm2951, %v9593, 0.0
  %v9848 = vadd.f32 %v9846, %v9847
  %v9849 = vsel %vm2951, %v9598, 0.0
  %v9850 = vadd.f32 %v9848, %v9849
  %v9851 = vsel %vm2951, %v9601, 0.0
  %v9852 = vadd.f32 %v9850, %v9851
  %v9853 = vsel %vm2951, %v9606, 0.0
  %v9854 = vadd.f32 %v9852, %v9853
  %v9855 = vsel %vm2951, %v9609, 0.0
  %v9856 = vadd.f32 %v9854, %v9855
  %v9857 = vsel %vm2951, %v9614, 0.0
  %v9858 = vadd.f32 %v9856, %v9857
  %v9859 = vsel %vm2951, %v9617, 0.0
  %v9860 = vadd.f32 %v9858, %v9859
  %v9861 = vsel %vm2951, %v9622, 0.0
  %v9862 = vadd.f32 %v9860, %v9861
  %v9863 = vsel %vm2951, %v9625, 0.0
  %v9864 = vadd.f32 %v9862, %v9863
  %v9865 = vsel %vm2951, %v9630, 0.0
  %v9866 = vadd.f32 %v9864, %v9865
  %v9867 = vsel %vm2951, %v9633, 0.0
  %v9868 = vadd.f32 %v9866, %v9867
  %v9869 = vsel %vm2951, %v9638, 0.0
  %v9870 = vadd.f32 %v9868, %v9869
  %v9871 = vsel %vm2951, %v9641, 0.0
  %v9872 = vadd.f32 %v9870, %v9871
  %v9873 = vsel %vm2951, %v9646, 0.0
  %v9874 = vadd.f32 %v9872, %v9873
  %v9875 = vsel %vm2951, %v9649, 0.0
  %v9876 = vadd.f32 %v9874, %v9875
  %v9877 = vsel %vm2951, %v9654, 0.0
  %v9878 = vadd.f32 %v9876, %v9877
  %v9879 = vsel %vm2951, %v9657, 0.0
  %v9880 = vadd.f32 %v9878, %v9879
  %v9881 = vsel %vm2951, %v9662, 0.0
  %v9882 = vadd.f32 %v9880, %v9881
  %v9883 = vsel %vm2951, %v9665, 0.0
  %v9884 = vadd.f32 %v9882, %v9883
  %v9885 = vsel %vm2951, %v9670, 0.0
  %v9886 = vadd.f32 %v9884, %v9885
  %v9887 = vsel %vm2951, %v9673, 0.0
  %v9888 = vadd.f32 %v9886, %v9887
  %v9889 = vsel %vm2951, %v9678, 0.0
  %v9890 = vadd.f32 %v9888, %v9889
  %v9891 = vsel %vm2951, %v9681, 0.0
  %v9892 = vadd.f32 %v9890, %v9891
  %v9893 = vsel %vm2951, %v9686, 0.0
  %v9894 = vadd.f32 %v9892, %v9893
  %v9895 = vsel %vm2951, %v9689, 0.0
  %v9896 = vadd.f32 %v9894, %v9895
  %v9897 = vsel %vm2951, %v9694, 0.0
  %v9898 = vadd.f32 %v9896, %v9897
  %v9899 = vsel %vm2951, %v9697, 0.0
  %v9900 = vadd.f32 %v9898, %v9899
  %v9901 = vsel %vm2951, %v9702, 0.0
  %v9902 = vadd.f32 %v9900, %v9901
  %v9903 = vsel %vm2951, %v9705, 0.0
  %v9904 = vadd.f32 %v9902, %v9903
  %v9905 = vsel %vm2951, %v9710, 0.0
  %v9906 = vadd.f32 %v9904, %v9905
  %v9907 = vsel %vm2951, %v9713, 0.0
  %v9908 = vadd.f32 %v9906, %v9907
  %v9909 = vsel %vm2951, %v9718, 0.0
  %v9910 = vadd.f32 %v9908, %v9909
  %v9911 = vsel %vm2951, %v9721, 0.0
  %v9912 = vadd.f32 %v9910, %v9911
  %v9913 = vsel %vm2951, %v9726, 0.0
  %v9914 = vadd.f32 %v9912, %v9913
  %v9915 = vsel %vm2951, %v9729, 0.0
  %v9916 = vadd.f32 %v9914, %v9915
  %v9917 = vsel %vm2951, %v9734, 0.0
  %v9918 = vadd.f32 %v9916, %v9917
  %v9919 = vsel %vm2951, %v9737, 0.0
  %v9920 = vadd.f32 %v9918, %v9919
  %v9921 = vsel %vm2951, %v9742, 0.0
  %v9922 = vadd.f32 %v9920, %v9921
  %v9923 = vsel %vm2951, %v9745, 0.0
  %v9924 = vadd.f32 %v9922, %v9923
  %v9925 = vsel %vm2951, %v9750, 0.0
  %v9926 = vadd.f32 %v9924, %v9925
  %v9927 = vsel %vm2951, %v9753, 0.0
  %v9928 = vadd.f32 %v9926, %v9927
  %v9929 = vsel %vm2951, %v9758, 0.0
  %v9930 = vadd.f32 %v9928, %v9929
  %v9931 = vsel %vm2951, %v9761, 0.0
  %v9932 = vadd.f32 %v9930, %v9931
  %v9933 = vsel %vm2951, %v9766, 0.0
  %v9934 = vadd.f32 %v9932, %v9933
  %v9935 = vsel %vm2951, %v9769, 0.0
  %v9936 = vadd.f32 %v9934, %v9935
  %v9937 = vsel %vm2951, %v9774, 0.0
  %v9938 = vadd.f32 %v9936, %v9937
  %v9939 = vsel %vm2951, %v9777, 0.0
  %v9940 = vadd.f32 %v9938, %v9939
  %v9941 = vsel %vm2951, %v9782, 0.0
  %v9942 = vadd.f32 %v9940, %v9941
  %v9943 = vsel %vm2951, %v9785, 0.0
  %v9944 = vadd.f32 %v9942, %v9943
  %v9945 = vsel %vm2951, %v9790, 0.0
  %v9946 = vadd.f32 %v9944, %v9945
  %v9947 = vsel %vm2951, %v9793, 0.0
  %v9948 = vadd.f32 %v9946, %v9947
  %v9949 = vsel %vm2951, %v9798, 0.0
  %v9950 = vadd.f32 %v9948, %v9949
  %v9951 = vsel %vm2951, %v9801, 0.0
  %v9952 = vadd.f32 %v9950, %v9951
  %v9953 = vsel %vm2951, %v9806, 0.0
  %v9954 = vadd.f32 %v9952, %v9953
  %v9955 = vsel %vm2951, %v9809, 0.0
  %v9956 = vadd.f32 %v9954, %v9955
  %v9957 = vsel %vm2951, %v9814, 0.0
  %v9958 = vadd.f32 %v9956, %v9957
  %v9959 = vsel %vm2951, %v9817, 0.0
  %v9960 = vadd.f32 %v9958, %v9959
  %v9961 = vsel %vm2951, %v9822, 0.0
  %v9962 = vadd.f32 %v9960, %v9961
  %v9963 = vsel %vm2951, %v9825, 0.0
  %v9964 = vadd.f32 %v9962, %v9963
  %v9965 = vsel %vm2951, %v9830, 0.0
  %v9966 = vadd.f32 %v9964, %v9965
  %v9967 = vsel %vm2951, %v9833, 0.0
  %v9968 = vadd.f32 %v9966, %v9967
  %v9969 = vsel %vm2951, %v9838, 0.0
  %v9970 = vadd.f32 %v9968, %v9969
  %v9971 = vsel %vm2951, %v9841, 0.0
  %v9972 = vadd.f32 %v9970, %v9971
  %v9973 = vrot.slane %v9972, 4
  %v9974 = vadd.f32 %v9972, %v9973
  %v9975 = vrot.slane %v9974, 2
  %v9976 = vadd.f32 %v9974, %v9975
  %v9977 = vrot.slane %v9976, 1
  %v9978 = vadd.f32 %v9976, %v9977
  %v9979 = vmul.f32 %v9590, %v9590
  %v9980 = vmul.f32 %v9593, %v9593
  %v9981 = vmul.f32 %v9598, %v9598
  %v9982 = vmul.f32 %v9601, %v9601
  %v9983 = vmul.f32 %v9606, %v9606
  %v9984 = vmul.f32 %v9609, %v9609
  %v9985 = vmul.f32 %v9614, %v9614
  %v9986 = vmul.f32 %v9617, %v9617
  %v9987 = vmul.f32 %v9622, %v9622
  %v9988 = vmul.f32 %v9625, %v9625
  %v9989 = vmul.f32 %v9630, %v9630
  %v9990 = vmul.f32 %v9633, %v9633
  %v9991 = vmul.f32 %v9638, %v9638
  %v9992 = vmul.f32 %v9641, %v9641
  %v9993 = vmul.f32 %v9646, %v9646
  %v9994 = vmul.f32 %v9649, %v9649
  %v9995 = vmul.f32 %v9654, %v9654
  %v9996 = vmul.f32 %v9657, %v9657
  %v9997 = vmul.f32 %v9662, %v9662
  %v9998 = vmul.f32 %v9665, %v9665
  %v9999 = vmul.f32 %v9670, %v9670
  %v10000 = vmul.f32 %v9673, %v9673
  %v10001 = vmul.f32 %v9678, %v9678
  %v10002 = vmul.f32 %v9681, %v9681
  %v10003 = vmul.f32 %v9686, %v9686
  %v10004 = vmul.f32 %v9689, %v9689
  %v10005 = vmul.f32 %v9694, %v9694
  %v10006 = vmul.f32 %v9697, %v9697
  %v10007 = vmul.f32 %v9702, %v9702
  %v10008 = vmul.f32 %v9705, %v9705
  %v10009 = vmul.f32 %v9710, %v9710
  %v10010 = vmul.f32 %v9713, %v9713
  %v10011 = vmul.f32 %v9718, %v9718
  %v10012 = vmul.f32 %v9721, %v9721
  %v10013 = vmul.f32 %v9726, %v9726
  %v10014 = vmul.f32 %v9729, %v9729
  %v10015 = vmul.f32 %v9734, %v9734
  %v10016 = vmul.f32 %v9737, %v9737
  %v10017 = vmul.f32 %v9742, %v9742
  %v10018 = vmul.f32 %v9745, %v9745
  %v10019 = vmul.f32 %v9750, %v9750
  %v10020 = vmul.f32 %v9753, %v9753
  %v10021 = vmul.f32 %v9758, %v9758
  %v10022 = vmul.f32 %v9761, %v9761
  %v10023 = vmul.f32 %v9766, %v9766
  %v10024 = vmul.f32 %v9769, %v9769
  %v10025 = vmul.f32 %v9774, %v9774
  %v10026 = vmul.f32 %v9777, %v9777
  %v10027 = vmul.f32 %v9782, %v9782
  %v10028 = vmul.f32 %v9785, %v9785
  %v10029 = vmul.f32 %v9790, %v9790
  %v10030 = vmul.f32 %v9793, %v9793
  %v10031 = vmul.f32 %v9798, %v9798
  %v10032 = vmul.f32 %v9801, %v9801
  %v10033 = vmul.f32 %v9806, %v9806
  %v10034 = vmul.f32 %v9809, %v9809
  %v10035 = vmul.f32 %v9814, %v9814
  %v10036 = vmul.f32 %v9817, %v9817
  %v10037 = vmul.f32 %v9822, %v9822
  %v10038 = vmul.f32 %v9825, %v9825
  %v10039 = vmul.f32 %v9830, %v9830
  %v10040 = vmul.f32 %v9833, %v9833
  %v10041 = vmul.f32 %v9838, %v9838
  %v10042 = vmul.f32 %v9841, %v9841
  %v10043 = vsel %vm2951, %v9979, 0.0
  %v10044 = vsel %vm2951, %v9980, 0.0
  %v10045 = vadd.f32 %v10043, %v10044
  %v10046 = vsel %vm2951, %v9981, 0.0
  %v10047 = vadd.f32 %v10045, %v10046
  %v10048 = vsel %vm2951, %v9982, 0.0
  %v10049 = vadd.f32 %v10047, %v10048
  %v10050 = vsel %vm2951, %v9983, 0.0
  %v10051 = vadd.f32 %v10049, %v10050
  %v10052 = vsel %vm2951, %v9984, 0.0
  %v10053 = vadd.f32 %v10051, %v10052
  %v10054 = vsel %vm2951, %v9985, 0.0
  %v10055 = vadd.f32 %v10053, %v10054
  %v10056 = vsel %vm2951, %v9986, 0.0
  %v10057 = vadd.f32 %v10055, %v10056
  %v10058 = vsel %vm2951, %v9987, 0.0
  %v10059 = vadd.f32 %v10057, %v10058
  %v10060 = vsel %vm2951, %v9988, 0.0
  %v10061 = vadd.f32 %v10059, %v10060
  %v10062 = vsel %vm2951, %v9989, 0.0
  %v10063 = vadd.f32 %v10061, %v10062
  %v10064 = vsel %vm2951, %v9990, 0.0
  %v10065 = vadd.f32 %v10063, %v10064
  %v10066 = vsel %vm2951, %v9991, 0.0
  %v10067 = vadd.f32 %v10065, %v10066
  %v10068 = vsel %vm2951, %v9992, 0.0
  %v10069 = vadd.f32 %v10067, %v10068
  %v10070 = vsel %vm2951, %v9993, 0.0
  %v10071 = vadd.f32 %v10069, %v10070
  %v10072 = vsel %vm2951, %v9994, 0.0
  %v10073 = vadd.f32 %v10071, %v10072
  %v10074 = vsel %vm2951, %v9995, 0.0
  %v10075 = vadd.f32 %v10073, %v10074
  %v10076 = vsel %vm2951, %v9996, 0.0
  %v10077 = vadd.f32 %v10075, %v10076
  %v10078 = vsel %vm2951, %v9997, 0.0
  %v10079 = vadd.f32 %v10077, %v10078
  %v10080 = vsel %vm2951, %v9998, 0.0
  %v10081 = vadd.f32 %v10079, %v10080
  %v10082 = vsel %vm2951, %v9999, 0.0
  %v10083 = vadd.f32 %v10081, %v10082
  %v10084 = vsel %vm2951, %v10000, 0.0
  %v10085 = vadd.f32 %v10083, %v10084
  %v10086 = vsel %vm2951, %v10001, 0.0
  %v10087 = vadd.f32 %v10085, %v10086
  %v10088 = vsel %vm2951, %v10002, 0.0
  %v10089 = vadd.f32 %v10087, %v10088
  %v10090 = vsel %vm2951, %v10003, 0.0
  %v10091 = vadd.f32 %v10089, %v10090
  %v10092 = vsel %vm2951, %v10004, 0.0
  %v10093 = vadd.f32 %v10091, %v10092
  %v10094 = vsel %vm2951, %v10005, 0.0
  %v10095 = vadd.f32 %v10093, %v10094
  %v10096 = vsel %vm2951, %v10006, 0.0
  %v10097 = vadd.f32 %v10095, %v10096
  %v10098 = vsel %vm2951, %v10007, 0.0
  %v10099 = vadd.f32 %v10097, %v10098
  %v10100 = vsel %vm2951, %v10008, 0.0
  %v10101 = vadd.f32 %v10099, %v10100
  %v10102 = vsel %vm2951, %v10009, 0.0
  %v10103 = vadd.f32 %v10101, %v10102
  %v10104 = vsel %vm2951, %v10010, 0.0
  %v10105 = vadd.f32 %v10103, %v10104
  %v10106 = vsel %vm2951, %v10011, 0.0
  %v10107 = vadd.f32 %v10105, %v10106
  %v10108 = vsel %vm2951, %v10012, 0.0
  %v10109 = vadd.f32 %v10107, %v10108
  %v10110 = vsel %vm2951, %v10013, 0.0
  %v10111 = vadd.f32 %v10109, %v10110
  %v10112 = vsel %vm2951, %v10014, 0.0
  %v10113 = vadd.f32 %v10111, %v10112
  %v10114 = vsel %vm2951, %v10015, 0.0
  %v10115 = vadd.f32 %v10113, %v10114
  %v10116 = vsel %vm2951, %v10016, 0.0
  %v10117 = vadd.f32 %v10115, %v10116
  %v10118 = vsel %vm2951, %v10017, 0.0
  %v10119 = vadd.f32 %v10117, %v10118
  %v10120 = vsel %vm2951, %v10018, 0.0
  %v10121 = vadd.f32 %v10119, %v10120
  %v10122 = vsel %vm2951, %v10019, 0.0
  %v10123 = vadd.f32 %v10121, %v10122
  %v10124 = vsel %vm2951, %v10020, 0.0
  %v10125 = vadd.f32 %v10123, %v10124
  %v10126 = vsel %vm2951, %v10021, 0.0
  %v10127 = vadd.f32 %v10125, %v10126
  %v10128 = vsel %vm2951, %v10022, 0.0
  %v10129 = vadd.f32 %v10127, %v10128
  %v10130 = vsel %vm2951, %v10023, 0.0
  %v10131 = vadd.f32 %v10129, %v10130
  %v10132 = vsel %vm2951, %v10024, 0.0
  %v10133 = vadd.f32 %v10131, %v10132
  %v10134 = vsel %vm2951, %v10025, 0.0
  %v10135 = vadd.f32 %v10133, %v10134
  %v10136 = vsel %vm2951, %v10026, 0.0
  %v10137 = vadd.f32 %v10135, %v10136
  %v10138 = vsel %vm2951, %v10027, 0.0
  %v10139 = vadd.f32 %v10137, %v10138
  %v10140 = vsel %vm2951, %v10028, 0.0
  %v10141 = vadd.f32 %v10139, %v10140
  %v10142 = vsel %vm2951, %v10029, 0.0
  %v10143 = vadd.f32 %v10141, %v10142
  %v10144 = vsel %vm2951, %v10030, 0.0
  %v10145 = vadd.f32 %v10143, %v10144
  %v10146 = vsel %vm2951, %v10031, 0.0
  %v10147 = vadd.f32 %v10145, %v10146
  %v10148 = vsel %vm2951, %v10032, 0.0
  %v10149 = vadd.f32 %v10147, %v10148
  %v10150 = vsel %vm2951, %v10033, 0.0
  %v10151 = vadd.f32 %v10149, %v10150
  %v10152 = vsel %vm2951, %v10034, 0.0
  %v10153 = vadd.f32 %v10151, %v10152
  %v10154 = vsel %vm2951, %v10035, 0.0
  %v10155 = vadd.f32 %v10153, %v10154
  %v10156 = vsel %vm2951, %v10036, 0.0
  %v10157 = vadd.f32 %v10155, %v10156
  %v10158 = vsel %vm2951, %v10037, 0.0
  %v10159 = vadd.f32 %v10157, %v10158
  %v10160 = vsel %vm2951, %v10038, 0.0
  %v10161 = vadd.f32 %v10159, %v10160
  %v10162 = vsel %vm2951, %v10039, 0.0
  %v10163 = vadd.f32 %v10161, %v10162
  %v10164 = vsel %vm2951, %v10040, 0.0
  %v10165 = vadd.f32 %v10163, %v10164
  %v10166 = vsel %vm2951, %v10041, 0.0
  %v10167 = vadd.f32 %v10165, %v10166
  %v10168 = vsel %vm2951, %v10042, 0.0
  %v10169 = vadd.f32 %v10167, %v10168
  %v10170 = vrot.slane %v10169, 4
  %v10171 = vadd.f32 %v10169, %v10170
  %v10172 = vrot.slane %v10171, 2
  %v10173 = vadd.f32 %v10171, %v10172
  %v10174 = vrot.slane %v10173, 1
  %v10175 = vadd.f32 %v10173, %v10174
  %v10176 = vmul.f32 %v9978, 0.001953125
  %v10177 = vmul.f32 %v10175, 0.001953125
  %v10178 = vmul.f32 %v10176, %v10176
  %v10179 = vsub.f32 %v10177, %v10178
  %v10180 = vadd.f32 %v10179, 1e-05
  %v10181 = vrsqrt.pop %v10180
  %v10182 = vmul.f32 %v9844, %v10181
  %v10183 = vmul.f32 %v10176, %v10182
  %v10184 = vsub.f32 %v9845, %v10183
  %v10186 = vlaneseq
  %v10187 = vshrl.u32 %v10186, 7
  %v10188 = vsub.s32 0, %v10187
  %v10189 = vrot.slane %v10182, %v10188
  %v10191 = vmul.f32 %v9590, %v10189
  %v10192 = vmul.f32 %v9593, %v10189
  %v10193 = vmul.f32 %v9598, %v10189
  %v10194 = vmul.f32 %v9601, %v10189
  %v10195 = vmul.f32 %v9606, %v10189
  %v10196 = vmul.f32 %v9609, %v10189
  %v10197 = vmul.f32 %v9614, %v10189
  %v10198 = vmul.f32 %v9617, %v10189
  %v10199 = vmul.f32 %v9622, %v10189
  %v10200 = vmul.f32 %v9625, %v10189
  %v10201 = vmul.f32 %v9630, %v10189
  %v10202 = vmul.f32 %v9633, %v10189
  %v10203 = vmul.f32 %v9638, %v10189
  %v10204 = vmul.f32 %v9641, %v10189
  %v10205 = vmul.f32 %v9646, %v10189
  %v10206 = vmul.f32 %v9649, %v10189
  %v10207 = vmul.f32 %v9654, %v10189
  %v10208 = vmul.f32 %v9657, %v10189
  %v10209 = vmul.f32 %v9662, %v10189
  %v10210 = vmul.f32 %v9665, %v10189
  %v10211 = vmul.f32 %v9670, %v10189
  %v10212 = vmul.f32 %v9673, %v10189
  %v10213 = vmul.f32 %v9678, %v10189
  %v10214 = vmul.f32 %v9681, %v10189
  %v10215 = vmul.f32 %v9686, %v10189
  %v10216 = vmul.f32 %v9689, %v10189
  %v10217 = vmul.f32 %v9694, %v10189
  %v10218 = vmul.f32 %v9697, %v10189
  %v10219 = vmul.f32 %v9702, %v10189
  %v10220 = vmul.f32 %v9705, %v10189
  %v10221 = vmul.f32 %v9710, %v10189
  %v10222 = vmul.f32 %v9713, %v10189
  %v10223 = vmul.f32 %v9718, %v10189
  %v10224 = vmul.f32 %v9721, %v10189
  %v10225 = vmul.f32 %v9726, %v10189
  %v10226 = vmul.f32 %v9729, %v10189
  %v10227 = vmul.f32 %v9734, %v10189
  %v10228 = vmul.f32 %v9737, %v10189
  %v10229 = vmul.f32 %v9742, %v10189
  %v10230 = vmul.f32 %v9745, %v10189
  %v10231 = vmul.f32 %v9750, %v10189
  %v10232 = vmul.f32 %v9753, %v10189
  %v10233 = vmul.f32 %v9758, %v10189
  %v10234 = vmul.f32 %v9761, %v10189
  %v10235 = vmul.f32 %v9766, %v10189
  %v10236 = vmul.f32 %v9769, %v10189
  %v10237 = vmul.f32 %v9774, %v10189
  %v10238 = vmul.f32 %v9777, %v10189
  %v10239 = vmul.f32 %v9782, %v10189
  %v10240 = vmul.f32 %v9785, %v10189
  %v10241 = vmul.f32 %v9790, %v10189
  %v10242 = vmul.f32 %v9793, %v10189
  %v10243 = vmul.f32 %v9798, %v10189
  %v10244 = vmul.f32 %v9801, %v10189
  %v10245 = vmul.f32 %v9806, %v10189
  %v10246 = vmul.f32 %v9809, %v10189
  %v10247 = vmul.f32 %v9814, %v10189
  %v10248 = vmul.f32 %v9817, %v10189
  %v10249 = vmul.f32 %v9822, %v10189
  %v10250 = vmul.f32 %v9825, %v10189
  %v10251 = vmul.f32 %v9830, %v10189
  %v10252 = vmul.f32 %v9833, %v10189
  %v10253 = vmul.f32 %v9838, %v10189
  %v10254 = vmul.f32 %v9841, %v10189
  %v10256 = vlaneseq
  %v10257 = vshrl.u32 %v10256, 7
  %v10258 = vsub.s32 0, %v10257
  %v10259 = vrot.slane %v10184, %v10258
  %v10261 = vadd.f32 %v10191, %v10259
  %v10262 = vadd.f32 %v10192, %v10259
  %v10263 = vadd.f32 %v10193, %v10259
  %v10264 = vadd.f32 %v10194, %v10259
  %v10265 = vadd.f32 %v10195, %v10259
  %v10266 = vadd.f32 %v10196, %v10259
  %v10267 = vadd.f32 %v10197, %v10259
  %v10268 = vadd.f32 %v10198, %v10259
  %v10269 = vadd.f32 %v10199, %v10259
  %v10270 = vadd.f32 %v10200, %v10259
  %v10271 = vadd.f32 %v10201, %v10259
  %v10272 = vadd.f32 %v10202, %v10259
  %v10273 = vadd.f32 %v10203, %v10259
  %v10274 = vadd.f32 %v10204, %v10259
  %v10275 = vadd.f32 %v10205, %v10259
  %v10276 = vadd.f32 %v10206, %v10259
  %v10277 = vadd.f32 %v10207, %v10259
  %v10278 = vadd.f32 %v10208, %v10259
  %v10279 = vadd.f32 %v10209, %v10259
  %v10280 = vadd.f32 %v10210, %v10259
  %v10281 = vadd.f32 %v10211, %v10259
  %v10282 = vadd.f32 %v10212, %v10259
  %v10283 = vadd.f32 %v10213, %v10259
  %v10284 = vadd.f32 %v10214, %v10259
  %v10285 = vadd.f32 %v10215, %v10259
  %v10286 = vadd.f32 %v10216, %v10259
  %v10287 = vadd.f32 %v10217, %v10259
  %v10288 = vadd.f32 %v10218, %v10259
  %v10289 = vadd.f32 %v10219, %v10259
  %v10290 = vadd.f32 %v10220, %v10259
  %v10291 = vadd.f32 %v10221, %v10259
  %v10292 = vadd.f32 %v10222, %v10259
  %v10293 = vadd.f32 %v10223, %v10259
  %v10294 = vadd.f32 %v10224, %v10259
  %v10295 = vadd.f32 %v10225, %v10259
  %v10296 = vadd.f32 %v10226, %v10259
  %v10297 = vadd.f32 %v10227, %v10259
  %v10298 = vadd.f32 %v10228, %v10259
  %v10299 = vadd.f32 %v10229, %v10259
  %v10300 = vadd.f32 %v10230, %v10259
  %v10301 = vadd.f32 %v10231, %v10259
  %v10302 = vadd.f32 %v10232, %v10259
  %v10303 = vadd.f32 %v10233, %v10259
  %v10304 = vadd.f32 %v10234, %v10259
  %v10305 = vadd.f32 %v10235, %v10259
  %v10306 = vadd.f32 %v10236, %v10259
  %v10307 = vadd.f32 %v10237, %v10259
  %v10308 = vadd.f32 %v10238, %v10259
  %v10309 = vadd.f32 %v10239, %v10259
  %v10310 = vadd.f32 %v10240, %v10259
  %v10311 = vadd.f32 %v10241, %v10259
  %v10312 = vadd.f32 %v10242, %v10259
  %v10313 = vadd.f32 %v10243, %v10259
  %v10314 = vadd.f32 %v10244, %v10259
  %v10315 = vadd.f32 %v10245, %v10259
  %v10316 = vadd.f32 %v10246, %v10259
  %v10317 = vadd.f32 %v10247, %v10259
  %v10318 = vadd.f32 %v10248, %v10259
  %v10319 = vadd.f32 %v10249, %v10259
  %v10320 = vadd.f32 %v10250, %v10259
  %v10321 = vadd.f32 %v10251, %v10259
  %v10322 = vadd.f32 %v10252, %v10259
  %v10323 = vadd.f32 %v10253, %v10259
  %v10324 = vadd.f32 %v10254, %v10259
  %10325 = vst.msk [vmem:[%s13] sm:$0xff] %vm2951, %v10261
  %10326 = vst.msk [vmem:[%s13 + $0x8] sm:$0xff] %vm2951, %v10262
  %10327 = vst.msk [vmem:[%s13 + $0x10] sm:$0xff] %vm2951, %v10263
  %10328 = vst.msk [vmem:[%s13 + $0x18] sm:$0xff] %vm2951, %v10264
  %10329 = vst.msk [vmem:[%s13 + $0x20] sm:$0xff] %vm2951, %v10265
  %10330 = vst.msk [vmem:[%s13 + $0x28] sm:$0xff] %vm2951, %v10266
  %10331 = vst.msk [vmem:[%s13 + $0x30] sm:$0xff] %vm2951, %v10267
  %10332 = vst.msk [vmem:[%s13 + $0x38] sm:$0xff] %vm2951, %v10268
  %10333 = vst.msk [vmem:[%s13 + $0x40] sm:$0xff] %vm2951, %v10269
  %10334 = vst.msk [vmem:[%s13 + $0x48] sm:$0xff] %vm2951, %v10270
  %10335 = vst.msk [vmem:[%s13 + $0x50] sm:$0xff] %vm2951, %v10271
  %10336 = vst.msk [vmem:[%s13 + $0x58] sm:$0xff] %vm2951, %v10272
  %10337 = vst.msk [vmem:[%s13 + $0x60] sm:$0xff] %vm2951, %v10273
  %10338 = vst.msk [vmem:[%s13 + $0x68] sm:$0xff] %vm2951, %v10274
  %10339 = vst.msk [vmem:[%s13 + $0x70] sm:$0xff] %vm2951, %v10275
  %10340 = vst.msk [vmem:[%s13 + $0x78] sm:$0xff] %vm2951, %v10276
  %10341 = vst.msk [vmem:[%s13 + $0x80] sm:$0xff] %vm2951, %v10277
  %10342 = vst.msk [vmem:[%s13 + $0x88] sm:$0xff] %vm2951, %v10278
  %10343 = vst.msk [vmem:[%s13 + $0x90] sm:$0xff] %vm2951, %v10279
  %10344 = vst.msk [vmem:[%s13 + $0x98] sm:$0xff] %vm2951, %v10280
  %10345 = vst.msk [vmem:[%s13 + $0xa0] sm:$0xff] %vm2951, %v10281
  %10346 = vst.msk [vmem:[%s13 + $0xa8] sm:$0xff] %vm2951, %v10282
  %10347 = vst.msk [vmem:[%s13 + $0xb0] sm:$0xff] %vm2951, %v10283
  %10348 = vst.msk [vmem:[%s13 + $0xb8] sm:$0xff] %vm2951, %v10284
  %10349 = vst.msk [vmem:[%s13 + $0xc0] sm:$0xff] %vm2951, %v10285
  %10350 = vst.msk [vmem:[%s13 + $0xc8] sm:$0xff] %vm2951, %v10286
  %10351 = vst.msk [vmem:[%s13 + $0xd0] sm:$0xff] %vm2951, %v10287
  %10352 = vst.msk [vmem:[%s13 + $0xd8] sm:$0xff] %vm2951, %v10288
  %10353 = vst.msk [vmem:[%s13 + $0xe0] sm:$0xff] %vm2951, %v10289
  %10354 = vst.msk [vmem:[%s13 + $0xe8] sm:$0xff] %vm2951, %v10290
  %10355 = vst.msk [vmem:[%s13 + $0xf0] sm:$0xff] %vm2951, %v10291
  %10356 = vst.msk [vmem:[%s13 + $0xf8] sm:$0xff] %vm2951, %v10292
  %10357 = vst.msk [vmem:[%s13 + $0x100] sm:$0xff] %vm2951, %v10293
  %10358 = vst.msk [vmem:[%s13 + $0x108] sm:$0xff] %vm2951, %v10294
  %10359 = vst.msk [vmem:[%s13 + $0x110] sm:$0xff] %vm2951, %v10295
  %10360 = vst.msk [vmem:[%s13 + $0x118] sm:$0xff] %vm2951, %v10296
  %10361 = vst.msk [vmem:[%s13 + $0x120] sm:$0xff] %vm2951, %v10297
  %10362 = vst.msk [vmem:[%s13 + $0x128] sm:$0xff] %vm2951, %v10298
  %10363 = vst.msk [vmem:[%s13 + $0x130] sm:$0xff] %vm2951, %v10299
  %10364 = vst.msk [vmem:[%s13 + $0x138] sm:$0xff] %vm2951, %v10300
  %10365 = vst.msk [vmem:[%s13 + $0x140] sm:$0xff] %vm2951, %v10301
  %10366 = vst.msk [vmem:[%s13 + $0x148] sm:$0xff] %vm2951, %v10302
  %10367 = vst.msk [vmem:[%s13 + $0x150] sm:$0xff] %vm2951, %v10303
  %10368 = vst.msk [vmem:[%s13 + $0x158] sm:$0xff] %vm2951, %v10304
  %10369 = vst.msk [vmem:[%s13 + $0x160] sm:$0xff] %vm2951, %v10305
  %10370 = vst.msk [vmem:[%s13 + $0x168] sm:$0xff] %vm2951, %v10306
  %10371 = vst.msk [vmem:[%s13 + $0x170] sm:$0xff] %vm2951, %v10307
  %10372 = vst.msk [vmem:[%s13 + $0x178] sm:$0xff] %vm2951, %v10308
  %10373 = vst.msk [vmem:[%s13 + $0x180] sm:$0xff] %vm2951, %v10309
  %10374 = vst.msk [vmem:[%s13 + $0x188] sm:$0xff] %vm2951, %v10310
  %10375 = vst.msk [vmem:[%s13 + $0x190] sm:$0xff] %vm2951, %v10311
  %10376 = vst.msk [vmem:[%s13 + $0x198] sm:$0xff] %vm2951, %v10312
  %10377 = vst.msk [vmem:[%s13 + $0x1a0] sm:$0xff] %vm2951, %v10313
  %10378 = vst.msk [vmem:[%s13 + $0x1a8] sm:$0xff] %vm2951, %v10314
  %10379 = vst.msk [vmem:[%s13 + $0x1b0] sm:$0xff] %vm2951, %v10315
  %10380 = vst.msk [vmem:[%s13 + $0x1b8] sm:$0xff] %vm2951, %v10316
  %10381 = vst.msk [vmem:[%s13 + $0x1c0] sm:$0xff] %vm2951, %v10317
  %10382 = vst.msk [vmem:[%s13 + $0x1c8] sm:$0xff] %vm2951, %v10318
  %10383 = vst.msk [vmem:[%s13 + $0x1d0] sm:$0xff] %vm2951, %v10319
  %10384 = vst.msk [vmem:[%s13 + $0x1d8] sm:$0xff] %vm2951, %v10320
  %10385 = vst.msk [vmem:[%s13 + $0x1e0] sm:$0xff] %vm2951, %v10321
  %10386 = vst.msk [vmem:[%s13 + $0x1e8] sm:$0xff] %vm2951, %v10322
  %10387 = vst.msk [vmem:[%s13 + $0x1f0] sm:$0xff] %vm2951, %v10323
  %10388 = vst.msk [vmem:[%s13 + $0x1f8] sm:$0xff] %vm2951, %v10324
  // Predicated region
  $region54: #{segnet_forward.1} parent=0 // pred_check
    _
  $region55: #{segnet_forward.1} parent=0 // pred_check_branch
    %10390 = sbr.rel (0) target = $region57
  $region56: #{segnet_forward.1} parent=0 // pred_region
    _
  $region57: #{segnet_forward.1} parent=0 // pred_fallthru
    _
  // Predicated region
  $region58: #{segnet_forward.1} parent=0 // pred_check
    _
  $region59: #{segnet_forward.1} parent=0 // pred_check_branch
    %10392 = sbr.rel (0) target = $region61
  $region60: #{segnet_forward.1} parent=0 // pred_region
    _
  $region61: #{segnet_forward.1} parent=0 // pred_fallthru
    _

</llo_original>
